<compile_context>
chip_gen: v6e
topology: v6e:2x2x1
jax: 0.10.0
libtpu: 0.0.40
codegen_flags: <defaults>
</compile_context>

<pallas_src>
import math
from functools import partial

import jax
import jax.numpy as jnp
from jax import lax
from jax.experimental import pallas as pl
from jax.experimental.pallas import tpu as pltpu


# ----------------------------------------------------------------------------- helpers

def _detect_vmem_limit():
    """Generation-aware scoped-VMEM budget (~3/4 of physical, capped at 96 MiB)."""
    try:
        cap = int(pltpu.get_tpu_info().vmem_capacity_bytes)
        return max(32 * 1024 * 1024, min((cap * 3) // 4, 96 * 1024 * 1024))
    except Exception:
        return None


_VMEM_LIMIT = _detect_vmem_limit()


def _cparams(sem):
    kwargs = dict(dimension_semantics=sem)
    if _VMEM_LIMIT is not None:
        kwargs["vmem_limit_bytes"] = _VMEM_LIMIT
    return pltpu.CompilerParams(**kwargs)


def _row_tile(m, cap=1024):
    """Largest row tile (multiple of 8) that divides m, capped; full array if small."""
    if m <= cap:
        return m
    for t in range(cap, 7, -8):
        if m % t == 0:
            return t
    return m


def _softplus(x):
    # matches F.softplus(threshold=20)
    return jnp.where(x > 20.0, x, jnp.log1p(jnp.exp(jnp.minimum(x, 20.0))))


# ----------------------------------------------------------------------------- kernel 1: LN + in_proj

def _ln_inproj_kernel(x_ref, g_ref, b_ref, w_ref, xo_ref, zo_ref, *, eps, d_inner):
    x = x_ref[...]
    mu = jnp.mean(x, axis=-1, keepdims=True)
    var = jnp.mean((x - mu) ** 2, axis=-1, keepdims=True)
    h = (x - mu) * lax.rsqrt(var + eps) * g_ref[...] + b_ref[...]
    xz = jnp.dot(h, w_ref[...], preferred_element_type=jnp.float32)   # (tm, 2*d_inner)
    xo_ref[...] = xz[:, :d_inner]
    zo_ref[...] = xz[:, d_inner:]


def ln_inproj(x, g, b, w_in, d_inner, eps=1e-5):
    """Fused LayerNorm(eps) + Linear(no bias).  x: (M, C); w_in: (2*d_inner, C)."""
    M, C = x.shape
    tm = _row_tile(M)
    w = jnp.transpose(w_in.astype(jnp.float32))                       # (C, 2*d_inner)
    return pl.pallas_call(
        partial(_ln_inproj_kernel, eps=eps, d_inner=d_inner),
        out_shape=(jax.ShapeDtypeStruct((M, d_inner), jnp.float32),
                   jax.ShapeDtypeStruct((M, d_inner), jnp.float32)),
        grid=(M // tm,),
        in_specs=[pl.BlockSpec((tm, C), lambda i: (i, 0)),
                  pl.BlockSpec((1, C), lambda i: (0, 0)),
                  pl.BlockSpec((1, C), lambda i: (0, 0)),
                  pl.BlockSpec((C, 2 * d_inner), lambda i: (0, 0))],
        out_specs=[pl.BlockSpec((tm, d_inner), lambda i: (i, 0)),
                   pl.BlockSpec((tm, d_inner), lambda i: (i, 0))],
        compiler_params=_cparams(("parallel",)),
    )(x.astype(jnp.float32), g.reshape(1, C).astype(jnp.float32),
      b.reshape(1, C).astype(jnp.float32), w)


# ----------------------------------------------------------------------------- kernel 2: depthwise conv3d + SiLU

def _dwconv_silu_kernel(x0_ref, x1_ref, x2_ref, w_ref, b_ref, o_ref, *, H, W, C):
    planes = (x0_ref[0, 0], x1_ref[0, 0], x2_ref[0, 0])     # each (H+2, W+2, C)
    acc = jnp.zeros((H, W, C), jnp.float32)
    for kd in range(3):
        xs = planes[kd]
        for kh in range(3):
            for kw in range(3):
                acc = acc + xs[kh:kh + H, kw:kw + W, :] * w_ref[kd * 9 + kh * 3 + kw]
    acc = acc + b_ref[...]
    o_ref[0, 0] = acc * jax.nn.sigmoid(acc)                 # fused SiLU


def dwconv3d_silu(x, conv_w, conv_b):
    """Depthwise 3x3x3 conv (groups=C, pad=1) + SiLU, tiled over (batch, depth).

    x: (B, D, H, W, C) channels-last; conv_w: (C, 3, 3, 3); conv_b: (C,)."""
    B, Dd, H, W, C = x.shape
    xp = jnp.pad(x.astype(jnp.float32), ((0, 0), (1, 1), (1, 1), (1, 1), (0, 0)))
    w27 = jnp.transpose(conv_w.astype(jnp.float32).reshape(C, 27), (1, 0)).reshape(27, 1, 1, C)
    bz = conv_b.astype(jnp.float32).reshape(1, 1, C)
    halo = (1, 1, H + 2, W + 2, C)
    return pl.pallas_call(
        partial(_dwconv_silu_kernel, H=H, W=W, C=C),
        out_shape=jax.ShapeDtypeStruct((B, Dd, H, W, C), jnp.float32),
        grid=(B, Dd),
        in_specs=[pl.BlockSpec(halo, lambda b, d: (b, d, 0, 0, 0)),
                  pl.BlockSpec(halo, lambda b, d: (b, d + 1, 0, 0, 0)),
                  pl.BlockSpec(halo, lambda b, d: (b, d + 2, 0, 0, 0)),
                  pl.BlockSpec((27, 1, 1, C), lambda b, d: (0, 0, 0, 0)),
                  pl.BlockSpec((1, 1, C), lambda b, d: (0, 0, 0))],
        out_specs=pl.BlockSpec((1, 1, H, W, C), lambda b, d: (b, d, 0, 0, 0)),
        compiler_params=_cparams(("parallel", "parallel")),
    )(xp, xp, xp, w27, bz)


# ----------------------------------------------------------------------------- kernel 3: fused projection + bidirectional selective scan

def _ss_scan_kernel(x0_ref, x1_ref, w_ref, a_ref, d_ref, db_ref, y_ref, proj_ref,
                    *, L, N, Dn, R):
    """One (batch, ordering) tile: fused [dt|B|C] projection + forward AND reverse scan.

    x0_ref / x1_ref : (1, L, Dn)  conv output in (D,H,W) / (W,H,D) flatten order
    w_ref           : (1, Dn, 2P) folded projection weights  (P = Dn + 2N, fwd||rev)
    a_ref           : (2, 1, N, Dn)   A^T for [fwd, rev]
    d_ref, db_ref   : (2, 1, 1, Dn)   D skip and dt bias for [fwd, rev]
    y_ref           : (1, 1, L, Dn)   y_fwd + y_rev (rev already mapped back to positions)
    proj_ref        : VMEM (L, 2P) scratch.
    """
    P = Dn + 2 * N
    is0 = pl.program_id(1) == 0
    x = jnp.where(is0, x0_ref[0], x1_ref[0])                      # (L, Dn)

    # fused x_proj (+ folded dt_proj) for both the forward and reverse parameter sets.
    proj_ref[...] = jnp.dot(x, w_ref[0], preferred_element_type=jnp.float32)

    # init output with the combined skip term (D_fwd + D_rev) * u.
    y_ref[0, 0] = (d_ref[0, 0] + d_ref[1, 0]) * x

    a_f = a_ref[0, 0]                                             # (N, Dn)
    a_r = a_ref[1, 0]
    db_f = db_ref[0, 0]                                           # (1, Dn)
    db_r = db_ref[1, 0]
    nchunks = L // R

    def chunk_step(c, carry):
        h_f, h_r = carry

        # ---------- forward direction: rows [c*R, c*R + R) ----------
        sf = pl.multiple_of(c * R, R)
        xf = jnp.where(is0, x0_ref[0, pl.ds(sf, R), :], x1_ref[0, pl.ds(sf, R), :])
        pf = proj_ref[pl.ds(sf, R), :]                            # (R, 2P)
        dsp_f = _softplus(pf[:, 0:Dn] + db_f)                     # (R, Dn)
        bm_f = pf[:, Dn:Dn + N]                                   # (R, N)
        cm_f = pf[:, Dn + N:Dn + 2 * N]                           # (R, N)
        dA_f = jnp.exp(dsp_f[:, None, :] * a_f[None, :, :])       # (R, N, Dn)
        dBu_f = bm_f[:, :, None] * (dsp_f * xf)[:, None, :]       # (R, N, Dn)
        hs_f = []
        for i in range(R):                                        # unrolled recurrence
            h_f = dA_f[i] * h_f + dBu_f[i]
            hs_f.append(h_f)
        hstk_f = jnp.stack(hs_f, axis=0)                          # (R, N, Dn)
        yc_f = jnp.sum(cm_f[:, :, None] * hstk_f, axis=1)         # (R, Dn)  batched C.h (VPU)
        y_ref[0, 0, pl.ds(sf, R), :] = y_ref[0, 0, pl.ds(sf, R), :] + yc_f

        # ---------- reverse direction: rows [L-(c+1)R, L-cR), traversed descending ----------
        sr = pl.multiple_of(L - (c + 1) * R, R)
        xr = jnp.where(is0, x0_ref[0, pl.ds(sr, R), :], x1_ref[0, pl.ds(sr, R), :])
        pr = proj_ref[pl.ds(sr, R), :]
        dsp_r = _softplus(pr[:, P:P + Dn] + db_r)
        bm_r = pr[:, P + Dn:P + Dn + N]
        cm_r = pr[:, P + Dn + N:P + Dn + 2 * N]
        dA_r = jnp.exp(dsp_r[:, None, :] * a_r[None, :, :])
        dBu_r = bm_r[:, :, None] * (dsp_r * xr)[:, None, :]
        hs_r = [None] * R
        for i in range(R - 1, -1, -1):                            # reversed traversal
            h_r = dA_r[i] * h_r + dBu_r[i]
            hs_r[i] = h_r
        hstk_r = jnp.stack(hs_r, axis=0)
        yc_r = jnp.sum(cm_r[:, :, None] * hstk_r, axis=1)
        y_ref[0, 0, pl.ds(sr, R), :] = y_ref[0, 0, pl.ds(sr, R), :] + yc_r

        return (h_f, h_r)

    h0 = jnp.zeros((N, Dn), jnp.float32)
    lax.fori_loop(0, nchunks, chunk_step, (h0, h0))


def selective_scan_dual(x0, x1, w_cat, a_all, d_all, db_all, chunk=8):
    """x0/x1: (B, L, Dn); w_cat: (2, Dn, 2P); a_all: (2,2,N,Dn); d_all/db_all: (2,2,1,Dn)."""
    B, L, Dn = x0.shape
    N = a_all.shape[2]
    P = Dn + 2 * N
    R = chunk
    while R > 1 and (L % R) != 0:
        R //= 2
    return pl.pallas_call(
        partial(_ss_scan_kernel, L=L, N=N, Dn=Dn, R=R),
        out_shape=jax.ShapeDtypeStruct((B, 2, L, Dn), jnp.float32),
        grid=(B, 2),
        in_specs=[
            pl.BlockSpec((1, L, Dn), lambda b, j: (b, 0, 0)),
            pl.BlockSpec((1, L, Dn), lambda b, j: (b, 0, 0)),
            pl.BlockSpec((1, Dn, 2 * P), lambda b, j: (j, 0, 0)),
            pl.BlockSpec((2, 1, N, Dn), lambda b, j: (0, j, 0, 0)),
            pl.BlockSpec((2, 1, 1, Dn), lambda b, j: (0, j, 0, 0)),
            pl.BlockSpec((2, 1, 1, Dn), lambda b, j: (0, j, 0, 0)),
        ],
        out_specs=pl.BlockSpec((1, 1, L, Dn), lambda b, j: (b, j, 0, 0)),
        scratch_shapes=[pltpu.VMEM((L, 2 * P), jnp.float32)],
        compiler_params=_cparams(("parallel", "parallel")),
    )(x0.astype(jnp.float32), x1.astype(jnp.float32), w_cat.astype(jnp.float32),
      a_all.astype(jnp.float32), d_all.astype(jnp.float32), db_all.astype(jnp.float32))


# ----------------------------------------------------------------------------- kernel 4: out_norm + gate + out_proj + residual

def _gate_outproj_kernel(y0_ref, y1_ref, z_ref, r_ref, g_ref, b_ref, w_ref, o_ref, *, eps):
    y = y0_ref[...] + y1_ref[...]
    mu = jnp.mean(y, axis=-1, keepdims=True)
    var = jnp.mean((y - mu) ** 2, axis=-1, keepdims=True)
    yn = (y - mu) * lax.rsqrt(var + eps) * g_ref[...] + b_ref[...]
    z = z_ref[...]
    gated = yn * (z * jax.nn.sigmoid(z))                          # y * SiLU(z)
    o_ref[...] = r_ref[...] + jnp.dot(gated, w_ref[...], preferred_element_type=jnp.float32)


def gate_outproj_residual(y0, y1, z, res, g, b, w_out, eps=1e-5):
    M, Dn = y0.shape
    C = w_out.shape[0]
    tm = _row_tile(M)
    w = jnp.transpose(w_out.astype(jnp.float32))                  # (Dn, C)
    return pl.pallas_call(
        partial(_gate_outproj_kernel, eps=eps),
        out_shape=jax.ShapeDtypeStruct((M, C), jnp.float32),
        grid=(M // tm,),
        in_specs=[pl.BlockSpec((tm, Dn), lambda i: (i, 0)),
                  pl.BlockSpec((tm, Dn), lambda i: (i, 0)),
                  pl.BlockSpec((tm, Dn), lambda i: (i, 0)),
                  pl.BlockSpec((tm, C), lambda i: (i, 0)),
                  pl.BlockSpec((1, Dn), lambda i: (0, 0)),
                  pl.BlockSpec((1, Dn), lambda i: (0, 0)),
                  pl.BlockSpec((Dn, C), lambda i: (0, 0))],
        out_specs=pl.BlockSpec((tm, C), lambda i: (i, 0)),
        compiler_params=_cparams(("parallel",)),
    )(y0.astype(jnp.float32), y1.astype(jnp.float32), z.astype(jnp.float32),
      res.astype(jnp.float32), g.reshape(1, Dn).astype(jnp.float32),
      b.reshape(1, Dn).astype(jnp.float32), w)


# ----------------------------------------------------------------------------- model glue

def vss_block_forward(x, p, d_state):
    B, Dd, H, W, C = x.shape
    L = Dd * H * W
    M = B * L
    d_inner = p["in_proj_w"].shape[0] // 2
    N = d_state

    x_flat = x.reshape(M, C).astype(jnp.float32)

    # (1) LN + in_proj (no bias); outputs the conv branch and the gate z.
    xin, z = ln_inproj(x_flat, p["ln1_g"], p["ln1_b"], p["in_proj_w"], d_inner)

    # (2) depthwise conv3d + SiLU (channels-last).
    xc = dwconv3d_silu(xin.reshape(B, Dd, H, W, d_inner), p["conv_w"][:, 0], p["conv_b"])

    # (3) the two scan orderings: (D,H,W) flatten and (W,H,D) flatten.
    x0 = xc.reshape(B, L, d_inner)
    x1 = jnp.transpose(xc, (0, 3, 2, 1, 4)).reshape(B, L, d_inner)

    # (4) fold dt_proj into x_proj; pack per-ordering forward/reverse parameters.
    wx = p["x_proj_w"].astype(jnp.float32)                 # (4, dt_rank + 2N, d_inner)
    wd = p["dt_w"].astype(jnp.float32)                     # (4, d_inner, dt_rank)
    dt_rank = wd.shape[-1]
    m_dt = jnp.einsum("kdr,kri->kdi", wd, wx[:, :dt_rank, :])          # (4, d_inner, d_inner)
    w_eff = jnp.concatenate([m_dt, wx[:, dt_rank:, :]], axis=1)        # (4, d_inner+2N, d_inner)
    w_eff_t = jnp.transpose(w_eff, (0, 2, 1)).reshape(2, 2, d_inner, d_inner + 2 * N)
    w_cat = jnp.concatenate([w_eff_t[0], w_eff_t[1]], axis=-1)         # (2, d_inner, 2P)
    a_all = jnp.transpose((-jnp.exp(p["A_logs"].astype(jnp.float32))).reshape(4, d_inner, N),
                          (0, 2, 1)).reshape(2, 2, N, d_inner)
    d_all = p["Ds"].astype(jnp.float32).reshape(2, 2, 1, d_inner)
    db_all = p["dt_b"].astype(jnp.float32).reshape(2, 2, 1, d_inner)

    # (5) fused projection + bidirectional selective scan per (batch, ordering).
    y_pair = selective_scan_dual(x0, x1, w_cat, a_all, d_all, db_all)  # (B, 2, L, d_inner)

    # (6) combine orderings; ordering-1 rows re-permuted exactly as the reference
    #     (view(B,C,D,W,H).transpose(2,4)) does.
    y0 = y_pair[:, 0].reshape(M, d_inner)
    y1 = jnp.transpose(y_pair[:, 1].reshape(B, Dd, W, H, d_inner),
                       (0, 3, 2, 1, 4)).reshape(M, d_inner)

    # (7) out_norm + SiLU gate + out_proj + residual (DropPath(0) is identity).
    out = gate_outproj_residual(y0, y1, z, x_flat, p["out_norm_g"], p["out_norm_b"],
                                p["out_proj_w"])
    return out.reshape(B, Dd, H, W, C)


def vss_layer_forward(x, params, d_state):
    for p in params:
        x = vss_block_forward(x, p, d_state)
    return x   # downsample=None


# ----------------------------------------------------------------------------- params

def init_block_params(key, dim, d_state):
    d_inner = 2 * dim
    dt_rank = math.ceil(dim / 16)
    ks = jax.random.split(key, 8)

    def uni(k, shape, bound):
        return jax.random.uniform(k, shape, jnp.float32, -bound, bound)

    dt = jnp.exp(jax.random.uniform(ks[5], (4, d_inner), jnp.float32) *
                 (math.log(0.1) - math.log(0.001)) + math.log(0.001))
    dt = jnp.maximum(dt, 1e-4)
    inv_dt = dt + jnp.log(-jnp.expm1(-dt))
    A_logs = jnp.tile(jnp.log(jnp.arange(1, d_state + 1, dtype=jnp.float32))[None, :],
                      (4 * d_inner, 1))

    return dict(
        ln1_g=jnp.ones((dim,), jnp.float32),
        ln1_b=jnp.zeros((dim,), jnp.float32),
        in_proj_w=uni(ks[0], (2 * d_inner, dim), 1.0 / math.sqrt(dim)),
        conv_w=uni(ks[1], (d_inner, 1, 3, 3, 3), 1.0 / math.sqrt(27.0)),
        conv_b=uni(ks[2], (d_inner,), 1.0 / math.sqrt(27.0)),
        x_proj_w=uni(ks[3], (4, dt_rank + 2 * d_state, d_inner), 1.0 / math.sqrt(d_inner)),
        dt_w=uni(ks[4], (4, d_inner, dt_rank), dt_rank ** -0.5),
        dt_b=inv_dt,
        A_logs=A_logs,
        Ds=jnp.ones((4 * d_inner,), jnp.float32),
        out_norm_g=jnp.ones((d_inner,), jnp.float32),
        out_norm_b=jnp.zeros((d_inner,), jnp.float32),
        out_proj_w=uni(ks[6], (dim, d_inner), 1.0 / math.sqrt(d_inner)),
    )


# ----------------------------------------------------------------------------- main

if __name__ == "__main__":
    B, Dd, H, W = 2, 4, 4, 4
    dim, depth, d_state = 16, 2, 16

    key = jax.random.PRNGKey(0)
    kx, kp = jax.random.split(key)
    x = jax.random.normal(kx, (B, Dd, H, W, dim), jnp.float32)
    block_keys = jax.random.split(kp, depth)
    params = [init_block_params(block_keys[i], dim, d_state) for i in range(depth)]

    @jax.jit
    def forward(x_in):
        return vss_layer_forward(x_in, params, d_state)

    out = forward(x)
    jax.block_until_ready(out)
    assert out.shape == (B, Dd, H, W, dim)
    assert bool(jnp.all(jnp.isfinite(out)))
    print("KERNEL_OK")
</pallas_src>

<mosaic_0001>
module attributes {stable_mosaic.version = 11 : i64} {
  func.func @_ln_inproj_kernel(%arg0: i32, %arg1: memref<128x16xf32, #tpu.memory_space<vmem>>, %arg2: memref<1x16xf32, #tpu.memory_space<vmem>>, %arg3: memref<1x16xf32, #tpu.memory_space<vmem>>, %arg4: memref<16x64xf32, #tpu.memory_space<vmem>>, %arg5: memref<128x32xf32, #tpu.memory_space<vmem>>, %arg6: memref<128x32xf32, #tpu.memory_space<vmem>>) attributes {dimension_semantics = [#tpu.dimension_semantics<parallel>], iteration_bounds = array<i64: 1>, scalar_prefetch = 0 : i64, scratch_operands = 0 : i64, tpu.core_type = #tpu.core_type<tc>, window_params = [{transform_indices = @transform_0, window_bounds = array<i64: 128, 16>}, {pipeline_mode = #tpu.pipeline_mode<synchronous>, transform_indices = @transform_1, window_bounds = array<i64: 1, 16>}, {pipeline_mode = #tpu.pipeline_mode<synchronous>, transform_indices = @transform_2, window_bounds = array<i64: 1, 16>}, {pipeline_mode = #tpu.pipeline_mode<synchronous>, transform_indices = @transform_3, window_bounds = array<i64: 16, 64>}, {transform_indices = @transform_4, window_bounds = array<i64: 128, 32>}, {transform_indices = @transform_5, window_bounds = array<i64: 128, 32>}]} {
    %c0 = arith.constant 0 : index
    %c0_0 = arith.constant 0 : index
    %0 = vector.load %arg1[%c0, %c0_0] : memref<128x16xf32, #tpu.memory_space<vmem>>, vector<128x16xf32>
    %cst = arith.constant dense<0.000000e+00> : vector<128xf32>
    %1 = vector.multi_reduction <add>, %0, %cst [1] : vector<128x16xf32> to vector<128xf32>
    %2 = vector.shape_cast %1 : vector<128xf32> to vector<128x1xf32>
    %cst_1 = arith.constant 1.600000e+01 : f32
    %3 = vector.broadcast %cst_1 : f32 to vector<128x1xf32>
    %4 = arith.divf %2, %3 : vector<128x1xf32>
    %5 = vector.broadcast %4 : vector<128x1xf32> to vector<128x16xf32>
    %6 = arith.subf %0, %5 : vector<128x16xf32>
    %7 = arith.mulf %6, %6 : vector<128x16xf32>
    %cst_2 = arith.constant dense<0.000000e+00> : vector<128xf32>
    %8 = vector.multi_reduction <add>, %7, %cst_2 [1] : vector<128x16xf32> to vector<128xf32>
    %9 = vector.shape_cast %8 : vector<128xf32> to vector<128x1xf32>
    %cst_3 = arith.constant 1.600000e+01 : f32
    %10 = vector.broadcast %cst_3 : f32 to vector<128x1xf32>
    %11 = arith.divf %9, %10 : vector<128x1xf32>
    %12 = vector.broadcast %4 : vector<128x1xf32> to vector<128x16xf32>
    %13 = arith.subf %0, %12 : vector<128x16xf32>
    %cst_4 = arith.constant 9.99999974E-6 : f32
    %14 = vector.broadcast %cst_4 : f32 to vector<128x1xf32>
    %15 = arith.addf %11, %14 : vector<128x1xf32>
    %16 = math.rsqrt %15 : vector<128x1xf32>
    %17 = vector.broadcast %16 : vector<128x1xf32> to vector<128x16xf32>
    %18 = arith.mulf %13, %17 : vector<128x16xf32>
    %c0_5 = arith.constant 0 : index
    %c0_6 = arith.constant 0 : index
    %19 = vector.load %arg2[%c0_5, %c0_6] : memref<1x16xf32, #tpu.memory_space<vmem>>, vector<1x16xf32>
    %20 = vector.broadcast %19 : vector<1x16xf32> to vector<128x16xf32>
    %21 = arith.mulf %18, %20 : vector<128x16xf32>
    %c0_7 = arith.constant 0 : index
    %c0_8 = arith.constant 0 : index
    %22 = vector.load %arg3[%c0_7, %c0_8] : memref<1x16xf32, #tpu.memory_space<vmem>>, vector<1x16xf32>
    %23 = vector.broadcast %22 : vector<1x16xf32> to vector<128x16xf32>
    %24 = arith.addf %21, %23 : vector<128x16xf32>
    %c0_9 = arith.constant 0 : index
    %c0_10 = arith.constant 0 : index
    %25 = vector.load %arg4[%c0_9, %c0_10] : memref<16x64xf32, #tpu.memory_space<vmem>>, vector<16x64xf32>
    %cst_11 = arith.constant dense<0.000000e+00> : vector<128x64xf32>
    %26 = tpu.matmul %24, %25, %cst_11 {dimension_numbers = #tpu.dot_dimension_numbers<[1], [0], [0], [1], [0, 0, 1, 1], [], []>} : vector<128x16xf32>, vector<16x64xf32>, vector<128x64xf32> -> vector<128x64xf32>
    %27 = vector.extract_strided_slice %26 {offsets = [0, 0], sizes = [128, 32], strides = [1, 1]} : vector<128x64xf32> to vector<128x32xf32>
    %c0_12 = arith.constant 0 : index
    %c0_13 = arith.constant 0 : index
    %28 = vector.load %arg5[%c0_12, %c0_13] : memref<128x32xf32, #tpu.memory_space<vmem>>, vector<128x32xf32>
    tpu.vector_store %arg5[%c0_12, %c0_13], %27 {strides = array<i32>} : memref<128x32xf32, #tpu.memory_space<vmem>>, vector<128x32xf32>,
    %29 = vector.extract_strided_slice %26 {offsets = [0, 32], sizes = [128, 32], strides = [1, 1]} : vector<128x64xf32> to vector<128x32xf32>
    %c0_14 = arith.constant 0 : index
    %c0_15 = arith.constant 0 : index
    %30 = vector.load %arg6[%c0_14, %c0_15] : memref<128x32xf32, #tpu.memory_space<vmem>>, vector<128x32xf32>
    tpu.vector_store %arg6[%c0_14, %c0_15], %29 {strides = array<i32>} : memref<128x32xf32, #tpu.memory_space<vmem>>, vector<128x32xf32>,
    return
  }
  func.func @transform_0(%arg0: i32) -> (i32, i32) {
    %c0_i32 = arith.constant 0 : i32
    %c0_i32_0 = arith.constant 0 : i32
    return %arg0, %c0_i32 : i32, i32
  }
  func.func @transform_1(%arg0: i32) -> (i32, i32) {
    %c0_i32 = arith.constant 0 : i32
    %c0_i32_0 = arith.constant 0 : i32
    %c0_i32_1 = arith.constant 0 : i32
    return %c0_i32, %c0_i32_0 : i32, i32
  }
  func.func @transform_2(%arg0: i32) -> (i32, i32) {
    %c0_i32 = arith.constant 0 : i32
    %c0_i32_0 = arith.constant 0 : i32
    %c0_i32_1 = arith.constant 0 : i32
    return %c0_i32, %c0_i32_0 : i32, i32
  }
  func.func @transform_3(%arg0: i32) -> (i32, i32) {
    %c0_i32 = arith.constant 0 : i32
    %c0_i32_0 = arith.constant 0 : i32
    %c0_i32_1 = arith.constant 0 : i32
    return %c0_i32, %c0_i32_0 : i32, i32
  }
  func.func @transform_4(%arg0: i32) -> (i32, i32) {
    %c0_i32 = arith.constant 0 : i32
    %c0_i32_0 = arith.constant 0 : i32
    return %arg0, %c0_i32 : i32, i32
  }
  func.func @transform_5(%arg0: i32) -> (i32, i32) {
    %c0_i32 = arith.constant 0 : i32
    %c0_i32_0 = arith.constant 0 : i32
    return %arg0, %c0_i32 : i32, i32
  }
}

module attributes {stable_mosaic.version = 11 : i64} {
  func.func @_dwconv_silu_kernel(%arg0: i32, %arg1: i32, %arg2: memref<1x1x6x6x32xf32, #tpu.memory_space<vmem>>, %arg3: memref<1x1x6x6x32xf32, #tpu.memory_space<vmem>>, %arg4: memref<1x1x6x6x32xf32, #tpu.memory_space<vmem>>, %arg5: memref<27x1x1x32xf32, #tpu.memory_space<vmem>>, %arg6: memref<1x1x32xf32, #tpu.memory_space<vmem>>, %arg7: memref<1x1x4x4x32xf32, #tpu.memory_space<vmem>>) attributes {dimension_semantics = [#tpu.dimension_semantics<parallel>, #tpu.dimension_semantics<parallel>], iteration_bounds = array<i64: 2, 4>, scalar_prefetch = 0 : i64, scratch_operands = 0 : i64, tpu.core_type = #tpu.core_type<tc>, window_params = [{transform_indices = @transform_0, window_bounds = array<i64: 1, 1, 6, 6, 32>}, {transform_indices = @transform_1, window_bounds = array<i64: 1, 1, 6, 6, 32>}, {transform_indices = @transform_2, window_bounds = array<i64: 1, 1, 6, 6, 32>}, {pipeline_mode = #tpu.pipeline_mode<synchronous>, transform_indices = @transform_3, window_bounds = array<i64: 27, 1, 1, 32>}, {pipeline_mode = #tpu.pipeline_mode<synchronous>, transform_indices = @transform_4, window_bounds = array<i64: 1, 1, 32>}, {transform_indices = @transform_5, window_bounds = array<i64: 1, 1, 4, 4, 32>}]} {
    %c0 = arith.constant 0 : index
    %c0_0 = arith.constant 0 : index
    %c0_1 = arith.constant 0 : index
    %c0_2 = arith.constant 0 : index
    %c0_3 = arith.constant 0 : index
    %0 = vector.load %arg2[%c0, %c0_0, %c0_1, %c0_2, %c0_3] : memref<1x1x6x6x32xf32, #tpu.memory_space<vmem>>, vector<1x1x6x6x32xf32>
    %1 = vector.shape_cast %0 : vector<1x1x6x6x32xf32> to vector<6x6x32xf32>
    %c0_4 = arith.constant 0 : index
    %c0_5 = arith.constant 0 : index
    %c0_6 = arith.constant 0 : index
    %c0_7 = arith.constant 0 : index
    %c0_8 = arith.constant 0 : index
    %2 = vector.load %arg3[%c0_4, %c0_5, %c0_6, %c0_7, %c0_8] : memref<1x1x6x6x32xf32, #tpu.memory_space<vmem>>, vector<1x1x6x6x32xf32>
    %3 = vector.shape_cast %2 : vector<1x1x6x6x32xf32> to vector<6x6x32xf32>
    %c0_9 = arith.constant 0 : index
    %c0_10 = arith.constant 0 : index
    %c0_11 = arith.constant 0 : index
    %c0_12 = arith.constant 0 : index
    %c0_13 = arith.constant 0 : index
    %4 = vector.load %arg4[%c0_9, %c0_10, %c0_11, %c0_12, %c0_13] : memref<1x1x6x6x32xf32, #tpu.memory_space<vmem>>, vector<1x1x6x6x32xf32>
    %5 = vector.shape_cast %4 : vector<1x1x6x6x32xf32> to vector<6x6x32xf32>
    %cst = arith.constant 0.000000e+00 : f32
    %6 = vector.broadcast %cst : f32 to vector<4x4x32xf32>
    %7 = vector.extract_strided_slice %1 {offsets = [0, 0, 0], sizes = [4, 4, 32], strides = [1, 1, 1]} : vector<6x6x32xf32> to vector<4x4x32xf32>
    %c0_14 = arith.constant 0 : index
    %c0_15 = arith.constant 0 : index
    %c0_16 = arith.constant 0 : index
    %c0_17 = arith.constant 0 : index
    %8 = vector.load %arg5[%c0_14, %c0_15, %c0_16, %c0_17] : memref<27x1x1x32xf32, #tpu.memory_space<vmem>>, vector<1x1x1x32xf32>
    %9 = vector.shape_cast %8 : vector<1x1x1x32xf32> to vector<1x1x32xf32>
    %10 = vector.broadcast %9 : vector<1x1x32xf32> to vector<4x4x32xf32>
    %11 = arith.mulf %7, %10 : vector<4x4x32xf32>
    %12 = arith.addf %6, %11 : vector<4x4x32xf32>
    %13 = vector.extract_strided_slice %1 {offsets = [0, 1, 0], sizes = [4, 4, 32], strides = [1, 1, 1]} : vector<6x6x32xf32> to vector<4x4x32xf32>
    %c1 = arith.constant 1 : index
    %c0_18 = arith.constant 0 : index
    %c0_19 = arith.constant 0 : index
    %c0_20 = arith.constant 0 : index
    %14 = vector.load %arg5[%c1, %c0_18, %c0_19, %c0_20] : memref<27x1x1x32xf32, #tpu.memory_space<vmem>>, vector<1x1x1x32xf32>
    %15 = vector.shape_cast %14 : vector<1x1x1x32xf32> to vector<1x1x32xf32>
    %16 = vector.broadcast %15 : vector<1x1x32xf32> to vector<4x4x32xf32>
    %17 = arith.mulf %13, %16 : vector<4x4x32xf32>
    %18 = arith.addf %12, %17 : vector<4x4x32xf32>
    %19 = vector.extract_strided_slice %1 {offsets = [0, 2, 0], sizes = [4, 4, 32], strides = [1, 1, 1]} : vector<6x6x32xf32> to vector<4x4x32xf32>
    %c2 = arith.constant 2 : index
    %c0_21 = arith.constant 0 : index
    %c0_22 = arith.constant 0 : index
    %c0_23 = arith.constant 0 : index
    %20 = vector.load %arg5[%c2, %c0_21, %c0_22, %c0_23] : memref<27x1x1x32xf32, #tpu.memory_space<vmem>>, vector<1x1x1x32xf32>
    %21 = vector.shape_cast %20 : vector<1x1x1x32xf32> to vector<1x1x32xf32>
    %22 = vector.broadcast %21 : vector<1x1x32xf32> to vector<4x4x32xf32>
    %23 = arith.mulf %19, %22 : vector<4x4x32xf32>
    %24 = arith.addf %18, %23 : vector<4x4x32xf32>
    %25 = vector.extract_strided_slice %1 {offsets = [1, 0, 0], sizes = [4, 4, 32], strides = [1, 1, 1]} : vector<6x6x32xf32> to vector<4x4x32xf32>
    %c3 = arith.constant 3 : index
    %c0_24 = arith.constant 0 : index
    %c0_25 = arith.constant 0 : index
    %c0_26 = arith.constant 0 : index
    %26 = vector.load %arg5[%c3, %c0_24, %c0_25, %c0_26] : memref<27x1x1x32xf32, #tpu.memory_space<vmem>>, vector<1x1x1x32xf32>
    %27 = vector.shape_cast %26 : vector<1x1x1x32xf32> to vector<1x1x32xf32>
    %28 = vector.broadcast %27 : vector<1x1x32xf32> to vector<4x4x32xf32>
    %29 = arith.mulf %25, %28 : vector<4x4x32xf32>
    %30 = arith.addf %24, %29 : vector<4x4x32xf32>
    %31 = vector.extract_strided_slice %1 {offsets = [1, 1, 0], sizes = [4, 4, 32], strides = [1, 1, 1]} : vector<6x6x32xf32> to vector<4x4x32xf32>
    %c4 = arith.constant 4 : index
    %c0_27 = arith.constant 0 : index
    %c0_28 = arith.constant 0 : index
    %c0_29 = arith.constant 0 : index
    %32 = vector.load %arg5[%c4, %c0_27, %c0_28, %c0_29] : memref<27x1x1x32xf32, #tpu.memory_space<vmem>>, vector<1x1x1x32xf32>
    %33 = vector.shape_cast %32 : vector<1x1x1x32xf32> to vector<1x1x32xf32>
    %34 = vector.broadcast %33 : vector<1x1x32xf32> to vector<4x4x32xf32>
    %35 = arith.mulf %31, %34 : vector<4x4x32xf32>
    %36 = arith.addf %30, %35 : vector<4x4x32xf32>
    %37 = vector.extract_strided_slice %1 {offsets = [1, 2, 0], sizes = [4, 4, 32], strides = [1, 1, 1]} : vector<6x6x32xf32> to vector<4x4x32xf32>
    %c5 = arith.constant 5 : index
    %c0_30 = arith.constant 0 : index
    %c0_31 = arith.constant 0 : index
    %c0_32 = arith.constant 0 : index
    %38 = vector.load %arg5[%c5, %c0_30, %c0_31, %c0_32] : memref<27x1x1x32xf32, #tpu.memory_space<vmem>>, vector<1x1x1x32xf32>
    %39 = vector.shape_cast %38 : vector<1x1x1x32xf32> to vector<1x1x32xf32>
    %40 = vector.broadcast %39 : vector<1x1x32xf32> to vector<4x4x32xf32>
    %41 = arith.mulf %37, %40 : vector<4x4x32xf32>
    %42 = arith.addf %36, %41 : vector<4x4x32xf32>
    %43 = vector.extract_strided_slice %1 {offsets = [2, 0, 0], sizes = [4, 4, 32], strides = [1, 1, 1]} : vector<6x6x32xf32> to vector<4x4x32xf32>
    %c6 = arith.constant 6 : index
    %c0_33 = arith.constant 0 : index
    %c0_34 = arith.constant 0 : index
    %c0_35 = arith.constant 0 : index
    %44 = vector.load %arg5[%c6, %c0_33, %c0_34, %c0_35] : memref<27x1x1x32xf32, #tpu.memory_space<vmem>>, vector<1x1x1x32xf32>
    %45 = vector.shape_cast %44 : vector<1x1x1x32xf32> to vector<1x1x32xf32>
    %46 = vector.broadcast %45 : vector<1x1x32xf32> to vector<4x4x32xf32>
    %47 = arith.mulf %43, %46 : vector<4x4x32xf32>
    %48 = arith.addf %42, %47 : vector<4x4x32xf32>
    %49 = vector.extract_strided_slice %1 {offsets = [2, 1, 0], sizes = [4, 4, 32], strides = [1, 1, 1]} : vector<6x6x32xf32> to vector<4x4x32xf32>
    %c7 = arith.constant 7 : index
    %c0_36 = arith.constant 0 : index
    %c0_37 = arith.constant 0 : index
    %c0_38 = arith.constant 0 : index
    %50 = vector.load %arg5[%c7, %c0_36, %c0_37, %c0_38] : memref<27x1x1x32xf32, #tpu.memory_space<vmem>>, vector<1x1x1x32xf32>
    %51 = vector.shape_cast %50 : vector<1x1x1x32xf32> to vector<1x1x32xf32>
    %52 = vector.broadcast %51 : vector<1x1x32xf32> to vector<4x4x32xf32>
    %53 = arith.mulf %49, %52 : vector<4x4x32xf32>
    %54 = arith.addf %48, %53 : vector<4x4x32xf32>
    %55 = vector.extract_strided_slice %1 {offsets = [2, 2, 0], sizes = [4, 4, 32], strides = [1, 1, 1]} : vector<6x6x32xf32> to vector<4x4x32xf32>
    %c8 = arith.constant 8 : index
    %c0_39 = arith.constant 0 : index
    %c0_40 = arith.constant 0 : index
    %c0_41 = arith.constant 0 : index
    %56 = vector.load %arg5[%c8, %c0_39, %c0_40, %c0_41] : memref<27x1x1x32xf32, #tpu.memory_space<vmem>>, vector<1x1x1x32xf32>
    %57 = vector.shape_cast %56 : vector<1x1x1x32xf32> to vector<1x1x32xf32>
    %58 = vector.broadcast %57 : vector<1x1x32xf32> to vector<4x4x32xf32>
    %59 = arith.mulf %55, %58 : vector<4x4x32xf32>
    %60 = arith.addf %54, %59 : vector<4x4x32xf32>
    %61 = vector.extract_strided_slice %3 {offsets = [0, 0, 0], sizes = [4, 4, 32], strides = [1, 1, 1]} : vector<6x6x32xf32> to vector<4x4x32xf32>
    %c9 = arith.constant 9 : index
    %c0_42 = arith.constant 0 : index
    %c0_43 = arith.constant 0 : index
    %c0_44 = arith.constant 0 : index
    %62 = vector.load %arg5[%c9, %c0_42, %c0_43, %c0_44] : memref<27x1x1x32xf32, #tpu.memory_space<vmem>>, vector<1x1x1x32xf32>
    %63 = vector.shape_cast %62 : vector<1x1x1x32xf32> to vector<1x1x32xf32>
    %64 = vector.broadcast %63 : vector<1x1x32xf32> to vector<4x4x32xf32>
    %65 = arith.mulf %61, %64 : vector<4x4x32xf32>
    %66 = arith.addf %60, %65 : vector<4x4x32xf32>
    %67 = vector.extract_strided_slice %3 {offsets = [0, 1, 0], sizes = [4, 4, 32], strides = [1, 1, 1]} : vector<6x6x32xf32> to vector<4x4x32xf32>
    %c10 = arith.constant 10 : index
    %c0_45 = arith.constant 0 : index
    %c0_46 = arith.constant 0 : index
    %c0_47 = arith.constant 0 : index
    %68 = vector.load %arg5[%c10, %c0_45, %c0_46, %c0_47] : memref<27x1x1x32xf32, #tpu.memory_space<vmem>>, vector<1x1x1x32xf32>
    %69 = vector.shape_cast %68 : vector<1x1x1x32xf32> to vector<1x1x32xf32>
    %70 = vector.broadcast %69 : vector<1x1x32xf32> to vector<4x4x32xf32>
    %71 = arith.mulf %67, %70 : vector<4x4x32xf32>
    %72 = arith.addf %66, %71 : vector<4x4x32xf32>
    %73 = vector.extract_strided_slice %3 {offsets = [0, 2, 0], sizes = [4, 4, 32], strides = [1, 1, 1]} : vector<6x6x32xf32> to vector<4x4x32xf32>
    %c11 = arith.constant 11 : index
    %c0_48 = arith.constant 0 : index
    %c0_49 = arith.constant 0 : index
    %c0_50 = arith.constant 0 : index
    %74 = vector.load %arg5[%c11, %c0_48, %c0_49, %c0_50] : memref<27x1x1x32xf32, #tpu.memory_space<vmem>>, vector<1x1x1x32xf32>
    %75 = vector.shape_cast %74 : vector<1x1x1x32xf32> to vector<1x1x32xf32>
    %76 = vector.broadcast %75 : vector<1x1x32xf32> to vector<4x4x32xf32>
    %77 = arith.mulf %73, %76 : vector<4x4x32xf32>
    %78 = arith.addf %72, %77 : vector<4x4x32xf32>
    %79 = vector.extract_strided_slice %3 {offsets = [1, 0, 0], sizes = [4, 4, 32], strides = [1, 1, 1]} : vector<6x6x32xf32> to vector<4x4x32xf32>
    %c12 = arith.constant 12 : index
    %c0_51 = arith.constant 0 : index
    %c0_52 = arith.constant 0 : index
    %c0_53 = arith.constant 0 : index
    %80 = vector.load %arg5[%c12, %c0_51, %c0_52, %c0_53] : memref<27x1x1x32xf32, #tpu.memory_space<vmem>>, vector<1x1x1x32xf32>
    %81 = vector.shape_cast %80 : vector<1x1x1x32xf32> to vector<1x1x32xf32>
    %82 = vector.broadcast %81 : vector<1x1x32xf32> to vector<4x4x32xf32>
    %83 = arith.mulf %79, %82 : vector<4x4x32xf32>
    %84 = arith.addf %78, %83 : vector<4x4x32xf32>
    %85 = vector.extract_strided_slice %3 {offsets = [1, 1, 0], sizes = [4, 4, 32], strides = [1, 1, 1]} : vector<6x6x32xf32> to vector<4x4x32xf32>
    %c13 = arith.constant 13 : index
    %c0_54 = arith.constant 0 : index
    %c0_55 = arith.constant 0 : index
    %c0_56 = arith.constant 0 : index
    %86 = vector.load %arg5[%c13, %c0_54, %c0_55, %c0_56] : memref<27x1x1x32xf32, #tpu.memory_space<vmem>>, vector<1x1x1x32xf32>
    %87 = vector.shape_cast %86 : vector<1x1x1x32xf32> to vector<1x1x32xf32>
    %88 = vector.broadcast %87 : vector<1x1x32xf32> to vector<4x4x32xf32>
    %89 = arith.mulf %85, %88 : vector<4x4x32xf32>
    %90 = arith.addf %84, %89 : vector<4x4x32xf32>
    %91 = vector.extract_strided_slice %3 {offsets = [1, 2, 0], sizes = [4, 4, 32], strides = [1, 1, 1]} : vector<6x6x32xf32> to vector<4x4x32xf32>
    %c14 = arith.constant 14 : index
    %c0_57 = arith.constant 0 : index
    %c0_58 = arith.constant 0 : index
    %c0_59 = arith.constant 0 : index
    %92 = vector.load %arg5[%c14, %c0_57, %c0_58, %c0_59] : memref<27x1x1x32xf32, #tpu.memory_space<vmem>>, vector<1x1x1x32xf32>
    %93 = vector.shape_cast %92 : vector<1x1x1x32xf32> to vector<1x1x32xf32>
    %94 = vector.broadcast %93 : vector<1x1x32xf32> to vector<4x4x32xf32>
    %95 = arith.mulf %91, %94 : vector<4x4x32xf32>
    %96 = arith.addf %90, %95 : vector<4x4x32xf32>
    %97 = vector.extract_strided_slice %3 {offsets = [2, 0, 0], sizes = [4, 4, 32], strides = [1, 1, 1]} : vector<6x6x32xf32> to vector<4x4x32xf32>
    %c15 = arith.constant 15 : index
    %c0_60 = arith.constant 0 : index
    %c0_61 = arith.constant 0 : index
    %c0_62 = arith.constant 0 : index
    %98 = vector.load %arg5[%c15, %c0_60, %c0_61, %c0_62] : memref<27x1x1x32xf32, #tpu.memory_space<vmem>>, vector<1x1x1x32xf32>
    %99 = vector.shape_cast %98 : vector<1x1x1x32xf32> to vector<1x1x32xf32>
    %100 = vector.broadcast %99 : vector<1x1x32xf32> to vector<4x4x32xf32>
    %101 = arith.mulf %97, %100 : vector<4x4x32xf32>
    %102 = arith.addf %96, %101 : vector<4x4x32xf32>
    %103 = vector.extract_strided_slice %3 {offsets = [2, 1, 0], sizes = [4, 4, 32], strides = [1, 1, 1]} : vector<6x6x32xf32> to vector<4x4x32xf32>
    %c16 = arith.constant 16 : index
    %c0_63 = arith.constant 0 : index
    %c0_64 = arith.constant 0 : index
    %c0_65 = arith.constant 0 : index
    %104 = vector.load %arg5[%c16, %c0_63, %c0_64, %c0_65] : memref<27x1x1x32xf32, #tpu.memory_space<vmem>>, vector<1x1x1x32xf32>
    %105 = vector.shape_cast %104 : vector<1x1x1x32xf32> to vector<1x1x32xf32>
    %106 = vector.broadcast %105 : vector<1x1x32xf32> to vector<4x4x32xf32>
    %107 = arith.mulf %103, %106 : vector<4x4x32xf32>
    %108 = arith.addf %102, %107 : vector<4x4x32xf32>
    %109 = vector.extract_strided_slice %3 {offsets = [2, 2, 0], sizes = [4, 4, 32], strides = [1, 1, 1]} : vector<6x6x32xf32> to vector<4x4x32xf32>
    %c17 = arith.constant 17 : index
    %c0_66 = arith.constant 0 : index
    %c0_67 = arith.constant 0 : index
    %c0_68 = arith.constant 0 : index
    %110 = vector.load %arg5[%c17, %c0_66, %c0_67, %c0_68] : memref<27x1x1x32xf32, #tpu.memory_space<vmem>>, vector<1x1x1x32xf32>
    %111 = vector.shape_cast %110 : vector<1x1x1x32xf32> to vector<1x1x32xf32>
    %112 = vector.broadcast %111 : vector<1x1x32xf32> to vector<4x4x32xf32>
    %113 = arith.mulf %109, %112 : vector<4x4x32xf32>
    %114 = arith.addf %108, %113 : vector<4x4x32xf32>
    %115 = vector.extract_strided_slice %5 {offsets = [0, 0, 0], sizes = [4, 4, 32], strides = [1, 1, 1]} : vector<6x6x32xf32> to vector<4x4x32xf32>
    %c18 = arith.constant 18 : index
    %c0_69 = arith.constant 0 : index
    %c0_70 = arith.constant 0 : index
    %c0_71 = arith.constant 0 : index
    %116 = vector.load %arg5[%c18, %c0_69, %c0_70, %c0_71] : memref<27x1x1x32xf32, #tpu.memory_space<vmem>>, vector<1x1x1x32xf32>
    %117 = vector.shape_cast %116 : vector<1x1x1x32xf32> to vector<1x1x32xf32>
    %118 = vector.broadcast %117 : vector<1x1x32xf32> to vector<4x4x32xf32>
    %119 = arith.mulf %115, %118 : vector<4x4x32xf32>
    %120 = arith.addf %114, %119 : vector<4x4x32xf32>
    %121 = vector.extract_strided_slice %5 {offsets = [0, 1, 0], sizes = [4, 4, 32], strides = [1, 1, 1]} : vector<6x6x32xf32> to vector<4x4x32xf32>
    %c19 = arith.constant 19 : index
    %c0_72 = arith.constant 0 : index
    %c0_73 = arith.constant 0 : index
    %c0_74 = arith.constant 0 : index
    %122 = vector.load %arg5[%c19, %c0_72, %c0_73, %c0_74] : memref<27x1x1x32xf32, #tpu.memory_space<vmem>>, vector<1x1x1x32xf32>
    %123 = vector.shape_cast %122 : vector<1x1x1x32xf32> to vector<1x1x32xf32>
    %124 = vector.broadcast %123 : vector<1x1x32xf32> to vector<4x4x32xf32>
    %125 = arith.mulf %121, %124 : vector<4x4x32xf32>
    %126 = arith.addf %120, %125 : vector<4x4x32xf32>
    %127 = vector.extract_strided_slice %5 {offsets = [0, 2, 0], sizes = [4, 4, 32], strides = [1, 1, 1]} : vector<6x6x32xf32> to vector<4x4x32xf32>
    %c20 = arith.constant 20 : index
    %c0_75 = arith.constant 0 : index
    %c0_76 = arith.constant 0 : index
    %c0_77 = arith.constant 0 : index
    %128 = vector.load %arg5[%c20, %c0_75, %c0_76, %c0_77] : memref<27x1x1x32xf32, #tpu.memory_space<vmem>>, vector<1x1x1x32xf32>
    %129 = vector.shape_cast %128 : vector<1x1x1x32xf32> to vector<1x1x32xf32>
    %130 = vector.broadcast %129 : vector<1x1x32xf32> to vector<4x4x32xf32>
    %131 = arith.mulf %127, %130 : vector<4x4x32xf32>
    %132 = arith.addf %126, %131 : vector<4x4x32xf32>
    %133 = vector.extract_strided_slice %5 {offsets = [1, 0, 0], sizes = [4, 4, 32], strides = [1, 1, 1]} : vector<6x6x32xf32> to vector<4x4x32xf32>
    %c21 = arith.constant 21 : index
    %c0_78 = arith.constant 0 : index
    %c0_79 = arith.constant 0 : index
    %c0_80 = arith.constant 0 : index
    %134 = vector.load %arg5[%c21, %c0_78, %c0_79, %c0_80] : memref<27x1x1x32xf32, #tpu.memory_space<vmem>>, vector<1x1x1x32xf32>
    %135 = vector.shape_cast %134 : vector<1x1x1x32xf32> to vector<1x1x32xf32>
    %136 = vector.broadcast %135 : vector<1x1x32xf32> to vector<4x4x32xf32>
    %137 = arith.mulf %133, %136 : vector<4x4x32xf32>
    %138 = arith.addf %132, %137 : vector<4x4x32xf32>
    %139 = vector.extract_strided_slice %5 {offsets = [1, 1, 0], sizes = [4, 4, 32], strides = [1, 1, 1]} : vector<6x6x32xf32> to vector<4x4x32xf32>
    %c22 = arith.constant 22 : index
    %c0_81 = arith.constant 0 : index
    %c0_82 = arith.constant 0 : index
    %c0_83 = arith.constant 0 : index
    %140 = vector.load %arg5[%c22, %c0_81, %c0_82, %c0_83] : memref<27x1x1x32xf32, #tpu.memory_space<vmem>>, vector<1x1x1x32xf32>
    %141 = vector.shape_cast %140 : vector<1x1x1x32xf32> to vector<1x1x32xf32>
    %142 = vector.broadcast %141 : vector<1x1x32xf32> to vector<4x4x32xf32>
    %143 = arith.mulf %139, %142 : vector<4x4x32xf32>
    %144 = arith.addf %138, %143 : vector<4x4x32xf32>
    %145 = vector.extract_strided_slice %5 {offsets = [1, 2, 0], sizes = [4, 4, 32], strides = [1, 1, 1]} : vector<6x6x32xf32> to vector<4x4x32xf32>
    %c23 = arith.constant 23 : index
    %c0_84 = arith.constant 0 : index
    %c0_85 = arith.constant 0 : index
    %c0_86 = arith.constant 0 : index
    %146 = vector.load %arg5[%c23, %c0_84, %c0_85, %c0_86] : memref<27x1x1x32xf32, #tpu.memory_space<vmem>>, vector<1x1x1x32xf32>
    %147 = vector.shape_cast %146 : vector<1x1x1x32xf32> to vector<1x1x32xf32>
    %148 = vector.broadcast %147 : vector<1x1x32xf32> to vector<4x4x32xf32>
    %149 = arith.mulf %145, %148 : vector<4x4x32xf32>
    %150 = arith.addf %144, %149 : vector<4x4x32xf32>
    %151 = vector.extract_strided_slice %5 {offsets = [2, 0, 0], sizes = [4, 4, 32], strides = [1, 1, 1]} : vector<6x6x32xf32> to vector<4x4x32xf32>
    %c24 = arith.constant 24 : index
    %c0_87 = arith.constant 0 : index
    %c0_88 = arith.constant 0 : index
    %c0_89 = arith.constant 0 : index
    %152 = vector.load %arg5[%c24, %c0_87, %c0_88, %c0_89] : memref<27x1x1x32xf32, #tpu.memory_space<vmem>>, vector<1x1x1x32xf32>
    %153 = vector.shape_cast %152 : vector<1x1x1x32xf32> to vector<1x1x32xf32>
    %154 = vector.broadcast %153 : vector<1x1x32xf32> to vector<4x4x32xf32>
    %155 = arith.mulf %151, %154 : vector<4x4x32xf32>
    %156 = arith.addf %150, %155 : vector<4x4x32xf32>
    %157 = vector.extract_strided_slice %5 {offsets = [2, 1, 0], sizes = [4, 4, 32], strides = [1, 1, 1]} : vector<6x6x32xf32> to vector<4x4x32xf32>
    %c25 = arith.constant 25 : index
    %c0_90 = arith.constant 0 : index
    %c0_91 = arith.constant 0 : index
    %c0_92 = arith.constant 0 : index
    %158 = vector.load %arg5[%c25, %c0_90, %c0_91, %c0_92] : memref<27x1x1x32xf32, #tpu.memory_space<vmem>>, vector<1x1x1x32xf32>
    %159 = vector.shape_cast %158 : vector<1x1x1x32xf32> to vector<1x1x32xf32>
    %160 = vector.broadcast %159 : vector<1x1x32xf32> to vector<4x4x32xf32>
    %161 = arith.mulf %157, %160 : vector<4x4x32xf32>
    %162 = arith.addf %156, %161 : vector<4x4x32xf32>
    %163 = vector.extract_strided_slice %5 {offsets = [2, 2, 0], sizes = [4, 4, 32], strides = [1, 1, 1]} : vector<6x6x32xf32> to vector<4x4x32xf32>
    %c26 = arith.constant 26 : index
    %c0_93 = arith.constant 0 : index
    %c0_94 = arith.constant 0 : index
    %c0_95 = arith.constant 0 : index
    %164 = vector.load %arg5[%c26, %c0_93, %c0_94, %c0_95] : memref<27x1x1x32xf32, #tpu.memory_space<vmem>>, vector<1x1x1x32xf32>
    %165 = vector.shape_cast %164 : vector<1x1x1x32xf32> to vector<1x1x32xf32>
    %166 = vector.broadcast %165 : vector<1x1x32xf32> to vector<4x4x32xf32>
    %167 = arith.mulf %163, %166 : vector<4x4x32xf32>
    %168 = arith.addf %162, %167 : vector<4x4x32xf32>
    %c0_96 = arith.constant 0 : index
    %c0_97 = arith.constant 0 : index
    %c0_98 = arith.constant 0 : index
    %169 = vector.load %arg6[%c0_96, %c0_97, %c0_98] : memref<1x1x32xf32, #tpu.memory_space<vmem>>, vector<1x1x32xf32>
    %170 = vector.broadcast %169 : vector<1x1x32xf32> to vector<4x4x32xf32>
    %171 = arith.addf %168, %170 : vector<4x4x32xf32>
    %172 = arith.negf %171 : vector<4x4x32xf32>
    %173 = math.exp %172 : vector<4x4x32xf32>
    %cst_99 = arith.constant 1.000000e+00 : f32
    %174 = vector.broadcast %cst_99 : f32 to vector<4x4x32xf32>
    %175 = arith.addf %174, %173 : vector<4x4x32xf32>
    %176 = arith.divf %174, %175 : vector<4x4x32xf32>
    %177 = arith.mulf %171, %176 : vector<4x4x32xf32>
    %c0_100 = arith.constant 0 : index
    %c0_101 = arith.constant 0 : index
    %c0_102 = arith.constant 0 : index
    %c0_103 = arith.constant 0 : index
    %c0_104 = arith.constant 0 : index
    %178 = vector.load %arg7[%c0_100, %c0_101, %c0_102, %c0_103, %c0_104] : memref<1x1x4x4x32xf32, #tpu.memory_space<vmem>>, vector<1x1x4x4x32xf32>
    %179 = vector.shape_cast %178 : vector<1x1x4x4x32xf32> to vector<4x4x32xf32>
    %180 = vector.shape_cast %177 : vector<4x4x32xf32> to vector<1x1x4x4x32xf32>
    tpu.vector_store %arg7[%c0_100, %c0_101, %c0_102, %c0_103, %c0_104], %180 {strides = array<i32>} : memref<1x1x4x4x32xf32, #tpu.memory_space<vmem>>, vector<1x1x4x4x32xf32>,
    return
  }
  func.func @transform_0(%arg0: i32, %arg1: i32) -> (i32, i32, i32, i32, i32) {
    %c0_i32 = arith.constant 0 : i32
    %c0_i32_0 = arith.constant 0 : i32
    %c0_i32_1 = arith.constant 0 : i32
    %c0_i32_2 = arith.constant 0 : i32
    return %arg0, %arg1, %c0_i32, %c0_i32_0, %c0_i32_1 : i32, i32, i32, i32, i32
  }
  func.func @transform_1(%arg0: i32, %arg1: i32) -> (i32, i32, i32, i32, i32) {
    %c1_i32 = arith.constant 1 : i32
    %0 = arith.addi %arg1, %c1_i32 : i32
    %c0_i32 = arith.constant 0 : i32
    %c0_i32_0 = arith.constant 0 : i32
    %c0_i32_1 = arith.constant 0 : i32
    %c0_i32_2 = arith.constant 0 : i32
    return %arg0, %0, %c0_i32, %c0_i32_0, %c0_i32_1 : i32, i32, i32, i32, i32
  }
  func.func @transform_2(%arg0: i32, %arg1: i32) -> (i32, i32, i32, i32, i32) {
    %c2_i32 = arith.constant 2 : i32
    %0 = arith.addi %arg1, %c2_i32 : i32
    %c0_i32 = arith.constant 0 : i32
    %c0_i32_0 = arith.constant 0 : i32
    %c0_i32_1 = arith.constant 0 : i32
    %c0_i32_2 = arith.constant 0 : i32
    return %arg0, %0, %c0_i32, %c0_i32_0, %c0_i32_1 : i32, i32, i32, i32, i32
  }
  func.func @transform_3(%arg0: i32, %arg1: i32) -> (i32, i32, i32, i32) {
    %c0_i32 = arith.constant 0 : i32
    %c0_i32_0 = arith.constant 0 : i32
    %c0_i32_1 = arith.constant 0 : i32
    %c0_i32_2 = arith.constant 0 : i32
    %c0_i32_3 = arith.constant 0 : i32
    return %c0_i32, %c0_i32_0, %c0_i32_1, %c0_i32_2 : i32, i32, i32, i32
  }
  func.func @transform_4(%arg0: i32, %arg1: i32) -> (i32, i32, i32) {
    %c0_i32 = arith.constant 0 : i32
    %c0_i32_0 = arith.constant 0 : i32
    %c0_i32_1 = arith.constant 0 : i32
    %c0_i32_2 = arith.constant 0 : i32
    return %c0_i32, %c0_i32_0, %c0_i32_1 : i32, i32, i32
  }
  func.func @transform_5(%arg0: i32, %arg1: i32) -> (i32, i32, i32, i32, i32) {
    %c0_i32 = arith.constant 0 : i32
    %c0_i32_0 = arith.constant 0 : i32
    %c0_i32_1 = arith.constant 0 : i32
    %c0_i32_2 = arith.constant 0 : i32
    return %arg0, %arg1, %c0_i32, %c0_i32_0, %c0_i32_1 : i32, i32, i32, i32, i32
  }
}

module attributes {stable_mosaic.version = 11 : i64} {
  func.func @_gate_outproj_kernel(%arg0: i32, %arg1: memref<128x32xf32, #tpu.memory_space<vmem>>, %arg2: memref<128x32xf32, #tpu.memory_space<vmem>>, %arg3: memref<128x32xf32, #tpu.memory_space<vmem>>, %arg4: memref<128x16xf32, #tpu.memory_space<vmem>>, %arg5: memref<1x32xf32, #tpu.memory_space<vmem>>, %arg6: memref<1x32xf32, #tpu.memory_space<vmem>>, %arg7: memref<32x16xf32, #tpu.memory_space<vmem>>, %arg8: memref<128x16xf32, #tpu.memory_space<vmem>>) attributes {dimension_semantics = [#tpu.dimension_semantics<parallel>], iteration_bounds = array<i64: 1>, scalar_prefetch = 0 : i64, scratch_operands = 0 : i64, tpu.core_type = #tpu.core_type<tc>, window_params = [{transform_indices = @transform_0, window_bounds = array<i64: 128, 32>}, {transform_indices = @transform_1, window_bounds = array<i64: 128, 32>}, {transform_indices = @transform_2, window_bounds = array<i64: 128, 32>}, {transform_indices = @transform_3, window_bounds = array<i64: 128, 16>}, {pipeline_mode = #tpu.pipeline_mode<synchronous>, transform_indices = @transform_4, window_bounds = array<i64: 1, 32>}, {pipeline_mode = #tpu.pipeline_mode<synchronous>, transform_indices = @transform_5, window_bounds = array<i64: 1, 32>}, {pipeline_mode = #tpu.pipeline_mode<synchronous>, transform_indices = @transform_6, window_bounds = array<i64: 32, 16>}, {transform_indices = @transform_7, window_bounds = array<i64: 128, 16>}]} {
    %c0 = arith.constant 0 : index
    %c0_0 = arith.constant 0 : index
    %0 = vector.load %arg1[%c0, %c0_0] : memref<128x32xf32, #tpu.memory_space<vmem>>, vector<128x32xf32>
    %c0_1 = arith.constant 0 : index
    %c0_2 = arith.constant 0 : index
    %1 = vector.load %arg2[%c0_1, %c0_2] : memref<128x32xf32, #tpu.memory_space<vmem>>, vector<128x32xf32>
    %2 = arith.addf %0, %1 : vector<128x32xf32>
    %cst = arith.constant dense<0.000000e+00> : vector<128xf32>
    %3 = vector.multi_reduction <add>, %2, %cst [1] : vector<128x32xf32> to vector<128xf32>
    %4 = vector.shape_cast %3 : vector<128xf32> to vector<128x1xf32>
    %cst_3 = arith.constant 3.200000e+01 : f32
    %5 = vector.broadcast %cst_3 : f32 to vector<128x1xf32>
    %6 = arith.divf %4, %5 : vector<128x1xf32>
    %7 = vector.broadcast %6 : vector<128x1xf32> to vector<128x32xf32>
    %8 = arith.subf %2, %7 : vector<128x32xf32>
    %9 = arith.mulf %8, %8 : vector<128x32xf32>
    %cst_4 = arith.constant dense<0.000000e+00> : vector<128xf32>
    %10 = vector.multi_reduction <add>, %9, %cst_4 [1] : vector<128x32xf32> to vector<128xf32>
    %11 = vector.shape_cast %10 : vector<128xf32> to vector<128x1xf32>
    %cst_5 = arith.constant 3.200000e+01 : f32
    %12 = vector.broadcast %cst_5 : f32 to vector<128x1xf32>
    %13 = arith.divf %11, %12 : vector<128x1xf32>
    %14 = vector.broadcast %6 : vector<128x1xf32> to vector<128x32xf32>
    %15 = arith.subf %2, %14 : vector<128x32xf32>
    %cst_6 = arith.constant 9.99999974E-6 : f32
    %16 = vector.broadcast %cst_6 : f32 to vector<128x1xf32>
    %17 = arith.addf %13, %16 : vector<128x1xf32>
    %18 = math.rsqrt %17 : vector<128x1xf32>
    %19 = vector.broadcast %18 : vector<128x1xf32> to vector<128x32xf32>
    %20 = arith.mulf %15, %19 : vector<128x32xf32>
    %c0_7 = arith.constant 0 : index
    %c0_8 = arith.constant 0 : index
    %21 = vector.load %arg5[%c0_7, %c0_8] : memref<1x32xf32, #tpu.memory_space<vmem>>, vector<1x32xf32>
    %22 = vector.broadcast %21 : vector<1x32xf32> to vector<128x32xf32>
    %23 = arith.mulf %20, %22 : vector<128x32xf32>
    %c0_9 = arith.constant 0 : index
    %c0_10 = arith.constant 0 : index
    %24 = vector.load %arg6[%c0_9, %c0_10] : memref<1x32xf32, #tpu.memory_space<vmem>>, vector<1x32xf32>
    %25 = vector.broadcast %24 : vector<1x32xf32> to vector<128x32xf32>
    %26 = arith.addf %23, %25 : vector<128x32xf32>
    %c0_11 = arith.constant 0 : index
    %c0_12 = arith.constant 0 : index
    %27 = vector.load %arg3[%c0_11, %c0_12] : memref<128x32xf32, #tpu.memory_space<vmem>>, vector<128x32xf32>
    %28 = arith.negf %27 : vector<128x32xf32>
    %29 = math.exp %28 : vector<128x32xf32>
    %cst_13 = arith.constant 1.000000e+00 : f32
    %30 = vector.broadcast %cst_13 : f32 to vector<128x32xf32>
    %31 = arith.addf %30, %29 : vector<128x32xf32>
    %32 = arith.divf %30, %31 : vector<128x32xf32>
    %33 = arith.mulf %27, %32 : vector<128x32xf32>
    %34 = arith.mulf %26, %33 : vector<128x32xf32>
    %c0_14 = arith.constant 0 : index
    %c0_15 = arith.constant 0 : index
    %35 = vector.load %arg4[%c0_14, %c0_15] : memref<128x16xf32, #tpu.memory_space<vmem>>, vector<128x16xf32>
    %c0_16 = arith.constant 0 : index
    %c0_17 = arith.constant 0 : index
    %36 = vector.load %arg7[%c0_16, %c0_17] : memref<32x16xf32, #tpu.memory_space<vmem>>, vector<32x16xf32>
    %cst_18 = arith.constant dense<0.000000e+00> : vector<128x16xf32>
    %37 = tpu.matmul %34, %36, %cst_18 {dimension_numbers = #tpu.dot_dimension_numbers<[1], [0], [0], [1], [0, 0, 1, 1], [], []>} : vector<128x32xf32>, vector<32x16xf32>, vector<128x16xf32> -> vector<128x16xf32>
    %38 = arith.addf %35, %37 : vector<128x16xf32>
    %c0_19 = arith.constant 0 : index
    %c0_20 = arith.constant 0 : index
    %39 = vector.load %arg8[%c0_19, %c0_20] : memref<128x16xf32, #tpu.memory_space<vmem>>, vector<128x16xf32>
    tpu.vector_store %arg8[%c0_19, %c0_20], %38 {strides = array<i32>} : memref<128x16xf32, #tpu.memory_space<vmem>>, vector<128x16xf32>,
    return
  }
  func.func @transform_0(%arg0: i32) -> (i32, i32) {
    %c0_i32 = arith.constant 0 : i32
    %c0_i32_0 = arith.constant 0 : i32
    return %arg0, %c0_i32 : i32, i32
  }
  func.func @transform_1(%arg0: i32) -> (i32, i32) {
    %c0_i32 = arith.constant 0 : i32
    %c0_i32_0 = arith.constant 0 : i32
    return %arg0, %c0_i32 : i32, i32
  }
  func.func @transform_2(%arg0: i32) -> (i32, i32) {
    %c0_i32 = arith.constant 0 : i32
    %c0_i32_0 = arith.constant 0 : i32
    return %arg0, %c0_i32 : i32, i32
  }
  func.func @transform_3(%arg0: i32) -> (i32, i32) {
    %c0_i32 = arith.constant 0 : i32
    %c0_i32_0 = arith.constant 0 : i32
    return %arg0, %c0_i32 : i32, i32
  }
  func.func @transform_4(%arg0: i32) -> (i32, i32) {
    %c0_i32 = arith.constant 0 : i32
    %c0_i32_0 = arith.constant 0 : i32
    %c0_i32_1 = arith.constant 0 : i32
    return %c0_i32, %c0_i32_0 : i32, i32
  }
  func.func @transform_5(%arg0: i32) -> (i32, i32) {
    %c0_i32 = arith.constant 0 : i32
    %c0_i32_0 = arith.constant 0 : i32
    %c0_i32_1 = arith.constant 0 : i32
    return %c0_i32, %c0_i32_0 : i32, i32
  }
  func.func @transform_6(%arg0: i32) -> (i32, i32) {
    %c0_i32 = arith.constant 0 : i32
    %c0_i32_0 = arith.constant 0 : i32
    %c0_i32_1 = arith.constant 0 : i32
    return %c0_i32, %c0_i32_0 : i32, i32
  }
  func.func @transform_7(%arg0: i32) -> (i32, i32) {
    %c0_i32 = arith.constant 0 : i32
    %c0_i32_0 = arith.constant 0 : i32
    return %arg0, %c0_i32 : i32, i32
  }
}

module attributes {stable_mosaic.version = 11 : i64} {
  func.func @_ss_scan_kernel(%arg0: i32, %arg1: i32, %arg2: memref<1x64x32xf32, #tpu.memory_space<vmem>>, %arg3: memref<1x64x32xf32, #tpu.memory_space<vmem>>, %arg4: memref<1x32x128xf32, #tpu.memory_space<vmem>>, %arg5: memref<2x1x16x32xf32, #tpu.memory_space<vmem>>, %arg6: memref<2x1x1x32xf32, #tpu.memory_space<vmem>>, %arg7: memref<2x1x1x32xf32, #tpu.memory_space<vmem>>, %arg8: memref<1x1x64x32xf32, #tpu.memory_space<vmem>>, %arg9: memref<64x128xf32, #tpu.memory_space<vmem>>) attributes {dimension_semantics = [#tpu.dimension_semantics<parallel>, #tpu.dimension_semantics<parallel>], iteration_bounds = array<i64: 2, 2>, scalar_prefetch = 0 : i64, scratch_operands = 1 : i64, tpu.core_type = #tpu.core_type<tc>, window_params = [{transform_indices = @transform_0, window_bounds = array<i64: 1, 64, 32>}, {transform_indices = @transform_1, window_bounds = array<i64: 1, 64, 32>}, {transform_indices = @transform_2, window_bounds = array<i64: 1, 32, 128>}, {transform_indices = @transform_3, window_bounds = array<i64: 2, 1, 16, 32>}, {transform_indices = @transform_4, window_bounds = array<i64: 2, 1, 1, 32>}, {transform_indices = @transform_5, window_bounds = array<i64: 2, 1, 1, 32>}, {transform_indices = @transform_6, window_bounds = array<i64: 1, 1, 64, 32>}]} {
    %c0_i32 = arith.constant 0 : i32
    %0 = arith.cmpi eq, %arg1, %c0_i32 : i32
    %c0 = arith.constant 0 : index
    %c0_0 = arith.constant 0 : index
    %c0_1 = arith.constant 0 : index
    %1 = vector.load %arg2[%c0, %c0_0, %c0_1] : memref<1x64x32xf32, #tpu.memory_space<vmem>>, vector<1x64x32xf32>
    %2 = vector.shape_cast %1 : vector<1x64x32xf32> to vector<64x32xf32>
    %c0_2 = arith.constant 0 : index
    %c0_3 = arith.constant 0 : index
    %c0_4 = arith.constant 0 : index
    %3 = vector.load %arg3[%c0_2, %c0_3, %c0_4] : memref<1x64x32xf32, #tpu.memory_space<vmem>>, vector<1x64x32xf32>
    %4 = vector.shape_cast %3 : vector<1x64x32xf32> to vector<64x32xf32>
    %5 = arith.select %0, %2, %4 : vector<64x32xf32>
    %c0_5 = arith.constant 0 : index
    %c0_6 = arith.constant 0 : index
    %c0_7 = arith.constant 0 : index
    %6 = vector.load %arg4[%c0_5, %c0_6, %c0_7] : memref<1x32x128xf32, #tpu.memory_space<vmem>>, vector<1x32x128xf32>
    %7 = vector.shape_cast %6 : vector<1x32x128xf32> to vector<32x128xf32>
    %cst = arith.constant dense<0.000000e+00> : vector<64x128xf32>
    %8 = tpu.matmul %5, %7, %cst {dimension_numbers = #tpu.dot_dimension_numbers<[1], [0], [0], [1], [0, 0, 1, 1], [], []>} : vector<64x32xf32>, vector<32x128xf32>, vector<64x128xf32> -> vector<64x128xf32>
    %c0_8 = arith.constant 0 : index
    %c0_9 = arith.constant 0 : index
    %9 = vector.load %arg9[%c0_8, %c0_9] : memref<64x128xf32, #tpu.memory_space<vmem>>, vector<64x128xf32>
    tpu.vector_store %arg9[%c0_8, %c0_9], %8 {strides = array<i32>} : memref<64x128xf32, #tpu.memory_space<vmem>>, vector<64x128xf32>,
    %c0_10 = arith.constant 0 : index
    %c0_11 = arith.constant 0 : index
    %c0_12 = arith.constant 0 : index
    %c0_13 = arith.constant 0 : index
    %10 = vector.load %arg6[%c0_10, %c0_11, %c0_12, %c0_13] : memref<2x1x1x32xf32, #tpu.memory_space<vmem>>, vector<1x1x1x32xf32>
    %11 = vector.shape_cast %10 : vector<1x1x1x32xf32> to vector<1x32xf32>
    %c1 = arith.constant 1 : index
    %c0_14 = arith.constant 0 : index
    %c0_15 = arith.constant 0 : index
    %c0_16 = arith.constant 0 : index
    %12 = vector.load %arg6[%c1, %c0_14, %c0_15, %c0_16] : memref<2x1x1x32xf32, #tpu.memory_space<vmem>>, vector<1x1x1x32xf32>
    %13 = vector.shape_cast %12 : vector<1x1x1x32xf32> to vector<1x32xf32>
    %14 = arith.addf %11, %13 : vector<1x32xf32>
    %15 = vector.broadcast %14 : vector<1x32xf32> to vector<64x32xf32>
    %16 = arith.mulf %15, %5 : vector<64x32xf32>
    %c0_17 = arith.constant 0 : index
    %c0_18 = arith.constant 0 : index
    %c0_19 = arith.constant 0 : index
    %c0_20 = arith.constant 0 : index
    %17 = vector.load %arg8[%c0_17, %c0_18, %c0_19, %c0_20] : memref<1x1x64x32xf32, #tpu.memory_space<vmem>>, vector<1x1x64x32xf32>
    %18 = vector.shape_cast %17 : vector<1x1x64x32xf32> to vector<64x32xf32>
    %19 = vector.shape_cast %16 : vector<64x32xf32> to vector<1x1x64x32xf32>
    tpu.vector_store %arg8[%c0_17, %c0_18, %c0_19, %c0_20], %19 {strides = array<i32>} : memref<1x1x64x32xf32, #tpu.memory_space<vmem>>, vector<1x1x64x32xf32>,
    %c0_21 = arith.constant 0 : index
    %c0_22 = arith.constant 0 : index
    %c0_23 = arith.constant 0 : index
    %c0_24 = arith.constant 0 : index
    %20 = vector.load %arg5[%c0_21, %c0_22, %c0_23, %c0_24] : memref<2x1x16x32xf32, #tpu.memory_space<vmem>>, vector<1x1x16x32xf32>
    %21 = vector.shape_cast %20 : vector<1x1x16x32xf32> to vector<16x32xf32>
    %c1_25 = arith.constant 1 : index
    %c0_26 = arith.constant 0 : index
    %c0_27 = arith.constant 0 : index
    %c0_28 = arith.constant 0 : index
    %22 = vector.load %arg5[%c1_25, %c0_26, %c0_27, %c0_28] : memref<2x1x16x32xf32, #tpu.memory_space<vmem>>, vector<1x1x16x32xf32>
    %23 = vector.shape_cast %22 : vector<1x1x16x32xf32> to vector<16x32xf32>
    %c0_29 = arith.constant 0 : index
    %c0_30 = arith.constant 0 : index
    %c0_31 = arith.constant 0 : index
    %c0_32 = arith.constant 0 : index
    %24 = vector.load %arg7[%c0_29, %c0_30, %c0_31, %c0_32] : memref<2x1x1x32xf32, #tpu.memory_space<vmem>>, vector<1x1x1x32xf32>
    %25 = vector.shape_cast %24 : vector<1x1x1x32xf32> to vector<1x32xf32>
    %c1_33 = arith.constant 1 : index
    %c0_34 = arith.constant 0 : index
    %c0_35 = arith.constant 0 : index
    %c0_36 = arith.constant 0 : index
    %26 = vector.load %arg7[%c1_33, %c0_34, %c0_35, %c0_36] : memref<2x1x1x32xf32, #tpu.memory_space<vmem>>, vector<1x1x1x32xf32>
    %27 = vector.shape_cast %26 : vector<1x1x1x32xf32> to vector<1x32xf32>
    %cst_37 = arith.constant 0.000000e+00 : f32
    %28 = vector.broadcast %cst_37 : f32 to vector<16x32xf32>
    %c0_i32_38 = arith.constant 0 : i32
    %c8_i32 = arith.constant 8 : i32
    %29 = arith.addi %c0_i32_38, %c8_i32 : i32
    %c1_i32 = arith.constant 1 : i32
    %30:2 = scf.for %arg10 = %c0_i32_38 to %29 step %c1_i32 iter_args(%arg11 = %28, %arg12 = %28) -> (vector<16x32xf32>, vector<16x32xf32>)  : i32 {
      %c8_i32_40 = arith.constant 8 : i32
      %31 = arith.muli %arg10, %c8_i32_40 : i32
      %32 = tpu.assume_multiple %31, 8 : i32
      %c0_41 = arith.constant 0 : index
      %33 = arith.index_cast %32 : i32 to index
      %c0_42 = arith.constant 0 : index
      %34 = vector.load %arg2[%c0_41, %33, %c0_42] : memref<1x64x32xf32, #tpu.memory_space<vmem>>, vector<1x8x32xf32>
      %35 = vector.shape_cast %34 : vector<1x8x32xf32> to vector<8x32xf32>
      %c0_43 = arith.constant 0 : index
      %36 = arith.index_cast %32 : i32 to index
      %c0_44 = arith.constant 0 : index
      %37 = vector.load %arg3[%c0_43, %36, %c0_44] : memref<1x64x32xf32, #tpu.memory_space<vmem>>, vector<1x8x32xf32>
      %38 = vector.shape_cast %37 : vector<1x8x32xf32> to vector<8x32xf32>
      %39 = arith.select %0, %35, %38 : vector<8x32xf32>
      %40 = arith.index_cast %32 : i32 to index
      %c0_45 = arith.constant 0 : index
      %41 = vector.load %arg9[%40, %c0_45] : memref<64x128xf32, #tpu.memory_space<vmem>>, vector<8x128xf32>
      %42 = vector.extract_strided_slice %41 {offsets = [0, 0], sizes = [8, 32], strides = [1, 1]} : vector<8x128xf32> to vector<8x32xf32>
      %43 = vector.broadcast %25 : vector<1x32xf32> to vector<8x32xf32>
      %44 = arith.addf %42, %43 : vector<8x32xf32>
      %cst_46 = arith.constant 2.000000e+01 : f32
      %45 = vector.broadcast %cst_46 : f32 to vector<8x32xf32>
      %46 = arith.cmpf ogt, %44, %45 : vector<8x32xf32>
      %cst_47 = arith.constant 2.000000e+01 : f32
      %47 = vector.broadcast %cst_47 : f32 to vector<8x32xf32>
      %48 = arith.minimumf %44, %47 : vector<8x32xf32>
      %49 = math.exp %48 : vector<8x32xf32>
      %50 = math.log1p %49 : vector<8x32xf32>
      %51 = arith.select %46, %44, %50 : vector<8x32xi1>, vector<8x32xf32>
      %52 = vector.extract_strided_slice %41 {offsets = [0, 32], sizes = [8, 16], strides = [1, 1]} : vector<8x128xf32> to vector<8x16xf32>
      %53 = vector.extract_strided_slice %41 {offsets = [0, 48], sizes = [8, 16], strides = [1, 1]} : vector<8x128xf32> to vector<8x16xf32>
      %54 = vector.shape_cast %51 : vector<8x32xf32> to vector<8x1x32xf32>
      %55 = vector.shape_cast %21 : vector<16x32xf32> to vector<1x16x32xf32>
      %56 = vector.broadcast %54 : vector<8x1x32xf32> to vector<8x16x32xf32>
      %57 = vector.broadcast %55 : vector<1x16x32xf32> to vector<8x16x32xf32>
      %58 = arith.mulf %56, %57 : vector<8x16x32xf32>
      %59 = math.exp %58 : vector<8x16x32xf32>
      %60 = vector.shape_cast %52 : vector<8x16xf32> to vector<8x16x1xf32>
      %61 = arith.mulf %51, %39 : vector<8x32xf32>
      %62 = vector.shape_cast %61 : vector<8x32xf32> to vector<8x1x32xf32>
      %63 = vector.broadcast %60 : vector<8x16x1xf32> to vector<8x16x32xf32>
      %64 = vector.broadcast %62 : vector<8x1x32xf32> to vector<8x16x32xf32>
      %65 = arith.mulf %63, %64 : vector<8x16x32xf32>
      %66 = vector.extract_strided_slice %59 {offsets = [0, 0, 0], sizes = [1, 16, 32], strides = [1, 1, 1]} : vector<8x16x32xf32> to vector<1x16x32xf32>
      %67 = vector.shape_cast %66 : vector<1x16x32xf32> to vector<16x32xf32>
      %68 = arith.mulf %67, %arg11 : vector<16x32xf32>
      %69 = vector.extract_strided_slice %65 {offsets = [0, 0, 0], sizes = [1, 16, 32], strides = [1, 1, 1]} : vector<8x16x32xf32> to vector<1x16x32xf32>
      %70 = vector.shape_cast %69 : vector<1x16x32xf32> to vector<16x32xf32>
      %71 = arith.addf %68, %70 : vector<16x32xf32>
      %72 = vector.extract_strided_slice %59 {offsets = [1, 0, 0], sizes = [1, 16, 32], strides = [1, 1, 1]} : vector<8x16x32xf32> to vector<1x16x32xf32>
      %73 = vector.shape_cast %72 : vector<1x16x32xf32> to vector<16x32xf32>
      %74 = arith.mulf %73, %71 : vector<16x32xf32>
      %75 = vector.extract_strided_slice %65 {offsets = [1, 0, 0], sizes = [1, 16, 32], strides = [1, 1, 1]} : vector<8x16x32xf32> to vector<1x16x32xf32>
      %76 = vector.shape_cast %75 : vector<1x16x32xf32> to vector<16x32xf32>
      %77 = arith.addf %74, %76 : vector<16x32xf32>
      %78 = vector.extract_strided_slice %59 {offsets = [2, 0, 0], sizes = [1, 16, 32], strides = [1, 1, 1]} : vector<8x16x32xf32> to vector<1x16x32xf32>
      %79 = vector.shape_cast %78 : vector<1x16x32xf32> to vector<16x32xf32>
      %80 = arith.mulf %79, %77 : vector<16x32xf32>
      %81 = vector.extract_strided_slice %65 {offsets = [2, 0, 0], sizes = [1, 16, 32], strides = [1, 1, 1]} : vector<8x16x32xf32> to vector<1x16x32xf32>
      %82 = vector.shape_cast %81 : vector<1x16x32xf32> to vector<16x32xf32>
      %83 = arith.addf %80, %82 : vector<16x32xf32>
      %84 = vector.extract_strided_slice %59 {offsets = [3, 0, 0], sizes = [1, 16, 32], strides = [1, 1, 1]} : vector<8x16x32xf32> to vector<1x16x32xf32>
      %85 = vector.shape_cast %84 : vector<1x16x32xf32> to vector<16x32xf32>
      %86 = arith.mulf %85, %83 : vector<16x32xf32>
      %87 = vector.extract_strided_slice %65 {offsets = [3, 0, 0], sizes = [1, 16, 32], strides = [1, 1, 1]} : vector<8x16x32xf32> to vector<1x16x32xf32>
      %88 = vector.shape_cast %87 : vector<1x16x32xf32> to vector<16x32xf32>
      %89 = arith.addf %86, %88 : vector<16x32xf32>
      %90 = vector.extract_strided_slice %59 {offsets = [4, 0, 0], sizes = [1, 16, 32], strides = [1, 1, 1]} : vector<8x16x32xf32> to vector<1x16x32xf32>
      %91 = vector.shape_cast %90 : vector<1x16x32xf32> to vector<16x32xf32>
      %92 = arith.mulf %91, %89 : vector<16x32xf32>
      %93 = vector.extract_strided_slice %65 {offsets = [4, 0, 0], sizes = [1, 16, 32], strides = [1, 1, 1]} : vector<8x16x32xf32> to vector<1x16x32xf32>
      %94 = vector.shape_cast %93 : vector<1x16x32xf32> to vector<16x32xf32>
      %95 = arith.addf %92, %94 : vector<16x32xf32>
      %96 = vector.extract_strided_slice %59 {offsets = [5, 0, 0], sizes = [1, 16, 32], strides = [1, 1, 1]} : vector<8x16x32xf32> to vector<1x16x32xf32>
      %97 = vector.shape_cast %96 : vector<1x16x32xf32> to vector<16x32xf32>
      %98 = arith.mulf %97, %95 : vector<16x32xf32>
      %99 = vector.extract_strided_slice %65 {offsets = [5, 0, 0], sizes = [1, 16, 32], strides = [1, 1, 1]} : vector<8x16x32xf32> to vector<1x16x32xf32>
      %100 = vector.shape_cast %99 : vector<1x16x32xf32> to vector<16x32xf32>
      %101 = arith.addf %98, %100 : vector<16x32xf32>
      %102 = vector.extract_strided_slice %59 {offsets = [6, 0, 0], sizes = [1, 16, 32], strides = [1, 1, 1]} : vector<8x16x32xf32> to vector<1x16x32xf32>
      %103 = vector.shape_cast %102 : vector<1x16x32xf32> to vector<16x32xf32>
      %104 = arith.mulf %103, %101 : vector<16x32xf32>
      %105 = vector.extract_strided_slice %65 {offsets = [6, 0, 0], sizes = [1, 16, 32], strides = [1, 1, 1]} : vector<8x16x32xf32> to vector<1x16x32xf32>
      %106 = vector.shape_cast %105 : vector<1x16x32xf32> to vector<16x32xf32>
      %107 = arith.addf %104, %106 : vector<16x32xf32>
      %108 = vector.extract_strided_slice %59 {offsets = [7, 0, 0], sizes = [1, 16, 32], strides = [1, 1, 1]} : vector<8x16x32xf32> to vector<1x16x32xf32>
      %109 = vector.shape_cast %108 : vector<1x16x32xf32> to vector<16x32xf32>
      %110 = arith.mulf %109, %107 : vector<16x32xf32>
      %111 = vector.extract_strided_slice %65 {offsets = [7, 0, 0], sizes = [1, 16, 32], strides = [1, 1, 1]} : vector<8x16x32xf32> to vector<1x16x32xf32>
      %112 = vector.shape_cast %111 : vector<1x16x32xf32> to vector<16x32xf32>
      %113 = arith.addf %110, %112 : vector<16x32xf32>
      %114 = vector.shape_cast %71 : vector<16x32xf32> to vector<1x16x32xf32>
      %115 = vector.shape_cast %77 : vector<16x32xf32> to vector<1x16x32xf32>
      %116 = vector.shape_cast %83 : vector<16x32xf32> to vector<1x16x32xf32>
      %117 = vector.shape_cast %89 : vector<16x32xf32> to vector<1x16x32xf32>
      %118 = vector.shape_cast %95 : vector<16x32xf32> to vector<1x16x32xf32>
      %119 = vector.shape_cast %101 : vector<16x32xf32> to vector<1x16x32xf32>
      %120 = vector.shape_cast %107 : vector<16x32xf32> to vector<1x16x32xf32>
      %121 = vector.shape_cast %113 : vector<16x32xf32> to vector<1x16x32xf32>
      %122 = tpu.concatenate %114, %115, %116, %117, %118, %119, %120, %121 in 0 : vector<1x16x32xf32>, vector<1x16x32xf32>, vector<1x16x32xf32>, vector<1x16x32xf32>, vector<1x16x32xf32>, vector<1x16x32xf32>, vector<1x16x32xf32>, vector<1x16x32xf32> -> vector<8x16x32xf32>
      %123 = vector.shape_cast %53 : vector<8x16xf32> to vector<8x16x1xf32>
      %124 = vector.broadcast %123 : vector<8x16x1xf32> to vector<8x16x32xf32>
      %125 = arith.mulf %124, %122 : vector<8x16x32xf32>
      %cst_48 = arith.constant dense<0.000000e+00> : vector<8x32xf32>
      %126 = vector.multi_reduction <add>, %125, %cst_48 [1] : vector<8x16x32xf32> to vector<8x32xf32>
      %c0_49 = arith.constant 0 : index
      %c0_50 = arith.constant 0 : index
      %127 = arith.index_cast %32 : i32 to index
      %c0_51 = arith.constant 0 : index
      %128 = vector.load %arg8[%c0_49, %c0_50, %127, %c0_51] : memref<1x1x64x32xf32, #tpu.memory_space<vmem>>, vector<1x1x8x32xf32>
      %129 = vector.shape_cast %128 : vector<1x1x8x32xf32> to vector<8x32xf32>
      %130 = arith.addf %129, %126 : vector<8x32xf32>
      %c0_52 = arith.constant 0 : index
      %c0_53 = arith.constant 0 : index
      %131 = arith.index_cast %32 : i32 to index
      %c0_54 = arith.constant 0 : index
      %132 = vector.load %arg8[%c0_52, %c0_53, %131, %c0_54] : memref<1x1x64x32xf32, #tpu.memory_space<vmem>>, vector<1x1x8x32xf32>
      %133 = vector.shape_cast %132 : vector<1x1x8x32xf32> to vector<8x32xf32>
      %134 = vector.shape_cast %130 : vector<8x32xf32> to vector<1x1x8x32xf32>
      tpu.vector_store %arg8[%c0_52, %c0_53, %131, %c0_54], %134 {strides = array<i32>} : memref<1x1x64x32xf32, #tpu.memory_space<vmem>>, vector<1x1x8x32xf32>,
      %c1_i32_55 = arith.constant 1 : i32
      %135 = arith.addi %arg10, %c1_i32_55 : i32
      %c8_i32_56 = arith.constant 8 : i32
      %136 = arith.muli %135, %c8_i32_56 : i32
      %c64_i32 = arith.constant 64 : i32
      %137 = arith.subi %c64_i32, %136 : i32
      %138 = tpu.assume_multiple %137, 8 : i32
      %c0_57 = arith.constant 0 : index
      %139 = arith.index_cast %138 : i32 to index
      %c0_58 = arith.constant 0 : index
      %140 = vector.load %arg2[%c0_57, %139, %c0_58] : memref<1x64x32xf32, #tpu.memory_space<vmem>>, vector<1x8x32xf32>
      %141 = vector.shape_cast %140 : vector<1x8x32xf32> to vector<8x32xf32>
      %c0_59 = arith.constant 0 : index
      %142 = arith.index_cast %138 : i32 to index
      %c0_60 = arith.constant 0 : index
      %143 = vector.load %arg3[%c0_59, %142, %c0_60] : memref<1x64x32xf32, #tpu.memory_space<vmem>>, vector<1x8x32xf32>
      %144 = vector.shape_cast %143 : vector<1x8x32xf32> to vector<8x32xf32>
      %145 = arith.select %0, %141, %144 : vector<8x32xf32>
      %146 = arith.index_cast %138 : i32 to index
      %c0_61 = arith.constant 0 : index
      %147 = vector.load %arg9[%146, %c0_61] : memref<64x128xf32, #tpu.memory_space<vmem>>, vector<8x128xf32>
      %148 = vector.extract_strided_slice %147 {offsets = [0, 64], sizes = [8, 32], strides = [1, 1]} : vector<8x128xf32> to vector<8x32xf32>
      %149 = vector.broadcast %27 : vector<1x32xf32> to vector<8x32xf32>
      %150 = arith.addf %148, %149 : vector<8x32xf32>
      %cst_62 = arith.constant 2.000000e+01 : f32
      %151 = vector.broadcast %cst_62 : f32 to vector<8x32xf32>
      %152 = arith.cmpf ogt, %150, %151 : vector<8x32xf32>
      %cst_63 = arith.constant 2.000000e+01 : f32
      %153 = vector.broadcast %cst_63 : f32 to vector<8x32xf32>
      %154 = arith.minimumf %150, %153 : vector<8x32xf32>
      %155 = math.exp %154 : vector<8x32xf32>
      %156 = math.log1p %155 : vector<8x32xf32>
      %157 = arith.select %152, %150, %156 : vector<8x32xi1>, vector<8x32xf32>
      %158 = vector.extract_strided_slice %147 {offsets = [0, 96], sizes = [8, 16], strides = [1, 1]} : vector<8x128xf32> to vector<8x16xf32>
      %159 = vector.extract_strided_slice %147 {offsets = [0, 112], sizes = [8, 16], strides = [1, 1]} : vector<8x128xf32> to vector<8x16xf32>
      %160 = vector.shape_cast %157 : vector<8x32xf32> to vector<8x1x32xf32>
      %161 = vector.shape_cast %23 : vector<16x32xf32> to vector<1x16x32xf32>
      %162 = vector.broadcast %160 : vector<8x1x32xf32> to vector<8x16x32xf32>
      %163 = vector.broadcast %161 : vector<1x16x32xf32> to vector<8x16x32xf32>
      %164 = arith.mulf %162, %163 : vector<8x16x32xf32>
      %165 = math.exp %164 : vector<8x16x32xf32>
      %166 = vector.shape_cast %158 : vector<8x16xf32> to vector<8x16x1xf32>
      %167 = arith.mulf %157, %145 : vector<8x32xf32>
      %168 = vector.shape_cast %167 : vector<8x32xf32> to vector<8x1x32xf32>
      %169 = vector.broadcast %166 : vector<8x16x1xf32> to vector<8x16x32xf32>
      %170 = vector.broadcast %168 : vector<8x1x32xf32> to vector<8x16x32xf32>
      %171 = arith.mulf %169, %170 : vector<8x16x32xf32>
      %172 = vector.extract_strided_slice %165 {offsets = [7, 0, 0], sizes = [1, 16, 32], strides = [1, 1, 1]} : vector<8x16x32xf32> to vector<1x16x32xf32>
      %173 = vector.shape_cast %172 : vector<1x16x32xf32> to vector<16x32xf32>
      %174 = arith.mulf %173, %arg12 : vector<16x32xf32>
      %175 = vector.extract_strided_slice %171 {offsets = [7, 0, 0], sizes = [1, 16, 32], strides = [1, 1, 1]} : vector<8x16x32xf32> to vector<1x16x32xf32>
      %176 = vector.shape_cast %175 : vector<1x16x32xf32> to vector<16x32xf32>
      %177 = arith.addf %174, %176 : vector<16x32xf32>
      %178 = vector.extract_strided_slice %165 {offsets = [6, 0, 0], sizes = [1, 16, 32], strides = [1, 1, 1]} : vector<8x16x32xf32> to vector<1x16x32xf32>
      %179 = vector.shape_cast %178 : vector<1x16x32xf32> to vector<16x32xf32>
      %180 = arith.mulf %179, %177 : vector<16x32xf32>
      %181 = vector.extract_strided_slice %171 {offsets = [6, 0, 0], sizes = [1, 16, 32], strides = [1, 1, 1]} : vector<8x16x32xf32> to vector<1x16x32xf32>
      %182 = vector.shape_cast %181 : vector<1x16x32xf32> to vector<16x32xf32>
      %183 = arith.addf %180, %182 : vector<16x32xf32>
      %184 = vector.extract_strided_slice %165 {offsets = [5, 0, 0], sizes = [1, 16, 32], strides = [1, 1, 1]} : vector<8x16x32xf32> to vector<1x16x32xf32>
      %185 = vector.shape_cast %184 : vector<1x16x32xf32> to vector<16x32xf32>
      %186 = arith.mulf %185, %183 : vector<16x32xf32>
      %187 = vector.extract_strided_slice %171 {offsets = [5, 0, 0], sizes = [1, 16, 32], strides = [1, 1, 1]} : vector<8x16x32xf32> to vector<1x16x32xf32>
      %188 = vector.shape_cast %187 : vector<1x16x32xf32> to vector<16x32xf32>
      %189 = arith.addf %186, %188 : vector<16x32xf32>
      %190 = vector.extract_strided_slice %165 {offsets = [4, 0, 0], sizes = [1, 16, 32], strides = [1, 1, 1]} : vector<8x16x32xf32> to vector<1x16x32xf32>
      %191 = vector.shape_cast %190 : vector<1x16x32xf32> to vector<16x32xf32>
      %192 = arith.mulf %191, %189 : vector<16x32xf32>
      %193 = vector.extract_strided_slice %171 {offsets = [4, 0, 0], sizes = [1, 16, 32], strides = [1, 1, 1]} : vector<8x16x32xf32> to vector<1x16x32xf32>
      %194 = vector.shape_cast %193 : vector<1x16x32xf32> to vector<16x32xf32>
      %195 = arith.addf %192, %194 : vector<16x32xf32>
      %196 = vector.extract_strided_slice %165 {offsets = [3, 0, 0], sizes = [1, 16, 32], strides = [1, 1, 1]} : vector<8x16x32xf32> to vector<1x16x32xf32>
      %197 = vector.shape_cast %196 : vector<1x16x32xf32> to vector<16x32xf32>
      %198 = arith.mulf %197, %195 : vector<16x32xf32>
      %199 = vector.extract_strided_slice %171 {offsets = [3, 0, 0], sizes = [1, 16, 32], strides = [1, 1, 1]} : vector<8x16x32xf32> to vector<1x16x32xf32>
      %200 = vector.shape_cast %199 : vector<1x16x32xf32> to vector<16x32xf32>
      %201 = arith.addf %198, %200 : vector<16x32xf32>
      %202 = vector.extract_strided_slice %165 {offsets = [2, 0, 0], sizes = [1, 16, 32], strides = [1, 1, 1]} : vector<8x16x32xf32> to vector<1x16x32xf32>
      %203 = vector.shape_cast %202 : vector<1x16x32xf32> to vector<16x32xf32>
      %204 = arith.mulf %203, %201 : vector<16x32xf32>
      %205 = vector.extract_strided_slice %171 {offsets = [2, 0, 0], sizes = [1, 16, 32], strides = [1, 1, 1]} : vector<8x16x32xf32> to vector<1x16x32xf32>
      %206 = vector.shape_cast %205 : vector<1x16x32xf32> to vector<16x32xf32>
      %207 = arith.addf %204, %206 : vector<16x32xf32>
      %208 = vector.extract_strided_slice %165 {offsets = [1, 0, 0], sizes = [1, 16, 32], strides = [1, 1, 1]} : vector<8x16x32xf32> to vector<1x16x32xf32>
      %209 = vector.shape_cast %208 : vector<1x16x32xf32> to vector<16x32xf32>
      %210 = arith.mulf %209, %207 : vector<16x32xf32>
      %211 = vector.extract_strided_slice %171 {offsets = [1, 0, 0], sizes = [1, 16, 32], strides = [1, 1, 1]} : vector<8x16x32xf32> to vector<1x16x32xf32>
      %212 = vector.shape_cast %211 : vector<1x16x32xf32> to vector<16x32xf32>
      %213 = arith.addf %210, %212 : vector<16x32xf32>
      %214 = vector.extract_strided_slice %165 {offsets = [0, 0, 0], sizes = [1, 16, 32], strides = [1, 1, 1]} : vector<8x16x32xf32> to vector<1x16x32xf32>
      %215 = vector.shape_cast %214 : vector<1x16x32xf32> to vector<16x32xf32>
      %216 = arith.mulf %215, %213 : vector<16x32xf32>
      %217 = vector.extract_strided_slice %171 {offsets = [0, 0, 0], sizes = [1, 16, 32], strides = [1, 1, 1]} : vector<8x16x32xf32> to vector<1x16x32xf32>
      %218 = vector.shape_cast %217 : vector<1x16x32xf32> to vector<16x32xf32>
      %219 = arith.addf %216, %218 : vector<16x32xf32>
      %220 = vector.shape_cast %219 : vector<16x32xf32> to vector<1x16x32xf32>
      %221 = vector.shape_cast %213 : vector<16x32xf32> to vector<1x16x32xf32>
      %222 = vector.shape_cast %207 : vector<16x32xf32> to vector<1x16x32xf32>
      %223 = vector.shape_cast %201 : vector<16x32xf32> to vector<1x16x32xf32>
      %224 = vector.shape_cast %195 : vector<16x32xf32> to vector<1x16x32xf32>
      %225 = vector.shape_cast %189 : vector<16x32xf32> to vector<1x16x32xf32>
      %226 = vector.shape_cast %183 : vector<16x32xf32> to vector<1x16x32xf32>
      %227 = vector.shape_cast %177 : vector<16x32xf32> to vector<1x16x32xf32>
      %228 = tpu.concatenate %220, %221, %222, %223, %224, %225, %226, %227 in 0 : vector<1x16x32xf32>, vector<1x16x32xf32>, vector<1x16x32xf32>, vector<1x16x32xf32>, vector<1x16x32xf32>, vector<1x16x32xf32>, vector<1x16x32xf32>, vector<1x16x32xf32> -> vector<8x16x32xf32>
      %229 = vector.shape_cast %159 : vector<8x16xf32> to vector<8x16x1xf32>
      %230 = vector.broadcast %229 : vector<8x16x1xf32> to vector<8x16x32xf32>
      %231 = arith.mulf %230, %228 : vector<8x16x32xf32>
      %cst_64 = arith.constant dense<0.000000e+00> : vector<8x32xf32>
      %232 = vector.multi_reduction <add>, %231, %cst_64 [1] : vector<8x16x32xf32> to vector<8x32xf32>
      %c0_65 = arith.constant 0 : index
      %c0_66 = arith.constant 0 : index
      %233 = arith.index_cast %138 : i32 to index
      %c0_67 = arith.constant 0 : index
      %234 = vector.load %arg8[%c0_65, %c0_66, %233, %c0_67] : memref<1x1x64x32xf32, #tpu.memory_space<vmem>>, vector<1x1x8x32xf32>
      %235 = vector.shape_cast %234 : vector<1x1x8x32xf32> to vector<8x32xf32>
      %236 = arith.addf %235, %232 : vector<8x32xf32>
      %c0_68 = arith.constant 0 : index
      %c0_69 = arith.constant 0 : index
      %237 = arith.index_cast %138 : i32 to index
      %c0_70 = arith.constant 0 : index
      %238 = vector.load %arg8[%c0_68, %c0_69, %237, %c0_70] : memref<1x1x64x32xf32, #tpu.memory_space<vmem>>, vector<1x1x8x32xf32>
      %239 = vector.shape_cast %238 : vector<1x1x8x32xf32> to vector<8x32xf32>
      %240 = vector.shape_cast %236 : vector<8x32xf32> to vector<1x1x8x32xf32>
      tpu.vector_store %arg8[%c0_68, %c0_69, %237, %c0_70], %240 {strides = array<i32>} : memref<1x1x64x32xf32, #tpu.memory_space<vmem>>, vector<1x1x8x32xf32>,
      scf.yield %113, %219 : vector<16x32xf32>, vector<16x32xf32>
    }
    %c8_i32_39 = arith.constant 8 : i32
    return
  }
  func.func @transform_0(%arg0: i32, %arg1: i32) -> (i32, i32, i32) {
    %c0_i32 = arith.constant 0 : i32
    %c0_i32_0 = arith.constant 0 : i32
    %c0_i32_1 = arith.constant 0 : i32
    return %arg0, %c0_i32, %c0_i32_0 : i32, i32, i32
  }
  func.func @transform_1(%arg0: i32, %arg1: i32) -> (i32, i32, i32) {
    %c0_i32 = arith.constant 0 : i32
    %c0_i32_0 = arith.constant 0 : i32
    %c0_i32_1 = arith.constant 0 : i32
    return %arg0, %c0_i32, %c0_i32_0 : i32, i32, i32
  }
  func.func @transform_2(%arg0: i32, %arg1: i32) -> (i32, i32, i32) {
    %c0_i32 = arith.constant 0 : i32
    %c0_i32_0 = arith.constant 0 : i32
    %c0_i32_1 = arith.constant 0 : i32
    return %arg1, %c0_i32, %c0_i32_0 : i32, i32, i32
  }
  func.func @transform_3(%arg0: i32, %arg1: i32) -> (i32, i32, i32, i32) {
    %c0_i32 = arith.constant 0 : i32
    %c0_i32_0 = arith.constant 0 : i32
    %c0_i32_1 = arith.constant 0 : i32
    %c0_i32_2 = arith.constant 0 : i32
    return %c0_i32, %arg1, %c0_i32_0, %c0_i32_1 : i32, i32, i32, i32
  }
  func.func @transform_4(%arg0: i32, %arg1: i32) -> (i32, i32, i32, i32) {
    %c0_i32 = arith.constant 0 : i32
    %c0_i32_0 = arith.constant 0 : i32
    %c0_i32_1 = arith.constant 0 : i32
    %c0_i32_2 = arith.constant 0 : i32
    return %c0_i32, %arg1, %c0_i32_0, %c0_i32_1 : i32, i32, i32, i32
  }
  func.func @transform_5(%arg0: i32, %arg1: i32) -> (i32, i32, i32, i32) {
    %c0_i32 = arith.constant 0 : i32
    %c0_i32_0 = arith.constant 0 : i32
    %c0_i32_1 = arith.constant 0 : i32
    %c0_i32_2 = arith.constant 0 : i32
    return %c0_i32, %arg1, %c0_i32_0, %c0_i32_1 : i32, i32, i32, i32
  }
  func.func @transform_6(%arg0: i32, %arg1: i32) -> (i32, i32, i32, i32) {
    %c0_i32 = arith.constant 0 : i32
    %c0_i32_0 = arith.constant 0 : i32
    %c0_i32_1 = arith.constant 0 : i32
    return %arg0, %arg1, %c0_i32, %c0_i32_0 : i32, i32, i32, i32
  }
}

module attributes {stable_mosaic.version = 11 : i64} {
  func.func @_ln_inproj_kernel(%arg0: i32, %arg1: memref<128x16xf32, #tpu.memory_space<vmem>>, %arg2: memref<1x16xf32, #tpu.memory_space<vmem>>, %arg3: memref<1x16xf32, #tpu.memory_space<vmem>>, %arg4: memref<16x64xf32, #tpu.memory_space<vmem>>, %arg5: memref<128x32xf32, #tpu.memory_space<vmem>>, %arg6: memref<128x32xf32, #tpu.memory_space<vmem>>) attributes {dimension_semantics = [#tpu.dimension_semantics<parallel>], iteration_bounds = array<i64: 1>, scalar_prefetch = 0 : i64, scratch_operands = 0 : i64, tpu.core_type = #tpu.core_type<tc>, window_params = [{transform_indices = @transform_0, window_bounds = array<i64: 128, 16>}, {pipeline_mode = #tpu.pipeline_mode<synchronous>, transform_indices = @transform_1, window_bounds = array<i64: 1, 16>}, {pipeline_mode = #tpu.pipeline_mode<synchronous>, transform_indices = @transform_2, window_bounds = array<i64: 1, 16>}, {pipeline_mode = #tpu.pipeline_mode<synchronous>, transform_indices = @transform_3, window_bounds = array<i64: 16, 64>}, {transform_indices = @transform_4, window_bounds = array<i64: 128, 32>}, {transform_indices = @transform_5, window_bounds = array<i64: 128, 32>}]} {
    %c0 = arith.constant 0 : index
    %c0_0 = arith.constant 0 : index
    %0 = vector.load %arg1[%c0, %c0_0] : memref<128x16xf32, #tpu.memory_space<vmem>>, vector<128x16xf32>
    %cst = arith.constant dense<0.000000e+00> : vector<128xf32>
    %1 = vector.multi_reduction <add>, %0, %cst [1] : vector<128x16xf32> to vector<128xf32>
    %2 = vector.shape_cast %1 : vector<128xf32> to vector<128x1xf32>
    %cst_1 = arith.constant 1.600000e+01 : f32
    %3 = vector.broadcast %cst_1 : f32 to vector<128x1xf32>
    %4 = arith.divf %2, %3 : vector<128x1xf32>
    %5 = vector.broadcast %4 : vector<128x1xf32> to vector<128x16xf32>
    %6 = arith.subf %0, %5 : vector<128x16xf32>
    %7 = arith.mulf %6, %6 : vector<128x16xf32>
    %cst_2 = arith.constant dense<0.000000e+00> : vector<128xf32>
    %8 = vector.multi_reduction <add>, %7, %cst_2 [1] : vector<128x16xf32> to vector<128xf32>
    %9 = vector.shape_cast %8 : vector<128xf32> to vector<128x1xf32>
    %cst_3 = arith.constant 1.600000e+01 : f32
    %10 = vector.broadcast %cst_3 : f32 to vector<128x1xf32>
    %11 = arith.divf %9, %10 : vector<128x1xf32>
    %12 = vector.broadcast %4 : vector<128x1xf32> to vector<128x16xf32>
    %13 = arith.subf %0, %12 : vector<128x16xf32>
    %cst_4 = arith.constant 9.99999974E-6 : f32
    %14 = vector.broadcast %cst_4 : f32 to vector<128x1xf32>
    %15 = arith.addf %11, %14 : vector<128x1xf32>
    %16 = math.rsqrt %15 : vector<128x1xf32>
    %17 = vector.broadcast %16 : vector<128x1xf32> to vector<128x16xf32>
    %18 = arith.mulf %13, %17 : vector<128x16xf32>
    %c0_5 = arith.constant 0 : index
    %c0_6 = arith.constant 0 : index
    %19 = vector.load %arg2[%c0_5, %c0_6] : memref<1x16xf32, #tpu.memory_space<vmem>>, vector<1x16xf32>
    %20 = vector.broadcast %19 : vector<1x16xf32> to vector<128x16xf32>
    %21 = arith.mulf %18, %20 : vector<128x16xf32>
    %c0_7 = arith.constant 0 : index
    %c0_8 = arith.constant 0 : index
    %22 = vector.load %arg3[%c0_7, %c0_8] : memref<1x16xf32, #tpu.memory_space<vmem>>, vector<1x16xf32>
    %23 = vector.broadcast %22 : vector<1x16xf32> to vector<128x16xf32>
    %24 = arith.addf %21, %23 : vector<128x16xf32>
    %c0_9 = arith.constant 0 : index
    %c0_10 = arith.constant 0 : index
    %25 = vector.load %arg4[%c0_9, %c0_10] : memref<16x64xf32, #tpu.memory_space<vmem>>, vector<16x64xf32>
    %cst_11 = arith.constant dense<0.000000e+00> : vector<128x64xf32>
    %26 = tpu.matmul %24, %25, %cst_11 {dimension_numbers = #tpu.dot_dimension_numbers<[1], [0], [0], [1], [0, 0, 1, 1], [], []>} : vector<128x16xf32>, vector<16x64xf32>, vector<128x64xf32> -> vector<128x64xf32>
    %27 = vector.extract_strided_slice %26 {offsets = [0, 0], sizes = [128, 32], strides = [1, 1]} : vector<128x64xf32> to vector<128x32xf32>
    %c0_12 = arith.constant 0 : index
    %c0_13 = arith.constant 0 : index
    %28 = vector.load %arg5[%c0_12, %c0_13] : memref<128x32xf32, #tpu.memory_space<vmem>>, vector<128x32xf32>
    tpu.vector_store %arg5[%c0_12, %c0_13], %27 {strides = array<i32>} : memref<128x32xf32, #tpu.memory_space<vmem>>, vector<128x32xf32>,
    %29 = vector.extract_strided_slice %26 {offsets = [0, 32], sizes = [128, 32], strides = [1, 1]} : vector<128x64xf32> to vector<128x32xf32>
    %c0_14 = arith.constant 0 : index
    %c0_15 = arith.constant 0 : index
    %30 = vector.load %arg6[%c0_14, %c0_15] : memref<128x32xf32, #tpu.memory_space<vmem>>, vector<128x32xf32>
    tpu.vector_store %arg6[%c0_14, %c0_15], %29 {strides = array<i32>} : memref<128x32xf32, #tpu.memory_space<vmem>>, vector<128x32xf32>,
    return
  }
  func.func @transform_0(%arg0: i32) -> (i32, i32) {
    %c0_i32 = arith.constant 0 : i32
    %c0_i32_0 = arith.constant 0 : i32
    return %arg0, %c0_i32 : i32, i32
  }
  func.func @transform_1(%arg0: i32) -> (i32, i32) {
    %c0_i32 = arith.constant 0 : i32
    %c0_i32_0 = arith.constant 0 : i32
    %c0_i32_1 = arith.constant 0 : i32
    return %c0_i32, %c0_i32_0 : i32, i32
  }
  func.func @transform_2(%arg0: i32) -> (i32, i32) {
    %c0_i32 = arith.constant 0 : i32
    %c0_i32_0 = arith.constant 0 : i32
    %c0_i32_1 = arith.constant 0 : i32
    return %c0_i32, %c0_i32_0 : i32, i32
  }
  func.func @transform_3(%arg0: i32) -> (i32, i32) {
    %c0_i32 = arith.constant 0 : i32
    %c0_i32_0 = arith.constant 0 : i32
    %c0_i32_1 = arith.constant 0 : i32
    return %c0_i32, %c0_i32_0 : i32, i32
  }
  func.func @transform_4(%arg0: i32) -> (i32, i32) {
    %c0_i32 = arith.constant 0 : i32
    %c0_i32_0 = arith.constant 0 : i32
    return %arg0, %c0_i32 : i32, i32
  }
  func.func @transform_5(%arg0: i32) -> (i32, i32) {
    %c0_i32 = arith.constant 0 : i32
    %c0_i32_0 = arith.constant 0 : i32
    return %arg0, %c0_i32 : i32, i32
  }
}

module attributes {stable_mosaic.version = 11 : i64} {
  func.func @_gate_outproj_kernel(%arg0: i32, %arg1: memref<128x32xf32, #tpu.memory_space<vmem>>, %arg2: memref<128x32xf32, #tpu.memory_space<vmem>>, %arg3: memref<128x32xf32, #tpu.memory_space<vmem>>, %arg4: memref<128x16xf32, #tpu.memory_space<vmem>>, %arg5: memref<1x32xf32, #tpu.memory_space<vmem>>, %arg6: memref<1x32xf32, #tpu.memory_space<vmem>>, %arg7: memref<32x16xf32, #tpu.memory_space<vmem>>, %arg8: memref<128x16xf32, #tpu.memory_space<vmem>>) attributes {dimension_semantics = [#tpu.dimension_semantics<parallel>], iteration_bounds = array<i64: 1>, scalar_prefetch = 0 : i64, scratch_operands = 0 : i64, tpu.core_type = #tpu.core_type<tc>, window_params = [{transform_indices = @transform_0, window_bounds = array<i64: 128, 32>}, {transform_indices = @transform_1, window_bounds = array<i64: 128, 32>}, {transform_indices = @transform_2, window_bounds = array<i64: 128, 32>}, {transform_indices = @transform_3, window_bounds = array<i64: 128, 16>}, {pipeline_mode = #tpu.pipeline_mode<synchronous>, transform_indices = @transform_4, window_bounds = array<i64: 1, 32>}, {pipeline_mode = #tpu.pipeline_mode<synchronous>, transform_indices = @transform_5, window_bounds = array<i64: 1, 32>}, {pipeline_mode = #tpu.pipeline_mode<synchronous>, transform_indices = @transform_6, window_bounds = array<i64: 32, 16>}, {transform_indices = @transform_7, window_bounds = array<i64: 128, 16>}]} {
    %c0 = arith.constant 0 : index
    %c0_0 = arith.constant 0 : index
    %0 = vector.load %arg1[%c0, %c0_0] : memref<128x32xf32, #tpu.memory_space<vmem>>, vector<128x32xf32>
    %c0_1 = arith.constant 0 : index
    %c0_2 = arith.constant 0 : index
    %1 = vector.load %arg2[%c0_1, %c0_2] : memref<128x32xf32, #tpu.memory_space<vmem>>, vector<128x32xf32>
    %2 = arith.addf %0, %1 : vector<128x32xf32>
    %cst = arith.constant dense<0.000000e+00> : vector<128xf32>
    %3 = vector.multi_reduction <add>, %2, %cst [1] : vector<128x32xf32> to vector<128xf32>
    %4 = vector.shape_cast %3 : vector<128xf32> to vector<128x1xf32>
    %cst_3 = arith.constant 3.200000e+01 : f32
    %5 = vector.broadcast %cst_3 : f32 to vector<128x1xf32>
    %6 = arith.divf %4, %5 : vector<128x1xf32>
    %7 = vector.broadcast %6 : vector<128x1xf32> to vector<128x32xf32>
    %8 = arith.subf %2, %7 : vector<128x32xf32>
    %9 = arith.mulf %8, %8 : vector<128x32xf32>
    %cst_4 = arith.constant dense<0.000000e+00> : vector<128xf32>
    %10 = vector.multi_reduction <add>, %9, %cst_4 [1] : vector<128x32xf32> to vector<128xf32>
    %11 = vector.shape_cast %10 : vector<128xf32> to vector<128x1xf32>
    %cst_5 = arith.constant 3.200000e+01 : f32
    %12 = vector.broadcast %cst_5 : f32 to vector<128x1xf32>
    %13 = arith.divf %11, %12 : vector<128x1xf32>
    %14 = vector.broadcast %6 : vector<128x1xf32> to vector<128x32xf32>
    %15 = arith.subf %2, %14 : vector<128x32xf32>
    %cst_6 = arith.constant 9.99999974E-6 : f32
    %16 = vector.broadcast %cst_6 : f32 to vector<128x1xf32>
    %17 = arith.addf %13, %16 : vector<128x1xf32>
    %18 = math.rsqrt %17 : vector<128x1xf32>
    %19 = vector.broadcast %18 : vector<128x1xf32> to vector<128x32xf32>
    %20 = arith.mulf %15, %19 : vector<128x32xf32>
    %c0_7 = arith.constant 0 : index
    %c0_8 = arith.constant 0 : index
    %21 = vector.load %arg5[%c0_7, %c0_8] : memref<1x32xf32, #tpu.memory_space<vmem>>, vector<1x32xf32>
    %22 = vector.broadcast %21 : vector<1x32xf32> to vector<128x32xf32>
    %23 = arith.mulf %20, %22 : vector<128x32xf32>
    %c0_9 = arith.constant 0 : index
    %c0_10 = arith.constant 0 : index
    %24 = vector.load %arg6[%c0_9, %c0_10] : memref<1x32xf32, #tpu.memory_space<vmem>>, vector<1x32xf32>
    %25 = vector.broadcast %24 : vector<1x32xf32> to vector<128x32xf32>
    %26 = arith.addf %23, %25 : vector<128x32xf32>
    %c0_11 = arith.constant 0 : index
    %c0_12 = arith.constant 0 : index
    %27 = vector.load %arg3[%c0_11, %c0_12] : memref<128x32xf32, #tpu.memory_space<vmem>>, vector<128x32xf32>
    %28 = arith.negf %27 : vector<128x32xf32>
    %29 = math.exp %28 : vector<128x32xf32>
    %cst_13 = arith.constant 1.000000e+00 : f32
    %30 = vector.broadcast %cst_13 : f32 to vector<128x32xf32>
    %31 = arith.addf %30, %29 : vector<128x32xf32>
    %32 = arith.divf %30, %31 : vector<128x32xf32>
    %33 = arith.mulf %27, %32 : vector<128x32xf32>
    %34 = arith.mulf %26, %33 : vector<128x32xf32>
    %c0_14 = arith.constant 0 : index
    %c0_15 = arith.constant 0 : index
    %35 = vector.load %arg4[%c0_14, %c0_15] : memref<128x16xf32, #tpu.memory_space<vmem>>, vector<128x16xf32>
    %c0_16 = arith.constant 0 : index
    %c0_17 = arith.constant 0 : index
    %36 = vector.load %arg7[%c0_16, %c0_17] : memref<32x16xf32, #tpu.memory_space<vmem>>, vector<32x16xf32>
    %cst_18 = arith.constant dense<0.000000e+00> : vector<128x16xf32>
    %37 = tpu.matmul %34, %36, %cst_18 {dimension_numbers = #tpu.dot_dimension_numbers<[1], [0], [0], [1], [0, 0, 1, 1], [], []>} : vector<128x32xf32>, vector<32x16xf32>, vector<128x16xf32> -> vector<128x16xf32>
    %38 = arith.addf %35, %37 : vector<128x16xf32>
    %c0_19 = arith.constant 0 : index
    %c0_20 = arith.constant 0 : index
    %39 = vector.load %arg8[%c0_19, %c0_20] : memref<128x16xf32, #tpu.memory_space<vmem>>, vector<128x16xf32>
    tpu.vector_store %arg8[%c0_19, %c0_20], %38 {strides = array<i32>} : memref<128x16xf32, #tpu.memory_space<vmem>>, vector<128x16xf32>,
    return
  }
  func.func @transform_0(%arg0: i32) -> (i32, i32) {
    %c0_i32 = arith.constant 0 : i32
    %c0_i32_0 = arith.constant 0 : i32
    return %arg0, %c0_i32 : i32, i32
  }
  func.func @transform_1(%arg0: i32) -> (i32, i32) {
    %c0_i32 = arith.constant 0 : i32
    %c0_i32_0 = arith.constant 0 : i32
    return %arg0, %c0_i32 : i32, i32
  }
  func.func @transform_2(%arg0: i32) -> (i32, i32) {
    %c0_i32 = arith.constant 0 : i32
    %c0_i32_0 = arith.constant 0 : i32
    return %arg0, %c0_i32 : i32, i32
  }
  func.func @transform_3(%arg0: i32) -> (i32, i32) {
    %c0_i32 = arith.constant 0 : i32
    %c0_i32_0 = arith.constant 0 : i32
    return %arg0, %c0_i32 : i32, i32
  }
  func.func @transform_4(%arg0: i32) -> (i32, i32) {
    %c0_i32 = arith.constant 0 : i32
    %c0_i32_0 = arith.constant 0 : i32
    %c0_i32_1 = arith.constant 0 : i32
    return %c0_i32, %c0_i32_0 : i32, i32
  }
  func.func @transform_5(%arg0: i32) -> (i32, i32) {
    %c0_i32 = arith.constant 0 : i32
    %c0_i32_0 = arith.constant 0 : i32
    %c0_i32_1 = arith.constant 0 : i32
    return %c0_i32, %c0_i32_0 : i32, i32
  }
  func.func @transform_6(%arg0: i32) -> (i32, i32) {
    %c0_i32 = arith.constant 0 : i32
    %c0_i32_0 = arith.constant 0 : i32
    %c0_i32_1 = arith.constant 0 : i32
    return %c0_i32, %c0_i32_0 : i32, i32
  }
  func.func @transform_7(%arg0: i32) -> (i32, i32) {
    %c0_i32 = arith.constant 0 : i32
    %c0_i32_0 = arith.constant 0 : i32
    return %arg0, %c0_i32 : i32, i32
  }
}

</mosaic_0001>

<llo_original>
// kernel: forward.9
$region0: #{forward.9}
  #allocation0 [shape = 'u32[]', space=smem, size = 0x4, offset = 0x4, fixed_abs, tag = 'smem constant byte address 0x4 - core index']
  #allocation1 [shape = 'u32[144,128]{1,0:T(1,128)}', space=vmem, size = 0x12000, scoped, tag = 'internal scratch']
  %s0 = inlined_call_operand.vmem [shape: f32[2,6,6,6,32], index: 0, kind: input, shape index: {}, may-alias: {0,1,2}]
  %s1 = inlined_call_operand.vmem [shape: f32[2,6,6,6,32], index: 1, kind: input, shape index: {}, may-alias: {0,1,2}]
  %s2 = inlined_call_operand.vmem [shape: f32[2,6,6,6,32], index: 2, kind: input, shape index: {}, may-alias: {0,1,2}]
  %s3 = inlined_call_operand.vmem [shape: f32[27,1,1,32], index: 3, kind: input, shape index: {}]
  %s4 = inlined_call_operand.vmem [shape: f32[1,1,32], index: 4, kind: input, shape index: {}]
  %s5 = inlined_call_operand.vmem [shape: f32[2,4,4,4,32], index: 5, kind: output, shape index: {}]
  %s6 = sld [smem:[#allocation0]]
  $region53: #{forward.9} parent=0
    _
  %s8 = ssub.s32 1, %s6
  %s9 = scalar_select 0, %s8, %s6
  loop: start=0, step=1, limit=10
  $region2: #{forward.9} parent=0 // loop_pre_header
    _
  $region3: #{forward.9} parent=0 // loop_header
    %s11 = sphi 0, %s15
    %p12 = scmp.ge.s32.totalorder %s11, 10
    %s18 = sphi 0, %s30
    %s19 = sphi 0, %s26
    %s20 = sphi 0, %s18
    %s21 = sphi 0, %s19
    %s22 = sphi 0, %s20
    %s23 = sphi 0, %s21
    %s35 = sphi 0, %s37
    %s38 = sphi 0, %s35
    %s39 = sphi 0, %s38
    %s55 = sphi 0, %s39
    %s65 = sphi 0, %s67
    %s68 = sphi 0, %s65
    %s69 = sphi 0, %s68
    %s85 = sphi 0, %s69
    %s95 = sphi 0, %s97
    %s98 = sphi 0, %s95
    %s99 = sphi 0, %s98
    %s115 = sphi 0, %s99
    %s119 = sphi 0, %s119
    %s121 = sphi 0, %s119
    %s122 = sphi 0, %s121
    %s136 = sphi 0, %s122
    %s140 = sphi 0, %s140
    %s142 = sphi 0, %s140
    %s143 = sphi 0, %s142
    %s157 = sphi 0, %s143
    %s165 = sphi 0, %s167
    %s168 = sphi 0, %s165
    %s169 = sphi 0, %s168
    %s185 = sphi 0, %s169
  $region4: #{forward.9} parent=0 // loop_header_branch
    %14 = sbr.rel (%p12) target = $region8
  $region5: #{forward.9} parent=0 // loop_body
    %s16 = ssub.s32 %s11, 1
    %s17 = ssub.s32 %s11, 2
    %s24 = sadd.s32 1, %s19
    %p25 = scmp.ge.s32.totalorder %s24, 4
    %s26 = scalar_select %p25, 0, %s24
    %s27 = sadd.s32 1, %s18
    %s28 = scalar_select %p25, %s27, %s18
    %p29 = scmp.ge.s32.totalorder %s28, 2
    %s30 = scalar_select %p29, 0, %s28
    %s31 = ssub.s32 %s18, %s30
    %s32 = ssub.s32 %s19, %s26
    %s33 = sor.u32 %s31, %s32
    %p34 = scmp.eq.s32.totalorder %s33, 0
    %s36 = sadd.s32 %s35, 1
    %s37 = scalar_select %p34, %s35, %s36
    %p40 = pneg %p34
    %p41 = scmp.eq.s32.totalorder %s11, 7
    %p42 = por %p40, %p41
    %p43 = scmp.ne.s32.totalorder %s35, %s38
    %p44 = scmp.eq.s32.totalorder %s11, 0
    %p45 = por %p43, %p44
    %p46 = scmp.ne.s32.totalorder %s35, %s38
    %p47 = scmp.eq.s32.totalorder %s16, 7
    %p48 = por %p46, %p47
    %p49 = scmp.ne.s32.totalorder %s38, %s39
    %p50 = scmp.eq.s32.totalorder %s16, 0
    %p51 = por %p49, %p50
    %p52 = scmp.ne.s32.totalorder %s38, %s39
    %p53 = scmp.eq.s32.totalorder %s17, 7
    %p54 = por %p52, %p53
    %p56 = scmp.ne.s32.totalorder %s39, %s55
    %p57 = scmp.eq.s32.totalorder %s17, 0
    %p58 = por %p56, %p57
    %s59 = sadd.s32 %s19, 1
    %s60 = sadd.s32 %s26, 1
    %s61 = ssub.s32 %s18, %s30
    %s62 = ssub.s32 %s59, %s60
    %s63 = sor.u32 %s61, %s62
    %p64 = scmp.eq.s32.totalorder %s63, 0
    %s66 = sadd.s32 %s65, 1
    %s67 = scalar_select %p64, %s65, %s66
    %p70 = pneg %p64
    %p71 = scmp.eq.s32.totalorder %s11, 7
    %p72 = por %p70, %p71
    %p73 = scmp.ne.s32.totalorder %s65, %s68
    %p74 = scmp.eq.s32.totalorder %s11, 0
    %p75 = por %p73, %p74
    %p76 = scmp.ne.s32.totalorder %s65, %s68
    %p77 = scmp.eq.s32.totalorder %s16, 7
    %p78 = por %p76, %p77
    %p79 = scmp.ne.s32.totalorder %s68, %s69
    %p80 = scmp.eq.s32.totalorder %s16, 0
    %p81 = por %p79, %p80
    %p82 = scmp.ne.s32.totalorder %s68, %s69
    %p83 = scmp.eq.s32.totalorder %s17, 7
    %p84 = por %p82, %p83
    %p86 = scmp.ne.s32.totalorder %s69, %s85
    %p87 = scmp.eq.s32.totalorder %s17, 0
    %p88 = por %p86, %p87
    %s89 = sadd.s32 %s19, 2
    %s90 = sadd.s32 %s26, 2
    %s91 = ssub.s32 %s18, %s30
    %s92 = ssub.s32 %s89, %s90
    %s93 = sor.u32 %s91, %s92
    %p94 = scmp.eq.s32.totalorder %s93, 0
    %s96 = sadd.s32 %s95, 1
    %s97 = scalar_select %p94, %s95, %s96
    %p100 = pneg %p94
    %p101 = scmp.eq.s32.totalorder %s11, 7
    %p102 = por %p100, %p101
    %p103 = scmp.ne.s32.totalorder %s95, %s98
    %p104 = scmp.eq.s32.totalorder %s11, 0
    %p105 = por %p103, %p104
    %p106 = scmp.ne.s32.totalorder %s95, %s98
    %p107 = scmp.eq.s32.totalorder %s16, 7
    %p108 = por %p106, %p107
    %p109 = scmp.ne.s32.totalorder %s98, %s99
    %p110 = scmp.eq.s32.totalorder %s16, 0
    %p111 = por %p109, %p110
    %p112 = scmp.ne.s32.totalorder %s98, %s99
    %p113 = scmp.eq.s32.totalorder %s17, 7
    %p114 = por %p112, %p113
    %p116 = scmp.ne.s32.totalorder %s99, %s115
    %p117 = scmp.eq.s32.totalorder %s17, 0
    %p118 = por %p116, %p117
    %s120 = sadd.s32 %s119, 1
    %p123 = scmp.eq.s32.totalorder %s11, 7
    %p124 = scmp.ne.s32.totalorder %s119, %s121
    %p125 = scmp.eq.s32.totalorder %s11, 0
    %p126 = por %p124, %p125
    %p127 = scmp.ne.s32.totalorder %s119, %s121
    %p128 = scmp.eq.s32.totalorder %s16, 7
    %p129 = por %p127, %p128
    %p130 = scmp.ne.s32.totalorder %s121, %s122
    %p131 = scmp.eq.s32.totalorder %s16, 0
    %p132 = por %p130, %p131
    %p133 = scmp.ne.s32.totalorder %s121, %s122
    %p134 = scmp.eq.s32.totalorder %s17, 7
    %p135 = por %p133, %p134
    %p137 = scmp.ne.s32.totalorder %s122, %s136
    %p138 = scmp.eq.s32.totalorder %s17, 0
    %p139 = por %p137, %p138
    %s141 = sadd.s32 %s140, 1
    %p144 = scmp.eq.s32.totalorder %s11, 7
    %p145 = scmp.ne.s32.totalorder %s140, %s142
    %p146 = scmp.eq.s32.totalorder %s11, 0
    %p147 = por %p145, %p146
    %p148 = scmp.ne.s32.totalorder %s140, %s142
    %p149 = scmp.eq.s32.totalorder %s16, 7
    %p150 = por %p148, %p149
    %p151 = scmp.ne.s32.totalorder %s142, %s143
    %p152 = scmp.eq.s32.totalorder %s16, 0
    %p153 = por %p151, %p152
    %p154 = scmp.ne.s32.totalorder %s142, %s143
    %p155 = scmp.eq.s32.totalorder %s17, 7
    %p156 = por %p154, %p155
    %p158 = scmp.ne.s32.totalorder %s143, %s157
    %p159 = scmp.eq.s32.totalorder %s17, 0
    %p160 = por %p158, %p159
    %s161 = ssub.s32 %s18, %s30
    %s162 = ssub.s32 %s19, %s26
    %s163 = sor.u32 %s161, %s162
    %p164 = scmp.eq.s32.totalorder %s163, 0
    %s166 = sadd.s32 %s165, 1
    %s167 = scalar_select %p164, %s165, %s166
    %p170 = pneg %p164
    %p171 = scmp.eq.s32.totalorder %s11, 7
    %p172 = por %p170, %p171
    %p173 = scmp.ne.s32.totalorder %s165, %s168
    %p174 = scmp.eq.s32.totalorder %s11, 0
    %p175 = por %p173, %p174
    %p176 = scmp.ne.s32.totalorder %s165, %s168
    %p177 = scmp.eq.s32.totalorder %s16, 7
    %p178 = por %p176, %p177
    %p179 = scmp.ne.s32.totalorder %s168, %s169
    %p180 = scmp.eq.s32.totalorder %s16, 0
    %p181 = por %p179, %p180
    %p182 = scmp.ne.s32.totalorder %s168, %s169
    %p183 = scmp.eq.s32.totalorder %s17, 7
    %p184 = por %p182, %p183
    %p186 = scmp.ne.s32.totalorder %s169, %s185
    %p187 = scmp.eq.s32.totalorder %s17, 0
    %p188 = por %p186, %p187
    %p189 = scmp.le.s32.totalorder 1, %s11
    %p190 = scmp.lt.s32.totalorder %s11, 9
    %p191 = pnand %p189, %p190
    %p192 = pneg %p191
    // Predicated region
    $region9: #{forward.9} parent=5 // pred_check
      _
    $region10: #{forward.9} parent=5 // pred_check_branch
      %194 = sbr.rel (%p191) target = $region12
    $region11: #{forward.9} parent=5 // pred_region
      %s195 = ssub.s32 %s11, 1
      // Predicated region
      $region13: #{forward.9} parent=11 // pred_check
        %p196 = pneg %p132
      $region14: #{forward.9} parent=11 // pred_check_branch
        %198 = sbr.rel (%p196) target = $region16
      $region15: #{forward.9} parent=11 // pred_region
        _
      $region16: #{forward.9} parent=11 // pred_fallthru
        _
      // Predicated region
      $region17: #{forward.9} parent=11 // pred_check
        %p199 = pneg %p153
      $region18: #{forward.9} parent=11 // pred_check_branch
        %201 = sbr.rel (%p199) target = $region20
      $region19: #{forward.9} parent=11 // pred_region
        _
      $region20: #{forward.9} parent=11 // pred_fallthru
        _
    $region12: #{forward.9} parent=5 // pred_fallthru
      _
    %p202 = scmp.lt.s32.totalorder %s11, 8
    // Predicated region
    $region21: #{forward.9} parent=5 // pred_check
      %p203 = pneg %p202
    $region22: #{forward.9} parent=5 // pred_check_branch
      %205 = sbr.rel (%p203) target = $region24
    $region23: #{forward.9} parent=5 // pred_region
      // Predicated region
      $region25: #{forward.9} parent=23 // pred_check
        %p206 = pneg %p45
      $region26: #{forward.9} parent=23 // pred_check_branch
        %208 = sbr.rel (%p206) target = $region28
      $region27: #{forward.9} parent=23 // pred_region
        %p209 = scmp.lt.s32.totalorder %s18, 1
        %s210 = scalar_select %p209, %s18, 1
        %p211 = scmp.lt.s32.totalorder %s19, 5
        %s212 = scalar_select %p211, %s19, 5
        %s213 = smul.addr %s212, 6
        %s214 = smul.addr %s210, 36
        %s215 = sadd.s32 %s213, %s214
        %s216 = smul.addr %s215, 8
        %s217 = scalar_lea.vmem %s0, %s216
      $region28: #{forward.9} parent=23 // pred_fallthru
        _
      // Predicated region
      $region29: #{forward.9} parent=23 // pred_check
        %p218 = pneg %p75
      $region30: #{forward.9} parent=23 // pred_check_branch
        %220 = sbr.rel (%p218) target = $region32
      $region31: #{forward.9} parent=23 // pred_region
        %s221 = sadd.s32 %s19, 1
        %p222 = scmp.lt.s32.totalorder %s18, 1
        %s223 = scalar_select %p222, %s18, 1
        %p224 = scmp.lt.s32.totalorder %s221, 5
        %s225 = scalar_select %p224, %s221, 5
        %s226 = smul.addr %s225, 6
        %s227 = smul.addr %s223, 36
        %s228 = sadd.s32 %s226, %s227
        %s229 = smul.addr %s228, 8
        %s230 = scalar_lea.vmem %s1, %s229
        %s231 = sadd.s32 %s19, 1
      $region32: #{forward.9} parent=23 // pred_fallthru
        _
      // Predicated region
      $region33: #{forward.9} parent=23 // pred_check
        %p232 = pneg %p105
      $region34: #{forward.9} parent=23 // pred_check_branch
        %234 = sbr.rel (%p232) target = $region36
      $region35: #{forward.9} parent=23 // pred_region
        %s235 = sadd.s32 %s19, 2
        %p236 = scmp.lt.s32.totalorder %s18, 1
        %s237 = scalar_select %p236, %s18, 1
        %p238 = scmp.lt.s32.totalorder %s235, 5
        %s239 = scalar_select %p238, %s235, 5
        %s240 = smul.addr %s239, 6
        %s241 = smul.addr %s237, 36
        %s242 = sadd.s32 %s240, %s241
        %s243 = smul.addr %s242, 8
        %s244 = scalar_lea.vmem %s2, %s243
        %s245 = sadd.s32 %s19, 2
      $region36: #{forward.9} parent=23 // pred_fallthru
        _
    $region24: #{forward.9} parent=5 // pred_fallthru
      _
    %p246 = scmp.le.s32.totalorder 1, %s11
    %p247 = scmp.lt.s32.totalorder %s11, 9
    %p248 = pnand %p246, %p247
    %p249 = pneg %p248
    // Predicated region
    $region37: #{forward.9} parent=5 // pred_check
      _
    $region38: #{forward.9} parent=5 // pred_check_branch
      %251 = sbr.rel (%p248) target = $region40
    $region39: #{forward.9} parent=5 // pred_region
      %s252 = ssub.s32 %s11, 1
      %p253 = scmp.lt.s32.totalorder %s20, 1
      %s254 = scalar_select %p253, %s20, 1
      %p255 = scmp.lt.s32.totalorder %s21, 5
      %s256 = scalar_select %p255, %s21, 5
      %s257 = smul.addr %s256, 6
      %s258 = smul.addr %s254, 36
      %s259 = sadd.s32 %s257, %s258
      %s260 = smul.addr %s259, 8
      %s261 = scalar_lea.vmem %s0, %s260
      %p262 = pneg %p51
      %p263 = pneg %p48
      %s264 = sadd.s32 %s21, 1
      %p265 = scmp.lt.s32.totalorder %s20, 1
      %s266 = scalar_select %p265, %s20, 1
      %p267 = scmp.lt.s32.totalorder %s264, 5
      %s268 = scalar_select %p267, %s264, 5
      %s269 = smul.addr %s268, 6
      %s270 = smul.addr %s266, 36
      %s271 = sadd.s32 %s269, %s270
      %s272 = smul.addr %s271, 8
      %s273 = scalar_lea.vmem %s1, %s272
      %p274 = pneg %p81
      %p275 = pneg %p78
      %s276 = sadd.s32 %s21, 2
      %p277 = scmp.lt.s32.totalorder %s20, 1
      %s278 = scalar_select %p277, %s20, 1
      %p279 = scmp.lt.s32.totalorder %s276, 5
      %s280 = scalar_select %p279, %s276, 5
      %s281 = smul.addr %s280, 6
      %s282 = smul.addr %s278, 36
      %s283 = sadd.s32 %s281, %s282
      %s284 = smul.addr %s283, 8
      %s285 = scalar_lea.vmem %s2, %s284
      %p286 = pneg %p111
      %p287 = pneg %p108
      %p288 = pneg %p132
      %p289 = pneg %p129
      %p290 = pneg %p153
      %p291 = pneg %p150
      %p292 = pneg %p181
      %p293 = pneg %p178
      %p294 = scmp.lt.s32.totalorder %s20, 1
      %s295 = scalar_select %p294, %s20, 1
      %p296 = scmp.lt.s32.totalorder %s21, 3
      %s297 = scalar_select %p296, %s21, 3
      %s298 = smul.addr %s297, 4
      %s299 = smul.addr %s295, 16
      %s300 = sadd.s32 %s298, %s299
      %s301 = smul.addr %s300, 4
      %s302 = scalar_lea.vmem %s5, %s301
      %p303 = scmp.lt.s32.totalorder %s20, 1
      %s304 = scalar_select %p303, %s20, 1
      %p305 = scmp.lt.s32.totalorder %s21, 5
      %s306 = scalar_select %p305, %s21, 5
      %s307 = smul.addr %s306, 6
      %s308 = smul.addr %s304, 36
      %s309 = sadd.s32 %s307, %s308
      %s310 = smul.addr %s309, 8
      %s311 = scalar_lea.vmem %s0, %s310
      %s312 = sadd.s32 %s21, 1
      %p313 = scmp.lt.s32.totalorder %s20, 1
      %s314 = scalar_select %p313, %s20, 1
      %p315 = scmp.lt.s32.totalorder %s312, 5
      %s316 = scalar_select %p315, %s312, 5
      %s317 = smul.addr %s316, 6
      %s318 = smul.addr %s314, 36
      %s319 = sadd.s32 %s317, %s318
      %s320 = smul.addr %s319, 8
      %s321 = scalar_lea.vmem %s1, %s320
      %s322 = sadd.s32 %s21, 1
      %s323 = sadd.s32 %s21, 2
      %p324 = scmp.lt.s32.totalorder %s20, 1
      %s325 = scalar_select %p324, %s20, 1
      %p326 = scmp.lt.s32.totalorder %s323, 5
      %s327 = scalar_select %p326, %s323, 5
      %s328 = smul.addr %s327, 6
      %s329 = smul.addr %s325, 36
      %s330 = sadd.s32 %s328, %s329
      %s331 = smul.addr %s330, 8
      %s332 = scalar_lea.vmem %s2, %s331
      %s333 = sadd.s32 %s21, 2
      %p334 = scmp.lt.s32.totalorder %s20, 1
      %s335 = scalar_select %p334, %s20, 1
      %p336 = scmp.lt.s32.totalorder %s21, 3
      %s337 = scalar_select %p336, %s21, 3
      %s338 = smul.addr %s337, 4
      %s339 = smul.addr %s335, 16
      %s340 = sadd.s32 %s338, %s339
      %s341 = smul.addr %s340, 4
      %s342 = scalar_lea.vmem %s5, %s341
      %v343 = vld [vmem:[%s311] sm:$0x3f]
      %v344 = vld [vmem:[%s311 + $0x8] sm:$0x3f]
      %v345 = vld [vmem:[%s311 + $0x10] sm:$0x3f]
      %v346 = vld [vmem:[%s311 + $0x18] sm:$0x3f]
      %v347 = vld [vmem:[%s311 + $0x20] sm:$0x3f]
      %v348 = vld [vmem:[%s311 + $0x28] sm:$0x3f]
      %v349 = vld [vmem:[%s321] sm:$0x3f]
      %v350 = vld [vmem:[%s321 + $0x8] sm:$0x3f]
      %v351 = vld [vmem:[%s321 + $0x10] sm:$0x3f]
      %v352 = vld [vmem:[%s321 + $0x18] sm:$0x3f]
      %v353 = vld [vmem:[%s321 + $0x20] sm:$0x3f]
      %v354 = vld [vmem:[%s321 + $0x28] sm:$0x3f]
      %v355 = vld [vmem:[%s332] sm:$0x3f]
      %v356 = vld [vmem:[%s332 + $0x8] sm:$0x3f]
      %v357 = vld [vmem:[%s332 + $0x10] sm:$0x3f]
      %v358 = vld [vmem:[%s332 + $0x18] sm:$0x3f]
      %v359 = vld [vmem:[%s332 + $0x20] sm:$0x3f]
      %v360 = vld [vmem:[%s332 + $0x28] sm:$0x3f]
      %v361 = vld [vmem:[%s3] sm:$0x1]
      %v363 = vlaneseq
      %v364 = vshrl.u32 %v363, 7
      %v365 = vsub.s32 0, %v364
      %v366 = vrot.slane %v361, %v365
      %v368 = vmul.f32 %v343, %v366
      %v369 = vmul.f32 %v344, %v366
      %v370 = vmul.f32 %v345, %v366
      %v371 = vmul.f32 %v346, %v366
      %v372 = vadd.f32 %v368, 0.0
      %v373 = vadd.f32 %v369, 0.0
      %v374 = vadd.f32 %v370, 0.0
      %v375 = vadd.f32 %v371, 0.0
      %s376 = scalar_lea.vmem %s3, 1
      %v377 = vld [vmem:[%s376] sm:$0x1]
      %v379 = vlaneseq
      %v380 = vshrl.u32 %v379, 7
      %v381 = vsub.s32 0, %v380
      %v382 = vrot.slane %v377, %v381
      %v384 = vmul.f32 %v343, %v382
      %v385 = vmul.f32 %v344, %v382
      %v386 = vmul.f32 %v345, %v382
      %v387 = vmul.f32 %v346, %v382
      %v392 = vrot.slane %v384, 1
      %v393 = vrot.slane %v385, 1
      %v394 = vrot.slane %v386, 1
      %v395 = vrot.slane %v387, 1
      %v400 = vadd.f32 %v372, %v392
      %v401 = vadd.f32 %v373, %v393
      %v402 = vadd.f32 %v374, %v394
      %v403 = vadd.f32 %v375, %v395
      %s404 = scalar_lea.vmem %s3, 2
      %v405 = vld [vmem:[%s404] sm:$0x1]
      %v407 = vlaneseq
      %v408 = vshrl.u32 %v407, 7
      %v409 = vsub.s32 0, %v408
      %v410 = vrot.slane %v405, %v409
      %v412 = vmul.f32 %v343, %v410
      %v413 = vmul.f32 %v344, %v410
      %v414 = vmul.f32 %v345, %v410
      %v415 = vmul.f32 %v346, %v410
      %v420 = vrot.slane %v412, 2
      %v421 = vrot.slane %v413, 2
      %v422 = vrot.slane %v414, 2
      %v423 = vrot.slane %v415, 2
      %v428 = vadd.f32 %v400, %v420
      %v429 = vadd.f32 %v401, %v421
      %v430 = vadd.f32 %v402, %v422
      %v431 = vadd.f32 %v403, %v423
      %s432 = scalar_lea.vmem %s3, 3
      %v433 = vld [vmem:[%s432] sm:$0x1]
      %v435 = vlaneseq
      %v436 = vshrl.u32 %v435, 7
      %v437 = vsub.s32 0, %v436
      %v438 = vrot.slane %v433, %v437
      %v440 = vmul.f32 %v344, %v438
      %v441 = vmul.f32 %v345, %v438
      %v442 = vmul.f32 %v346, %v438
      %v443 = vmul.f32 %v347, %v438
      %v444 = vadd.f32 %v428, %v440
      %v445 = vadd.f32 %v429, %v441
      %v446 = vadd.f32 %v430, %v442
      %v447 = vadd.f32 %v431, %v443
      %s448 = scalar_lea.vmem %s3, 4
      %v449 = vld [vmem:[%s448] sm:$0x1]
      %v451 = vlaneseq
      %v452 = vshrl.u32 %v451, 7
      %v453 = vsub.s32 0, %v452
      %v454 = vrot.slane %v449, %v453
      %v456 = vmul.f32 %v344, %v454
      %v457 = vmul.f32 %v345, %v454
      %v458 = vmul.f32 %v346, %v454
      %v459 = vmul.f32 %v347, %v454
      %v464 = vrot.slane %v456, 1
      %v465 = vrot.slane %v457, 1
      %v466 = vrot.slane %v458, 1
      %v467 = vrot.slane %v459, 1
      %v472 = vadd.f32 %v444, %v464
      %v473 = vadd.f32 %v445, %v465
      %v474 = vadd.f32 %v446, %v466
      %v475 = vadd.f32 %v447, %v467
      %s476 = scalar_lea.vmem %s3, 5
      %v477 = vld [vmem:[%s476] sm:$0x1]
      %v479 = vlaneseq
      %v480 = vshrl.u32 %v479, 7
      %v481 = vsub.s32 0, %v480
      %v482 = vrot.slane %v477, %v481
      %v484 = vmul.f32 %v344, %v482
      %v485 = vmul.f32 %v345, %v482
      %v486 = vmul.f32 %v346, %v482
      %v487 = vmul.f32 %v347, %v482
      %v492 = vrot.slane %v484, 2
      %v493 = vrot.slane %v485, 2
      %v494 = vrot.slane %v486, 2
      %v495 = vrot.slane %v487, 2
      %v500 = vadd.f32 %v472, %v492
      %v501 = vadd.f32 %v473, %v493
      %v502 = vadd.f32 %v474, %v494
      %v503 = vadd.f32 %v475, %v495
      %s504 = scalar_lea.vmem %s3, 6
      %v505 = vld [vmem:[%s504] sm:$0x1]
      %v507 = vlaneseq
      %v508 = vshrl.u32 %v507, 7
      %v509 = vsub.s32 0, %v508
      %v510 = vrot.slane %v505, %v509
      %v512 = vmul.f32 %v345, %v510
      %v513 = vmul.f32 %v346, %v510
      %v514 = vmul.f32 %v347, %v510
      %v515 = vmul.f32 %v348, %v510
      %v516 = vadd.f32 %v500, %v512
      %v517 = vadd.f32 %v501, %v513
      %v518 = vadd.f32 %v502, %v514
      %v519 = vadd.f32 %v503, %v515
      %s520 = scalar_lea.vmem %s3, 7
      %v521 = vld [vmem:[%s520] sm:$0x1]
      %v523 = vlaneseq
      %v524 = vshrl.u32 %v523, 7
      %v525 = vsub.s32 0, %v524
      %v526 = vrot.slane %v521, %v525
      %v528 = vmul.f32 %v345, %v526
      %v529 = vmul.f32 %v346, %v526
      %v530 = vmul.f32 %v347, %v526
      %v531 = vmul.f32 %v348, %v526
      %v536 = vrot.slane %v528, 1
      %v537 = vrot.slane %v529, 1
      %v538 = vrot.slane %v530, 1
      %v539 = vrot.slane %v531, 1
      %v544 = vadd.f32 %v516, %v536
      %v545 = vadd.f32 %v517, %v537
      %v546 = vadd.f32 %v518, %v538
      %v547 = vadd.f32 %v519, %v539
      %s548 = scalar_lea.vmem %s3, 8
      %v549 = vld [vmem:[%s548] sm:$0x1]
      %v551 = vlaneseq
      %v552 = vshrl.u32 %v551, 7
      %v553 = vsub.s32 0, %v552
      %v554 = vrot.slane %v549, %v553
      %v556 = vmul.f32 %v345, %v554
      %v557 = vmul.f32 %v346, %v554
      %v558 = vmul.f32 %v347, %v554
      %v559 = vmul.f32 %v348, %v554
      %v564 = vrot.slane %v556, 2
      %v565 = vrot.slane %v557, 2
      %v566 = vrot.slane %v558, 2
      %v567 = vrot.slane %v559, 2
      %v572 = vadd.f32 %v544, %v564
      %v573 = vadd.f32 %v545, %v565
      %v574 = vadd.f32 %v546, %v566
      %v575 = vadd.f32 %v547, %v567
      %s576 = scalar_lea.vmem %s3, 9
      %v577 = vld [vmem:[%s576] sm:$0x1]
      %v579 = vlaneseq
      %v580 = vshrl.u32 %v579, 7
      %v581 = vsub.s32 0, %v580
      %v582 = vrot.slane %v577, %v581
      %v584 = vmul.f32 %v349, %v582
      %v585 = vmul.f32 %v350, %v582
      %v586 = vmul.f32 %v351, %v582
      %v587 = vmul.f32 %v352, %v582
      %v588 = vadd.f32 %v572, %v584
      %v589 = vadd.f32 %v573, %v585
      %v590 = vadd.f32 %v574, %v586
      %v591 = vadd.f32 %v575, %v587
      %s592 = scalar_lea.vmem %s3, 10
      %v593 = vld [vmem:[%s592] sm:$0x1]
      %v595 = vlaneseq
      %v596 = vshrl.u32 %v595, 7
      %v597 = vsub.s32 0, %v596
      %v598 = vrot.slane %v593, %v597
      %v600 = vmul.f32 %v349, %v598
      %v601 = vmul.f32 %v350, %v598
      %v602 = vmul.f32 %v351, %v598
      %v603 = vmul.f32 %v352, %v598
      %v608 = vrot.slane %v600, 1
      %v609 = vrot.slane %v601, 1
      %v610 = vrot.slane %v602, 1
      %v611 = vrot.slane %v603, 1
      %v616 = vadd.f32 %v588, %v608
      %v617 = vadd.f32 %v589, %v609
      %v618 = vadd.f32 %v590, %v610
      %v619 = vadd.f32 %v591, %v611
      %s620 = scalar_lea.vmem %s3, 11
      %v621 = vld [vmem:[%s620] sm:$0x1]
      %v623 = vlaneseq
      %v624 = vshrl.u32 %v623, 7
      %v625 = vsub.s32 0, %v624
      %v626 = vrot.slane %v621, %v625
      %v628 = vmul.f32 %v349, %v626
      %v629 = vmul.f32 %v350, %v626
      %v630 = vmul.f32 %v351, %v626
      %v631 = vmul.f32 %v352, %v626
      %v636 = vrot.slane %v628, 2
      %v637 = vrot.slane %v629, 2
      %v638 = vrot.slane %v630, 2
      %v639 = vrot.slane %v631, 2
      %v644 = vadd.f32 %v616, %v636
      %v645 = vadd.f32 %v617, %v637
      %v646 = vadd.f32 %v618, %v638
      %v647 = vadd.f32 %v619, %v639
      %s648 = scalar_lea.vmem %s3, 12
      %v649 = vld [vmem:[%s648] sm:$0x1]
      %v651 = vlaneseq
      %v652 = vshrl.u32 %v651, 7
      %v653 = vsub.s32 0, %v652
      %v654 = vrot.slane %v649, %v653
      %v656 = vmul.f32 %v350, %v654
      %v657 = vmul.f32 %v351, %v654
      %v658 = vmul.f32 %v352, %v654
      %v659 = vmul.f32 %v353, %v654
      %v660 = vadd.f32 %v644, %v656
      %v661 = vadd.f32 %v645, %v657
      %v662 = vadd.f32 %v646, %v658
      %v663 = vadd.f32 %v647, %v659
      %s664 = scalar_lea.vmem %s3, 13
      %v665 = vld [vmem:[%s664] sm:$0x1]
      %v667 = vlaneseq
      %v668 = vshrl.u32 %v667, 7
      %v669 = vsub.s32 0, %v668
      %v670 = vrot.slane %v665, %v669
      %v672 = vmul.f32 %v350, %v670
      %v673 = vmul.f32 %v351, %v670
      %v674 = vmul.f32 %v352, %v670
      %v675 = vmul.f32 %v353, %v670
      %v680 = vrot.slane %v672, 1
      %v681 = vrot.slane %v673, 1
      %v682 = vrot.slane %v674, 1
      %v683 = vrot.slane %v675, 1
      %v688 = vadd.f32 %v660, %v680
      %v689 = vadd.f32 %v661, %v681
      %v690 = vadd.f32 %v662, %v682
      %v691 = vadd.f32 %v663, %v683
      %s692 = scalar_lea.vmem %s3, 14
      %v693 = vld [vmem:[%s692] sm:$0x1]
      %v695 = vlaneseq
      %v696 = vshrl.u32 %v695, 7
      %v697 = vsub.s32 0, %v696
      %v698 = vrot.slane %v693, %v697
      %v700 = vmul.f32 %v350, %v698
      %v701 = vmul.f32 %v351, %v698
      %v702 = vmul.f32 %v352, %v698
      %v703 = vmul.f32 %v353, %v698
      %v708 = vrot.slane %v700, 2
      %v709 = vrot.slane %v701, 2
      %v710 = vrot.slane %v702, 2
      %v711 = vrot.slane %v703, 2
      %v716 = vadd.f32 %v688, %v708
      %v717 = vadd.f32 %v689, %v709
      %v718 = vadd.f32 %v690, %v710
      %v719 = vadd.f32 %v691, %v711
      %s720 = scalar_lea.vmem %s3, 15
      %v721 = vld [vmem:[%s720] sm:$0x1]
      %v723 = vlaneseq
      %v724 = vshrl.u32 %v723, 7
      %v725 = vsub.s32 0, %v724
      %v726 = vrot.slane %v721, %v725
      %v728 = vmul.f32 %v351, %v726
      %v729 = vmul.f32 %v352, %v726
      %v730 = vmul.f32 %v353, %v726
      %v731 = vmul.f32 %v354, %v726
      %v732 = vadd.f32 %v716, %v728
      %v733 = vadd.f32 %v717, %v729
      %v734 = vadd.f32 %v718, %v730
      %v735 = vadd.f32 %v719, %v731
      %s736 = scalar_lea.vmem %s3, 16
      %v737 = vld [vmem:[%s736] sm:$0x1]
      %v739 = vlaneseq
      %v740 = vshrl.u32 %v739, 7
      %v741 = vsub.s32 0, %v740
      %v742 = vrot.slane %v737, %v741
      %v744 = vmul.f32 %v351, %v742
      %v745 = vmul.f32 %v352, %v742
      %v746 = vmul.f32 %v353, %v742
      %v747 = vmul.f32 %v354, %v742
      %v752 = vrot.slane %v744, 1
      %v753 = vrot.slane %v745, 1
      %v754 = vrot.slane %v746, 1
      %v755 = vrot.slane %v747, 1
      %v760 = vadd.f32 %v732, %v752
      %v761 = vadd.f32 %v733, %v753
      %v762 = vadd.f32 %v734, %v754
      %v763 = vadd.f32 %v735, %v755
      %s764 = scalar_lea.vmem %s3, 17
      %v765 = vld [vmem:[%s764] sm:$0x1]
      %v767 = vlaneseq
      %v768 = vshrl.u32 %v767, 7
      %v769 = vsub.s32 0, %v768
      %v770 = vrot.slane %v765, %v769
      %v772 = vmul.f32 %v351, %v770
      %v773 = vmul.f32 %v352, %v770
      %v774 = vmul.f32 %v353, %v770
      %v775 = vmul.f32 %v354, %v770
      %v780 = vrot.slane %v772, 2
      %v781 = vrot.slane %v773, 2
      %v782 = vrot.slane %v774, 2
      %v783 = vrot.slane %v775, 2
      %v788 = vadd.f32 %v760, %v780
      %v789 = vadd.f32 %v761, %v781
      %v790 = vadd.f32 %v762, %v782
      %v791 = vadd.f32 %v763, %v783
      %s792 = scalar_lea.vmem %s3, 18
      %v793 = vld [vmem:[%s792] sm:$0x1]
      %v795 = vlaneseq
      %v796 = vshrl.u32 %v795, 7
      %v797 = vsub.s32 0, %v796
      %v798 = vrot.slane %v793, %v797
      %v800 = vmul.f32 %v355, %v798
      %v801 = vmul.f32 %v356, %v798
      %v802 = vmul.f32 %v357, %v798
      %v803 = vmul.f32 %v358, %v798
      %v804 = vadd.f32 %v788, %v800
      %v805 = vadd.f32 %v789, %v801
      %v806 = vadd.f32 %v790, %v802
      %v807 = vadd.f32 %v791, %v803
      %s808 = scalar_lea.vmem %s3, 19
      %v809 = vld [vmem:[%s808] sm:$0x1]
      %v811 = vlaneseq
      %v812 = vshrl.u32 %v811, 7
      %v813 = vsub.s32 0, %v812
      %v814 = vrot.slane %v809, %v813
      %v816 = vmul.f32 %v355, %v814
      %v817 = vmul.f32 %v356, %v814
      %v818 = vmul.f32 %v357, %v814
      %v819 = vmul.f32 %v358, %v814
      %v824 = vrot.slane %v816, 1
      %v825 = vrot.slane %v817, 1
      %v826 = vrot.slane %v818, 1
      %v827 = vrot.slane %v819, 1
      %v832 = vadd.f32 %v804, %v824
      %v833 = vadd.f32 %v805, %v825
      %v834 = vadd.f32 %v806, %v826
      %v835 = vadd.f32 %v807, %v827
      %s836 = scalar_lea.vmem %s3, 20
      %v837 = vld [vmem:[%s836] sm:$0x1]
      %v839 = vlaneseq
      %v840 = vshrl.u32 %v839, 7
      %v841 = vsub.s32 0, %v840
      %v842 = vrot.slane %v837, %v841
      %v844 = vmul.f32 %v355, %v842
      %v845 = vmul.f32 %v356, %v842
      %v846 = vmul.f32 %v357, %v842
      %v847 = vmul.f32 %v358, %v842
      %v852 = vrot.slane %v844, 2
      %v853 = vrot.slane %v845, 2
      %v854 = vrot.slane %v846, 2
      %v855 = vrot.slane %v847, 2
      %v860 = vadd.f32 %v832, %v852
      %v861 = vadd.f32 %v833, %v853
      %v862 = vadd.f32 %v834, %v854
      %v863 = vadd.f32 %v835, %v855
      %s864 = scalar_lea.vmem %s3, 21
      %v865 = vld [vmem:[%s864] sm:$0x1]
      %v867 = vlaneseq
      %v868 = vshrl.u32 %v867, 7
      %v869 = vsub.s32 0, %v868
      %v870 = vrot.slane %v865, %v869
      %v872 = vmul.f32 %v356, %v870
      %v873 = vmul.f32 %v357, %v870
      %v874 = vmul.f32 %v358, %v870
      %v875 = vmul.f32 %v359, %v870
      %v876 = vadd.f32 %v860, %v872
      %v877 = vadd.f32 %v861, %v873
      %v878 = vadd.f32 %v862, %v874
      %v879 = vadd.f32 %v863, %v875
      %s880 = scalar_lea.vmem %s3, 22
      %v881 = vld [vmem:[%s880] sm:$0x1]
      %v883 = vlaneseq
      %v884 = vshrl.u32 %v883, 7
      %v885 = vsub.s32 0, %v884
      %v886 = vrot.slane %v881, %v885
      %v888 = vmul.f32 %v356, %v886
      %v889 = vmul.f32 %v357, %v886
      %v890 = vmul.f32 %v358, %v886
      %v891 = vmul.f32 %v359, %v886
      %v896 = vrot.slane %v888, 1
      %v897 = vrot.slane %v889, 1
      %v898 = vrot.slane %v890, 1
      %v899 = vrot.slane %v891, 1
      %v904 = vadd.f32 %v876, %v896
      %v905 = vadd.f32 %v877, %v897
      %v906 = vadd.f32 %v878, %v898
      %v907 = vadd.f32 %v879, %v899
      %s908 = scalar_lea.vmem %s3, 23
      %v909 = vld [vmem:[%s908] sm:$0x1]
      %v911 = vlaneseq
      %v912 = vshrl.u32 %v911, 7
      %v913 = vsub.s32 0, %v912
      %v914 = vrot.slane %v909, %v913
      %v916 = vmul.f32 %v356, %v914
      %v917 = vmul.f32 %v357, %v914
      %v918 = vmul.f32 %v358, %v914
      %v919 = vmul.f32 %v359, %v914
      %v924 = vrot.slane %v916, 2
      %v925 = vrot.slane %v917, 2
      %v926 = vrot.slane %v918, 2
      %v927 = vrot.slane %v919, 2
      %v932 = vadd.f32 %v904, %v924
      %v933 = vadd.f32 %v905, %v925
      %v934 = vadd.f32 %v906, %v926
      %v935 = vadd.f32 %v907, %v927
      %s936 = scalar_lea.vmem %s3, 24
      %v937 = vld [vmem:[%s936] sm:$0x1]
      %v939 = vlaneseq
      %v940 = vshrl.u32 %v939, 7
      %v941 = vsub.s32 0, %v940
      %v942 = vrot.slane %v937, %v941
      %v944 = vmul.f32 %v357, %v942
      %v945 = vmul.f32 %v358, %v942
      %v946 = vmul.f32 %v359, %v942
      %v947 = vmul.f32 %v360, %v942
      %v948 = vadd.f32 %v932, %v944
      %v949 = vadd.f32 %v933, %v945
      %v950 = vadd.f32 %v934, %v946
      %v951 = vadd.f32 %v935, %v947
      %s952 = scalar_lea.vmem %s3, 25
      %v953 = vld [vmem:[%s952] sm:$0x1]
      %v955 = vlaneseq
      %v956 = vshrl.u32 %v955, 7
      %v957 = vsub.s32 0, %v956
      %v958 = vrot.slane %v953, %v957
      %v960 = vmul.f32 %v357, %v958
      %v961 = vmul.f32 %v358, %v958
      %v962 = vmul.f32 %v359, %v958
      %v963 = vmul.f32 %v360, %v958
      %v968 = vrot.slane %v960, 1
      %v969 = vrot.slane %v961, 1
      %v970 = vrot.slane %v962, 1
      %v971 = vrot.slane %v963, 1
      %v976 = vadd.f32 %v948, %v968
      %v977 = vadd.f32 %v949, %v969
      %v978 = vadd.f32 %v950, %v970
      %v979 = vadd.f32 %v951, %v971
      %s980 = scalar_lea.vmem %s3, 26
      %v981 = vld [vmem:[%s980] sm:$0x1]
      %v983 = vlaneseq
      %v984 = vshrl.u32 %v983, 7
      %v985 = vsub.s32 0, %v984
      %v986 = vrot.slane %v981, %v985
      %v988 = vmul.f32 %v357, %v986
      %v989 = vmul.f32 %v358, %v986
      %v990 = vmul.f32 %v359, %v986
      %v991 = vmul.f32 %v360, %v986
      %v996 = vrot.slane %v988, 2
      %v997 = vrot.slane %v989, 2
      %v998 = vrot.slane %v990, 2
      %v999 = vrot.slane %v991, 2
      %v1004 = vadd.f32 %v976, %v996
      %v1005 = vadd.f32 %v977, %v997
      %v1006 = vadd.f32 %v978, %v998
      %v1007 = vadd.f32 %v979, %v999
      %v1008 = vld [vmem:[%s4] sm:$0x1]
      %v1010 = vlaneseq
      %v1011 = vshrl.u32 %v1010, 7
      %v1012 = vsub.s32 0, %v1011
      %v1013 = vrot.slane %v1008, %v1012
      %v1015 = vadd.f32 %v1004, %v1013
      %v1016 = vadd.f32 %v1005, %v1013
      %v1017 = vadd.f32 %v1006, %v1013
      %v1018 = vadd.f32 %v1007, %v1013
      %v1019 = vxor.u32 %v1015, 2147483648
      %v1020 = vxor.u32 %v1016, 2147483648
      %v1021 = vxor.u32 %v1017, 2147483648
      %v1022 = vxor.u32 %v1018, 2147483648
      %v1023 = vmul.f32 %v1019, 1.442695
      %v1024 = vpow.pop %v1023
      %v1025 = vmul.f32 %v1020, 1.442695
      %v1026 = vpow.pop %v1025
      %v1027 = vmul.f32 %v1021, 1.442695
      %v1028 = vpow.pop %v1027
      %v1029 = vmul.f32 %v1022, 1.442695
      %v1030 = vpow.pop %v1029
      %v1031 = vadd.f32 %v1024, 1.0
      %v1032 = vadd.f32 %v1026, 1.0
      %v1033 = vadd.f32 %v1028, 1.0
      %v1034 = vadd.f32 %v1030, 1.0
      %v1035 = vrcp.pop %v1031
      %v1036 = vmul.f32 1.0, %v1035
      %v1037 = vrcp.pop %v1032
      %v1038 = vmul.f32 1.0, %v1037
      %v1039 = vrcp.pop %v1033
      %v1040 = vmul.f32 1.0, %v1039
      %v1041 = vrcp.pop %v1034
      %v1042 = vmul.f32 1.0, %v1041
      %v1043 = vmul.f32 %v1015, %v1036
      %v1044 = vmul.f32 %v1016, %v1038
      %v1045 = vmul.f32 %v1017, %v1040
      %v1046 = vmul.f32 %v1018, %v1042
      %vm1047 = vcmask 257024
      %1048 = vst.msk [vmem:[%s342] sm:$0xf] %vm1047, %v1043
      %1049 = vst.msk [vmem:[%s342 + $0x4] sm:$0xf] %vm1047, %v1044
      %1050 = vst.msk [vmem:[%s342 + $0x8] sm:$0xf] %vm1047, %v1045
      %1051 = vst.msk [vmem:[%s342 + $0xc] sm:$0xf] %vm1047, %v1046
      %p1052 = scmp.lt.s32.totalorder %s20, 1
      %s1053 = scalar_select %p1052, %s20, 1
      %p1054 = scmp.lt.s32.totalorder %s21, 3
      %s1055 = scalar_select %p1054, %s21, 3
      %s1056 = smul.addr %s1055, 4
      %s1057 = smul.addr %s1053, 16
      %s1058 = sadd.s32 %s1056, %s1057
      %s1059 = smul.addr %s1058, 4
      %s1060 = scalar_lea.vmem %s5, %s1059
      // Predicated region
      $region41: #{forward.9} parent=39 // pred_check
        %p1061 = pneg %p178
      $region42: #{forward.9} parent=39 // pred_check_branch
        %1063 = sbr.rel (%p1061) target = $region44
      $region43: #{forward.9} parent=39 // pred_region
        _
      $region44: #{forward.9} parent=39 // pred_fallthru
        _
    $region40: #{forward.9} parent=5 // pred_fallthru
      _
    %p1064 = scmp.le.s32.totalorder 2, %s11
    // Predicated region
    $region45: #{forward.9} parent=5 // pred_check
      %p1065 = pneg %p1064
    $region46: #{forward.9} parent=5 // pred_check_branch
      %1067 = sbr.rel (%p1065) target = $region48
    $region47: #{forward.9} parent=5 // pred_region
      %s1068 = ssub.s32 %s11, 2
      // Predicated region
      $region49: #{forward.9} parent=47 // pred_check
        %p1069 = pneg %p184
      $region50: #{forward.9} parent=47 // pred_check_branch
        %1071 = sbr.rel (%p1069) target = $region52
      $region51: #{forward.9} parent=47 // pred_region
        %p1072 = scmp.lt.s32.totalorder %s22, 1
        %s1073 = scalar_select %p1072, %s22, 1
        %p1074 = scmp.lt.s32.totalorder %s23, 3
        %s1075 = scalar_select %p1074, %s23, 3
        %s1076 = smul.addr %s1075, 4
        %s1077 = smul.addr %s1073, 16
        %s1078 = sadd.s32 %s1076, %s1077
        %s1079 = smul.addr %s1078, 4
        %s1080 = scalar_lea.vmem %s5, %s1079
      $region52: #{forward.9} parent=47 // pred_fallthru
        _
    $region48: #{forward.9} parent=5 // pred_fallthru
      _
  $region6: #{forward.9} parent=0 // loop_footer
    %s15 = sadd.s32 1, %s11
  $region7: #{forward.9} parent=0 // loop_footer_branch
    %10 = sbr.rel target = $region3
  $region8: #{forward.9} parent=0 // loop_exit
    _

// kernel: forward.8
$region0: #{forward.8}
  #allocation0 [shape = 'u32[]', space=smem, size = 0x4, offset = 0x4, fixed_abs, tag = 'smem constant byte address 0x4 - core index']
  #allocation1 [shape = 'u32[144,128]{1,0:T(1,128)}', space=vmem, size = 0x12000, scoped, tag = 'internal scratch']
  %s0 = inlined_call_operand.hbm [shape: f32[128,16], index: 0, kind: input, shape index: {}]
  %s1 = inlined_call_operand.vmem [shape: f32[1,16], index: 1, kind: input, shape index: {}]
  %s2 = inlined_call_operand.vmem [shape: f32[1,16], index: 2, kind: input, shape index: {}]
  %s3 = inlined_call_operand.vmem [shape: f32[16,64], index: 3, kind: input, shape index: {}]
  %s4 = inlined_call_operand.vmem [shape: f32[128,32], index: 4, kind: output, shape index: {0}]
  %s5 = inlined_call_operand.vmem [shape: f32[128,32], index: 5, kind: output, shape index: {1}]
  %6 = xla_tuple %s4, %s5
  %s7 = sld [smem:[#allocation0]]
  $region38: #{forward.8} parent=0
    _
  %s9 = ssub.s32 1, %s7
  %s10 = scalar_select 0, %s9, %s7
  $region1: #{forward.8} parent=0
    #allocation2 [shape = 'u8[65536]{0}', space=vmem, size = 0x10000, scoped, tag = 'input window, operand 0, single buffered']
    #allocation3 [shape = 's32[1]{0}', space=sflag, size = 0x4, scoped, tag = 'scoped memory for forward.8']
    %11 = vsyncpa [#allocation3], 0
    // Predicated region
    $region2: #{forward.8} parent=1 // pred_check
      _
    $region3: #{forward.8} parent=1 // pred_check_branch
      %13 = sbr.rel (0) target = $region5
    $region4: #{forward.8} parent=1 // pred_region
      %s15 = ssub.s32 2048, 2048
      %16 = vsyncadd [#allocation3], %s15
      %s17 = sshll.u32 [#allocation2], 4
      %s18 = int_to_ptr.vmem [resolvable:$true] %s17
      %23 = dma.hbm_to_vmem [thread:$0]  %s0, 2048, %s18, [#allocation3], 128, 128, 8
    $region5: #{forward.8} parent=1 // pred_fallthru
      _
    // Predicated region
    $region6: #{forward.8} parent=1 // pred_check
      _
    $region7: #{forward.8} parent=1 // pred_check_branch
      %25 = sbr.rel (0) target = $region9
    $region8: #{forward.8} parent=1 // pred_region
      _
    $region9: #{forward.8} parent=1 // pred_fallthru
      _
    // Predicated region
    $region10: #{forward.8} parent=1 // pred_check
      _
    $region11: #{forward.8} parent=1 // pred_check_branch
      %27 = sbr.rel (0) target = $region13
    $region12: #{forward.8} parent=1 // pred_region
      _
    $region13: #{forward.8} parent=1 // pred_fallthru
      _
    // Predicated region
    $region14: #{forward.8} parent=1 // pred_check
      _
    $region15: #{forward.8} parent=1 // pred_check_branch
      %29 = sbr.rel (0) target = $region17
    $region16: #{forward.8} parent=1 // pred_region
      _
    $region17: #{forward.8} parent=1 // pred_fallthru
      _
    // Predicated region
    $region18: #{forward.8} parent=1 // pred_check
      _
    $region19: #{forward.8} parent=1 // pred_check_branch
      %31 = sbr.rel (0) target = $region21
    $region20: #{forward.8} parent=1 // pred_region
      %32 = dma.done [#allocation3], 2048
    $region21: #{forward.8} parent=1 // pred_fallthru
      _
    %v33 = vld [vmem:[#allocation2] sm:$0xff]
    %v34 = vld [vmem:[#allocation2 + $0x8] sm:$0xff]
    %v35 = vld [vmem:[#allocation2 + $0x10] sm:$0xff]
    %v36 = vld [vmem:[#allocation2 + $0x18] sm:$0xff]
    %v37 = vld [vmem:[#allocation2 + $0x20] sm:$0xff]
    %v38 = vld [vmem:[#allocation2 + $0x28] sm:$0xff]
    %v39 = vld [vmem:[#allocation2 + $0x30] sm:$0xff]
    %v40 = vld [vmem:[#allocation2 + $0x38] sm:$0xff]
    %v41 = vld [vmem:[#allocation2 + $0x40] sm:$0xff]
    %v42 = vld [vmem:[#allocation2 + $0x48] sm:$0xff]
    %v43 = vld [vmem:[#allocation2 + $0x50] sm:$0xff]
    %v44 = vld [vmem:[#allocation2 + $0x58] sm:$0xff]
    %v45 = vld [vmem:[#allocation2 + $0x60] sm:$0xff]
    %v46 = vld [vmem:[#allocation2 + $0x68] sm:$0xff]
    %v47 = vld [vmem:[#allocation2 + $0x70] sm:$0xff]
    %v48 = vld [vmem:[#allocation2 + $0x78] sm:$0xff]
    %vm49 = vcmask 130048
    %v50 = vsel %vm49, %v33, 0.0
    %51 = vadd.xlane.f32.xlu0 %v50
    %v52 = vpop.xlane.xlu0 %51
    %v53 = vsel %vm49, %v34, 0.0
    %54 = vadd.xlane.f32.xlu0 %v53
    %v55 = vpop.xlane.xlu0 %54
    %v56 = vsel %vm49, %v35, 0.0
    %57 = vadd.xlane.f32.xlu0 %v56
    %v58 = vpop.xlane.xlu0 %57
    %v59 = vsel %vm49, %v36, 0.0
    %60 = vadd.xlane.f32.xlu0 %v59
    %v61 = vpop.xlane.xlu0 %60
    %v62 = vsel %vm49, %v37, 0.0
    %63 = vadd.xlane.f32.xlu0 %v62
    %v64 = vpop.xlane.xlu0 %63
    %v65 = vsel %vm49, %v38, 0.0
    %66 = vadd.xlane.f32.xlu0 %v65
    %v67 = vpop.xlane.xlu0 %66
    %v68 = vsel %vm49, %v39, 0.0
    %69 = vadd.xlane.f32.xlu0 %v68
    %v70 = vpop.xlane.xlu0 %69
    %v71 = vsel %vm49, %v40, 0.0
    %72 = vadd.xlane.f32.xlu0 %v71
    %v73 = vpop.xlane.xlu0 %72
    %v74 = vsel %vm49, %v41, 0.0
    %75 = vadd.xlane.f32.xlu0 %v74
    %v76 = vpop.xlane.xlu0 %75
    %v77 = vsel %vm49, %v42, 0.0
    %78 = vadd.xlane.f32.xlu0 %v77
    %v79 = vpop.xlane.xlu0 %78
    %v80 = vsel %vm49, %v43, 0.0
    %81 = vadd.xlane.f32.xlu0 %v80
    %v82 = vpop.xlane.xlu0 %81
    %v83 = vsel %vm49, %v44, 0.0
    %84 = vadd.xlane.f32.xlu0 %v83
    %v85 = vpop.xlane.xlu0 %84
    %v86 = vsel %vm49, %v45, 0.0
    %87 = vadd.xlane.f32.xlu0 %v86
    %v88 = vpop.xlane.xlu0 %87
    %v89 = vsel %vm49, %v46, 0.0
    %90 = vadd.xlane.f32.xlu0 %v89
    %v91 = vpop.xlane.xlu0 %90
    %v92 = vsel %vm49, %v47, 0.0
    %93 = vadd.xlane.f32.xlu0 %v92
    %v94 = vpop.xlane.xlu0 %93
    %v95 = vsel %vm49, %v48, 0.0
    %96 = vadd.xlane.f32.xlu0 %v95
    %v97 = vpop.xlane.xlu0 %96
    %v98 = vrcp.pop 16.0
    %v99 = vmul.f32 %v52, %v98
    %v100 = vmul.f32 %v55, %v98
    %v101 = vmul.f32 %v58, %v98
    %v102 = vmul.f32 %v61, %v98
    %v103 = vmul.f32 %v64, %v98
    %v104 = vmul.f32 %v67, %v98
    %v105 = vmul.f32 %v70, %v98
    %v106 = vmul.f32 %v73, %v98
    %v107 = vmul.f32 %v76, %v98
    %v108 = vmul.f32 %v79, %v98
    %v109 = vmul.f32 %v82, %v98
    %v110 = vmul.f32 %v85, %v98
    %v111 = vmul.f32 %v88, %v98
    %v112 = vmul.f32 %v91, %v98
    %v113 = vmul.f32 %v94, %v98
    %v114 = vmul.f32 %v97, %v98
    %v115 = vsub.f32 %v33, %v99
    %v116 = vsub.f32 %v34, %v100
    %v117 = vsub.f32 %v35, %v101
    %v118 = vsub.f32 %v36, %v102
    %v119 = vsub.f32 %v37, %v103
    %v120 = vsub.f32 %v38, %v104
    %v121 = vsub.f32 %v39, %v105
    %v122 = vsub.f32 %v40, %v106
    %v123 = vsub.f32 %v41, %v107
    %v124 = vsub.f32 %v42, %v108
    %v125 = vsub.f32 %v43, %v109
    %v126 = vsub.f32 %v44, %v110
    %v127 = vsub.f32 %v45, %v111
    %v128 = vsub.f32 %v46, %v112
    %v129 = vsub.f32 %v47, %v113
    %v130 = vsub.f32 %v48, %v114
    %v131 = vmul.f32 %v115, %v115
    %v132 = vmul.f32 %v116, %v116
    %v133 = vmul.f32 %v117, %v117
    %v134 = vmul.f32 %v118, %v118
    %v135 = vmul.f32 %v119, %v119
    %v136 = vmul.f32 %v120, %v120
    %v137 = vmul.f32 %v121, %v121
    %v138 = vmul.f32 %v122, %v122
    %v139 = vmul.f32 %v123, %v123
    %v140 = vmul.f32 %v124, %v124
    %v141 = vmul.f32 %v125, %v125
    %v142 = vmul.f32 %v126, %v126
    %v143 = vmul.f32 %v127, %v127
    %v144 = vmul.f32 %v128, %v128
    %v145 = vmul.f32 %v129, %v129
    %v146 = vmul.f32 %v130, %v130
    %v147 = vsel %vm49, %v131, 0.0
    %148 = vadd.xlane.f32.xlu0 %v147
    %v149 = vpop.xlane.xlu0 %148
    %v150 = vsel %vm49, %v132, 0.0
    %151 = vadd.xlane.f32.xlu0 %v150
    %v152 = vpop.xlane.xlu0 %151
    %v153 = vsel %vm49, %v133, 0.0
    %154 = vadd.xlane.f32.xlu0 %v153
    %v155 = vpop.xlane.xlu0 %154
    %v156 = vsel %vm49, %v134, 0.0
    %157 = vadd.xlane.f32.xlu0 %v156
    %v158 = vpop.xlane.xlu0 %157
    %v159 = vsel %vm49, %v135, 0.0
    %160 = vadd.xlane.f32.xlu0 %v159
    %v161 = vpop.xlane.xlu0 %160
    %v162 = vsel %vm49, %v136, 0.0
    %163 = vadd.xlane.f32.xlu0 %v162
    %v164 = vpop.xlane.xlu0 %163
    %v165 = vsel %vm49, %v137, 0.0
    %166 = vadd.xlane.f32.xlu0 %v165
    %v167 = vpop.xlane.xlu0 %166
    %v168 = vsel %vm49, %v138, 0.0
    %169 = vadd.xlane.f32.xlu0 %v168
    %v170 = vpop.xlane.xlu0 %169
    %v171 = vsel %vm49, %v139, 0.0
    %172 = vadd.xlane.f32.xlu0 %v171
    %v173 = vpop.xlane.xlu0 %172
    %v174 = vsel %vm49, %v140, 0.0
    %175 = vadd.xlane.f32.xlu0 %v174
    %v176 = vpop.xlane.xlu0 %175
    %v177 = vsel %vm49, %v141, 0.0
    %178 = vadd.xlane.f32.xlu0 %v177
    %v179 = vpop.xlane.xlu0 %178
    %v180 = vsel %vm49, %v142, 0.0
    %181 = vadd.xlane.f32.xlu0 %v180
    %v182 = vpop.xlane.xlu0 %181
    %v183 = vsel %vm49, %v143, 0.0
    %184 = vadd.xlane.f32.xlu0 %v183
    %v185 = vpop.xlane.xlu0 %184
    %v186 = vsel %vm49, %v144, 0.0
    %187 = vadd.xlane.f32.xlu0 %v186
    %v188 = vpop.xlane.xlu0 %187
    %v189 = vsel %vm49, %v145, 0.0
    %190 = vadd.xlane.f32.xlu0 %v189
    %v191 = vpop.xlane.xlu0 %190
    %v192 = vsel %vm49, %v146, 0.0
    %193 = vadd.xlane.f32.xlu0 %v192
    %v194 = vpop.xlane.xlu0 %193
    %v195 = vmul.f32 %v149, %v98
    %v196 = vmul.f32 %v152, %v98
    %v197 = vmul.f32 %v155, %v98
    %v198 = vmul.f32 %v158, %v98
    %v199 = vmul.f32 %v161, %v98
    %v200 = vmul.f32 %v164, %v98
    %v201 = vmul.f32 %v167, %v98
    %v202 = vmul.f32 %v170, %v98
    %v203 = vmul.f32 %v173, %v98
    %v204 = vmul.f32 %v176, %v98
    %v205 = vmul.f32 %v179, %v98
    %v206 = vmul.f32 %v182, %v98
    %v207 = vmul.f32 %v185, %v98
    %v208 = vmul.f32 %v188, %v98
    %v209 = vmul.f32 %v191, %v98
    %v210 = vmul.f32 %v194, %v98
    %v211 = vadd.f32 %v195, 1e-05
    %v212 = vadd.f32 %v196, 1e-05
    %v213 = vadd.f32 %v197, 1e-05
    %v214 = vadd.f32 %v198, 1e-05
    %v215 = vadd.f32 %v199, 1e-05
    %v216 = vadd.f32 %v200, 1e-05
    %v217 = vadd.f32 %v201, 1e-05
    %v218 = vadd.f32 %v202, 1e-05
    %v219 = vadd.f32 %v203, 1e-05
    %v220 = vadd.f32 %v204, 1e-05
    %v221 = vadd.f32 %v205, 1e-05
    %v222 = vadd.f32 %v206, 1e-05
    %v223 = vadd.f32 %v207, 1e-05
    %v224 = vadd.f32 %v208, 1e-05
    %v225 = vadd.f32 %v209, 1e-05
    %v226 = vadd.f32 %v210, 1e-05
    %v227 = vrsqrt.pop %v211
    %v228 = vrsqrt.pop %v212
    %v229 = vrsqrt.pop %v213
    %v230 = vrsqrt.pop %v214
    %v231 = vrsqrt.pop %v215
    %v232 = vrsqrt.pop %v216
    %v233 = vrsqrt.pop %v217
    %v234 = vrsqrt.pop %v218
    %v235 = vrsqrt.pop %v219
    %v236 = vrsqrt.pop %v220
    %v237 = vrsqrt.pop %v221
    %v238 = vrsqrt.pop %v222
    %v239 = vrsqrt.pop %v223
    %v240 = vrsqrt.pop %v224
    %v241 = vrsqrt.pop %v225
    %v242 = vrsqrt.pop %v226
    %v243 = vmul.f32 %v115, %v227
    %v244 = vmul.f32 %v116, %v228
    %v245 = vmul.f32 %v117, %v229
    %v246 = vmul.f32 %v118, %v230
    %v247 = vmul.f32 %v119, %v231
    %v248 = vmul.f32 %v120, %v232
    %v249 = vmul.f32 %v121, %v233
    %v250 = vmul.f32 %v122, %v234
    %v251 = vmul.f32 %v123, %v235
    %v252 = vmul.f32 %v124, %v236
    %v253 = vmul.f32 %v125, %v237
    %v254 = vmul.f32 %v126, %v238
    %v255 = vmul.f32 %v127, %v239
    %v256 = vmul.f32 %v128, %v240
    %v257 = vmul.f32 %v129, %v241
    %v258 = vmul.f32 %v130, %v242
    %v259 = vld [vmem:[%s1] sm:$0x1]
    %v261 = vlaneseq
    %v262 = vshrl.u32 %v261, 7
    %v263 = vsub.s32 0, %v262
    %v264 = vrot.slane %v259, %v263
    %v266 = vmul.f32 %v243, %v264
    %v267 = vmul.f32 %v244, %v264
    %v268 = vmul.f32 %v245, %v264
    %v269 = vmul.f32 %v246, %v264
    %v270 = vmul.f32 %v247, %v264
    %v271 = vmul.f32 %v248, %v264
    %v272 = vmul.f32 %v249, %v264
    %v273 = vmul.f32 %v250, %v264
    %v274 = vmul.f32 %v251, %v264
    %v275 = vmul.f32 %v252, %v264
    %v276 = vmul.f32 %v253, %v264
    %v277 = vmul.f32 %v254, %v264
    %v278 = vmul.f32 %v255, %v264
    %v279 = vmul.f32 %v256, %v264
    %v280 = vmul.f32 %v257, %v264
    %v281 = vmul.f32 %v258, %v264
    %v282 = vld [vmem:[%s2] sm:$0x1]
    %v284 = vlaneseq
    %v285 = vshrl.u32 %v284, 7
    %v286 = vsub.s32 0, %v285
    %v287 = vrot.slane %v282, %v286
    %v289 = vadd.f32 %v266, %v287
    %v290 = vadd.f32 %v267, %v287
    %v291 = vadd.f32 %v268, %v287
    %v292 = vadd.f32 %v269, %v287
    %v293 = vadd.f32 %v270, %v287
    %v294 = vadd.f32 %v271, %v287
    %v295 = vadd.f32 %v272, %v287
    %v296 = vadd.f32 %v273, %v287
    %v297 = vadd.f32 %v274, %v287
    %v298 = vadd.f32 %v275, %v287
    %v299 = vadd.f32 %v276, %v287
    %v300 = vadd.f32 %v277, %v287
    %v301 = vadd.f32 %v278, %v287
    %v302 = vadd.f32 %v279, %v287
    %v303 = vadd.f32 %v280, %v287
    %v304 = vadd.f32 %v281, %v287
    %v305 = vld [vmem:[%s3] sm:$0xff]
    %v306 = vld [vmem:[%s3 + $0x8] sm:$0xff]
    %v308 = vsel %vm49, %v289, 0
    %v311 = vsel %vm49, %v290, 0
    %v314 = vsel %vm49, %v291, 0
    %v317 = vsel %vm49, %v292, 0
    %v320 = vsel %vm49, %v293, 0
    %v323 = vsel %vm49, %v294, 0
    %v326 = vsel %vm49, %v295, 0
    %v329 = vsel %vm49, %v296, 0
    %v332 = vsel %vm49, %v297, 0
    %v335 = vsel %vm49, %v298, 0
    %v338 = vsel %vm49, %v299, 0
    %v341 = vsel %vm49, %v300, 0
    %v344 = vsel %vm49, %v301, 0
    %v347 = vsel %vm49, %v302, 0
    %v350 = vsel %vm49, %v303, 0
    %v353 = vsel %vm49, %v304, 0
    %355 = vmatprep.subr.mxu0 0.0
    %356 = vmatpush1.msra.mxu0 0.0
    %357 = vmatprep.subr.mxu0 0.0
    %358 = vmatpush1.msra.mxu0 0.0
    %359 = vmatprep.subr.mxu0 0.0
    %360 = vmatpush1.msra.mxu0 0.0
    %361 = vmatprep.subr.mxu0 0.0
    %362 = vmatpush1.msra.mxu0 0.0
    %363 = vmatprep.subr.mxu0 0.0
    %364 = vmatpush1.msra.mxu0 0.0
    %365 = vmatprep.subr.mxu0 0.0
    %366 = vmatpush1.msra.mxu0 0.0
    %367 = vmatprep.subr.mxu0 0.0
    %368 = vmatpush1.msra.mxu0 0.0
    %369 = vmatprep.subr.mxu0 0.0
    %370 = vmatpush1.msra.mxu0 0.0
    %371 = vmatprep.subr.mxu0 0.0
    %372 = vmatpush1.msra.mxu0 0.0
    %373 = vmatprep.subr.mxu0 0.0
    %374 = vmatpush1.msra.mxu0 0.0
    %375 = vmatprep.subr.mxu0 0.0
    %376 = vmatpush1.msra.mxu0 0.0
    %377 = vmatprep.subr.mxu0 0.0
    %378 = vmatpush1.msra.mxu0 0.0
    %379 = vmatprep.subr.mxu0 0.0
    %380 = vmatpush1.msra.mxu0 0.0
    %381 = vmatprep.subr.mxu0 0.0
    %382 = vmatpush1.msra.mxu0 0.0
    %383 = vmatprep.subr.mxu0 0.0
    %384 = vmatpush1.msra.mxu0 %v306
    %385 = vmatprep.subr.mxu0 0.0
    %386 = vmatpush1.msra.mxu0 %v305
    %387 = vmatprep.subr.mxu0 0.0
    %388 = vmatpush2.msra.mxu0 0.0
    %389 = vmatprep.subr.mxu0 0.0
    %390 = vmatpush2.msra.mxu0 0.0
    %391 = vmatprep.subr.mxu0 0.0
    %392 = vmatpush2.msra.mxu0 0.0
    %393 = vmatprep.subr.mxu0 0.0
    %394 = vmatpush2.msra.mxu0 0.0
    %395 = vmatprep.subr.mxu0 0.0
    %396 = vmatpush2.msra.mxu0 0.0
    %397 = vmatprep.subr.mxu0 0.0
    %398 = vmatpush2.msra.mxu0 0.0
    %399 = vmatprep.subr.mxu0 0.0
    %400 = vmatpush2.msra.mxu0 0.0
    %401 = vmatprep.subr.mxu0 0.0
    %402 = vmatpush2.msra.mxu0 0.0
    %403 = vmatprep.subr.mxu0 0.0
    %404 = vmatpush2.msra.mxu0 0.0
    %405 = vmatprep.subr.mxu0 0.0
    %406 = vmatpush2.msra.mxu0 0.0
    %407 = vmatprep.subr.mxu0 0.0
    %408 = vmatpush2.msra.mxu0 0.0
    %409 = vmatprep.subr.mxu0 0.0
    %410 = vmatpush2.msra.mxu0 0.0
    %411 = vmatprep.subr.mxu0 0.0
    %412 = vmatpush2.msra.mxu0 0.0
    %413 = vmatprep.subr.mxu0 0.0
    %414 = vmatpush2.msra.mxu0 0.0
    %415 = vmatprep.subr.mxu0 0.0
    %416 = vmatpush2.msra.mxu0 0.0
    %417 = vmatprep.subr.mxu0 0.0
    %418 = vmatpush2.msra.mxu0 0.0
    %419 = vmatprep.mubr.f32.mxu0 0.0
    %420 = vmatmul.mubr.f32.gmra.mxu0 %v308
    %v421 = vpop.f32.mrf.mxu0
    %v422 = vadd.f32 0.0, %v421
    %v423 = vpop.f32.mrf.mxu0
    %424 = vmatprep.mubr.f32.mxu0 0.0
    %425 = vmatmul.mubr.f32.gmra.mxu0 %v311
    %v426 = vpop.f32.mrf.mxu0
    %v427 = vadd.f32 0.0, %v426
    %v428 = vpop.f32.mrf.mxu0
    %429 = vmatprep.mubr.f32.mxu0 0.0
    %430 = vmatmul.mubr.f32.gmra.mxu0 %v314
    %v431 = vpop.f32.mrf.mxu0
    %v432 = vadd.f32 0.0, %v431
    %v433 = vpop.f32.mrf.mxu0
    %434 = vmatprep.mubr.f32.mxu0 0.0
    %435 = vmatmul.mubr.f32.gmra.mxu0 %v317
    %v436 = vpop.f32.mrf.mxu0
    %v437 = vadd.f32 0.0, %v436
    %v438 = vpop.f32.mrf.mxu0
    %439 = vmatprep.mubr.f32.mxu0 0.0
    %440 = vmatmul.mubr.f32.gmra.mxu0 %v320
    %v441 = vpop.f32.mrf.mxu0
    %v442 = vadd.f32 0.0, %v441
    %v443 = vpop.f32.mrf.mxu0
    %444 = vmatprep.mubr.f32.mxu0 0.0
    %445 = vmatmul.mubr.f32.gmra.mxu0 %v323
    %v446 = vpop.f32.mrf.mxu0
    %v447 = vadd.f32 0.0, %v446
    %v448 = vpop.f32.mrf.mxu0
    %449 = vmatprep.mubr.f32.mxu0 0.0
    %450 = vmatmul.mubr.f32.gmra.mxu0 %v326
    %v451 = vpop.f32.mrf.mxu0
    %v452 = vadd.f32 0.0, %v451
    %v453 = vpop.f32.mrf.mxu0
    %454 = vmatprep.mubr.f32.mxu0 0.0
    %455 = vmatmul.mubr.f32.gmra.mxu0 %v329
    %v456 = vpop.f32.mrf.mxu0
    %v457 = vadd.f32 0.0, %v456
    %v458 = vpop.f32.mrf.mxu0
    %459 = vmatprep.mubr.f32.mxu0 0.0
    %460 = vmatmul.mubr.f32.gmra.mxu0 %v332
    %v461 = vpop.f32.mrf.mxu0
    %v462 = vadd.f32 0.0, %v461
    %v463 = vpop.f32.mrf.mxu0
    %464 = vmatprep.mubr.f32.mxu0 0.0
    %465 = vmatmul.mubr.f32.gmra.mxu0 %v335
    %v466 = vpop.f32.mrf.mxu0
    %v467 = vadd.f32 0.0, %v466
    %v468 = vpop.f32.mrf.mxu0
    %469 = vmatprep.mubr.f32.mxu0 0.0
    %470 = vmatmul.mubr.f32.gmra.mxu0 %v338
    %v471 = vpop.f32.mrf.mxu0
    %v472 = vadd.f32 0.0, %v471
    %v473 = vpop.f32.mrf.mxu0
    %474 = vmatprep.mubr.f32.mxu0 0.0
    %475 = vmatmul.mubr.f32.gmra.mxu0 %v341
    %v476 = vpop.f32.mrf.mxu0
    %v477 = vadd.f32 0.0, %v476
    %v478 = vpop.f32.mrf.mxu0
    %479 = vmatprep.mubr.f32.mxu0 0.0
    %480 = vmatmul.mubr.f32.gmra.mxu0 %v344
    %v481 = vpop.f32.mrf.mxu0
    %v482 = vadd.f32 0.0, %v481
    %v483 = vpop.f32.mrf.mxu0
    %484 = vmatprep.mubr.f32.mxu0 0.0
    %485 = vmatmul.mubr.f32.gmra.mxu0 %v347
    %v486 = vpop.f32.mrf.mxu0
    %v487 = vadd.f32 0.0, %v486
    %v488 = vpop.f32.mrf.mxu0
    %489 = vmatprep.mubr.f32.mxu0 0.0
    %490 = vmatmul.mubr.f32.gmra.mxu0 %v350
    %v491 = vpop.f32.mrf.mxu0
    %v492 = vadd.f32 0.0, %v491
    %v493 = vpop.f32.mrf.mxu0
    %494 = vmatprep.mubr.f32.mxu0 0.0
    %495 = vmatmul.mubr.f32.gmra.mxu0 %v353
    %v496 = vpop.f32.mrf.mxu0
    %v497 = vadd.f32 0.0, %v496
    %v498 = vpop.f32.mrf.mxu0
    %499 = vdwg.mxu0
    %vm500 = vcmask 261120
    %501 = vst.msk [vmem:[%s4] sm:$0xff] %vm500, %v422
    %502 = vst.msk [vmem:[%s4 + $0x8] sm:$0xff] %vm500, %v427
    %503 = vst.msk [vmem:[%s4 + $0x10] sm:$0xff] %vm500, %v432
    %504 = vst.msk [vmem:[%s4 + $0x18] sm:$0xff] %vm500, %v437
    %505 = vst.msk [vmem:[%s4 + $0x20] sm:$0xff] %vm500, %v442
    %506 = vst.msk [vmem:[%s4 + $0x28] sm:$0xff] %vm500, %v447
    %507 = vst.msk [vmem:[%s4 + $0x30] sm:$0xff] %vm500, %v452
    %508 = vst.msk [vmem:[%s4 + $0x38] sm:$0xff] %vm500, %v457
    %509 = vst.msk [vmem:[%s4 + $0x40] sm:$0xff] %vm500, %v462
    %510 = vst.msk [vmem:[%s4 + $0x48] sm:$0xff] %vm500, %v467
    %511 = vst.msk [vmem:[%s4 + $0x50] sm:$0xff] %vm500, %v472
    %512 = vst.msk [vmem:[%s4 + $0x58] sm:$0xff] %vm500, %v477
    %513 = vst.msk [vmem:[%s4 + $0x60] sm:$0xff] %vm500, %v482
    %514 = vst.msk [vmem:[%s4 + $0x68] sm:$0xff] %vm500, %v487
    %515 = vst.msk [vmem:[%s4 + $0x70] sm:$0xff] %vm500, %v492
    %516 = vst.msk [vmem:[%s4 + $0x78] sm:$0xff] %vm500, %v497
    %533 = vrot.lane.b32.xlu0 %v422, 96
    %v534 = vpop.permute.xlu0 %533
    %535 = vrot.lane.b32.xlu0 %v427, 96
    %v536 = vpop.permute.xlu0 %535
    %537 = vrot.lane.b32.xlu0 %v432, 96
    %v538 = vpop.permute.xlu0 %537
    %539 = vrot.lane.b32.xlu0 %v437, 96
    %v540 = vpop.permute.xlu0 %539
    %541 = vrot.lane.b32.xlu0 %v442, 96
    %v542 = vpop.permute.xlu0 %541
    %543 = vrot.lane.b32.xlu0 %v447, 96
    %v544 = vpop.permute.xlu0 %543
    %545 = vrot.lane.b32.xlu0 %v452, 96
    %v546 = vpop.permute.xlu0 %545
    %547 = vrot.lane.b32.xlu0 %v457, 96
    %v548 = vpop.permute.xlu0 %547
    %549 = vrot.lane.b32.xlu0 %v462, 96
    %v550 = vpop.permute.xlu0 %549
    %551 = vrot.lane.b32.xlu0 %v467, 96
    %v552 = vpop.permute.xlu0 %551
    %553 = vrot.lane.b32.xlu0 %v472, 96
    %v554 = vpop.permute.xlu0 %553
    %555 = vrot.lane.b32.xlu0 %v477, 96
    %v556 = vpop.permute.xlu0 %555
    %557 = vrot.lane.b32.xlu0 %v482, 96
    %v558 = vpop.permute.xlu0 %557
    %559 = vrot.lane.b32.xlu0 %v487, 96
    %v560 = vpop.permute.xlu0 %559
    %561 = vrot.lane.b32.xlu0 %v492, 96
    %v562 = vpop.permute.xlu0 %561
    %563 = vrot.lane.b32.xlu0 %v497, 96
    %v564 = vpop.permute.xlu0 %563
    %581 = vst.msk [vmem:[%s5] sm:$0xff] %vm500, %v534
    %582 = vst.msk [vmem:[%s5 + $0x8] sm:$0xff] %vm500, %v536
    %583 = vst.msk [vmem:[%s5 + $0x10] sm:$0xff] %vm500, %v538
    %584 = vst.msk [vmem:[%s5 + $0x18] sm:$0xff] %vm500, %v540
    %585 = vst.msk [vmem:[%s5 + $0x20] sm:$0xff] %vm500, %v542
    %586 = vst.msk [vmem:[%s5 + $0x28] sm:$0xff] %vm500, %v544
    %587 = vst.msk [vmem:[%s5 + $0x30] sm:$0xff] %vm500, %v546
    %588 = vst.msk [vmem:[%s5 + $0x38] sm:$0xff] %vm500, %v548
    %589 = vst.msk [vmem:[%s5 + $0x40] sm:$0xff] %vm500, %v550
    %590 = vst.msk [vmem:[%s5 + $0x48] sm:$0xff] %vm500, %v552
    %591 = vst.msk [vmem:[%s5 + $0x50] sm:$0xff] %vm500, %v554
    %592 = vst.msk [vmem:[%s5 + $0x58] sm:$0xff] %vm500, %v556
    %593 = vst.msk [vmem:[%s5 + $0x60] sm:$0xff] %vm500, %v558
    %594 = vst.msk [vmem:[%s5 + $0x68] sm:$0xff] %vm500, %v560
    %595 = vst.msk [vmem:[%s5 + $0x70] sm:$0xff] %vm500, %v562
    %596 = vst.msk [vmem:[%s5 + $0x78] sm:$0xff] %vm500, %v564
    // Predicated region
    $region22: #{forward.8} parent=1 // pred_check
      _
    $region23: #{forward.8} parent=1 // pred_check_branch
      %598 = sbr.rel (0) target = $region25
    $region24: #{forward.8} parent=1 // pred_region
      _
    $region25: #{forward.8} parent=1 // pred_fallthru
      _
    // Predicated region
    $region26: #{forward.8} parent=1 // pred_check
      _
    $region27: #{forward.8} parent=1 // pred_check_branch
      %600 = sbr.rel (0) target = $region29
    $region28: #{forward.8} parent=1 // pred_region
      _
    $region29: #{forward.8} parent=1 // pred_fallthru
      _
    // Predicated region
    $region30: #{forward.8} parent=1 // pred_check
      _
    $region31: #{forward.8} parent=1 // pred_check_branch
      %602 = sbr.rel (0) target = $region33
    $region32: #{forward.8} parent=1 // pred_region
      _
    $region33: #{forward.8} parent=1 // pred_fallthru
      _
    // Predicated region
    $region34: #{forward.8} parent=1 // pred_check
      _
    $region35: #{forward.8} parent=1 // pred_check_branch
      %604 = sbr.rel (0) target = $region37
    $region36: #{forward.8} parent=1 // pred_region
      _
    $region37: #{forward.8} parent=1 // pred_fallthru
      _
    %605 = vsyncpa [#allocation3], 1

// kernel: forward.11
$region0: #{forward.11}
  #allocation0 [shape = 'u32[]', space=smem, size = 0x4, offset = 0x4, fixed_abs, tag = 'smem constant byte address 0x4 - core index']
  #allocation1 [shape = 'u32[144,128]{1,0:T(1,128)}', space=vmem, size = 0x12000, scoped, tag = 'internal scratch']
  %s0 = inlined_call_operand.vmem [shape: f32[128,32], index: 0, kind: input, shape index: {}]
  %s1 = inlined_call_operand.vmem [shape: f32[128,32], index: 1, kind: input, shape index: {}]
  %s2 = inlined_call_operand.vmem [shape: f32[128,32], index: 2, kind: input, shape index: {}]
  %s3 = inlined_call_operand.vmem [shape: f32[128,16], index: 3, kind: input, shape index: {}]
  %s4 = inlined_call_operand.vmem [shape: f32[1,32], index: 4, kind: input, shape index: {}]
  %s5 = inlined_call_operand.vmem [shape: f32[1,32], index: 5, kind: input, shape index: {}]
  %s6 = inlined_call_operand.vmem [shape: f32[32,16], index: 6, kind: input, shape index: {}]
  %s7 = inlined_call_operand.vmem [shape: f32[128,16], index: 7, kind: output, shape index: {}]
  %s8 = sld [smem:[#allocation0]]
  $region38: #{forward.11} parent=0
    _
  %s10 = ssub.s32 1, %s8
  %s11 = scalar_select 0, %s10, %s8
  // Predicated region
  $region2: #{forward.11} parent=0 // pred_check
    _
  $region3: #{forward.11} parent=0 // pred_check_branch
    %13 = sbr.rel (0) target = $region5
  $region4: #{forward.11} parent=0 // pred_region
    _
  $region5: #{forward.11} parent=0 // pred_fallthru
    _
  // Predicated region
  $region6: #{forward.11} parent=0 // pred_check
    _
  $region7: #{forward.11} parent=0 // pred_check_branch
    %15 = sbr.rel (0) target = $region9
  $region8: #{forward.11} parent=0 // pred_region
    _
  $region9: #{forward.11} parent=0 // pred_fallthru
    _
  // Predicated region
  $region10: #{forward.11} parent=0 // pred_check
    _
  $region11: #{forward.11} parent=0 // pred_check_branch
    %17 = sbr.rel (0) target = $region13
  $region12: #{forward.11} parent=0 // pred_region
    _
  $region13: #{forward.11} parent=0 // pred_fallthru
    _
  // Predicated region
  $region14: #{forward.11} parent=0 // pred_check
    _
  $region15: #{forward.11} parent=0 // pred_check_branch
    %19 = sbr.rel (0) target = $region17
  $region16: #{forward.11} parent=0 // pred_region
    _
  $region17: #{forward.11} parent=0 // pred_fallthru
    _
  // Predicated region
  $region18: #{forward.11} parent=0 // pred_check
    _
  $region19: #{forward.11} parent=0 // pred_check_branch
    %21 = sbr.rel (0) target = $region21
  $region20: #{forward.11} parent=0 // pred_region
    _
  $region21: #{forward.11} parent=0 // pred_fallthru
    _
  // Predicated region
  $region22: #{forward.11} parent=0 // pred_check
    _
  $region23: #{forward.11} parent=0 // pred_check_branch
    %23 = sbr.rel (0) target = $region25
  $region24: #{forward.11} parent=0 // pred_region
    _
  $region25: #{forward.11} parent=0 // pred_fallthru
    _
  // Predicated region
  $region26: #{forward.11} parent=0 // pred_check
    _
  $region27: #{forward.11} parent=0 // pred_check_branch
    %25 = sbr.rel (0) target = $region29
  $region28: #{forward.11} parent=0 // pred_region
    _
  $region29: #{forward.11} parent=0 // pred_fallthru
    _
  %v26 = vld [vmem:[%s0] sm:$0xff]
  %v27 = vld [vmem:[%s0 + $0x8] sm:$0xff]
  %v28 = vld [vmem:[%s0 + $0x10] sm:$0xff]
  %v29 = vld [vmem:[%s0 + $0x18] sm:$0xff]
  %v30 = vld [vmem:[%s0 + $0x20] sm:$0xff]
  %v31 = vld [vmem:[%s0 + $0x28] sm:$0xff]
  %v32 = vld [vmem:[%s0 + $0x30] sm:$0xff]
  %v33 = vld [vmem:[%s0 + $0x38] sm:$0xff]
  %v34 = vld [vmem:[%s0 + $0x40] sm:$0xff]
  %v35 = vld [vmem:[%s0 + $0x48] sm:$0xff]
  %v36 = vld [vmem:[%s0 + $0x50] sm:$0xff]
  %v37 = vld [vmem:[%s0 + $0x58] sm:$0xff]
  %v38 = vld [vmem:[%s0 + $0x60] sm:$0xff]
  %v39 = vld [vmem:[%s0 + $0x68] sm:$0xff]
  %v40 = vld [vmem:[%s0 + $0x70] sm:$0xff]
  %v41 = vld [vmem:[%s0 + $0x78] sm:$0xff]
  %v42 = vld [vmem:[%s1] sm:$0xff]
  %v43 = vld [vmem:[%s1 + $0x8] sm:$0xff]
  %v44 = vld [vmem:[%s1 + $0x10] sm:$0xff]
  %v45 = vld [vmem:[%s1 + $0x18] sm:$0xff]
  %v46 = vld [vmem:[%s1 + $0x20] sm:$0xff]
  %v47 = vld [vmem:[%s1 + $0x28] sm:$0xff]
  %v48 = vld [vmem:[%s1 + $0x30] sm:$0xff]
  %v49 = vld [vmem:[%s1 + $0x38] sm:$0xff]
  %v50 = vld [vmem:[%s1 + $0x40] sm:$0xff]
  %v51 = vld [vmem:[%s1 + $0x48] sm:$0xff]
  %v52 = vld [vmem:[%s1 + $0x50] sm:$0xff]
  %v53 = vld [vmem:[%s1 + $0x58] sm:$0xff]
  %v54 = vld [vmem:[%s1 + $0x60] sm:$0xff]
  %v55 = vld [vmem:[%s1 + $0x68] sm:$0xff]
  %v56 = vld [vmem:[%s1 + $0x70] sm:$0xff]
  %v57 = vld [vmem:[%s1 + $0x78] sm:$0xff]
  %v58 = vadd.f32 %v26, %v42
  %v59 = vadd.f32 %v27, %v43
  %v60 = vadd.f32 %v28, %v44
  %v61 = vadd.f32 %v29, %v45
  %v62 = vadd.f32 %v30, %v46
  %v63 = vadd.f32 %v31, %v47
  %v64 = vadd.f32 %v32, %v48
  %v65 = vadd.f32 %v33, %v49
  %v66 = vadd.f32 %v34, %v50
  %v67 = vadd.f32 %v35, %v51
  %v68 = vadd.f32 %v36, %v52
  %v69 = vadd.f32 %v37, %v53
  %v70 = vadd.f32 %v38, %v54
  %v71 = vadd.f32 %v39, %v55
  %v72 = vadd.f32 %v40, %v56
  %v73 = vadd.f32 %v41, %v57
  %vm74 = vcmask 261120
  %v75 = vsel %vm74, %v58, 0.0
  %76 = vadd.xlane.f32.xlu0 %v75
  %v77 = vpop.xlane.xlu0 %76
  %v78 = vsel %vm74, %v59, 0.0
  %79 = vadd.xlane.f32.xlu0 %v78
  %v80 = vpop.xlane.xlu0 %79
  %v81 = vsel %vm74, %v60, 0.0
  %82 = vadd.xlane.f32.xlu0 %v81
  %v83 = vpop.xlane.xlu0 %82
  %v84 = vsel %vm74, %v61, 0.0
  %85 = vadd.xlane.f32.xlu0 %v84
  %v86 = vpop.xlane.xlu0 %85
  %v87 = vsel %vm74, %v62, 0.0
  %88 = vadd.xlane.f32.xlu0 %v87
  %v89 = vpop.xlane.xlu0 %88
  %v90 = vsel %vm74, %v63, 0.0
  %91 = vadd.xlane.f32.xlu0 %v90
  %v92 = vpop.xlane.xlu0 %91
  %v93 = vsel %vm74, %v64, 0.0
  %94 = vadd.xlane.f32.xlu0 %v93
  %v95 = vpop.xlane.xlu0 %94
  %v96 = vsel %vm74, %v65, 0.0
  %97 = vadd.xlane.f32.xlu0 %v96
  %v98 = vpop.xlane.xlu0 %97
  %v99 = vsel %vm74, %v66, 0.0
  %100 = vadd.xlane.f32.xlu0 %v99
  %v101 = vpop.xlane.xlu0 %100
  %v102 = vsel %vm74, %v67, 0.0
  %103 = vadd.xlane.f32.xlu0 %v102
  %v104 = vpop.xlane.xlu0 %103
  %v105 = vsel %vm74, %v68, 0.0
  %106 = vadd.xlane.f32.xlu0 %v105
  %v107 = vpop.xlane.xlu0 %106
  %v108 = vsel %vm74, %v69, 0.0
  %109 = vadd.xlane.f32.xlu0 %v108
  %v110 = vpop.xlane.xlu0 %109
  %v111 = vsel %vm74, %v70, 0.0
  %112 = vadd.xlane.f32.xlu0 %v111
  %v113 = vpop.xlane.xlu0 %112
  %v114 = vsel %vm74, %v71, 0.0
  %115 = vadd.xlane.f32.xlu0 %v114
  %v116 = vpop.xlane.xlu0 %115
  %v117 = vsel %vm74, %v72, 0.0
  %118 = vadd.xlane.f32.xlu0 %v117
  %v119 = vpop.xlane.xlu0 %118
  %v120 = vsel %vm74, %v73, 0.0
  %121 = vadd.xlane.f32.xlu0 %v120
  %v122 = vpop.xlane.xlu0 %121
  %v123 = vrcp.pop 32.0
  %v124 = vmul.f32 %v77, %v123
  %v125 = vmul.f32 %v80, %v123
  %v126 = vmul.f32 %v83, %v123
  %v127 = vmul.f32 %v86, %v123
  %v128 = vmul.f32 %v89, %v123
  %v129 = vmul.f32 %v92, %v123
  %v130 = vmul.f32 %v95, %v123
  %v131 = vmul.f32 %v98, %v123
  %v132 = vmul.f32 %v101, %v123
  %v133 = vmul.f32 %v104, %v123
  %v134 = vmul.f32 %v107, %v123
  %v135 = vmul.f32 %v110, %v123
  %v136 = vmul.f32 %v113, %v123
  %v137 = vmul.f32 %v116, %v123
  %v138 = vmul.f32 %v119, %v123
  %v139 = vmul.f32 %v122, %v123
  %v140 = vsub.f32 %v58, %v124
  %v141 = vsub.f32 %v59, %v125
  %v142 = vsub.f32 %v60, %v126
  %v143 = vsub.f32 %v61, %v127
  %v144 = vsub.f32 %v62, %v128
  %v145 = vsub.f32 %v63, %v129
  %v146 = vsub.f32 %v64, %v130
  %v147 = vsub.f32 %v65, %v131
  %v148 = vsub.f32 %v66, %v132
  %v149 = vsub.f32 %v67, %v133
  %v150 = vsub.f32 %v68, %v134
  %v151 = vsub.f32 %v69, %v135
  %v152 = vsub.f32 %v70, %v136
  %v153 = vsub.f32 %v71, %v137
  %v154 = vsub.f32 %v72, %v138
  %v155 = vsub.f32 %v73, %v139
  %v156 = vmul.f32 %v140, %v140
  %v157 = vmul.f32 %v141, %v141
  %v158 = vmul.f32 %v142, %v142
  %v159 = vmul.f32 %v143, %v143
  %v160 = vmul.f32 %v144, %v144
  %v161 = vmul.f32 %v145, %v145
  %v162 = vmul.f32 %v146, %v146
  %v163 = vmul.f32 %v147, %v147
  %v164 = vmul.f32 %v148, %v148
  %v165 = vmul.f32 %v149, %v149
  %v166 = vmul.f32 %v150, %v150
  %v167 = vmul.f32 %v151, %v151
  %v168 = vmul.f32 %v152, %v152
  %v169 = vmul.f32 %v153, %v153
  %v170 = vmul.f32 %v154, %v154
  %v171 = vmul.f32 %v155, %v155
  %v172 = vsel %vm74, %v156, 0.0
  %173 = vadd.xlane.f32.xlu0 %v172
  %v174 = vpop.xlane.xlu0 %173
  %v175 = vsel %vm74, %v157, 0.0
  %176 = vadd.xlane.f32.xlu0 %v175
  %v177 = vpop.xlane.xlu0 %176
  %v178 = vsel %vm74, %v158, 0.0
  %179 = vadd.xlane.f32.xlu0 %v178
  %v180 = vpop.xlane.xlu0 %179
  %v181 = vsel %vm74, %v159, 0.0
  %182 = vadd.xlane.f32.xlu0 %v181
  %v183 = vpop.xlane.xlu0 %182
  %v184 = vsel %vm74, %v160, 0.0
  %185 = vadd.xlane.f32.xlu0 %v184
  %v186 = vpop.xlane.xlu0 %185
  %v187 = vsel %vm74, %v161, 0.0
  %188 = vadd.xlane.f32.xlu0 %v187
  %v189 = vpop.xlane.xlu0 %188
  %v190 = vsel %vm74, %v162, 0.0
  %191 = vadd.xlane.f32.xlu0 %v190
  %v192 = vpop.xlane.xlu0 %191
  %v193 = vsel %vm74, %v163, 0.0
  %194 = vadd.xlane.f32.xlu0 %v193
  %v195 = vpop.xlane.xlu0 %194
  %v196 = vsel %vm74, %v164, 0.0
  %197 = vadd.xlane.f32.xlu0 %v196
  %v198 = vpop.xlane.xlu0 %197
  %v199 = vsel %vm74, %v165, 0.0
  %200 = vadd.xlane.f32.xlu0 %v199
  %v201 = vpop.xlane.xlu0 %200
  %v202 = vsel %vm74, %v166, 0.0
  %203 = vadd.xlane.f32.xlu0 %v202
  %v204 = vpop.xlane.xlu0 %203
  %v205 = vsel %vm74, %v167, 0.0
  %206 = vadd.xlane.f32.xlu0 %v205
  %v207 = vpop.xlane.xlu0 %206
  %v208 = vsel %vm74, %v168, 0.0
  %209 = vadd.xlane.f32.xlu0 %v208
  %v210 = vpop.xlane.xlu0 %209
  %v211 = vsel %vm74, %v169, 0.0
  %212 = vadd.xlane.f32.xlu0 %v211
  %v213 = vpop.xlane.xlu0 %212
  %v214 = vsel %vm74, %v170, 0.0
  %215 = vadd.xlane.f32.xlu0 %v214
  %v216 = vpop.xlane.xlu0 %215
  %v217 = vsel %vm74, %v171, 0.0
  %218 = vadd.xlane.f32.xlu0 %v217
  %v219 = vpop.xlane.xlu0 %218
  %v220 = vmul.f32 %v174, %v123
  %v221 = vmul.f32 %v177, %v123
  %v222 = vmul.f32 %v180, %v123
  %v223 = vmul.f32 %v183, %v123
  %v224 = vmul.f32 %v186, %v123
  %v225 = vmul.f32 %v189, %v123
  %v226 = vmul.f32 %v192, %v123
  %v227 = vmul.f32 %v195, %v123
  %v228 = vmul.f32 %v198, %v123
  %v229 = vmul.f32 %v201, %v123
  %v230 = vmul.f32 %v204, %v123
  %v231 = vmul.f32 %v207, %v123
  %v232 = vmul.f32 %v210, %v123
  %v233 = vmul.f32 %v213, %v123
  %v234 = vmul.f32 %v216, %v123
  %v235 = vmul.f32 %v219, %v123
  %v236 = vadd.f32 %v220, 1e-05
  %v237 = vadd.f32 %v221, 1e-05
  %v238 = vadd.f32 %v222, 1e-05
  %v239 = vadd.f32 %v223, 1e-05
  %v240 = vadd.f32 %v224, 1e-05
  %v241 = vadd.f32 %v225, 1e-05
  %v242 = vadd.f32 %v226, 1e-05
  %v243 = vadd.f32 %v227, 1e-05
  %v244 = vadd.f32 %v228, 1e-05
  %v245 = vadd.f32 %v229, 1e-05
  %v246 = vadd.f32 %v230, 1e-05
  %v247 = vadd.f32 %v231, 1e-05
  %v248 = vadd.f32 %v232, 1e-05
  %v249 = vadd.f32 %v233, 1e-05
  %v250 = vadd.f32 %v234, 1e-05
  %v251 = vadd.f32 %v235, 1e-05
  %v252 = vrsqrt.pop %v236
  %v253 = vrsqrt.pop %v237
  %v254 = vrsqrt.pop %v238
  %v255 = vrsqrt.pop %v239
  %v256 = vrsqrt.pop %v240
  %v257 = vrsqrt.pop %v241
  %v258 = vrsqrt.pop %v242
  %v259 = vrsqrt.pop %v243
  %v260 = vrsqrt.pop %v244
  %v261 = vrsqrt.pop %v245
  %v262 = vrsqrt.pop %v246
  %v263 = vrsqrt.pop %v247
  %v264 = vrsqrt.pop %v248
  %v265 = vrsqrt.pop %v249
  %v266 = vrsqrt.pop %v250
  %v267 = vrsqrt.pop %v251
  %v268 = vmul.f32 %v140, %v252
  %v269 = vmul.f32 %v141, %v253
  %v270 = vmul.f32 %v142, %v254
  %v271 = vmul.f32 %v143, %v255
  %v272 = vmul.f32 %v144, %v256
  %v273 = vmul.f32 %v145, %v257
  %v274 = vmul.f32 %v146, %v258
  %v275 = vmul.f32 %v147, %v259
  %v276 = vmul.f32 %v148, %v260
  %v277 = vmul.f32 %v149, %v261
  %v278 = vmul.f32 %v150, %v262
  %v279 = vmul.f32 %v151, %v263
  %v280 = vmul.f32 %v152, %v264
  %v281 = vmul.f32 %v153, %v265
  %v282 = vmul.f32 %v154, %v266
  %v283 = vmul.f32 %v155, %v267
  %v284 = vld [vmem:[%s4] sm:$0x1]
  %v286 = vlaneseq
  %v287 = vshrl.u32 %v286, 7
  %v288 = vsub.s32 0, %v287
  %v289 = vrot.slane %v284, %v288
  %v291 = vmul.f32 %v268, %v289
  %v292 = vmul.f32 %v269, %v289
  %v293 = vmul.f32 %v270, %v289
  %v294 = vmul.f32 %v271, %v289
  %v295 = vmul.f32 %v272, %v289
  %v296 = vmul.f32 %v273, %v289
  %v297 = vmul.f32 %v274, %v289
  %v298 = vmul.f32 %v275, %v289
  %v299 = vmul.f32 %v276, %v289
  %v300 = vmul.f32 %v277, %v289
  %v301 = vmul.f32 %v278, %v289
  %v302 = vmul.f32 %v279, %v289
  %v303 = vmul.f32 %v280, %v289
  %v304 = vmul.f32 %v281, %v289
  %v305 = vmul.f32 %v282, %v289
  %v306 = vmul.f32 %v283, %v289
  %v307 = vld [vmem:[%s5] sm:$0x1]
  %v309 = vlaneseq
  %v310 = vshrl.u32 %v309, 7
  %v311 = vsub.s32 0, %v310
  %v312 = vrot.slane %v307, %v311
  %v314 = vadd.f32 %v291, %v312
  %v315 = vadd.f32 %v292, %v312
  %v316 = vadd.f32 %v293, %v312
  %v317 = vadd.f32 %v294, %v312
  %v318 = vadd.f32 %v295, %v312
  %v319 = vadd.f32 %v296, %v312
  %v320 = vadd.f32 %v297, %v312
  %v321 = vadd.f32 %v298, %v312
  %v322 = vadd.f32 %v299, %v312
  %v323 = vadd.f32 %v300, %v312
  %v324 = vadd.f32 %v301, %v312
  %v325 = vadd.f32 %v302, %v312
  %v326 = vadd.f32 %v303, %v312
  %v327 = vadd.f32 %v304, %v312
  %v328 = vadd.f32 %v305, %v312
  %v329 = vadd.f32 %v306, %v312
  %v330 = vld [vmem:[%s2] sm:$0xff]
  %v331 = vld [vmem:[%s2 + $0x8] sm:$0xff]
  %v332 = vld [vmem:[%s2 + $0x10] sm:$0xff]
  %v333 = vld [vmem:[%s2 + $0x18] sm:$0xff]
  %v334 = vld [vmem:[%s2 + $0x20] sm:$0xff]
  %v335 = vld [vmem:[%s2 + $0x28] sm:$0xff]
  %v336 = vld [vmem:[%s2 + $0x30] sm:$0xff]
  %v337 = vld [vmem:[%s2 + $0x38] sm:$0xff]
  %v338 = vld [vmem:[%s2 + $0x40] sm:$0xff]
  %v339 = vld [vmem:[%s2 + $0x48] sm:$0xff]
  %v340 = vld [vmem:[%s2 + $0x50] sm:$0xff]
  %v341 = vld [vmem:[%s2 + $0x58] sm:$0xff]
  %v342 = vld [vmem:[%s2 + $0x60] sm:$0xff]
  %v343 = vld [vmem:[%s2 + $0x68] sm:$0xff]
  %v344 = vld [vmem:[%s2 + $0x70] sm:$0xff]
  %v345 = vld [vmem:[%s2 + $0x78] sm:$0xff]
  %v346 = vxor.u32 %v330, 2147483648
  %v347 = vxor.u32 %v331, 2147483648
  %v348 = vxor.u32 %v332, 2147483648
  %v349 = vxor.u32 %v333, 2147483648
  %v350 = vxor.u32 %v334, 2147483648
  %v351 = vxor.u32 %v335, 2147483648
  %v352 = vxor.u32 %v336, 2147483648
  %v353 = vxor.u32 %v337, 2147483648
  %v354 = vxor.u32 %v338, 2147483648
  %v355 = vxor.u32 %v339, 2147483648
  %v356 = vxor.u32 %v340, 2147483648
  %v357 = vxor.u32 %v341, 2147483648
  %v358 = vxor.u32 %v342, 2147483648
  %v359 = vxor.u32 %v343, 2147483648
  %v360 = vxor.u32 %v344, 2147483648
  %v361 = vxor.u32 %v345, 2147483648
  %v362 = vmul.f32 %v346, 1.442695
  %v363 = vpow.pop %v362
  %v364 = vmul.f32 %v347, 1.442695
  %v365 = vpow.pop %v364
  %v366 = vmul.f32 %v348, 1.442695
  %v367 = vpow.pop %v366
  %v368 = vmul.f32 %v349, 1.442695
  %v369 = vpow.pop %v368
  %v370 = vmul.f32 %v350, 1.442695
  %v371 = vpow.pop %v370
  %v372 = vmul.f32 %v351, 1.442695
  %v373 = vpow.pop %v372
  %v374 = vmul.f32 %v352, 1.442695
  %v375 = vpow.pop %v374
  %v376 = vmul.f32 %v353, 1.442695
  %v377 = vpow.pop %v376
  %v378 = vmul.f32 %v354, 1.442695
  %v379 = vpow.pop %v378
  %v380 = vmul.f32 %v355, 1.442695
  %v381 = vpow.pop %v380
  %v382 = vmul.f32 %v356, 1.442695
  %v383 = vpow.pop %v382
  %v384 = vmul.f32 %v357, 1.442695
  %v385 = vpow.pop %v384
  %v386 = vmul.f32 %v358, 1.442695
  %v387 = vpow.pop %v386
  %v388 = vmul.f32 %v359, 1.442695
  %v389 = vpow.pop %v388
  %v390 = vmul.f32 %v360, 1.442695
  %v391 = vpow.pop %v390
  %v392 = vmul.f32 %v361, 1.442695
  %v393 = vpow.pop %v392
  %v394 = vadd.f32 %v363, 1.0
  %v395 = vadd.f32 %v365, 1.0
  %v396 = vadd.f32 %v367, 1.0
  %v397 = vadd.f32 %v369, 1.0
  %v398 = vadd.f32 %v371, 1.0
  %v399 = vadd.f32 %v373, 1.0
  %v400 = vadd.f32 %v375, 1.0
  %v401 = vadd.f32 %v377, 1.0
  %v402 = vadd.f32 %v379, 1.0
  %v403 = vadd.f32 %v381, 1.0
  %v404 = vadd.f32 %v383, 1.0
  %v405 = vadd.f32 %v385, 1.0
  %v406 = vadd.f32 %v387, 1.0
  %v407 = vadd.f32 %v389, 1.0
  %v408 = vadd.f32 %v391, 1.0
  %v409 = vadd.f32 %v393, 1.0
  %v410 = vrcp.pop %v394
  %v411 = vmul.f32 1.0, %v410
  %v412 = vrcp.pop %v395
  %v413 = vmul.f32 1.0, %v412
  %v414 = vrcp.pop %v396
  %v415 = vmul.f32 1.0, %v414
  %v416 = vrcp.pop %v397
  %v417 = vmul.f32 1.0, %v416
  %v418 = vrcp.pop %v398
  %v419 = vmul.f32 1.0, %v418
  %v420 = vrcp.pop %v399
  %v421 = vmul.f32 1.0, %v420
  %v422 = vrcp.pop %v400
  %v423 = vmul.f32 1.0, %v422
  %v424 = vrcp.pop %v401
  %v425 = vmul.f32 1.0, %v424
  %v426 = vrcp.pop %v402
  %v427 = vmul.f32 1.0, %v426
  %v428 = vrcp.pop %v403
  %v429 = vmul.f32 1.0, %v428
  %v430 = vrcp.pop %v404
  %v431 = vmul.f32 1.0, %v430
  %v432 = vrcp.pop %v405
  %v433 = vmul.f32 1.0, %v432
  %v434 = vrcp.pop %v406
  %v435 = vmul.f32 1.0, %v434
  %v436 = vrcp.pop %v407
  %v437 = vmul.f32 1.0, %v436
  %v438 = vrcp.pop %v408
  %v439 = vmul.f32 1.0, %v438
  %v440 = vrcp.pop %v409
  %v441 = vmul.f32 1.0, %v440
  %v442 = vmul.f32 %v330, %v411
  %v443 = vmul.f32 %v331, %v413
  %v444 = vmul.f32 %v332, %v415
  %v445 = vmul.f32 %v333, %v417
  %v446 = vmul.f32 %v334, %v419
  %v447 = vmul.f32 %v335, %v421
  %v448 = vmul.f32 %v336, %v423
  %v449 = vmul.f32 %v337, %v425
  %v450 = vmul.f32 %v338, %v427
  %v451 = vmul.f32 %v339, %v429
  %v452 = vmul.f32 %v340, %v431
  %v453 = vmul.f32 %v341, %v433
  %v454 = vmul.f32 %v342, %v435
  %v455 = vmul.f32 %v343, %v437
  %v456 = vmul.f32 %v344, %v439
  %v457 = vmul.f32 %v345, %v441
  %v458 = vmul.f32 %v314, %v442
  %v459 = vmul.f32 %v315, %v443
  %v460 = vmul.f32 %v316, %v444
  %v461 = vmul.f32 %v317, %v445
  %v462 = vmul.f32 %v318, %v446
  %v463 = vmul.f32 %v319, %v447
  %v464 = vmul.f32 %v320, %v448
  %v465 = vmul.f32 %v321, %v449
  %v466 = vmul.f32 %v322, %v450
  %v467 = vmul.f32 %v323, %v451
  %v468 = vmul.f32 %v324, %v452
  %v469 = vmul.f32 %v325, %v453
  %v470 = vmul.f32 %v326, %v454
  %v471 = vmul.f32 %v327, %v455
  %v472 = vmul.f32 %v328, %v456
  %v473 = vmul.f32 %v329, %v457
  %v474 = vld [vmem:[%s3] sm:$0xff]
  %v475 = vld [vmem:[%s3 + $0x8] sm:$0xff]
  %v476 = vld [vmem:[%s3 + $0x10] sm:$0xff]
  %v477 = vld [vmem:[%s3 + $0x18] sm:$0xff]
  %v478 = vld [vmem:[%s3 + $0x20] sm:$0xff]
  %v479 = vld [vmem:[%s3 + $0x28] sm:$0xff]
  %v480 = vld [vmem:[%s3 + $0x30] sm:$0xff]
  %v481 = vld [vmem:[%s3 + $0x38] sm:$0xff]
  %v482 = vld [vmem:[%s3 + $0x40] sm:$0xff]
  %v483 = vld [vmem:[%s3 + $0x48] sm:$0xff]
  %v484 = vld [vmem:[%s3 + $0x50] sm:$0xff]
  %v485 = vld [vmem:[%s3 + $0x58] sm:$0xff]
  %v486 = vld [vmem:[%s3 + $0x60] sm:$0xff]
  %v487 = vld [vmem:[%s3 + $0x68] sm:$0xff]
  %v488 = vld [vmem:[%s3 + $0x70] sm:$0xff]
  %v489 = vld [vmem:[%s3 + $0x78] sm:$0xff]
  %v490 = vld [vmem:[%s6] sm:$0xff]
  %v491 = vld [vmem:[%s6 + $0x8] sm:$0xff]
  %v492 = vld [vmem:[%s6 + $0x10] sm:$0xff]
  %v493 = vld [vmem:[%s6 + $0x18] sm:$0xff]
  %v495 = vsel %vm74, %v458, 0
  %v498 = vsel %vm74, %v459, 0
  %v501 = vsel %vm74, %v460, 0
  %v504 = vsel %vm74, %v461, 0
  %v507 = vsel %vm74, %v462, 0
  %v510 = vsel %vm74, %v463, 0
  %v513 = vsel %vm74, %v464, 0
  %v516 = vsel %vm74, %v465, 0
  %v519 = vsel %vm74, %v466, 0
  %v522 = vsel %vm74, %v467, 0
  %v525 = vsel %vm74, %v468, 0
  %v528 = vsel %vm74, %v469, 0
  %v531 = vsel %vm74, %v470, 0
  %v534 = vsel %vm74, %v471, 0
  %v537 = vsel %vm74, %v472, 0
  %v540 = vsel %vm74, %v473, 0
  %542 = vmatprep.subr.mxu0 0.0
  %543 = vmatpush1.msra.mxu0 0.0
  %544 = vmatprep.subr.mxu0 0.0
  %545 = vmatpush1.msra.mxu0 0.0
  %546 = vmatprep.subr.mxu0 0.0
  %547 = vmatpush1.msra.mxu0 0.0
  %548 = vmatprep.subr.mxu0 0.0
  %549 = vmatpush1.msra.mxu0 0.0
  %550 = vmatprep.subr.mxu0 0.0
  %551 = vmatpush1.msra.mxu0 0.0
  %552 = vmatprep.subr.mxu0 0.0
  %553 = vmatpush1.msra.mxu0 0.0
  %554 = vmatprep.subr.mxu0 0.0
  %555 = vmatpush1.msra.mxu0 0.0
  %556 = vmatprep.subr.mxu0 0.0
  %557 = vmatpush1.msra.mxu0 0.0
  %558 = vmatprep.subr.mxu0 0.0
  %559 = vmatpush1.msra.mxu0 0.0
  %560 = vmatprep.subr.mxu0 0.0
  %561 = vmatpush1.msra.mxu0 0.0
  %562 = vmatprep.subr.mxu0 0.0
  %563 = vmatpush1.msra.mxu0 0.0
  %564 = vmatprep.subr.mxu0 0.0
  %565 = vmatpush1.msra.mxu0 0.0
  %566 = vmatprep.subr.mxu0 0.0
  %567 = vmatpush1.msra.mxu0 %v493
  %568 = vmatprep.subr.mxu0 0.0
  %569 = vmatpush1.msra.mxu0 %v492
  %570 = vmatprep.subr.mxu0 0.0
  %571 = vmatpush1.msra.mxu0 %v491
  %572 = vmatprep.subr.mxu0 0.0
  %573 = vmatpush1.msra.mxu0 %v490
  %574 = vmatprep.subr.mxu0 0.0
  %575 = vmatpush2.msra.mxu0 0.0
  %576 = vmatprep.subr.mxu0 0.0
  %577 = vmatpush2.msra.mxu0 0.0
  %578 = vmatprep.subr.mxu0 0.0
  %579 = vmatpush2.msra.mxu0 0.0
  %580 = vmatprep.subr.mxu0 0.0
  %581 = vmatpush2.msra.mxu0 0.0
  %582 = vmatprep.subr.mxu0 0.0
  %583 = vmatpush2.msra.mxu0 0.0
  %584 = vmatprep.subr.mxu0 0.0
  %585 = vmatpush2.msra.mxu0 0.0
  %586 = vmatprep.subr.mxu0 0.0
  %587 = vmatpush2.msra.mxu0 0.0
  %588 = vmatprep.subr.mxu0 0.0
  %589 = vmatpush2.msra.mxu0 0.0
  %590 = vmatprep.subr.mxu0 0.0
  %591 = vmatpush2.msra.mxu0 0.0
  %592 = vmatprep.subr.mxu0 0.0
  %593 = vmatpush2.msra.mxu0 0.0
  %594 = vmatprep.subr.mxu0 0.0
  %595 = vmatpush2.msra.mxu0 0.0
  %596 = vmatprep.subr.mxu0 0.0
  %597 = vmatpush2.msra.mxu0 0.0
  %598 = vmatprep.subr.mxu0 0.0
  %599 = vmatpush2.msra.mxu0 0.0
  %600 = vmatprep.subr.mxu0 0.0
  %601 = vmatpush2.msra.mxu0 0.0
  %602 = vmatprep.subr.mxu0 0.0
  %603 = vmatpush2.msra.mxu0 0.0
  %604 = vmatprep.subr.mxu0 0.0
  %605 = vmatpush2.msra.mxu0 0.0
  %606 = vmatprep.mubr.f32.mxu0 0.0
  %607 = vmatmul.mubr.f32.gmra.mxu0 %v495
  %v608 = vpop.f32.mrf.mxu0
  %v609 = vadd.f32 0.0, %v608
  %v610 = vpop.f32.mrf.mxu0
  %611 = vmatprep.mubr.f32.mxu0 0.0
  %612 = vmatmul.mubr.f32.gmra.mxu0 %v498
  %v613 = vpop.f32.mrf.mxu0
  %v614 = vadd.f32 0.0, %v613
  %v615 = vpop.f32.mrf.mxu0
  %616 = vmatprep.mubr.f32.mxu0 0.0
  %617 = vmatmul.mubr.f32.gmra.mxu0 %v501
  %v618 = vpop.f32.mrf.mxu0
  %v619 = vadd.f32 0.0, %v618
  %v620 = vpop.f32.mrf.mxu0
  %621 = vmatprep.mubr.f32.mxu0 0.0
  %622 = vmatmul.mubr.f32.gmra.mxu0 %v504
  %v623 = vpop.f32.mrf.mxu0
  %v624 = vadd.f32 0.0, %v623
  %v625 = vpop.f32.mrf.mxu0
  %626 = vmatprep.mubr.f32.mxu0 0.0
  %627 = vmatmul.mubr.f32.gmra.mxu0 %v507
  %v628 = vpop.f32.mrf.mxu0
  %v629 = vadd.f32 0.0, %v628
  %v630 = vpop.f32.mrf.mxu0
  %631 = vmatprep.mubr.f32.mxu0 0.0
  %632 = vmatmul.mubr.f32.gmra.mxu0 %v510
  %v633 = vpop.f32.mrf.mxu0
  %v634 = vadd.f32 0.0, %v633
  %v635 = vpop.f32.mrf.mxu0
  %636 = vmatprep.mubr.f32.mxu0 0.0
  %637 = vmatmul.mubr.f32.gmra.mxu0 %v513
  %v638 = vpop.f32.mrf.mxu0
  %v639 = vadd.f32 0.0, %v638
  %v640 = vpop.f32.mrf.mxu0
  %641 = vmatprep.mubr.f32.mxu0 0.0
  %642 = vmatmul.mubr.f32.gmra.mxu0 %v516
  %v643 = vpop.f32.mrf.mxu0
  %v644 = vadd.f32 0.0, %v643
  %v645 = vpop.f32.mrf.mxu0
  %646 = vmatprep.mubr.f32.mxu0 0.0
  %647 = vmatmul.mubr.f32.gmra.mxu0 %v519
  %v648 = vpop.f32.mrf.mxu0
  %v649 = vadd.f32 0.0, %v648
  %v650 = vpop.f32.mrf.mxu0
  %651 = vmatprep.mubr.f32.mxu0 0.0
  %652 = vmatmul.mubr.f32.gmra.mxu0 %v522
  %v653 = vpop.f32.mrf.mxu0
  %v654 = vadd.f32 0.0, %v653
  %v655 = vpop.f32.mrf.mxu0
  %656 = vmatprep.mubr.f32.mxu0 0.0
  %657 = vmatmul.mubr.f32.gmra.mxu0 %v525
  %v658 = vpop.f32.mrf.mxu0
  %v659 = vadd.f32 0.0, %v658
  %v660 = vpop.f32.mrf.mxu0
  %661 = vmatprep.mubr.f32.mxu0 0.0
  %662 = vmatmul.mubr.f32.gmra.mxu0 %v528
  %v663 = vpop.f32.mrf.mxu0
  %v664 = vadd.f32 0.0, %v663
  %v665 = vpop.f32.mrf.mxu0
  %666 = vmatprep.mubr.f32.mxu0 0.0
  %667 = vmatmul.mubr.f32.gmra.mxu0 %v531
  %v668 = vpop.f32.mrf.mxu0
  %v669 = vadd.f32 0.0, %v668
  %v670 = vpop.f32.mrf.mxu0
  %671 = vmatprep.mubr.f32.mxu0 0.0
  %672 = vmatmul.mubr.f32.gmra.mxu0 %v534
  %v673 = vpop.f32.mrf.mxu0
  %v674 = vadd.f32 0.0, %v673
  %v675 = vpop.f32.mrf.mxu0
  %676 = vmatprep.mubr.f32.mxu0 0.0
  %677 = vmatmul.mubr.f32.gmra.mxu0 %v537
  %v678 = vpop.f32.mrf.mxu0
  %v679 = vadd.f32 0.0, %v678
  %v680 = vpop.f32.mrf.mxu0
  %681 = vmatprep.mubr.f32.mxu0 0.0
  %682 = vmatmul.mubr.f32.gmra.mxu0 %v540
  %v683 = vpop.f32.mrf.mxu0
  %v684 = vadd.f32 0.0, %v683
  %v685 = vpop.f32.mrf.mxu0
  %686 = vdwg.mxu0
  %v687 = vadd.f32 %v474, %v609
  %v688 = vadd.f32 %v475, %v614
  %v689 = vadd.f32 %v476, %v619
  %v690 = vadd.f32 %v477, %v624
  %v691 = vadd.f32 %v478, %v629
  %v692 = vadd.f32 %v479, %v634
  %v693 = vadd.f32 %v480, %v639
  %v694 = vadd.f32 %v481, %v644
  %v695 = vadd.f32 %v482, %v649
  %v696 = vadd.f32 %v483, %v654
  %v697 = vadd.f32 %v484, %v659
  %v698 = vadd.f32 %v485, %v664
  %v699 = vadd.f32 %v486, %v669
  %v700 = vadd.f32 %v487, %v674
  %v701 = vadd.f32 %v488, %v679
  %v702 = vadd.f32 %v489, %v684
  %vm703 = vcmask 130048
  %704 = vst.msk [vmem:[%s7] sm:$0xff] %vm703, %v687
  %705 = vst.msk [vmem:[%s7 + $0x8] sm:$0xff] %vm703, %v688
  %706 = vst.msk [vmem:[%s7 + $0x10] sm:$0xff] %vm703, %v689
  %707 = vst.msk [vmem:[%s7 + $0x18] sm:$0xff] %vm703, %v690
  %708 = vst.msk [vmem:[%s7 + $0x20] sm:$0xff] %vm703, %v691
  %709 = vst.msk [vmem:[%s7 + $0x28] sm:$0xff] %vm703, %v692
  %710 = vst.msk [vmem:[%s7 + $0x30] sm:$0xff] %vm703, %v693
  %711 = vst.msk [vmem:[%s7 + $0x38] sm:$0xff] %vm703, %v694
  %712 = vst.msk [vmem:[%s7 + $0x40] sm:$0xff] %vm703, %v695
  %713 = vst.msk [vmem:[%s7 + $0x48] sm:$0xff] %vm703, %v696
  %714 = vst.msk [vmem:[%s7 + $0x50] sm:$0xff] %vm703, %v697
  %715 = vst.msk [vmem:[%s7 + $0x58] sm:$0xff] %vm703, %v698
  %716 = vst.msk [vmem:[%s7 + $0x60] sm:$0xff] %vm703, %v699
  %717 = vst.msk [vmem:[%s7 + $0x68] sm:$0xff] %vm703, %v700
  %718 = vst.msk [vmem:[%s7 + $0x70] sm:$0xff] %vm703, %v701
  %719 = vst.msk [vmem:[%s7 + $0x78] sm:$0xff] %vm703, %v702
  // Predicated region
  $region30: #{forward.11} parent=0 // pred_check
    _
  $region31: #{forward.11} parent=0 // pred_check_branch
    %721 = sbr.rel (0) target = $region33
  $region32: #{forward.11} parent=0 // pred_region
    _
  $region33: #{forward.11} parent=0 // pred_fallthru
    _
  // Predicated region
  $region34: #{forward.11} parent=0 // pred_check
    _
  $region35: #{forward.11} parent=0 // pred_check_branch
    %723 = sbr.rel (0) target = $region37
  $region36: #{forward.11} parent=0 // pred_region
    _
  $region37: #{forward.11} parent=0 // pred_fallthru
    _

// kernel: forward.12
$region0: #{forward.12}
  #allocation0 [shape = 'u32[]', space=smem, size = 0x4, offset = 0x4, fixed_abs, tag = 'smem constant byte address 0x4 - core index']
  #allocation1 [shape = 'u32[144,128]{1,0:T(1,128)}', space=vmem, size = 0x12000, scoped, tag = 'internal scratch']
  %s0 = inlined_call_operand.vmem [shape: f32[128,16], index: 0, kind: input, shape index: {}]
  %s1 = inlined_call_operand.vmem [shape: f32[1,16], index: 1, kind: input, shape index: {}]
  %s2 = inlined_call_operand.vmem [shape: f32[1,16], index: 2, kind: input, shape index: {}]
  %s3 = inlined_call_operand.vmem [shape: f32[16,64], index: 3, kind: input, shape index: {}]
  %s4 = inlined_call_operand.vmem [shape: f32[128,32], index: 4, kind: output, shape index: {0}]
  %s5 = inlined_call_operand.vmem [shape: f32[128,32], index: 5, kind: output, shape index: {1}]
  %6 = xla_tuple %s4, %s5
  %s7 = sld [smem:[#allocation0]]
  $region34: #{forward.12} parent=0
    _
  %s9 = ssub.s32 1, %s7
  %s10 = scalar_select 0, %s9, %s7
  // Predicated region
  $region2: #{forward.12} parent=0 // pred_check
    _
  $region3: #{forward.12} parent=0 // pred_check_branch
    %12 = sbr.rel (0) target = $region5
  $region4: #{forward.12} parent=0 // pred_region
    _
  $region5: #{forward.12} parent=0 // pred_fallthru
    _
  // Predicated region
  $region6: #{forward.12} parent=0 // pred_check
    _
  $region7: #{forward.12} parent=0 // pred_check_branch
    %14 = sbr.rel (0) target = $region9
  $region8: #{forward.12} parent=0 // pred_region
    _
  $region9: #{forward.12} parent=0 // pred_fallthru
    _
  // Predicated region
  $region10: #{forward.12} parent=0 // pred_check
    _
  $region11: #{forward.12} parent=0 // pred_check_branch
    %16 = sbr.rel (0) target = $region13
  $region12: #{forward.12} parent=0 // pred_region
    _
  $region13: #{forward.12} parent=0 // pred_fallthru
    _
  // Predicated region
  $region14: #{forward.12} parent=0 // pred_check
    _
  $region15: #{forward.12} parent=0 // pred_check_branch
    %18 = sbr.rel (0) target = $region17
  $region16: #{forward.12} parent=0 // pred_region
    _
  $region17: #{forward.12} parent=0 // pred_fallthru
    _
  %v19 = vld [vmem:[%s0] sm:$0xff]
  %v20 = vld [vmem:[%s0 + $0x8] sm:$0xff]
  %v21 = vld [vmem:[%s0 + $0x10] sm:$0xff]
  %v22 = vld [vmem:[%s0 + $0x18] sm:$0xff]
  %v23 = vld [vmem:[%s0 + $0x20] sm:$0xff]
  %v24 = vld [vmem:[%s0 + $0x28] sm:$0xff]
  %v25 = vld [vmem:[%s0 + $0x30] sm:$0xff]
  %v26 = vld [vmem:[%s0 + $0x38] sm:$0xff]
  %v27 = vld [vmem:[%s0 + $0x40] sm:$0xff]
  %v28 = vld [vmem:[%s0 + $0x48] sm:$0xff]
  %v29 = vld [vmem:[%s0 + $0x50] sm:$0xff]
  %v30 = vld [vmem:[%s0 + $0x58] sm:$0xff]
  %v31 = vld [vmem:[%s0 + $0x60] sm:$0xff]
  %v32 = vld [vmem:[%s0 + $0x68] sm:$0xff]
  %v33 = vld [vmem:[%s0 + $0x70] sm:$0xff]
  %v34 = vld [vmem:[%s0 + $0x78] sm:$0xff]
  %vm35 = vcmask 130048
  %v36 = vsel %vm35, %v19, 0.0
  %37 = vadd.xlane.f32.xlu0 %v36
  %v38 = vpop.xlane.xlu0 %37
  %v39 = vsel %vm35, %v20, 0.0
  %40 = vadd.xlane.f32.xlu0 %v39
  %v41 = vpop.xlane.xlu0 %40
  %v42 = vsel %vm35, %v21, 0.0
  %43 = vadd.xlane.f32.xlu0 %v42
  %v44 = vpop.xlane.xlu0 %43
  %v45 = vsel %vm35, %v22, 0.0
  %46 = vadd.xlane.f32.xlu0 %v45
  %v47 = vpop.xlane.xlu0 %46
  %v48 = vsel %vm35, %v23, 0.0
  %49 = vadd.xlane.f32.xlu0 %v48
  %v50 = vpop.xlane.xlu0 %49
  %v51 = vsel %vm35, %v24, 0.0
  %52 = vadd.xlane.f32.xlu0 %v51
  %v53 = vpop.xlane.xlu0 %52
  %v54 = vsel %vm35, %v25, 0.0
  %55 = vadd.xlane.f32.xlu0 %v54
  %v56 = vpop.xlane.xlu0 %55
  %v57 = vsel %vm35, %v26, 0.0
  %58 = vadd.xlane.f32.xlu0 %v57
  %v59 = vpop.xlane.xlu0 %58
  %v60 = vsel %vm35, %v27, 0.0
  %61 = vadd.xlane.f32.xlu0 %v60
  %v62 = vpop.xlane.xlu0 %61
  %v63 = vsel %vm35, %v28, 0.0
  %64 = vadd.xlane.f32.xlu0 %v63
  %v65 = vpop.xlane.xlu0 %64
  %v66 = vsel %vm35, %v29, 0.0
  %67 = vadd.xlane.f32.xlu0 %v66
  %v68 = vpop.xlane.xlu0 %67
  %v69 = vsel %vm35, %v30, 0.0
  %70 = vadd.xlane.f32.xlu0 %v69
  %v71 = vpop.xlane.xlu0 %70
  %v72 = vsel %vm35, %v31, 0.0
  %73 = vadd.xlane.f32.xlu0 %v72
  %v74 = vpop.xlane.xlu0 %73
  %v75 = vsel %vm35, %v32, 0.0
  %76 = vadd.xlane.f32.xlu0 %v75
  %v77 = vpop.xlane.xlu0 %76
  %v78 = vsel %vm35, %v33, 0.0
  %79 = vadd.xlane.f32.xlu0 %v78
  %v80 = vpop.xlane.xlu0 %79
  %v81 = vsel %vm35, %v34, 0.0
  %82 = vadd.xlane.f32.xlu0 %v81
  %v83 = vpop.xlane.xlu0 %82
  %v84 = vrcp.pop 16.0
  %v85 = vmul.f32 %v38, %v84
  %v86 = vmul.f32 %v41, %v84
  %v87 = vmul.f32 %v44, %v84
  %v88 = vmul.f32 %v47, %v84
  %v89 = vmul.f32 %v50, %v84
  %v90 = vmul.f32 %v53, %v84
  %v91 = vmul.f32 %v56, %v84
  %v92 = vmul.f32 %v59, %v84
  %v93 = vmul.f32 %v62, %v84
  %v94 = vmul.f32 %v65, %v84
  %v95 = vmul.f32 %v68, %v84
  %v96 = vmul.f32 %v71, %v84
  %v97 = vmul.f32 %v74, %v84
  %v98 = vmul.f32 %v77, %v84
  %v99 = vmul.f32 %v80, %v84
  %v100 = vmul.f32 %v83, %v84
  %v101 = vsub.f32 %v19, %v85
  %v102 = vsub.f32 %v20, %v86
  %v103 = vsub.f32 %v21, %v87
  %v104 = vsub.f32 %v22, %v88
  %v105 = vsub.f32 %v23, %v89
  %v106 = vsub.f32 %v24, %v90
  %v107 = vsub.f32 %v25, %v91
  %v108 = vsub.f32 %v26, %v92
  %v109 = vsub.f32 %v27, %v93
  %v110 = vsub.f32 %v28, %v94
  %v111 = vsub.f32 %v29, %v95
  %v112 = vsub.f32 %v30, %v96
  %v113 = vsub.f32 %v31, %v97
  %v114 = vsub.f32 %v32, %v98
  %v115 = vsub.f32 %v33, %v99
  %v116 = vsub.f32 %v34, %v100
  %v117 = vmul.f32 %v101, %v101
  %v118 = vmul.f32 %v102, %v102
  %v119 = vmul.f32 %v103, %v103
  %v120 = vmul.f32 %v104, %v104
  %v121 = vmul.f32 %v105, %v105
  %v122 = vmul.f32 %v106, %v106
  %v123 = vmul.f32 %v107, %v107
  %v124 = vmul.f32 %v108, %v108
  %v125 = vmul.f32 %v109, %v109
  %v126 = vmul.f32 %v110, %v110
  %v127 = vmul.f32 %v111, %v111
  %v128 = vmul.f32 %v112, %v112
  %v129 = vmul.f32 %v113, %v113
  %v130 = vmul.f32 %v114, %v114
  %v131 = vmul.f32 %v115, %v115
  %v132 = vmul.f32 %v116, %v116
  %v133 = vsel %vm35, %v117, 0.0
  %134 = vadd.xlane.f32.xlu0 %v133
  %v135 = vpop.xlane.xlu0 %134
  %v136 = vsel %vm35, %v118, 0.0
  %137 = vadd.xlane.f32.xlu0 %v136
  %v138 = vpop.xlane.xlu0 %137
  %v139 = vsel %vm35, %v119, 0.0
  %140 = vadd.xlane.f32.xlu0 %v139
  %v141 = vpop.xlane.xlu0 %140
  %v142 = vsel %vm35, %v120, 0.0
  %143 = vadd.xlane.f32.xlu0 %v142
  %v144 = vpop.xlane.xlu0 %143
  %v145 = vsel %vm35, %v121, 0.0
  %146 = vadd.xlane.f32.xlu0 %v145
  %v147 = vpop.xlane.xlu0 %146
  %v148 = vsel %vm35, %v122, 0.0
  %149 = vadd.xlane.f32.xlu0 %v148
  %v150 = vpop.xlane.xlu0 %149
  %v151 = vsel %vm35, %v123, 0.0
  %152 = vadd.xlane.f32.xlu0 %v151
  %v153 = vpop.xlane.xlu0 %152
  %v154 = vsel %vm35, %v124, 0.0
  %155 = vadd.xlane.f32.xlu0 %v154
  %v156 = vpop.xlane.xlu0 %155
  %v157 = vsel %vm35, %v125, 0.0
  %158 = vadd.xlane.f32.xlu0 %v157
  %v159 = vpop.xlane.xlu0 %158
  %v160 = vsel %vm35, %v126, 0.0
  %161 = vadd.xlane.f32.xlu0 %v160
  %v162 = vpop.xlane.xlu0 %161
  %v163 = vsel %vm35, %v127, 0.0
  %164 = vadd.xlane.f32.xlu0 %v163
  %v165 = vpop.xlane.xlu0 %164
  %v166 = vsel %vm35, %v128, 0.0
  %167 = vadd.xlane.f32.xlu0 %v166
  %v168 = vpop.xlane.xlu0 %167
  %v169 = vsel %vm35, %v129, 0.0
  %170 = vadd.xlane.f32.xlu0 %v169
  %v171 = vpop.xlane.xlu0 %170
  %v172 = vsel %vm35, %v130, 0.0
  %173 = vadd.xlane.f32.xlu0 %v172
  %v174 = vpop.xlane.xlu0 %173
  %v175 = vsel %vm35, %v131, 0.0
  %176 = vadd.xlane.f32.xlu0 %v175
  %v177 = vpop.xlane.xlu0 %176
  %v178 = vsel %vm35, %v132, 0.0
  %179 = vadd.xlane.f32.xlu0 %v178
  %v180 = vpop.xlane.xlu0 %179
  %v181 = vmul.f32 %v135, %v84
  %v182 = vmul.f32 %v138, %v84
  %v183 = vmul.f32 %v141, %v84
  %v184 = vmul.f32 %v144, %v84
  %v185 = vmul.f32 %v147, %v84
  %v186 = vmul.f32 %v150, %v84
  %v187 = vmul.f32 %v153, %v84
  %v188 = vmul.f32 %v156, %v84
  %v189 = vmul.f32 %v159, %v84
  %v190 = vmul.f32 %v162, %v84
  %v191 = vmul.f32 %v165, %v84
  %v192 = vmul.f32 %v168, %v84
  %v193 = vmul.f32 %v171, %v84
  %v194 = vmul.f32 %v174, %v84
  %v195 = vmul.f32 %v177, %v84
  %v196 = vmul.f32 %v180, %v84
  %v197 = vadd.f32 %v181, 1e-05
  %v198 = vadd.f32 %v182, 1e-05
  %v199 = vadd.f32 %v183, 1e-05
  %v200 = vadd.f32 %v184, 1e-05
  %v201 = vadd.f32 %v185, 1e-05
  %v202 = vadd.f32 %v186, 1e-05
  %v203 = vadd.f32 %v187, 1e-05
  %v204 = vadd.f32 %v188, 1e-05
  %v205 = vadd.f32 %v189, 1e-05
  %v206 = vadd.f32 %v190, 1e-05
  %v207 = vadd.f32 %v191, 1e-05
  %v208 = vadd.f32 %v192, 1e-05
  %v209 = vadd.f32 %v193, 1e-05
  %v210 = vadd.f32 %v194, 1e-05
  %v211 = vadd.f32 %v195, 1e-05
  %v212 = vadd.f32 %v196, 1e-05
  %v213 = vrsqrt.pop %v197
  %v214 = vrsqrt.pop %v198
  %v215 = vrsqrt.pop %v199
  %v216 = vrsqrt.pop %v200
  %v217 = vrsqrt.pop %v201
  %v218 = vrsqrt.pop %v202
  %v219 = vrsqrt.pop %v203
  %v220 = vrsqrt.pop %v204
  %v221 = vrsqrt.pop %v205
  %v222 = vrsqrt.pop %v206
  %v223 = vrsqrt.pop %v207
  %v224 = vrsqrt.pop %v208
  %v225 = vrsqrt.pop %v209
  %v226 = vrsqrt.pop %v210
  %v227 = vrsqrt.pop %v211
  %v228 = vrsqrt.pop %v212
  %v229 = vmul.f32 %v101, %v213
  %v230 = vmul.f32 %v102, %v214
  %v231 = vmul.f32 %v103, %v215
  %v232 = vmul.f32 %v104, %v216
  %v233 = vmul.f32 %v105, %v217
  %v234 = vmul.f32 %v106, %v218
  %v235 = vmul.f32 %v107, %v219
  %v236 = vmul.f32 %v108, %v220
  %v237 = vmul.f32 %v109, %v221
  %v238 = vmul.f32 %v110, %v222
  %v239 = vmul.f32 %v111, %v223
  %v240 = vmul.f32 %v112, %v224
  %v241 = vmul.f32 %v113, %v225
  %v242 = vmul.f32 %v114, %v226
  %v243 = vmul.f32 %v115, %v227
  %v244 = vmul.f32 %v116, %v228
  %v245 = vld [vmem:[%s1] sm:$0x1]
  %v247 = vlaneseq
  %v248 = vshrl.u32 %v247, 7
  %v249 = vsub.s32 0, %v248
  %v250 = vrot.slane %v245, %v249
  %v252 = vmul.f32 %v229, %v250
  %v253 = vmul.f32 %v230, %v250
  %v254 = vmul.f32 %v231, %v250
  %v255 = vmul.f32 %v232, %v250
  %v256 = vmul.f32 %v233, %v250
  %v257 = vmul.f32 %v234, %v250
  %v258 = vmul.f32 %v235, %v250
  %v259 = vmul.f32 %v236, %v250
  %v260 = vmul.f32 %v237, %v250
  %v261 = vmul.f32 %v238, %v250
  %v262 = vmul.f32 %v239, %v250
  %v263 = vmul.f32 %v240, %v250
  %v264 = vmul.f32 %v241, %v250
  %v265 = vmul.f32 %v242, %v250
  %v266 = vmul.f32 %v243, %v250
  %v267 = vmul.f32 %v244, %v250
  %v268 = vld [vmem:[%s2] sm:$0x1]
  %v270 = vlaneseq
  %v271 = vshrl.u32 %v270, 7
  %v272 = vsub.s32 0, %v271
  %v273 = vrot.slane %v268, %v272
  %v275 = vadd.f32 %v252, %v273
  %v276 = vadd.f32 %v253, %v273
  %v277 = vadd.f32 %v254, %v273
  %v278 = vadd.f32 %v255, %v273
  %v279 = vadd.f32 %v256, %v273
  %v280 = vadd.f32 %v257, %v273
  %v281 = vadd.f32 %v258, %v273
  %v282 = vadd.f32 %v259, %v273
  %v283 = vadd.f32 %v260, %v273
  %v284 = vadd.f32 %v261, %v273
  %v285 = vadd.f32 %v262, %v273
  %v286 = vadd.f32 %v263, %v273
  %v287 = vadd.f32 %v264, %v273
  %v288 = vadd.f32 %v265, %v273
  %v289 = vadd.f32 %v266, %v273
  %v290 = vadd.f32 %v267, %v273
  %v291 = vld [vmem:[%s3] sm:$0xff]
  %v292 = vld [vmem:[%s3 + $0x8] sm:$0xff]
  %v294 = vsel %vm35, %v275, 0
  %v297 = vsel %vm35, %v276, 0
  %v300 = vsel %vm35, %v277, 0
  %v303 = vsel %vm35, %v278, 0
  %v306 = vsel %vm35, %v279, 0
  %v309 = vsel %vm35, %v280, 0
  %v312 = vsel %vm35, %v281, 0
  %v315 = vsel %vm35, %v282, 0
  %v318 = vsel %vm35, %v283, 0
  %v321 = vsel %vm35, %v284, 0
  %v324 = vsel %vm35, %v285, 0
  %v327 = vsel %vm35, %v286, 0
  %v330 = vsel %vm35, %v287, 0
  %v333 = vsel %vm35, %v288, 0
  %v336 = vsel %vm35, %v289, 0
  %v339 = vsel %vm35, %v290, 0
  %341 = vmatprep.subr.mxu0 0.0
  %342 = vmatpush1.msra.mxu0 0.0
  %343 = vmatprep.subr.mxu0 0.0
  %344 = vmatpush1.msra.mxu0 0.0
  %345 = vmatprep.subr.mxu0 0.0
  %346 = vmatpush1.msra.mxu0 0.0
  %347 = vmatprep.subr.mxu0 0.0
  %348 = vmatpush1.msra.mxu0 0.0
  %349 = vmatprep.subr.mxu0 0.0
  %350 = vmatpush1.msra.mxu0 0.0
  %351 = vmatprep.subr.mxu0 0.0
  %352 = vmatpush1.msra.mxu0 0.0
  %353 = vmatprep.subr.mxu0 0.0
  %354 = vmatpush1.msra.mxu0 0.0
  %355 = vmatprep.subr.mxu0 0.0
  %356 = vmatpush1.msra.mxu0 0.0
  %357 = vmatprep.subr.mxu0 0.0
  %358 = vmatpush1.msra.mxu0 0.0
  %359 = vmatprep.subr.mxu0 0.0
  %360 = vmatpush1.msra.mxu0 0.0
  %361 = vmatprep.subr.mxu0 0.0
  %362 = vmatpush1.msra.mxu0 0.0
  %363 = vmatprep.subr.mxu0 0.0
  %364 = vmatpush1.msra.mxu0 0.0
  %365 = vmatprep.subr.mxu0 0.0
  %366 = vmatpush1.msra.mxu0 0.0
  %367 = vmatprep.subr.mxu0 0.0
  %368 = vmatpush1.msra.mxu0 0.0
  %369 = vmatprep.subr.mxu0 0.0
  %370 = vmatpush1.msra.mxu0 %v292
  %371 = vmatprep.subr.mxu0 0.0
  %372 = vmatpush1.msra.mxu0 %v291
  %373 = vmatprep.subr.mxu0 0.0
  %374 = vmatpush2.msra.mxu0 0.0
  %375 = vmatprep.subr.mxu0 0.0
  %376 = vmatpush2.msra.mxu0 0.0
  %377 = vmatprep.subr.mxu0 0.0
  %378 = vmatpush2.msra.mxu0 0.0
  %379 = vmatprep.subr.mxu0 0.0
  %380 = vmatpush2.msra.mxu0 0.0
  %381 = vmatprep.subr.mxu0 0.0
  %382 = vmatpush2.msra.mxu0 0.0
  %383 = vmatprep.subr.mxu0 0.0
  %384 = vmatpush2.msra.mxu0 0.0
  %385 = vmatprep.subr.mxu0 0.0
  %386 = vmatpush2.msra.mxu0 0.0
  %387 = vmatprep.subr.mxu0 0.0
  %388 = vmatpush2.msra.mxu0 0.0
  %389 = vmatprep.subr.mxu0 0.0
  %390 = vmatpush2.msra.mxu0 0.0
  %391 = vmatprep.subr.mxu0 0.0
  %392 = vmatpush2.msra.mxu0 0.0
  %393 = vmatprep.subr.mxu0 0.0
  %394 = vmatpush2.msra.mxu0 0.0
  %395 = vmatprep.subr.mxu0 0.0
  %396 = vmatpush2.msra.mxu0 0.0
  %397 = vmatprep.subr.mxu0 0.0
  %398 = vmatpush2.msra.mxu0 0.0
  %399 = vmatprep.subr.mxu0 0.0
  %400 = vmatpush2.msra.mxu0 0.0
  %401 = vmatprep.subr.mxu0 0.0
  %402 = vmatpush2.msra.mxu0 0.0
  %403 = vmatprep.subr.mxu0 0.0
  %404 = vmatpush2.msra.mxu0 0.0
  %405 = vmatprep.mubr.f32.mxu0 0.0
  %406 = vmatmul.mubr.f32.gmra.mxu0 %v294
  %v407 = vpop.f32.mrf.mxu0
  %v408 = vadd.f32 0.0, %v407
  %v409 = vpop.f32.mrf.mxu0
  %410 = vmatprep.mubr.f32.mxu0 0.0
  %411 = vmatmul.mubr.f32.gmra.mxu0 %v297
  %v412 = vpop.f32.mrf.mxu0
  %v413 = vadd.f32 0.0, %v412
  %v414 = vpop.f32.mrf.mxu0
  %415 = vmatprep.mubr.f32.mxu0 0.0
  %416 = vmatmul.mubr.f32.gmra.mxu0 %v300
  %v417 = vpop.f32.mrf.mxu0
  %v418 = vadd.f32 0.0, %v417
  %v419 = vpop.f32.mrf.mxu0
  %420 = vmatprep.mubr.f32.mxu0 0.0
  %421 = vmatmul.mubr.f32.gmra.mxu0 %v303
  %v422 = vpop.f32.mrf.mxu0
  %v423 = vadd.f32 0.0, %v422
  %v424 = vpop.f32.mrf.mxu0
  %425 = vmatprep.mubr.f32.mxu0 0.0
  %426 = vmatmul.mubr.f32.gmra.mxu0 %v306
  %v427 = vpop.f32.mrf.mxu0
  %v428 = vadd.f32 0.0, %v427
  %v429 = vpop.f32.mrf.mxu0
  %430 = vmatprep.mubr.f32.mxu0 0.0
  %431 = vmatmul.mubr.f32.gmra.mxu0 %v309
  %v432 = vpop.f32.mrf.mxu0
  %v433 = vadd.f32 0.0, %v432
  %v434 = vpop.f32.mrf.mxu0
  %435 = vmatprep.mubr.f32.mxu0 0.0
  %436 = vmatmul.mubr.f32.gmra.mxu0 %v312
  %v437 = vpop.f32.mrf.mxu0
  %v438 = vadd.f32 0.0, %v437
  %v439 = vpop.f32.mrf.mxu0
  %440 = vmatprep.mubr.f32.mxu0 0.0
  %441 = vmatmul.mubr.f32.gmra.mxu0 %v315
  %v442 = vpop.f32.mrf.mxu0
  %v443 = vadd.f32 0.0, %v442
  %v444 = vpop.f32.mrf.mxu0
  %445 = vmatprep.mubr.f32.mxu0 0.0
  %446 = vmatmul.mubr.f32.gmra.mxu0 %v318
  %v447 = vpop.f32.mrf.mxu0
  %v448 = vadd.f32 0.0, %v447
  %v449 = vpop.f32.mrf.mxu0
  %450 = vmatprep.mubr.f32.mxu0 0.0
  %451 = vmatmul.mubr.f32.gmra.mxu0 %v321
  %v452 = vpop.f32.mrf.mxu0
  %v453 = vadd.f32 0.0, %v452
  %v454 = vpop.f32.mrf.mxu0
  %455 = vmatprep.mubr.f32.mxu0 0.0
  %456 = vmatmul.mubr.f32.gmra.mxu0 %v324
  %v457 = vpop.f32.mrf.mxu0
  %v458 = vadd.f32 0.0, %v457
  %v459 = vpop.f32.mrf.mxu0
  %460 = vmatprep.mubr.f32.mxu0 0.0
  %461 = vmatmul.mubr.f32.gmra.mxu0 %v327
  %v462 = vpop.f32.mrf.mxu0
  %v463 = vadd.f32 0.0, %v462
  %v464 = vpop.f32.mrf.mxu0
  %465 = vmatprep.mubr.f32.mxu0 0.0
  %466 = vmatmul.mubr.f32.gmra.mxu0 %v330
  %v467 = vpop.f32.mrf.mxu0
  %v468 = vadd.f32 0.0, %v467
  %v469 = vpop.f32.mrf.mxu0
  %470 = vmatprep.mubr.f32.mxu0 0.0
  %471 = vmatmul.mubr.f32.gmra.mxu0 %v333
  %v472 = vpop.f32.mrf.mxu0
  %v473 = vadd.f32 0.0, %v472
  %v474 = vpop.f32.mrf.mxu0
  %475 = vmatprep.mubr.f32.mxu0 0.0
  %476 = vmatmul.mubr.f32.gmra.mxu0 %v336
  %v477 = vpop.f32.mrf.mxu0
  %v478 = vadd.f32 0.0, %v477
  %v479 = vpop.f32.mrf.mxu0
  %480 = vmatprep.mubr.f32.mxu0 0.0
  %481 = vmatmul.mubr.f32.gmra.mxu0 %v339
  %v482 = vpop.f32.mrf.mxu0
  %v483 = vadd.f32 0.0, %v482
  %v484 = vpop.f32.mrf.mxu0
  %485 = vdwg.mxu0
  %vm486 = vcmask 261120
  %487 = vst.msk [vmem:[%s4] sm:$0xff] %vm486, %v408
  %488 = vst.msk [vmem:[%s4 + $0x8] sm:$0xff] %vm486, %v413
  %489 = vst.msk [vmem:[%s4 + $0x10] sm:$0xff] %vm486, %v418
  %490 = vst.msk [vmem:[%s4 + $0x18] sm:$0xff] %vm486, %v423
  %491 = vst.msk [vmem:[%s4 + $0x20] sm:$0xff] %vm486, %v428
  %492 = vst.msk [vmem:[%s4 + $0x28] sm:$0xff] %vm486, %v433
  %493 = vst.msk [vmem:[%s4 + $0x30] sm:$0xff] %vm486, %v438
  %494 = vst.msk [vmem:[%s4 + $0x38] sm:$0xff] %vm486, %v443
  %495 = vst.msk [vmem:[%s4 + $0x40] sm:$0xff] %vm486, %v448
  %496 = vst.msk [vmem:[%s4 + $0x48] sm:$0xff] %vm486, %v453
  %497 = vst.msk [vmem:[%s4 + $0x50] sm:$0xff] %vm486, %v458
  %498 = vst.msk [vmem:[%s4 + $0x58] sm:$0xff] %vm486, %v463
  %499 = vst.msk [vmem:[%s4 + $0x60] sm:$0xff] %vm486, %v468
  %500 = vst.msk [vmem:[%s4 + $0x68] sm:$0xff] %vm486, %v473
  %501 = vst.msk [vmem:[%s4 + $0x70] sm:$0xff] %vm486, %v478
  %502 = vst.msk [vmem:[%s4 + $0x78] sm:$0xff] %vm486, %v483
  %519 = vrot.lane.b32.xlu0 %v408, 96
  %v520 = vpop.permute.xlu0 %519
  %521 = vrot.lane.b32.xlu0 %v413, 96
  %v522 = vpop.permute.xlu0 %521
  %523 = vrot.lane.b32.xlu0 %v418, 96
  %v524 = vpop.permute.xlu0 %523
  %525 = vrot.lane.b32.xlu0 %v423, 96
  %v526 = vpop.permute.xlu0 %525
  %527 = vrot.lane.b32.xlu0 %v428, 96
  %v528 = vpop.permute.xlu0 %527
  %529 = vrot.lane.b32.xlu0 %v433, 96
  %v530 = vpop.permute.xlu0 %529
  %531 = vrot.lane.b32.xlu0 %v438, 96
  %v532 = vpop.permute.xlu0 %531
  %533 = vrot.lane.b32.xlu0 %v443, 96
  %v534 = vpop.permute.xlu0 %533
  %535 = vrot.lane.b32.xlu0 %v448, 96
  %v536 = vpop.permute.xlu0 %535
  %537 = vrot.lane.b32.xlu0 %v453, 96
  %v538 = vpop.permute.xlu0 %537
  %539 = vrot.lane.b32.xlu0 %v458, 96
  %v540 = vpop.permute.xlu0 %539
  %541 = vrot.lane.b32.xlu0 %v463, 96
  %v542 = vpop.permute.xlu0 %541
  %543 = vrot.lane.b32.xlu0 %v468, 96
  %v544 = vpop.permute.xlu0 %543
  %545 = vrot.lane.b32.xlu0 %v473, 96
  %v546 = vpop.permute.xlu0 %545
  %547 = vrot.lane.b32.xlu0 %v478, 96
  %v548 = vpop.permute.xlu0 %547
  %549 = vrot.lane.b32.xlu0 %v483, 96
  %v550 = vpop.permute.xlu0 %549
  %567 = vst.msk [vmem:[%s5] sm:$0xff] %vm486, %v520
  %568 = vst.msk [vmem:[%s5 + $0x8] sm:$0xff] %vm486, %v522
  %569 = vst.msk [vmem:[%s5 + $0x10] sm:$0xff] %vm486, %v524
  %570 = vst.msk [vmem:[%s5 + $0x18] sm:$0xff] %vm486, %v526
  %571 = vst.msk [vmem:[%s5 + $0x20] sm:$0xff] %vm486, %v528
  %572 = vst.msk [vmem:[%s5 + $0x28] sm:$0xff] %vm486, %v530
  %573 = vst.msk [vmem:[%s5 + $0x30] sm:$0xff] %vm486, %v532
  %574 = vst.msk [vmem:[%s5 + $0x38] sm:$0xff] %vm486, %v534
  %575 = vst.msk [vmem:[%s5 + $0x40] sm:$0xff] %vm486, %v536
  %576 = vst.msk [vmem:[%s5 + $0x48] sm:$0xff] %vm486, %v538
  %577 = vst.msk [vmem:[%s5 + $0x50] sm:$0xff] %vm486, %v540
  %578 = vst.msk [vmem:[%s5 + $0x58] sm:$0xff] %vm486, %v542
  %579 = vst.msk [vmem:[%s5 + $0x60] sm:$0xff] %vm486, %v544
  %580 = vst.msk [vmem:[%s5 + $0x68] sm:$0xff] %vm486, %v546
  %581 = vst.msk [vmem:[%s5 + $0x70] sm:$0xff] %vm486, %v548
  %582 = vst.msk [vmem:[%s5 + $0x78] sm:$0xff] %vm486, %v550
  // Predicated region
  $region18: #{forward.12} parent=0 // pred_check
    _
  $region19: #{forward.12} parent=0 // pred_check_branch
    %584 = sbr.rel (0) target = $region21
  $region20: #{forward.12} parent=0 // pred_region
    _
  $region21: #{forward.12} parent=0 // pred_fallthru
    _
  // Predicated region
  $region22: #{forward.12} parent=0 // pred_check
    _
  $region23: #{forward.12} parent=0 // pred_check_branch
    %586 = sbr.rel (0) target = $region25
  $region24: #{forward.12} parent=0 // pred_region
    _
  $region25: #{forward.12} parent=0 // pred_fallthru
    _
  // Predicated region
  $region26: #{forward.12} parent=0 // pred_check
    _
  $region27: #{forward.12} parent=0 // pred_check_branch
    %588 = sbr.rel (0) target = $region29
  $region28: #{forward.12} parent=0 // pred_region
    _
  $region29: #{forward.12} parent=0 // pred_fallthru
    _
  // Predicated region
  $region30: #{forward.12} parent=0 // pred_check
    _
  $region31: #{forward.12} parent=0 // pred_check_branch
    %590 = sbr.rel (0) target = $region33
  $region32: #{forward.12} parent=0 // pred_region
    _
  $region33: #{forward.12} parent=0 // pred_fallthru
    _

// kernel: forward.10
$region0: #{forward.10}
  #allocation0 [shape = 'u32[]', space=smem, size = 0x4, offset = 0x4, fixed_abs, tag = 'smem constant byte address 0x4 - core index']
  #allocation1 [shape = 'u32[144,128]{1,0:T(1,128)}', space=vmem, size = 0x12000, scoped, tag = 'internal scratch']
  #allocation2 [shape = 'f32[64,128]{1,0:T(8,128)}', space=vmem, size = 0x8000, scoped, tag = 'scratch operand']
  %s0 = inlined_call_operand.vmem [shape: f32[2,64,32], index: 0, kind: input, shape index: {}]
  %s1 = inlined_call_operand.vmem [shape: f32[2,64,32], index: 1, kind: input, shape index: {}]
  %s2 = inlined_call_operand.vmem [shape: f32[2,32,128], index: 2, kind: input, shape index: {}]
  %s3 = inlined_call_operand.vmem [shape: f32[2,2,16,32], index: 3, kind: input, shape index: {}]
  %s4 = inlined_call_operand.vmem [shape: f32[2,2,1,32], index: 4, kind: input, shape index: {}]
  %s5 = inlined_call_operand.vmem [shape: f32[2,2,1,32], index: 5, kind: input, shape index: {}]
  %s6 = inlined_call_operand.vmem [shape: f32[2,2,64,32], index: 6, kind: output, shape index: {}]
  %s7 = sld [smem:[#allocation0]]
  $region170: #{forward.10} parent=0
    _
  %s9 = ssub.s32 1, %s7
  %s10 = scalar_select 0, %s9, %s7
  $region1: #{forward.10} parent=0
    #allocation3 [shape = 'u8[32768]{0}', space=vmem, size = 0x8000, scoped, tag = 'input window, operand 3']
    #allocation4 [shape = 'u8[2048]{0}', space=vmem, size = 0x800, scoped, tag = 'input window, operand 4']
    #allocation5 [shape = 'u8[2048]{0}', space=vmem, size = 0x800, scoped, tag = 'input window, operand 5']
    loop: start=0, step=1, limit=6
    $region2: #{forward.10} parent=1 // loop_pre_header
      _
    $region3: #{forward.10} parent=1 // loop_header
      %s12 = sphi 0, %s16
      %p13 = scmp.ge.s32.totalorder %s12, 6
      %s19 = sphi 0, %s31
      %s20 = sphi 0, %s27
      %s21 = sphi 0, %s19
      %s22 = sphi 0, %s20
      %s23 = sphi 0, %s21
      %s24 = sphi 0, %s22
      %s34 = sphi 0, %s36
      %s37 = sphi 0, %s34
      %s38 = sphi 0, %s37
      %s54 = sphi 0, %s38
      %s60 = sphi 0, %s62
      %s63 = sphi 0, %s60
      %s64 = sphi 0, %s63
      %s80 = sphi 0, %s64
      %s86 = sphi 0, %s88
      %s89 = sphi 0, %s86
      %s90 = sphi 0, %s89
      %s106 = sphi 0, %s90
      %s112 = sphi 0, %s114
      %s115 = sphi 0, %s112
      %s116 = sphi 0, %s115
      %s132 = sphi 0, %s116
      %s138 = sphi 0, %s140
      %s141 = sphi 0, %s138
      %s142 = sphi 0, %s141
      %s158 = sphi 0, %s142
      %s164 = sphi 0, %s166
      %s167 = sphi 0, %s164
      %s168 = sphi 0, %s167
      %s184 = sphi 0, %s168
      %s192 = sphi 0, %s194
      %s195 = sphi 0, %s192
      %s196 = sphi 0, %s195
      %s212 = sphi 0, %s196
    $region4: #{forward.10} parent=1 // loop_header_branch
      %15 = sbr.rel (%p13) target = $region8
    $region5: #{forward.10} parent=1 // loop_body
      %s17 = ssub.s32 %s12, 1
      %s18 = ssub.s32 %s12, 2
      %s25 = sadd.s32 1, %s20
      %p26 = scmp.ge.s32.totalorder %s25, 2
      %s27 = scalar_select %p26, 0, %s25
      %s28 = sadd.s32 1, %s19
      %s29 = scalar_select %p26, %s28, %s19
      %p30 = scmp.ge.s32.totalorder %s29, 2
      %s31 = scalar_select %p30, 0, %s29
      %s32 = ssub.s32 %s19, %s31
      %p33 = scmp.eq.s32.totalorder %s32, 0
      %s35 = sadd.s32 %s34, 1
      %s36 = scalar_select %p33, %s34, %s35
      %p39 = pneg %p33
      %p40 = scmp.eq.s32.totalorder %s12, 3
      %p41 = por %p39, %p40
      %p42 = scmp.ne.s32.totalorder %s34, %s37
      %p43 = scmp.eq.s32.totalorder %s12, 0
      %p44 = por %p42, %p43
      %p45 = scmp.ne.s32.totalorder %s34, %s37
      %p46 = scmp.eq.s32.totalorder %s17, 3
      %p47 = por %p45, %p46
      %p48 = scmp.ne.s32.totalorder %s37, %s38
      %p49 = scmp.eq.s32.totalorder %s17, 0
      %p50 = por %p48, %p49
      %p51 = scmp.ne.s32.totalorder %s37, %s38
      %p52 = scmp.eq.s32.totalorder %s18, 3
      %p53 = por %p51, %p52
      %p55 = scmp.ne.s32.totalorder %s38, %s54
      %p56 = scmp.eq.s32.totalorder %s18, 0
      %p57 = por %p55, %p56
      %s58 = ssub.s32 %s19, %s31
      %p59 = scmp.eq.s32.totalorder %s58, 0
      %s61 = sadd.s32 %s60, 1
      %s62 = scalar_select %p59, %s60, %s61
      %p65 = pneg %p59
      %p66 = scmp.eq.s32.totalorder %s12, 3
      %p67 = por %p65, %p66
      %p68 = scmp.ne.s32.totalorder %s60, %s63
      %p69 = scmp.eq.s32.totalorder %s12, 0
      %p70 = por %p68, %p69
      %p71 = scmp.ne.s32.totalorder %s60, %s63
      %p72 = scmp.eq.s32.totalorder %s17, 3
      %p73 = por %p71, %p72
      %p74 = scmp.ne.s32.totalorder %s63, %s64
      %p75 = scmp.eq.s32.totalorder %s17, 0
      %p76 = por %p74, %p75
      %p77 = scmp.ne.s32.totalorder %s63, %s64
      %p78 = scmp.eq.s32.totalorder %s18, 3
      %p79 = por %p77, %p78
      %p81 = scmp.ne.s32.totalorder %s64, %s80
      %p82 = scmp.eq.s32.totalorder %s18, 0
      %p83 = por %p81, %p82
      %s84 = ssub.s32 %s20, %s27
      %p85 = scmp.eq.s32.totalorder %s84, 0
      %s87 = sadd.s32 %s86, 1
      %s88 = scalar_select %p85, %s86, %s87
      %p91 = pneg %p85
      %p92 = scmp.eq.s32.totalorder %s12, 3
      %p93 = por %p91, %p92
      %p94 = scmp.ne.s32.totalorder %s86, %s89
      %p95 = scmp.eq.s32.totalorder %s12, 0
      %p96 = por %p94, %p95
      %p97 = scmp.ne.s32.totalorder %s86, %s89
      %p98 = scmp.eq.s32.totalorder %s17, 3
      %p99 = por %p97, %p98
      %p100 = scmp.ne.s32.totalorder %s89, %s90
      %p101 = scmp.eq.s32.totalorder %s17, 0
      %p102 = por %p100, %p101
      %p103 = scmp.ne.s32.totalorder %s89, %s90
      %p104 = scmp.eq.s32.totalorder %s18, 3
      %p105 = por %p103, %p104
      %p107 = scmp.ne.s32.totalorder %s90, %s106
      %p108 = scmp.eq.s32.totalorder %s18, 0
      %p109 = por %p107, %p108
      %s110 = ssub.s32 %s20, %s27
      %p111 = scmp.eq.s32.totalorder %s110, 0
      %s113 = sadd.s32 %s112, 1
      %s114 = scalar_select %p111, %s112, %s113
      %p117 = pneg %p111
      %p118 = scmp.eq.s32.totalorder %s12, 3
      %p119 = por %p117, %p118
      %p120 = scmp.ne.s32.totalorder %s112, %s115
      %p121 = scmp.eq.s32.totalorder %s12, 0
      %p122 = por %p120, %p121
      %p123 = scmp.ne.s32.totalorder %s112, %s115
      %p124 = scmp.eq.s32.totalorder %s17, 3
      %p125 = por %p123, %p124
      %p126 = scmp.ne.s32.totalorder %s115, %s116
      %p127 = scmp.eq.s32.totalorder %s17, 0
      %p128 = por %p126, %p127
      %p129 = scmp.ne.s32.totalorder %s115, %s116
      %p130 = scmp.eq.s32.totalorder %s18, 3
      %p131 = por %p129, %p130
      %p133 = scmp.ne.s32.totalorder %s116, %s132
      %p134 = scmp.eq.s32.totalorder %s18, 0
      %p135 = por %p133, %p134
      %s136 = ssub.s32 %s20, %s27
      %p137 = scmp.eq.s32.totalorder %s136, 0
      %s139 = sadd.s32 %s138, 1
      %s140 = scalar_select %p137, %s138, %s139
      %p143 = pneg %p137
      %p144 = scmp.eq.s32.totalorder %s12, 3
      %p145 = por %p143, %p144
      %p146 = scmp.ne.s32.totalorder %s138, %s141
      %p147 = scmp.eq.s32.totalorder %s12, 0
      %p148 = por %p146, %p147
      %p149 = scmp.ne.s32.totalorder %s138, %s141
      %p150 = scmp.eq.s32.totalorder %s17, 3
      %p151 = por %p149, %p150
      %p152 = scmp.ne.s32.totalorder %s141, %s142
      %p153 = scmp.eq.s32.totalorder %s17, 0
      %p154 = por %p152, %p153
      %p155 = scmp.ne.s32.totalorder %s141, %s142
      %p156 = scmp.eq.s32.totalorder %s18, 3
      %p157 = por %p155, %p156
      %p159 = scmp.ne.s32.totalorder %s142, %s158
      %p160 = scmp.eq.s32.totalorder %s18, 0
      %p161 = por %p159, %p160
      %s162 = ssub.s32 %s20, %s27
      %p163 = scmp.eq.s32.totalorder %s162, 0
      %s165 = sadd.s32 %s164, 1
      %s166 = scalar_select %p163, %s164, %s165
      %p169 = pneg %p163
      %p170 = scmp.eq.s32.totalorder %s12, 3
      %p171 = por %p169, %p170
      %p172 = scmp.ne.s32.totalorder %s164, %s167
      %p173 = scmp.eq.s32.totalorder %s12, 0
      %p174 = por %p172, %p173
      %p175 = scmp.ne.s32.totalorder %s164, %s167
      %p176 = scmp.eq.s32.totalorder %s17, 3
      %p177 = por %p175, %p176
      %p178 = scmp.ne.s32.totalorder %s167, %s168
      %p179 = scmp.eq.s32.totalorder %s17, 0
      %p180 = por %p178, %p179
      %p181 = scmp.ne.s32.totalorder %s167, %s168
      %p182 = scmp.eq.s32.totalorder %s18, 3
      %p183 = por %p181, %p182
      %p185 = scmp.ne.s32.totalorder %s168, %s184
      %p186 = scmp.eq.s32.totalorder %s18, 0
      %p187 = por %p185, %p186
      %s188 = ssub.s32 %s19, %s31
      %s189 = ssub.s32 %s20, %s27
      %s190 = sor.u32 %s188, %s189
      %p191 = scmp.eq.s32.totalorder %s190, 0
      %s193 = sadd.s32 %s192, 1
      %s194 = scalar_select %p191, %s192, %s193
      %p197 = pneg %p191
      %p198 = scmp.eq.s32.totalorder %s12, 3
      %p199 = por %p197, %p198
      %p200 = scmp.ne.s32.totalorder %s192, %s195
      %p201 = scmp.eq.s32.totalorder %s12, 0
      %p202 = por %p200, %p201
      %p203 = scmp.ne.s32.totalorder %s192, %s195
      %p204 = scmp.eq.s32.totalorder %s17, 3
      %p205 = por %p203, %p204
      %p206 = scmp.ne.s32.totalorder %s195, %s196
      %p207 = scmp.eq.s32.totalorder %s17, 0
      %p208 = por %p206, %p207
      %p209 = scmp.ne.s32.totalorder %s195, %s196
      %p210 = scmp.eq.s32.totalorder %s18, 3
      %p211 = por %p209, %p210
      %p213 = scmp.ne.s32.totalorder %s196, %s212
      %p214 = scmp.eq.s32.totalorder %s18, 0
      %p215 = por %p213, %p214
      %p216 = scmp.le.s32.totalorder 1, %s12
      %p217 = scmp.lt.s32.totalorder %s12, 5
      %p218 = pnand %p216, %p217
      %p219 = pneg %p218
      // Predicated region
      $region9: #{forward.10} parent=5 // pred_check
        _
      $region10: #{forward.10} parent=5 // pred_check_branch
        %221 = sbr.rel (%p218) target = $region12
      $region11: #{forward.10} parent=5 // pred_region
        %s222 = ssub.s32 %s12, 1
      $region12: #{forward.10} parent=5 // pred_fallthru
        _
      %p223 = scmp.lt.s32.totalorder %s12, 4
      // Predicated region
      $region13: #{forward.10} parent=5 // pred_check
        %p224 = pneg %p223
      $region14: #{forward.10} parent=5 // pred_check_branch
        %226 = sbr.rel (%p224) target = $region16
      $region15: #{forward.10} parent=5 // pred_region
        // Predicated region
        $region17: #{forward.10} parent=15 // pred_check
          %p227 = pneg %p44
        $region18: #{forward.10} parent=15 // pred_check_branch
          %229 = sbr.rel (%p227) target = $region20
        $region19: #{forward.10} parent=15 // pred_region
          %p230 = scmp.lt.s32.totalorder %s19, 1
          %s231 = scalar_select %p230, %s19, 1
          %s232 = smul.addr %s231, 8
          %s233 = smul.addr %s232, 8
          %s234 = scalar_lea.vmem %s0, %s233
        $region20: #{forward.10} parent=15 // pred_fallthru
          _
        // Predicated region
        $region21: #{forward.10} parent=15 // pred_check
          %p235 = pneg %p70
        $region22: #{forward.10} parent=15 // pred_check_branch
          %237 = sbr.rel (%p235) target = $region24
        $region23: #{forward.10} parent=15 // pred_region
          %p238 = scmp.lt.s32.totalorder %s19, 1
          %s239 = scalar_select %p238, %s19, 1
          %s240 = smul.addr %s239, 8
          %s241 = smul.addr %s240, 8
          %s242 = scalar_lea.vmem %s1, %s241
        $region24: #{forward.10} parent=15 // pred_fallthru
          _
        // Predicated region
        $region25: #{forward.10} parent=15 // pred_check
          %p243 = pneg %p96
        $region26: #{forward.10} parent=15 // pred_check_branch
          %245 = sbr.rel (%p243) target = $region28
        $region27: #{forward.10} parent=15 // pred_region
          %p246 = scmp.lt.s32.totalorder %s20, 1
          %s247 = scalar_select %p246, %s20, 1
          %s248 = smul.addr %s247, 4
          %s249 = smul.addr %s248, 8
          %s250 = scalar_lea.vmem %s2, %s249
        $region28: #{forward.10} parent=15 // pred_fallthru
          _
        // Predicated region
        $region29: #{forward.10} parent=15 // pred_check
          %p251 = pneg %p122
        $region30: #{forward.10} parent=15 // pred_check_branch
          %253 = sbr.rel (%p251) target = $region32
        $region31: #{forward.10} parent=15 // pred_region
          %s254 = sand.u32 %s112, 1
          %s255 = sand.u32 %s112, 1
          %s256 = smul.addr %s255, 32
          %s257 = scalar_lea.vmem [#allocation3], %s256
          %s258 = smul.addr %s20, 2
          %s259 = smul.addr %s258, 8
          %s260 = scalar_lea.vmem %s3, %s259
          // Predicated region
          $region33: #{forward.10} parent=31 // pred_check
            _
          $region34: #{forward.10} parent=31 // pred_check_branch
            %262 = sbr.rel (0) target = $region36
          $region35: #{forward.10} parent=31 // pred_region
            // Predicated region
            $region37: #{forward.10} parent=35 // pred_check
              _
            $region38: #{forward.10} parent=35 // pred_check_branch
              %264 = sbr.rel (0) target = $region40
            $region39: #{forward.10} parent=35 // pred_region
              // Predicated region
              $region52: #{forward.10} parent=39 // pred_check
                _
              $region53: #{forward.10} parent=39 // pred_check_branch
                %286 = sbr.rel (0) target = $region55
              $region54: #{forward.10} parent=39 // pred_region
                loop: start=0, step=1, limit=1
                $region56: #{forward.10} parent=54 // loop_pre_header
                  _
                $region57: #{forward.10} parent=54 // loop_header
                  %s288 = sphi 0, %s292
                  %p289 = scmp.ge.s32.totalorder %s288, 1
                  %s293 = sphi %s260, %s260
                  %s294 = sphi %s257, %s257
                $region58: #{forward.10} parent=54 // loop_header_branch
                  %291 = sbr.rel (%p289) target = $region62
                $region59: #{forward.10} parent=54 // loop_body
                  %v295 = vld [vmem:[%s293] sm:$0xff]
                  %296 = vst [vmem:[%s294] sm:$0xff] %v295
                  %v297 = vld [vmem:[%s293 + $0x8] sm:$0xff]
                  %298 = vst [vmem:[%s294 + $0x8] sm:$0xff] %v297
                  %v299 = vld [vmem:[%s293 + $0x20] sm:$0xff]
                  %300 = vst [vmem:[%s294 + $0x10] sm:$0xff] %v299
                  %v301 = vld [vmem:[%s293 + $0x28] sm:$0xff]
                  %302 = vst [vmem:[%s294 + $0x18] sm:$0xff] %v301
                $region60: #{forward.10} parent=54 // loop_footer
                  %s292 = sadd.s32 1, %s288
                $region61: #{forward.10} parent=54 // loop_footer_branch
                  %287 = sbr.rel target = $region57
                $region62: #{forward.10} parent=54 // loop_exit
                  _
              $region55: #{forward.10} parent=39 // pred_fallthru
                _
              // Predicated region
              $region63: #{forward.10} parent=39 // pred_check
                _
              $region64: #{forward.10} parent=39 // pred_check_branch
                %304 = sbr.rel target = $region66
              $region65: #{forward.10} parent=39 // pred_region
                _
              $region66: #{forward.10} parent=39 // pred_fallthru
                _
            $region40: #{forward.10} parent=35 // pred_fallthru
              _
            // Predicated region
            $region41: #{forward.10} parent=35 // pred_check
              _
            $region42: #{forward.10} parent=35 // pred_check_branch
              %266 = sbr.rel target = $region44
            $region43: #{forward.10} parent=35 // pred_region
              %s268 = ssub.s32 256, 1
              loop: start=0, step=1, limit=1
              $region45: #{forward.10} parent=43 // loop_pre_header
                _
              $region46: #{forward.10} parent=43 // loop_header
                %s270 = sphi 0, %s274
                %p271 = scmp.ge.s32.totalorder %s270, 1
                %s275 = sphi %s260, %s260
                %s276 = sphi %s257, %s257
              $region47: #{forward.10} parent=43 // loop_header_branch
                %273 = sbr.rel (%p271) target = $region51
              $region48: #{forward.10} parent=43 // loop_body
                %v277 = vld [vmem:[%s275] sm:%s268]
                %278 = vst [vmem:[%s276] sm:%s268] %v277
                %v279 = vld [vmem:[%s275 + $0x8] sm:%s268]
                %280 = vst [vmem:[%s276 + $0x8] sm:%s268] %v279
                %v281 = vld [vmem:[%s275 + $0x20] sm:%s268]
                %282 = vst [vmem:[%s276 + $0x10] sm:%s268] %v281
                %v283 = vld [vmem:[%s275 + $0x28] sm:%s268]
                %284 = vst [vmem:[%s276 + $0x18] sm:%s268] %v283
              $region49: #{forward.10} parent=43 // loop_footer
                %s274 = sadd.s32 1, %s270
              $region50: #{forward.10} parent=43 // loop_footer_branch
                %269 = sbr.rel target = $region46
              $region51: #{forward.10} parent=43 // loop_exit
                _
            $region44: #{forward.10} parent=35 // pred_fallthru
              _
          $region36: #{forward.10} parent=31 // pred_fallthru
            _
          %305 = vnop
        $region32: #{forward.10} parent=15 // pred_fallthru
          _
        // Predicated region
        $region67: #{forward.10} parent=15 // pred_check
          %p306 = pneg %p148
        $region68: #{forward.10} parent=15 // pred_check_branch
          %308 = sbr.rel (%p306) target = $region70
        $region69: #{forward.10} parent=15 // pred_region
          %s309 = sand.u32 %s138, 1
          %s310 = sand.u32 %s138, 1
          %s311 = smul.addr %s310, 2
          %s312 = scalar_lea.vmem [#allocation4], %s311
          %s313 = scalar_lea.vmem %s4, %s20
          // Predicated region
          $region71: #{forward.10} parent=69 // pred_check
            _
          $region72: #{forward.10} parent=69 // pred_check_branch
            %315 = sbr.rel (0) target = $region74
          $region73: #{forward.10} parent=69 // pred_region
            // Predicated region
            $region75: #{forward.10} parent=73 // pred_check
              _
            $region76: #{forward.10} parent=73 // pred_check_branch
              %317 = sbr.rel target = $region78
            $region77: #{forward.10} parent=73 // pred_region
              // Predicated region
              $region90: #{forward.10} parent=77 // pred_check
                _
              $region91: #{forward.10} parent=77 // pred_check_branch
                %335 = sbr.rel (0) target = $region93
              $region92: #{forward.10} parent=77 // pred_region
                %s337 = ssub.s32 2, 1
                loop: start=0, step=1, limit=1
                $region94: #{forward.10} parent=92 // loop_pre_header
                  _
                $region95: #{forward.10} parent=92 // loop_header
                  %s339 = sphi 0, %s343
                  %p340 = scmp.ge.s32.totalorder %s339, 1
                  %s344 = sphi %s313, %s313
                  %s345 = sphi %s312, %s312
                $region96: #{forward.10} parent=92 // loop_header_branch
                  %342 = sbr.rel (%p340) target = $region100
                $region97: #{forward.10} parent=92 // loop_body
                  %v346 = vld [vmem:[%s344] sm:%s337]
                  %347 = vst [vmem:[%s345] sm:%s337] %v346
                  %v348 = vld [vmem:[%s344 + $0x2] sm:%s337]
                  %349 = vst [vmem:[%s345 + $0x1] sm:%s337] %v348
                $region98: #{forward.10} parent=92 // loop_footer
                  %s343 = sadd.s32 1, %s339
                $region99: #{forward.10} parent=92 // loop_footer_branch
                  %338 = sbr.rel target = $region95
                $region100: #{forward.10} parent=92 // loop_exit
                  _
              $region93: #{forward.10} parent=77 // pred_fallthru
                _
            $region78: #{forward.10} parent=73 // pred_fallthru
              _
            // Predicated region
            $region79: #{forward.10} parent=73 // pred_check
              _
            $region80: #{forward.10} parent=73 // pred_check_branch
              %319 = sbr.rel (0) target = $region82
            $region81: #{forward.10} parent=73 // pred_region
              %s321 = ssub.s32 2, 1
              loop: start=0, step=1, limit=1
              $region83: #{forward.10} parent=81 // loop_pre_header
                _
              $region84: #{forward.10} parent=81 // loop_header
                %s323 = sphi 0, %s327
                %p324 = scmp.ge.s32.totalorder %s323, 1
                %s328 = sphi %s313, %s313
                %s329 = sphi %s312, %s312
              $region85: #{forward.10} parent=81 // loop_header_branch
                %326 = sbr.rel (%p324) target = $region89
              $region86: #{forward.10} parent=81 // loop_body
                %v330 = vld [vmem:[%s328] sm:%s321]
                %331 = vst [vmem:[%s329] sm:%s321] %v330
                %v332 = vld [vmem:[%s328 + $0x2] sm:%s321]
                %333 = vst [vmem:[%s329 + $0x1] sm:%s321] %v332
              $region87: #{forward.10} parent=81 // loop_footer
                %s327 = sadd.s32 1, %s323
              $region88: #{forward.10} parent=81 // loop_footer_branch
                %322 = sbr.rel target = $region84
              $region89: #{forward.10} parent=81 // loop_exit
                _
            $region82: #{forward.10} parent=73 // pred_fallthru
              _
          $region74: #{forward.10} parent=69 // pred_fallthru
            _
          %350 = vnop
        $region70: #{forward.10} parent=15 // pred_fallthru
          _
        // Predicated region
        $region101: #{forward.10} parent=15 // pred_check
          %p351 = pneg %p174
        $region102: #{forward.10} parent=15 // pred_check_branch
          %353 = sbr.rel (%p351) target = $region104
        $region103: #{forward.10} parent=15 // pred_region
          %s354 = sand.u32 %s164, 1
          %s355 = sand.u32 %s164, 1
          %s356 = smul.addr %s355, 2
          %s357 = scalar_lea.vmem [#allocation5], %s356
          %s358 = scalar_lea.vmem %s5, %s20
          // Predicated region
          $region105: #{forward.10} parent=103 // pred_check
            _
          $region106: #{forward.10} parent=103 // pred_check_branch
            %360 = sbr.rel (0) target = $region108
          $region107: #{forward.10} parent=103 // pred_region
            // Predicated region
            $region109: #{forward.10} parent=107 // pred_check
              _
            $region110: #{forward.10} parent=107 // pred_check_branch
              %362 = sbr.rel target = $region112
            $region111: #{forward.10} parent=107 // pred_region
              // Predicated region
              $region124: #{forward.10} parent=111 // pred_check
                _
              $region125: #{forward.10} parent=111 // pred_check_branch
                %380 = sbr.rel (0) target = $region127
              $region126: #{forward.10} parent=111 // pred_region
                %s382 = ssub.s32 2, 1
                loop: start=0, step=1, limit=1
                $region128: #{forward.10} parent=126 // loop_pre_header
                  _
                $region129: #{forward.10} parent=126 // loop_header
                  %s384 = sphi 0, %s388
                  %p385 = scmp.ge.s32.totalorder %s384, 1
                  %s389 = sphi %s358, %s358
                  %s390 = sphi %s357, %s357
                $region130: #{forward.10} parent=126 // loop_header_branch
                  %387 = sbr.rel (%p385) target = $region134
                $region131: #{forward.10} parent=126 // loop_body
                  %v391 = vld [vmem:[%s389] sm:%s382]
                  %392 = vst [vmem:[%s390] sm:%s382] %v391
                  %v393 = vld [vmem:[%s389 + $0x2] sm:%s382]
                  %394 = vst [vmem:[%s390 + $0x1] sm:%s382] %v393
                $region132: #{forward.10} parent=126 // loop_footer
                  %s388 = sadd.s32 1, %s384
                $region133: #{forward.10} parent=126 // loop_footer_branch
                  %383 = sbr.rel target = $region129
                $region134: #{forward.10} parent=126 // loop_exit
                  _
              $region127: #{forward.10} parent=111 // pred_fallthru
                _
            $region112: #{forward.10} parent=107 // pred_fallthru
              _
            // Predicated region
            $region113: #{forward.10} parent=107 // pred_check
              _
            $region114: #{forward.10} parent=107 // pred_check_branch
              %364 = sbr.rel (0) target = $region116
            $region115: #{forward.10} parent=107 // pred_region
              %s366 = ssub.s32 2, 1
              loop: start=0, step=1, limit=1
              $region117: #{forward.10} parent=115 // loop_pre_header
                _
              $region118: #{forward.10} parent=115 // loop_header
                %s368 = sphi 0, %s372
                %p369 = scmp.ge.s32.totalorder %s368, 1
                %s373 = sphi %s358, %s358
                %s374 = sphi %s357, %s357
              $region119: #{forward.10} parent=115 // loop_header_branch
                %371 = sbr.rel (%p369) target = $region123
              $region120: #{forward.10} parent=115 // loop_body
                %v375 = vld [vmem:[%s373] sm:%s366]
                %376 = vst [vmem:[%s374] sm:%s366] %v375
                %v377 = vld [vmem:[%s373 + $0x2] sm:%s366]
                %378 = vst [vmem:[%s374 + $0x1] sm:%s366] %v377
              $region121: #{forward.10} parent=115 // loop_footer
                %s372 = sadd.s32 1, %s368
              $region122: #{forward.10} parent=115 // loop_footer_branch
                %367 = sbr.rel target = $region118
              $region123: #{forward.10} parent=115 // loop_exit
                _
            $region116: #{forward.10} parent=107 // pred_fallthru
              _
          $region108: #{forward.10} parent=103 // pred_fallthru
            _
          %395 = vnop
        $region104: #{forward.10} parent=15 // pred_fallthru
          _
      $region16: #{forward.10} parent=5 // pred_fallthru
        _
      %p396 = scmp.le.s32.totalorder 1, %s12
      %p397 = scmp.lt.s32.totalorder %s12, 5
      %p398 = pnand %p396, %p397
      %p399 = pneg %p398
      // Predicated region
      $region135: #{forward.10} parent=5 // pred_check
        _
      $region136: #{forward.10} parent=5 // pred_check_branch
        %401 = sbr.rel (%p398) target = $region138
      $region137: #{forward.10} parent=5 // pred_region
        %s402 = ssub.s32 %s12, 1
        %s403 = sand.u32 %s115, 1
        %s404 = sand.u32 %s115, 1
        %s405 = smul.addr %s404, 32
        %s406 = scalar_lea.vmem [#allocation3], %s405
        // Predicated region
        $region139: #{forward.10} parent=137 // pred_check
          %p407 = pneg %p128
        $region140: #{forward.10} parent=137 // pred_check_branch
          %409 = sbr.rel (%p407) target = $region142
        $region141: #{forward.10} parent=137 // pred_region
          _
        $region142: #{forward.10} parent=137 // pred_fallthru
          _
        %s410 = sand.u32 %s141, 1
        %s411 = sand.u32 %s141, 1
        %s412 = smul.addr %s411, 2
        %s413 = scalar_lea.vmem [#allocation4], %s412
        // Predicated region
        $region143: #{forward.10} parent=137 // pred_check
          %p414 = pneg %p154
        $region144: #{forward.10} parent=137 // pred_check_branch
          %416 = sbr.rel (%p414) target = $region146
        $region145: #{forward.10} parent=137 // pred_region
          _
        $region146: #{forward.10} parent=137 // pred_fallthru
          _
        %s417 = sand.u32 %s167, 1
        %s418 = sand.u32 %s167, 1
        %s419 = smul.addr %s418, 2
        %s420 = scalar_lea.vmem [#allocation5], %s419
        // Predicated region
        $region147: #{forward.10} parent=137 // pred_check
          %p421 = pneg %p180
        $region148: #{forward.10} parent=137 // pred_check_branch
          %423 = sbr.rel (%p421) target = $region150
        $region149: #{forward.10} parent=137 // pred_region
          _
        $region150: #{forward.10} parent=137 // pred_fallthru
          _
        %p424 = scmp.lt.s32.totalorder %s21, 1
        %s425 = scalar_select %p424, %s21, 1
        %s426 = smul.addr %s425, 8
        %s427 = smul.addr %s426, 8
        %s428 = scalar_lea.vmem %s0, %s427
        %p429 = pneg %p50
        %p430 = pneg %p47
        %p431 = scmp.lt.s32.totalorder %s21, 1
        %s432 = scalar_select %p431, %s21, 1
        %s433 = smul.addr %s432, 8
        %s434 = smul.addr %s433, 8
        %s435 = scalar_lea.vmem %s1, %s434
        %p436 = pneg %p76
        %p437 = pneg %p73
        %p438 = scmp.lt.s32.totalorder %s22, 1
        %s439 = scalar_select %p438, %s22, 1
        %s440 = smul.addr %s439, 4
        %s441 = smul.addr %s440, 8
        %s442 = scalar_lea.vmem %s2, %s441
        %p443 = pneg %p102
        %p444 = pneg %p99
        %s445 = sand.u32 %s115, 1
        %s446 = sand.u32 %s115, 1
        %s447 = smul.addr %s446, 32
        %s448 = scalar_lea.vmem [#allocation3], %s447
        %p449 = pneg %p128
        %p450 = pneg %p125
        %s451 = sand.u32 %s141, 1
        %s452 = sand.u32 %s141, 1
        %s453 = smul.addr %s452, 2
        %s454 = scalar_lea.vmem [#allocation4], %s453
        %p455 = pneg %p154
        %p456 = pneg %p151
        %s457 = sand.u32 %s167, 1
        %s458 = sand.u32 %s167, 1
        %s459 = smul.addr %s458, 2
        %s460 = scalar_lea.vmem [#allocation5], %s459
        %p461 = pneg %p180
        %p462 = pneg %p177
        %p463 = pneg %p208
        %p464 = pneg %p205
        %p465 = scmp.lt.s32.totalorder %s21, 1
        %s466 = scalar_select %p465, %s21, 1
        %p467 = scmp.lt.s32.totalorder %s22, 1
        %s468 = scalar_select %p467, %s22, 1
        %s469 = smul.addr %s468, 8
        %s470 = smul.addr %s466, 16
        %s471 = sadd.s32 %s469, %s470
        %s472 = smul.addr %s471, 8
        %s473 = scalar_lea.vmem %s6, %s472
        %p474 = scmp.lt.s32.totalorder %s21, 1
        %s475 = scalar_select %p474, %s21, 1
        %s476 = smul.addr %s475, 8
        %s477 = smul.addr %s476, 8
        %s478 = scalar_lea.vmem %s0, %s477
        %p479 = scmp.lt.s32.totalorder %s21, 1
        %s480 = scalar_select %p479, %s21, 1
        %s481 = smul.addr %s480, 8
        %s482 = smul.addr %s481, 8
        %s483 = scalar_lea.vmem %s1, %s482
        %p484 = scmp.lt.s32.totalorder %s22, 1
        %s485 = scalar_select %p484, %s22, 1
        %s486 = smul.addr %s485, 4
        %s487 = smul.addr %s486, 8
        %s488 = scalar_lea.vmem %s2, %s487
        %p489 = scmp.lt.s32.totalorder %s21, 1
        %s490 = scalar_select %p489, %s21, 1
        %p491 = scmp.lt.s32.totalorder %s22, 1
        %s492 = scalar_select %p491, %s22, 1
        %s493 = smul.addr %s492, 8
        %s494 = smul.addr %s490, 16
        %s495 = sadd.s32 %s493, %s494
        %s496 = smul.addr %s495, 8
        %s497 = scalar_lea.vmem %s6, %s496
        %p498 = scmp.eq.s32.totalorder %s22, 0
        %v499 = vld [vmem:[%s478] sm:$0xff]
        %v500 = vld [vmem:[%s478 + $0x8] sm:$0xff]
        %v501 = vld [vmem:[%s478 + $0x10] sm:$0xff]
        %v502 = vld [vmem:[%s478 + $0x18] sm:$0xff]
        %v503 = vld [vmem:[%s478 + $0x20] sm:$0xff]
        %v504 = vld [vmem:[%s478 + $0x28] sm:$0xff]
        %v505 = vld [vmem:[%s478 + $0x30] sm:$0xff]
        %v506 = vld [vmem:[%s478 + $0x38] sm:$0xff]
        %v507 = vld [vmem:[%s483] sm:$0xff]
        %v508 = vld [vmem:[%s483 + $0x8] sm:$0xff]
        %v509 = vld [vmem:[%s483 + $0x10] sm:$0xff]
        %v510 = vld [vmem:[%s483 + $0x18] sm:$0xff]
        %v511 = vld [vmem:[%s483 + $0x20] sm:$0xff]
        %v512 = vld [vmem:[%s483 + $0x28] sm:$0xff]
        %v513 = vld [vmem:[%s483 + $0x30] sm:$0xff]
        %v514 = vld [vmem:[%s483 + $0x38] sm:$0xff]
        %s515 = scalar_select %p498, 1, 0
        %v516 = vstv %s515
        %vm517 = vcmp.eq.s32.totalorder %v516, 1
        %v518 = vsel %vm517, %v499, %v507
        %v519 = vsel %vm517, %v500, %v508
        %v520 = vsel %vm517, %v501, %v509
        %v521 = vsel %vm517, %v502, %v510
        %v522 = vsel %vm517, %v503, %v511
        %v523 = vsel %vm517, %v504, %v512
        %v524 = vsel %vm517, %v505, %v513
        %v525 = vsel %vm517, %v506, %v514
        %v526 = vld [vmem:[%s488] sm:$0xff]
        %v527 = vld [vmem:[%s488 + $0x8] sm:$0xff]
        %v528 = vld [vmem:[%s488 + $0x10] sm:$0xff]
        %v529 = vld [vmem:[%s488 + $0x18] sm:$0xff]
        %vm530 = vcmask 261120
        %v532 = vsel %vm530, %v518, 0
        %v535 = vsel %vm530, %v519, 0
        %v538 = vsel %vm530, %v520, 0
        %v541 = vsel %vm530, %v521, 0
        %v544 = vsel %vm530, %v522, 0
        %v547 = vsel %vm530, %v523, 0
        %v550 = vsel %vm530, %v524, 0
        %v553 = vsel %vm530, %v525, 0
        %555 = vmatprep.subr.mxu0 0.0
        %556 = vmatpush1.msra.mxu0 0.0
        %557 = vmatprep.subr.mxu0 0.0
        %558 = vmatpush1.msra.mxu0 0.0
        %559 = vmatprep.subr.mxu0 0.0
        %560 = vmatpush1.msra.mxu0 0.0
        %561 = vmatprep.subr.mxu0 0.0
        %562 = vmatpush1.msra.mxu0 0.0
        %563 = vmatprep.subr.mxu0 0.0
        %564 = vmatpush1.msra.mxu0 0.0
        %565 = vmatprep.subr.mxu0 0.0
        %566 = vmatpush1.msra.mxu0 0.0
        %567 = vmatprep.subr.mxu0 0.0
        %568 = vmatpush1.msra.mxu0 0.0
        %569 = vmatprep.subr.mxu0 0.0
        %570 = vmatpush1.msra.mxu0 0.0
        %571 = vmatprep.subr.mxu0 0.0
        %572 = vmatpush1.msra.mxu0 0.0
        %573 = vmatprep.subr.mxu0 0.0
        %574 = vmatpush1.msra.mxu0 0.0
        %575 = vmatprep.subr.mxu0 0.0
        %576 = vmatpush1.msra.mxu0 0.0
        %577 = vmatprep.subr.mxu0 0.0
        %578 = vmatpush1.msra.mxu0 0.0
        %579 = vmatprep.subr.mxu0 0.0
        %580 = vmatpush1.msra.mxu0 %v529
        %581 = vmatprep.subr.mxu0 0.0
        %582 = vmatpush1.msra.mxu0 %v528
        %583 = vmatprep.subr.mxu0 0.0
        %584 = vmatpush1.msra.mxu0 %v527
        %585 = vmatprep.subr.mxu0 0.0
        %586 = vmatpush1.msra.mxu0 %v526
        %587 = vmatprep.subr.mxu0 0.0
        %588 = vmatpush2.msra.mxu0 0.0
        %589 = vmatprep.subr.mxu0 0.0
        %590 = vmatpush2.msra.mxu0 0.0
        %591 = vmatprep.subr.mxu0 0.0
        %592 = vmatpush2.msra.mxu0 0.0
        %593 = vmatprep.subr.mxu0 0.0
        %594 = vmatpush2.msra.mxu0 0.0
        %595 = vmatprep.subr.mxu0 0.0
        %596 = vmatpush2.msra.mxu0 0.0
        %597 = vmatprep.subr.mxu0 0.0
        %598 = vmatpush2.msra.mxu0 0.0
        %599 = vmatprep.subr.mxu0 0.0
        %600 = vmatpush2.msra.mxu0 0.0
        %601 = vmatprep.subr.mxu0 0.0
        %602 = vmatpush2.msra.mxu0 0.0
        %603 = vmatprep.subr.mxu0 0.0
        %604 = vmatpush2.msra.mxu0 0.0
        %605 = vmatprep.subr.mxu0 0.0
        %606 = vmatpush2.msra.mxu0 0.0
        %607 = vmatprep.subr.mxu0 0.0
        %608 = vmatpush2.msra.mxu0 0.0
        %609 = vmatprep.subr.mxu0 0.0
        %610 = vmatpush2.msra.mxu0 0.0
        %611 = vmatprep.subr.mxu0 0.0
        %612 = vmatpush2.msra.mxu0 0.0
        %613 = vmatprep.subr.mxu0 0.0
        %614 = vmatpush2.msra.mxu0 0.0
        %615 = vmatprep.subr.mxu0 0.0
        %616 = vmatpush2.msra.mxu0 0.0
        %617 = vmatprep.subr.mxu0 0.0
        %618 = vmatpush2.msra.mxu0 0.0
        %619 = vmatprep.mubr.f32.mxu0 0.0
        %620 = vmatmul.mubr.f32.gmra.mxu0 %v532
        %v621 = vpop.f32.mrf.mxu0
        %v622 = vadd.f32 0.0, %v621
        %v623 = vpop.f32.mrf.mxu0
        %624 = vmatprep.mubr.f32.mxu0 0.0
        %625 = vmatmul.mubr.f32.gmra.mxu0 %v535
        %v626 = vpop.f32.mrf.mxu0
        %v627 = vadd.f32 0.0, %v626
        %v628 = vpop.f32.mrf.mxu0
        %629 = vmatprep.mubr.f32.mxu0 0.0
        %630 = vmatmul.mubr.f32.gmra.mxu0 %v538
        %v631 = vpop.f32.mrf.mxu0
        %v632 = vadd.f32 0.0, %v631
        %v633 = vpop.f32.mrf.mxu0
        %634 = vmatprep.mubr.f32.mxu0 0.0
        %635 = vmatmul.mubr.f32.gmra.mxu0 %v541
        %v636 = vpop.f32.mrf.mxu0
        %v637 = vadd.f32 0.0, %v636
        %v638 = vpop.f32.mrf.mxu0
        %639 = vmatprep.mubr.f32.mxu0 0.0
        %640 = vmatmul.mubr.f32.gmra.mxu0 %v544
        %v641 = vpop.f32.mrf.mxu0
        %v642 = vadd.f32 0.0, %v641
        %v643 = vpop.f32.mrf.mxu0
        %644 = vmatprep.mubr.f32.mxu0 0.0
        %645 = vmatmul.mubr.f32.gmra.mxu0 %v547
        %v646 = vpop.f32.mrf.mxu0
        %v647 = vadd.f32 0.0, %v646
        %v648 = vpop.f32.mrf.mxu0
        %649 = vmatprep.mubr.f32.mxu0 0.0
        %650 = vmatmul.mubr.f32.gmra.mxu0 %v550
        %v651 = vpop.f32.mrf.mxu0
        %v652 = vadd.f32 0.0, %v651
        %v653 = vpop.f32.mrf.mxu0
        %654 = vmatprep.mubr.f32.mxu0 0.0
        %655 = vmatmul.mubr.f32.gmra.mxu0 %v553
        %v656 = vpop.f32.mrf.mxu0
        %v657 = vadd.f32 0.0, %v656
        %v658 = vpop.f32.mrf.mxu0
        %659 = vdwg.mxu0
        %660 = vst [vmem:[#allocation2] sm:$0xff] %v622
        %661 = vst [vmem:[#allocation2 + $0x8] sm:$0xff] %v627
        %662 = vst [vmem:[#allocation2 + $0x10] sm:$0xff] %v632
        %663 = vst [vmem:[#allocation2 + $0x18] sm:$0xff] %v637
        %664 = vst [vmem:[#allocation2 + $0x20] sm:$0xff] %v642
        %665 = vst [vmem:[#allocation2 + $0x28] sm:$0xff] %v647
        %666 = vst [vmem:[#allocation2 + $0x30] sm:$0xff] %v652
        %667 = vst [vmem:[#allocation2 + $0x38] sm:$0xff] %v657
        %v668 = vld [vmem:[%s413] sm:$0x1]
        %s669 = scalar_lea.vmem %s413, 1 [#allocation4]
        %v670 = vld [vmem:[%s669] sm:$0x1]
        %v671 = vadd.f32 %v668, %v670
        %v673 = vlaneseq
        %v674 = vshrl.u32 %v673, 7
        %v675 = vsub.s32 0, %v674
        %v676 = vrot.slane %v671, %v675
        %v678 = vmul.f32 %v676, %v518
        %v679 = vmul.f32 %v676, %v519
        %v680 = vmul.f32 %v676, %v520
        %v681 = vmul.f32 %v676, %v521
        %v682 = vmul.f32 %v676, %v522
        %v683 = vmul.f32 %v676, %v523
        %v684 = vmul.f32 %v676, %v524
        %v685 = vmul.f32 %v676, %v525
        %686 = vst.msk [vmem:[%s497] sm:$0xff] %vm530, %v678
        %687 = vst.msk [vmem:[%s497 + $0x8] sm:$0xff] %vm530, %v679
        %688 = vst.msk [vmem:[%s497 + $0x10] sm:$0xff] %vm530, %v680
        %689 = vst.msk [vmem:[%s497 + $0x18] sm:$0xff] %vm530, %v681
        %690 = vst.msk [vmem:[%s497 + $0x20] sm:$0xff] %vm530, %v682
        %691 = vst.msk [vmem:[%s497 + $0x28] sm:$0xff] %vm530, %v683
        %692 = vst.msk [vmem:[%s497 + $0x30] sm:$0xff] %vm530, %v684
        %693 = vst.msk [vmem:[%s497 + $0x38] sm:$0xff] %vm530, %v685
        %v694 = vld [vmem:[%s406] sm:$0xff]
        %v695 = vld [vmem:[%s406 + $0x8] sm:$0xff]
        %s696 = scalar_lea.vmem %s406, 16 [#allocation3]
        %v697 = vld [vmem:[%s696] sm:$0xff]
        %v698 = vld [vmem:[%s696 + $0x8] sm:$0xff]
        %v699 = vld [vmem:[%s420] sm:$0x1]
        %s700 = scalar_lea.vmem %s420, 1 [#allocation5]
        %v701 = vld [vmem:[%s700] sm:$0x1]
        loop: start=0, step=1, limit=8
        $region151: #{forward.10} parent=137 // loop_pre_header
          _
        $region152: #{forward.10} parent=137 // loop_header
          %s703 = sphi 0, %s707
          %p704 = scmp.ge.s32.totalorder %s703, 8
          %v708 = vphi 0.0, %v1112
          %v709 = vphi 0.0, %v1113
          %v710 = vphi 0.0, %v1709
          %v711 = vphi 0.0, %v1710
        $region153: #{forward.10} parent=137 // loop_header_branch
          %706 = sbr.rel (%p704) target = $region157
        $region154: #{forward.10} parent=137 // loop_body
          %s712 = smul.u32 %s703, 8
          %s713 = scalar_lea.vmem %s478, %s712
          %v714 = vld [vmem:[%s713] sm:$0xff]
          %s715 = scalar_lea.vmem %s483, %s712
          %v716 = vld [vmem:[%s715] sm:$0xff]
          %v717 = vsel %vm517, %v714, %v716
          %s718 = scalar_lea.vmem [#allocation2], %s712
          %v719 = vld [vmem:[%s718] sm:$0xff]
          %v721 = vlaneseq
          %v722 = vshrl.u32 %v721, 7
          %v723 = vsub.s32 0, %v722
          %v724 = vrot.slane %v699, %v723
          %v726 = vadd.f32 %v719, %v724
          %vm727 = vcmp.gt.f32.partialorder %v726, 20.0
          %v728 = vmin.f32 %v726, 20.0
          %v729 = vmul.f32 %v728, 1.442695
          %v730 = vpow.pop %v729
          %v731 = vadd.f32 %v730, 1.0
          %v732 = vlog2.pop %v731
          %v733 = vmul.f32 %v732, 0.6931472
          %v734 = vmul.f32 -0.5, %v730
          %v735 = vadd.f32 %v734, 1.0
          %v736 = vmul.f32 %v735, %v730
          %v737 = vand.u32 2147483647, %v730
          %vm738 = vcmp.lt.f32.partialorder %v737, 0.0004427343
          %v739 = vsel %vm738, %v736, %v733
          %v740 = vsel %vm727, %v726, %v739
          %v742 = vcombine.high %v740, %v740
          %v744 = vunpack.c.l.s4 1966171168
          %v745 = vunpack.c.0.s8 %v744
          %v746 = vlaneseq
          %v747 = vshrl.u32 %v746, 7
          %v748 = vsub.s32 %v745, %v747
          %v749 = vrot.slane %v740, %v748
          %v751 = vunpack.c.l.s4 1966171168
          %v752 = vunpack.c.0.s8 %v751
          %v753 = vlaneseq
          %v754 = vshrl.u32 %v753, 7
          %v755 = vsub.s32 %v752, %v754
          %v756 = vrot.slane %v742, %v755
          %v757 = vcombine.high %v749, %v749
          %v758 = vcombine.high %v756, %v756
          %v760 = vunpack.c.l.s4 1966171168
          %v761 = vunpack.c.0.s8 %v760
          %v762 = vlaneseq
          %v763 = vshrl.u32 %v762, 7
          %v764 = vsub.s32 %v761, %v763
          %v765 = vrot.slane %v749, %v764
          %v767 = vunpack.c.l.s4 1966171168
          %v768 = vunpack.c.0.s8 %v767
          %v769 = vlaneseq
          %v770 = vshrl.u32 %v769, 7
          %v771 = vsub.s32 %v768, %v770
          %v772 = vrot.slane %v756, %v771
          %v774 = vunpack.c.l.s4 1966171168
          %v775 = vunpack.c.0.s8 %v774
          %v776 = vlaneseq
          %v777 = vshrl.u32 %v776, 7
          %v778 = vsub.s32 %v775, %v777
          %v779 = vrot.slane %v757, %v778
          %v781 = vunpack.c.l.s4 1966171168
          %v782 = vunpack.c.0.s8 %v781
          %v783 = vlaneseq
          %v784 = vshrl.u32 %v783, 7
          %v785 = vsub.s32 %v782, %v784
          %v786 = vrot.slane %v758, %v785
          %v787 = vcombine.high %v765, %v765
          %v788 = vcombine.high %v772, %v772
          %v789 = vcombine.high %v779, %v779
          %v790 = vcombine.high %v786, %v786
          %v791 = vlaneseq
          %v792 = vshrl.u32 %v791, 7
          %v793 = vsub.s32 0, %v792
          %v794 = vrot.slane %v765, %v793
          %v795 = vlaneseq
          %v796 = vshrl.u32 %v795, 7
          %v797 = vsub.s32 0, %v796
          %v798 = vrot.slane %v779, %v797
          %v799 = vlaneseq
          %v800 = vshrl.u32 %v799, 7
          %v801 = vsub.s32 0, %v800
          %v802 = vrot.slane %v787, %v801
          %v803 = vlaneseq
          %v804 = vshrl.u32 %v803, 7
          %v805 = vsub.s32 0, %v804
          %v806 = vrot.slane %v789, %v805
          %v807 = vlaneseq
          %v808 = vshrl.u32 %v807, 7
          %v809 = vsub.s32 0, %v808
          %v810 = vrot.slane %v772, %v809
          %v811 = vlaneseq
          %v812 = vshrl.u32 %v811, 7
          %v813 = vsub.s32 0, %v812
          %v814 = vrot.slane %v786, %v813
          %v815 = vlaneseq
          %v816 = vshrl.u32 %v815, 7
          %v817 = vsub.s32 0, %v816
          %v818 = vrot.slane %v788, %v817
          %v819 = vlaneseq
          %v820 = vshrl.u32 %v819, 7
          %v821 = vsub.s32 0, %v820
          %v822 = vrot.slane %v790, %v821
          %v831 = vmul.f32 %v794, %v694
          %v832 = vmul.f32 %v794, %v695
          %v833 = vmul.f32 %v798, %v694
          %v834 = vmul.f32 %v798, %v695
          %v835 = vmul.f32 %v802, %v694
          %v836 = vmul.f32 %v802, %v695
          %v837 = vmul.f32 %v806, %v694
          %v838 = vmul.f32 %v806, %v695
          %v839 = vmul.f32 %v810, %v694
          %v840 = vmul.f32 %v810, %v695
          %v841 = vmul.f32 %v814, %v694
          %v842 = vmul.f32 %v814, %v695
          %v843 = vmul.f32 %v818, %v694
          %v844 = vmul.f32 %v818, %v695
          %v845 = vmul.f32 %v822, %v694
          %v846 = vmul.f32 %v822, %v695
          %v847 = vmul.f32 %v831, 1.442695
          %v848 = vpow.pop %v847
          %v849 = vmul.f32 %v832, 1.442695
          %v850 = vpow.pop %v849
          %v851 = vmul.f32 %v833, 1.442695
          %v852 = vpow.pop %v851
          %v853 = vmul.f32 %v834, 1.442695
          %v854 = vpow.pop %v853
          %v855 = vmul.f32 %v835, 1.442695
          %v856 = vpow.pop %v855
          %v857 = vmul.f32 %v836, 1.442695
          %v858 = vpow.pop %v857
          %v859 = vmul.f32 %v837, 1.442695
          %v860 = vpow.pop %v859
          %v861 = vmul.f32 %v838, 1.442695
          %v862 = vpow.pop %v861
          %v863 = vmul.f32 %v839, 1.442695
          %v864 = vpow.pop %v863
          %v865 = vmul.f32 %v840, 1.442695
          %v866 = vpow.pop %v865
          %v867 = vmul.f32 %v841, 1.442695
          %v868 = vpow.pop %v867
          %v869 = vmul.f32 %v842, 1.442695
          %v870 = vpow.pop %v869
          %v871 = vmul.f32 %v843, 1.442695
          %v872 = vpow.pop %v871
          %v873 = vmul.f32 %v844, 1.442695
          %v874 = vpow.pop %v873
          %v875 = vmul.f32 %v845, 1.442695
          %v876 = vpow.pop %v875
          %v877 = vmul.f32 %v846, 1.442695
          %v878 = vpow.pop %v877
          %v879 = vlaneseq
          %v880 = vshrl.u32 %v879, 7
          %v881 = vsub.s32 0, %v880
          %v882 = vrot.slane %v719, %v881
          %s884 = sor.u32 256, 32
          %885 = vbcast.lane.b32.xlu0 %v882, %s884
          %v886 = vpop.permute.xlu0 %885
          %s888 = sor.u32 256, 40
          %889 = vbcast.lane.b32.xlu0 %v882, %s888
          %v890 = vpop.permute.xlu0 %889
          %v891 = vlaneseq
          %v892 = vshrl.u32 %v891, 7
          %v893 = vsub.s32 1, %v892
          %v894 = vrot.slane %v719, %v893
          %s896 = sor.u32 256, 32
          %897 = vbcast.lane.b32.xlu0 %v894, %s896
          %v898 = vpop.permute.xlu0 %897
          %s900 = sor.u32 256, 40
          %901 = vbcast.lane.b32.xlu0 %v894, %s900
          %v902 = vpop.permute.xlu0 %901
          %v903 = vlaneseq
          %v904 = vshrl.u32 %v903, 7
          %v905 = vsub.s32 2, %v904
          %v906 = vrot.slane %v719, %v905
          %s908 = sor.u32 256, 32
          %909 = vbcast.lane.b32.xlu0 %v906, %s908
          %v910 = vpop.permute.xlu0 %909
          %s912 = sor.u32 256, 40
          %913 = vbcast.lane.b32.xlu0 %v906, %s912
          %v914 = vpop.permute.xlu0 %913
          %v915 = vlaneseq
          %v916 = vshrl.u32 %v915, 7
          %v917 = vsub.s32 3, %v916
          %v918 = vrot.slane %v719, %v917
          %s920 = sor.u32 256, 32
          %921 = vbcast.lane.b32.xlu0 %v918, %s920
          %v922 = vpop.permute.xlu0 %921
          %s924 = sor.u32 256, 40
          %925 = vbcast.lane.b32.xlu0 %v918, %s924
          %v926 = vpop.permute.xlu0 %925
          %v927 = vlaneseq
          %v928 = vshrl.u32 %v927, 7
          %v929 = vsub.s32 4, %v928
          %v930 = vrot.slane %v719, %v929
          %s932 = sor.u32 256, 32
          %933 = vbcast.lane.b32.xlu0 %v930, %s932
          %v934 = vpop.permute.xlu0 %933
          %s936 = sor.u32 256, 40
          %937 = vbcast.lane.b32.xlu0 %v930, %s936
          %v938 = vpop.permute.xlu0 %937
          %v939 = vlaneseq
          %v940 = vshrl.u32 %v939, 7
          %v941 = vsub.s32 5, %v940
          %v942 = vrot.slane %v719, %v941
          %s944 = sor.u32 256, 32
          %945 = vbcast.lane.b32.xlu0 %v942, %s944
          %v946 = vpop.permute.xlu0 %945
          %s948 = sor.u32 256, 40
          %949 = vbcast.lane.b32.xlu0 %v942, %s948
          %v950 = vpop.permute.xlu0 %949
          %v951 = vlaneseq
          %v952 = vshrl.u32 %v951, 7
          %v953 = vsub.s32 6, %v952
          %v954 = vrot.slane %v719, %v953
          %s956 = sor.u32 256, 32
          %957 = vbcast.lane.b32.xlu0 %v954, %s956
          %v958 = vpop.permute.xlu0 %957
          %s960 = sor.u32 256, 40
          %961 = vbcast.lane.b32.xlu0 %v954, %s960
          %v962 = vpop.permute.xlu0 %961
          %v963 = vlaneseq
          %v964 = vshrl.u32 %v963, 7
          %v965 = vsub.s32 7, %v964
          %v966 = vrot.slane %v719, %v965
          %s968 = sor.u32 256, 32
          %969 = vbcast.lane.b32.xlu0 %v966, %s968
          %v970 = vpop.permute.xlu0 %969
          %s972 = sor.u32 256, 40
          %973 = vbcast.lane.b32.xlu0 %v966, %s972
          %v974 = vpop.permute.xlu0 %973
          %v975 = vmul.f32 %v740, %v717
          %v977 = vcombine.high %v975, %v975
          %v979 = vunpack.c.l.s4 1966171168
          %v980 = vunpack.c.0.s8 %v979
          %v981 = vlaneseq
          %v982 = vshrl.u32 %v981, 7
          %v983 = vsub.s32 %v980, %v982
          %v984 = vrot.slane %v975, %v983
          %v986 = vunpack.c.l.s4 1966171168
          %v987 = vunpack.c.0.s8 %v986
          %v988 = vlaneseq
          %v989 = vshrl.u32 %v988, 7
          %v990 = vsub.s32 %v987, %v989
          %v991 = vrot.slane %v977, %v990
          %v992 = vcombine.high %v984, %v984
          %v993 = vcombine.high %v991, %v991
          %v995 = vunpack.c.l.s4 1966171168
          %v996 = vunpack.c.0.s8 %v995
          %v997 = vlaneseq
          %v998 = vshrl.u32 %v997, 7
          %v999 = vsub.s32 %v996, %v998
          %v1000 = vrot.slane %v984, %v999
          %v1002 = vunpack.c.l.s4 1966171168
          %v1003 = vunpack.c.0.s8 %v1002
          %v1004 = vlaneseq
          %v1005 = vshrl.u32 %v1004, 7
          %v1006 = vsub.s32 %v1003, %v1005
          %v1007 = vrot.slane %v991, %v1006
          %v1009 = vunpack.c.l.s4 1966171168
          %v1010 = vunpack.c.0.s8 %v1009
          %v1011 = vlaneseq
          %v1012 = vshrl.u32 %v1011, 7
          %v1013 = vsub.s32 %v1010, %v1012
          %v1014 = vrot.slane %v992, %v1013
          %v1016 = vunpack.c.l.s4 1966171168
          %v1017 = vunpack.c.0.s8 %v1016
          %v1018 = vlaneseq
          %v1019 = vshrl.u32 %v1018, 7
          %v1020 = vsub.s32 %v1017, %v1019
          %v1021 = vrot.slane %v993, %v1020
          %v1022 = vcombine.high %v1000, %v1000
          %v1023 = vcombine.high %v1007, %v1007
          %v1024 = vcombine.high %v1014, %v1014
          %v1025 = vcombine.high %v1021, %v1021
          %v1026 = vlaneseq
          %v1027 = vshrl.u32 %v1026, 7
          %v1028 = vsub.s32 0, %v1027
          %v1029 = vrot.slane %v1000, %v1028
          %v1030 = vlaneseq
          %v1031 = vshrl.u32 %v1030, 7
          %v1032 = vsub.s32 0, %v1031
          %v1033 = vrot.slane %v1014, %v1032
          %v1034 = vlaneseq
          %v1035 = vshrl.u32 %v1034, 7
          %v1036 = vsub.s32 0, %v1035
          %v1037 = vrot.slane %v1022, %v1036
          %v1038 = vlaneseq
          %v1039 = vshrl.u32 %v1038, 7
          %v1040 = vsub.s32 0, %v1039
          %v1041 = vrot.slane %v1024, %v1040
          %v1042 = vlaneseq
          %v1043 = vshrl.u32 %v1042, 7
          %v1044 = vsub.s32 0, %v1043
          %v1045 = vrot.slane %v1007, %v1044
          %v1046 = vlaneseq
          %v1047 = vshrl.u32 %v1046, 7
          %v1048 = vsub.s32 0, %v1047
          %v1049 = vrot.slane %v1021, %v1048
          %v1050 = vlaneseq
          %v1051 = vshrl.u32 %v1050, 7
          %v1052 = vsub.s32 0, %v1051
          %v1053 = vrot.slane %v1023, %v1052
          %v1054 = vlaneseq
          %v1055 = vshrl.u32 %v1054, 7
          %v1056 = vsub.s32 0, %v1055
          %v1057 = vrot.slane %v1025, %v1056
          %v1066 = vmul.f32 %v886, %v1029
          %v1067 = vmul.f32 %v890, %v1029
          %v1068 = vmul.f32 %v898, %v1033
          %v1069 = vmul.f32 %v902, %v1033
          %v1070 = vmul.f32 %v910, %v1037
          %v1071 = vmul.f32 %v914, %v1037
          %v1072 = vmul.f32 %v922, %v1041
          %v1073 = vmul.f32 %v926, %v1041
          %v1074 = vmul.f32 %v934, %v1045
          %v1075 = vmul.f32 %v938, %v1045
          %v1076 = vmul.f32 %v946, %v1049
          %v1077 = vmul.f32 %v950, %v1049
          %v1078 = vmul.f32 %v958, %v1053
          %v1079 = vmul.f32 %v962, %v1053
          %v1080 = vmul.f32 %v970, %v1057
          %v1081 = vmul.f32 %v974, %v1057
          %v1082 = vmul.f32 %v848, %v708
          %v1083 = vmul.f32 %v850, %v709
          %v1084 = vadd.f32 %v1082, %v1066
          %v1085 = vadd.f32 %v1083, %v1067
          %v1086 = vmul.f32 %v852, %v1084
          %v1087 = vmul.f32 %v854, %v1085
          %v1088 = vadd.f32 %v1086, %v1068
          %v1089 = vadd.f32 %v1087, %v1069
          %v1090 = vmul.f32 %v856, %v1088
          %v1091 = vmul.f32 %v858, %v1089
          %v1092 = vadd.f32 %v1090, %v1070
          %v1093 = vadd.f32 %v1091, %v1071
          %v1094 = vmul.f32 %v860, %v1092
          %v1095 = vmul.f32 %v862, %v1093
          %v1096 = vadd.f32 %v1094, %v1072
          %v1097 = vadd.f32 %v1095, %v1073
          %v1098 = vmul.f32 %v864, %v1096
          %v1099 = vmul.f32 %v866, %v1097
          %v1100 = vadd.f32 %v1098, %v1074
          %v1101 = vadd.f32 %v1099, %v1075
          %v1102 = vmul.f32 %v868, %v1100
          %v1103 = vmul.f32 %v870, %v1101
          %v1104 = vadd.f32 %v1102, %v1076
          %v1105 = vadd.f32 %v1103, %v1077
          %v1106 = vmul.f32 %v872, %v1104
          %v1107 = vmul.f32 %v874, %v1105
          %v1108 = vadd.f32 %v1106, %v1078
          %v1109 = vadd.f32 %v1107, %v1079
          %v1110 = vmul.f32 %v876, %v1108
          %v1111 = vmul.f32 %v878, %v1109
          %v1112 = vadd.f32 %v1110, %v1080
          %v1113 = vadd.f32 %v1111, %v1081
          %s1115 = sor.u32 256, 48
          %1116 = vbcast.lane.b32.xlu0 %v882, %s1115
          %v1117 = vpop.permute.xlu0 %1116
          %s1119 = sor.u32 256, 56
          %1120 = vbcast.lane.b32.xlu0 %v882, %s1119
          %v1121 = vpop.permute.xlu0 %1120
          %s1123 = sor.u32 256, 48
          %1124 = vbcast.lane.b32.xlu0 %v894, %s1123
          %v1125 = vpop.permute.xlu0 %1124
          %s1127 = sor.u32 256, 56
          %1128 = vbcast.lane.b32.xlu0 %v894, %s1127
          %v1129 = vpop.permute.xlu0 %1128
          %s1131 = sor.u32 256, 48
          %1132 = vbcast.lane.b32.xlu0 %v906, %s1131
          %v1133 = vpop.permute.xlu0 %1132
          %s1135 = sor.u32 256, 56
          %1136 = vbcast.lane.b32.xlu0 %v906, %s1135
          %v1137 = vpop.permute.xlu0 %1136
          %s1139 = sor.u32 256, 48
          %1140 = vbcast.lane.b32.xlu0 %v918, %s1139
          %v1141 = vpop.permute.xlu0 %1140
          %s1143 = sor.u32 256, 56
          %1144 = vbcast.lane.b32.xlu0 %v918, %s1143
          %v1145 = vpop.permute.xlu0 %1144
          %s1147 = sor.u32 256, 48
          %1148 = vbcast.lane.b32.xlu0 %v930, %s1147
          %v1149 = vpop.permute.xlu0 %1148
          %s1151 = sor.u32 256, 56
          %1152 = vbcast.lane.b32.xlu0 %v930, %s1151
          %v1153 = vpop.permute.xlu0 %1152
          %s1155 = sor.u32 256, 48
          %1156 = vbcast.lane.b32.xlu0 %v942, %s1155
          %v1157 = vpop.permute.xlu0 %1156
          %s1159 = sor.u32 256, 56
          %1160 = vbcast.lane.b32.xlu0 %v942, %s1159
          %v1161 = vpop.permute.xlu0 %1160
          %s1163 = sor.u32 256, 48
          %1164 = vbcast.lane.b32.xlu0 %v954, %s1163
          %v1165 = vpop.permute.xlu0 %1164
          %s1167 = sor.u32 256, 56
          %1168 = vbcast.lane.b32.xlu0 %v954, %s1167
          %v1169 = vpop.permute.xlu0 %1168
          %s1171 = sor.u32 256, 48
          %1172 = vbcast.lane.b32.xlu0 %v966, %s1171
          %v1173 = vpop.permute.xlu0 %1172
          %s1175 = sor.u32 256, 56
          %1176 = vbcast.lane.b32.xlu0 %v966, %s1175
          %v1177 = vpop.permute.xlu0 %1176
          %v1178 = vmul.f32 %v1117, %v1084
          %v1179 = vmul.f32 %v1121, %v1085
          %v1180 = vmul.f32 %v1125, %v1088
          %v1181 = vmul.f32 %v1129, %v1089
          %v1182 = vmul.f32 %v1133, %v1092
          %v1183 = vmul.f32 %v1137, %v1093
          %v1184 = vmul.f32 %v1141, %v1096
          %v1185 = vmul.f32 %v1145, %v1097
          %v1186 = vmul.f32 %v1149, %v1100
          %v1187 = vmul.f32 %v1153, %v1101
          %v1188 = vmul.f32 %v1157, %v1104
          %v1189 = vmul.f32 %v1161, %v1105
          %v1190 = vmul.f32 %v1165, %v1108
          %v1191 = vmul.f32 %v1169, %v1109
          %v1192 = vmul.f32 %v1173, %v1112
          %v1193 = vmul.f32 %v1177, %v1113
          %v1194 = vsel %vm530, %v1178, 0.0
          %v1195 = vsel %vm530, %v1179, 0.0
          %v1196 = vadd.f32 %v1194, %v1195
          %v1197 = vrot.slane %v1196, 4
          %v1198 = vadd.f32 %v1196, %v1197
          %v1199 = vrot.slane %v1198, 2
          %v1200 = vadd.f32 %v1198, %v1199
          %v1201 = vrot.slane %v1200, 1
          %v1202 = vadd.f32 %v1200, %v1201
          %v1203 = vsel %vm530, %v1180, 0.0
          %v1204 = vsel %vm530, %v1181, 0.0
          %v1205 = vadd.f32 %v1203, %v1204
          %v1206 = vrot.slane %v1205, 4
          %v1207 = vadd.f32 %v1205, %v1206
          %v1208 = vrot.slane %v1207, 2
          %v1209 = vadd.f32 %v1207, %v1208
          %v1210 = vrot.slane %v1209, 1
          %v1211 = vadd.f32 %v1209, %v1210
          %v1212 = vsel %vm530, %v1182, 0.0
          %v1213 = vsel %vm530, %v1183, 0.0
          %v1214 = vadd.f32 %v1212, %v1213
          %v1215 = vrot.slane %v1214, 4
          %v1216 = vadd.f32 %v1214, %v1215
          %v1217 = vrot.slane %v1216, 2
          %v1218 = vadd.f32 %v1216, %v1217
          %v1219 = vrot.slane %v1218, 1
          %v1220 = vadd.f32 %v1218, %v1219
          %v1221 = vsel %vm530, %v1184, 0.0
          %v1222 = vsel %vm530, %v1185, 0.0
          %v1223 = vadd.f32 %v1221, %v1222
          %v1224 = vrot.slane %v1223, 4
          %v1225 = vadd.f32 %v1223, %v1224
          %v1226 = vrot.slane %v1225, 2
          %v1227 = vadd.f32 %v1225, %v1226
          %v1228 = vrot.slane %v1227, 1
          %v1229 = vadd.f32 %v1227, %v1228
          %v1230 = vsel %vm530, %v1186, 0.0
          %v1231 = vsel %vm530, %v1187, 0.0
          %v1232 = vadd.f32 %v1230, %v1231
          %v1233 = vrot.slane %v1232, 4
          %v1234 = vadd.f32 %v1232, %v1233
          %v1235 = vrot.slane %v1234, 2
          %v1236 = vadd.f32 %v1234, %v1235
          %v1237 = vrot.slane %v1236, 1
          %v1238 = vadd.f32 %v1236, %v1237
          %v1239 = vsel %vm530, %v1188, 0.0
          %v1240 = vsel %vm530, %v1189, 0.0
          %v1241 = vadd.f32 %v1239, %v1240
          %v1242 = vrot.slane %v1241, 4
          %v1243 = vadd.f32 %v1241, %v1242
          %v1244 = vrot.slane %v1243, 2
          %v1245 = vadd.f32 %v1243, %v1244
          %v1246 = vrot.slane %v1245, 1
          %v1247 = vadd.f32 %v1245, %v1246
          %v1248 = vsel %vm530, %v1190, 0.0
          %v1249 = vsel %vm530, %v1191, 0.0
          %v1250 = vadd.f32 %v1248, %v1249
          %v1251 = vrot.slane %v1250, 4
          %v1252 = vadd.f32 %v1250, %v1251
          %v1253 = vrot.slane %v1252, 2
          %v1254 = vadd.f32 %v1252, %v1253
          %v1255 = vrot.slane %v1254, 1
          %v1256 = vadd.f32 %v1254, %v1255
          %v1257 = vsel %vm530, %v1192, 0.0
          %v1258 = vsel %vm530, %v1193, 0.0
          %v1259 = vadd.f32 %v1257, %v1258
          %v1260 = vrot.slane %v1259, 4
          %v1261 = vadd.f32 %v1259, %v1260
          %v1262 = vrot.slane %v1261, 2
          %v1263 = vadd.f32 %v1261, %v1262
          %v1264 = vrot.slane %v1263, 1
          %v1265 = vadd.f32 %v1263, %v1264
          %s1266 = scalar_lea.vmem %s497, %s712
          %v1267 = vld [vmem:[%s1266] sm:$0xff]
          %vm1276 = vcmask 1041409
          %v1277 = vsel %vm1276, %v1211, %v1202
          %vm1278 = vcmask 1042434
          %v1279 = vsel %vm1278, %v1220, %v1277
          %vm1280 = vcmask 1043459
          %v1281 = vsel %vm1280, %v1229, %v1279
          %vm1282 = vcmask 1044484
          %v1283 = vsel %vm1282, %v1238, %v1281
          %vm1284 = vcmask 1045509
          %v1285 = vsel %vm1284, %v1247, %v1283
          %vm1286 = vcmask 1046534
          %v1287 = vsel %vm1286, %v1256, %v1285
          %vm1288 = vcmask 1047559
          %v1289 = vsel %vm1288, %v1265, %v1287
          %v1291 = vadd.f32 %v1267, %v1289
          %1292 = vst.msk [vmem:[%s1266] sm:$0xff] %vm530, %v1291
          %s1293 = sadd.s32 %s703, 1
          %s1294 = smul.u32 %s1293, 8
          %s1295 = ssub.s32 64, %s1294
          %s1296 = scalar_lea.vmem %s478, %s1295
          %v1297 = vld [vmem:[%s1296] sm:$0xff]
          %s1298 = scalar_lea.vmem %s483, %s1295
          %v1299 = vld [vmem:[%s1298] sm:$0xff]
          %v1300 = vsel %vm517, %v1297, %v1299
          %s1301 = scalar_lea.vmem [#allocation2], %s1295
          %v1302 = vld [vmem:[%s1301] sm:$0xff]
          %v1304 = vlaneseq
          %v1305 = vshrl.u32 %v1304, 7
          %v1306 = vsub.s32 0, %v1305
          %v1307 = vrot.slane %v701, %v1306
          %1308 = vrot.lane.b32.xlu0 %v1307, 64
          %v1309 = vpop.permute.xlu0 %1308
          %v1311 = vadd.f32 %v1302, %v1309
          %vm1312 = vcmp.gt.f32.partialorder %v1311, 20.0
          %v1313 = vmin.f32 %v1311, 20.0
          %v1314 = vmul.f32 %v1313, 1.442695
          %v1315 = vpow.pop %v1314
          %v1316 = vadd.f32 %v1315, 1.0
          %v1317 = vlog2.pop %v1316
          %v1318 = vmul.f32 %v1317, 0.6931472
          %v1319 = vmul.f32 -0.5, %v1315
          %v1320 = vadd.f32 %v1319, 1.0
          %v1321 = vmul.f32 %v1320, %v1315
          %v1322 = vand.u32 2147483647, %v1315
          %vm1323 = vcmp.lt.f32.partialorder %v1322, 0.0004427343
          %v1324 = vsel %vm1323, %v1321, %v1318
          %v1325 = vsel %vm1312, %v1311, %v1324
          %v1327 = vcombine.high %v1325, %v1325
          %v1329 = vunpack.c.l.s4 1966171168
          %v1330 = vunpack.c.0.s8 %v1329
          %v1331 = vlaneseq
          %v1332 = vshrl.u32 %v1331, 7
          %v1333 = vsub.s32 %v1330, %v1332
          %v1334 = vrot.slane %v1325, %v1333
          %v1336 = vunpack.c.l.s4 1966171168
          %v1337 = vunpack.c.0.s8 %v1336
          %v1338 = vlaneseq
          %v1339 = vshrl.u32 %v1338, 7
          %v1340 = vsub.s32 %v1337, %v1339
          %v1341 = vrot.slane %v1327, %v1340
          %v1342 = vcombine.high %v1334, %v1334
          %v1343 = vcombine.high %v1341, %v1341
          %v1345 = vunpack.c.l.s4 1966171168
          %v1346 = vunpack.c.0.s8 %v1345
          %v1347 = vlaneseq
          %v1348 = vshrl.u32 %v1347, 7
          %v1349 = vsub.s32 %v1346, %v1348
          %v1350 = vrot.slane %v1334, %v1349
          %v1352 = vunpack.c.l.s4 1966171168
          %v1353 = vunpack.c.0.s8 %v1352
          %v1354 = vlaneseq
          %v1355 = vshrl.u32 %v1354, 7
          %v1356 = vsub.s32 %v1353, %v1355
          %v1357 = vrot.slane %v1341, %v1356
          %v1359 = vunpack.c.l.s4 1966171168
          %v1360 = vunpack.c.0.s8 %v1359
          %v1361 = vlaneseq
          %v1362 = vshrl.u32 %v1361, 7
          %v1363 = vsub.s32 %v1360, %v1362
          %v1364 = vrot.slane %v1342, %v1363
          %v1366 = vunpack.c.l.s4 1966171168
          %v1367 = vunpack.c.0.s8 %v1366
          %v1368 = vlaneseq
          %v1369 = vshrl.u32 %v1368, 7
          %v1370 = vsub.s32 %v1367, %v1369
          %v1371 = vrot.slane %v1343, %v1370
          %v1372 = vcombine.high %v1350, %v1350
          %v1373 = vcombine.high %v1357, %v1357
          %v1374 = vcombine.high %v1364, %v1364
          %v1375 = vcombine.high %v1371, %v1371
          %v1376 = vlaneseq
          %v1377 = vshrl.u32 %v1376, 7
          %v1378 = vsub.s32 0, %v1377
          %v1379 = vrot.slane %v1350, %v1378
          %v1380 = vlaneseq
          %v1381 = vshrl.u32 %v1380, 7
          %v1382 = vsub.s32 0, %v1381
          %v1383 = vrot.slane %v1364, %v1382
          %v1384 = vlaneseq
          %v1385 = vshrl.u32 %v1384, 7
          %v1386 = vsub.s32 0, %v1385
          %v1387 = vrot.slane %v1372, %v1386
          %v1388 = vlaneseq
          %v1389 = vshrl.u32 %v1388, 7
          %v1390 = vsub.s32 0, %v1389
          %v1391 = vrot.slane %v1374, %v1390
          %v1392 = vlaneseq
          %v1393 = vshrl.u32 %v1392, 7
          %v1394 = vsub.s32 0, %v1393
          %v1395 = vrot.slane %v1357, %v1394
          %v1396 = vlaneseq
          %v1397 = vshrl.u32 %v1396, 7
          %v1398 = vsub.s32 0, %v1397
          %v1399 = vrot.slane %v1371, %v1398
          %v1400 = vlaneseq
          %v1401 = vshrl.u32 %v1400, 7
          %v1402 = vsub.s32 0, %v1401
          %v1403 = vrot.slane %v1373, %v1402
          %v1404 = vlaneseq
          %v1405 = vshrl.u32 %v1404, 7
          %v1406 = vsub.s32 0, %v1405
          %v1407 = vrot.slane %v1375, %v1406
          %1418 = vrot.lane.b32.xlu0 %v697, 64
          %v1419 = vpop.permute.xlu0 %1418
          %1420 = vrot.lane.b32.xlu0 %v698, 64
          %v1421 = vpop.permute.xlu0 %1420
          %v1424 = vmul.f32 %v1379, %v1419
          %v1425 = vmul.f32 %v1379, %v1421
          %v1426 = vmul.f32 %v1383, %v1419
          %v1427 = vmul.f32 %v1383, %v1421
          %v1428 = vmul.f32 %v1387, %v1419
          %v1429 = vmul.f32 %v1387, %v1421
          %v1430 = vmul.f32 %v1391, %v1419
          %v1431 = vmul.f32 %v1391, %v1421
          %v1432 = vmul.f32 %v1395, %v1419
          %v1433 = vmul.f32 %v1395, %v1421
          %v1434 = vmul.f32 %v1399, %v1419
          %v1435 = vmul.f32 %v1399, %v1421
          %v1436 = vmul.f32 %v1403, %v1419
          %v1437 = vmul.f32 %v1403, %v1421
          %v1438 = vmul.f32 %v1407, %v1419
          %v1439 = vmul.f32 %v1407, %v1421
          %v1440 = vmul.f32 %v1424, 1.442695
          %v1441 = vpow.pop %v1440
          %v1442 = vmul.f32 %v1425, 1.442695
          %v1443 = vpow.pop %v1442
          %v1444 = vmul.f32 %v1426, 1.442695
          %v1445 = vpow.pop %v1444
          %v1446 = vmul.f32 %v1427, 1.442695
          %v1447 = vpow.pop %v1446
          %v1448 = vmul.f32 %v1428, 1.442695
          %v1449 = vpow.pop %v1448
          %v1450 = vmul.f32 %v1429, 1.442695
          %v1451 = vpow.pop %v1450
          %v1452 = vmul.f32 %v1430, 1.442695
          %v1453 = vpow.pop %v1452
          %v1454 = vmul.f32 %v1431, 1.442695
          %v1455 = vpow.pop %v1454
          %v1456 = vmul.f32 %v1432, 1.442695
          %v1457 = vpow.pop %v1456
          %v1458 = vmul.f32 %v1433, 1.442695
          %v1459 = vpow.pop %v1458
          %v1460 = vmul.f32 %v1434, 1.442695
          %v1461 = vpow.pop %v1460
          %v1462 = vmul.f32 %v1435, 1.442695
          %v1463 = vpow.pop %v1462
          %v1464 = vmul.f32 %v1436, 1.442695
          %v1465 = vpow.pop %v1464
          %v1466 = vmul.f32 %v1437, 1.442695
          %v1467 = vpow.pop %v1466
          %v1468 = vmul.f32 %v1438, 1.442695
          %v1469 = vpow.pop %v1468
          %v1470 = vmul.f32 %v1439, 1.442695
          %v1471 = vpow.pop %v1470
          %v1472 = vlaneseq
          %v1473 = vshrl.u32 %v1472, 7
          %v1474 = vsub.s32 0, %v1473
          %v1475 = vrot.slane %v1302, %v1474
          %s1477 = sor.u32 256, 96
          %1478 = vbcast.lane.b32.xlu0 %v1475, %s1477
          %v1479 = vpop.permute.xlu0 %1478
          %s1481 = sor.u32 256, 104
          %1482 = vbcast.lane.b32.xlu0 %v1475, %s1481
          %v1483 = vpop.permute.xlu0 %1482
          %v1484 = vlaneseq
          %v1485 = vshrl.u32 %v1484, 7
          %v1486 = vsub.s32 1, %v1485
          %v1487 = vrot.slane %v1302, %v1486
          %s1489 = sor.u32 256, 96
          %1490 = vbcast.lane.b32.xlu0 %v1487, %s1489
          %v1491 = vpop.permute.xlu0 %1490
          %s1493 = sor.u32 256, 104
          %1494 = vbcast.lane.b32.xlu0 %v1487, %s1493
          %v1495 = vpop.permute.xlu0 %1494
          %v1496 = vlaneseq
          %v1497 = vshrl.u32 %v1496, 7
          %v1498 = vsub.s32 2, %v1497
          %v1499 = vrot.slane %v1302, %v1498
          %s1501 = sor.u32 256, 96
          %1502 = vbcast.lane.b32.xlu0 %v1499, %s1501
          %v1503 = vpop.permute.xlu0 %1502
          %s1505 = sor.u32 256, 104
          %1506 = vbcast.lane.b32.xlu0 %v1499, %s1505
          %v1507 = vpop.permute.xlu0 %1506
          %v1508 = vlaneseq
          %v1509 = vshrl.u32 %v1508, 7
          %v1510 = vsub.s32 3, %v1509
          %v1511 = vrot.slane %v1302, %v1510
          %s1513 = sor.u32 256, 96
          %1514 = vbcast.lane.b32.xlu0 %v1511, %s1513
          %v1515 = vpop.permute.xlu0 %1514
          %s1517 = sor.u32 256, 104
          %1518 = vbcast.lane.b32.xlu0 %v1511, %s1517
          %v1519 = vpop.permute.xlu0 %1518
          %v1520 = vlaneseq
          %v1521 = vshrl.u32 %v1520, 7
          %v1522 = vsub.s32 4, %v1521
          %v1523 = vrot.slane %v1302, %v1522
          %s1525 = sor.u32 256, 96
          %1526 = vbcast.lane.b32.xlu0 %v1523, %s1525
          %v1527 = vpop.permute.xlu0 %1526
          %s1529 = sor.u32 256, 104
          %1530 = vbcast.lane.b32.xlu0 %v1523, %s1529
          %v1531 = vpop.permute.xlu0 %1530
          %v1532 = vlaneseq
          %v1533 = vshrl.u32 %v1532, 7
          %v1534 = vsub.s32 5, %v1533
          %v1535 = vrot.slane %v1302, %v1534
          %s1537 = sor.u32 256, 96
          %1538 = vbcast.lane.b32.xlu0 %v1535, %s1537
          %v1539 = vpop.permute.xlu0 %1538
          %s1541 = sor.u32 256, 104
          %1542 = vbcast.lane.b32.xlu0 %v1535, %s1541
          %v1543 = vpop.permute.xlu0 %1542
          %v1544 = vlaneseq
          %v1545 = vshrl.u32 %v1544, 7
          %v1546 = vsub.s32 6, %v1545
          %v1547 = vrot.slane %v1302, %v1546
          %s1549 = sor.u32 256, 96
          %1550 = vbcast.lane.b32.xlu0 %v1547, %s1549
          %v1551 = vpop.permute.xlu0 %1550
          %s1553 = sor.u32 256, 104
          %1554 = vbcast.lane.b32.xlu0 %v1547, %s1553
          %v1555 = vpop.permute.xlu0 %1554
          %v1556 = vlaneseq
          %v1557 = vshrl.u32 %v1556, 7
          %v1558 = vsub.s32 7, %v1557
          %v1559 = vrot.slane %v1302, %v1558
          %s1561 = sor.u32 256, 96
          %1562 = vbcast.lane.b32.xlu0 %v1559, %s1561
          %v1563 = vpop.permute.xlu0 %1562
          %s1565 = sor.u32 256, 104
          %1566 = vbcast.lane.b32.xlu0 %v1559, %s1565
          %v1567 = vpop.permute.xlu0 %1566
          %1569 = vrot.lane.b32.xlu0 %v1300, 64
          %v1570 = vpop.permute.xlu0 %1569
          %v1572 = vmul.f32 %v1325, %v1570
          %v1574 = vcombine.high %v1572, %v1572
          %v1576 = vunpack.c.l.s4 1966171168
          %v1577 = vunpack.c.0.s8 %v1576
          %v1578 = vlaneseq
          %v1579 = vshrl.u32 %v1578, 7
          %v1580 = vsub.s32 %v1577, %v1579
          %v1581 = vrot.slane %v1572, %v1580
          %v1583 = vunpack.c.l.s4 1966171168
          %v1584 = vunpack.c.0.s8 %v1583
          %v1585 = vlaneseq
          %v1586 = vshrl.u32 %v1585, 7
          %v1587 = vsub.s32 %v1584, %v1586
          %v1588 = vrot.slane %v1574, %v1587
          %v1589 = vcombine.high %v1581, %v1581
          %v1590 = vcombine.high %v1588, %v1588
          %v1592 = vunpack.c.l.s4 1966171168
          %v1593 = vunpack.c.0.s8 %v1592
          %v1594 = vlaneseq
          %v1595 = vshrl.u32 %v1594, 7
          %v1596 = vsub.s32 %v1593, %v1595
          %v1597 = vrot.slane %v1581, %v1596
          %v1599 = vunpack.c.l.s4 1966171168
          %v1600 = vunpack.c.0.s8 %v1599
          %v1601 = vlaneseq
          %v1602 = vshrl.u32 %v1601, 7
          %v1603 = vsub.s32 %v1600, %v1602
          %v1604 = vrot.slane %v1588, %v1603
          %v1606 = vunpack.c.l.s4 1966171168
          %v1607 = vunpack.c.0.s8 %v1606
          %v1608 = vlaneseq
          %v1609 = vshrl.u32 %v1608, 7
          %v1610 = vsub.s32 %v1607, %v1609
          %v1611 = vrot.slane %v1589, %v1610
          %v1613 = vunpack.c.l.s4 1966171168
          %v1614 = vunpack.c.0.s8 %v1613
          %v1615 = vlaneseq
          %v1616 = vshrl.u32 %v1615, 7
          %v1617 = vsub.s32 %v1614, %v1616
          %v1618 = vrot.slane %v1590, %v1617
          %v1619 = vcombine.high %v1597, %v1597
          %v1620 = vcombine.high %v1604, %v1604
          %v1621 = vcombine.high %v1611, %v1611
          %v1622 = vcombine.high %v1618, %v1618
          %v1623 = vlaneseq
          %v1624 = vshrl.u32 %v1623, 7
          %v1625 = vsub.s32 0, %v1624
          %v1626 = vrot.slane %v1597, %v1625
          %v1627 = vlaneseq
          %v1628 = vshrl.u32 %v1627, 7
          %v1629 = vsub.s32 0, %v1628
          %v1630 = vrot.slane %v1611, %v1629
          %v1631 = vlaneseq
          %v1632 = vshrl.u32 %v1631, 7
          %v1633 = vsub.s32 0, %v1632
          %v1634 = vrot.slane %v1619, %v1633
          %v1635 = vlaneseq
          %v1636 = vshrl.u32 %v1635, 7
          %v1637 = vsub.s32 0, %v1636
          %v1638 = vrot.slane %v1621, %v1637
          %v1639 = vlaneseq
          %v1640 = vshrl.u32 %v1639, 7
          %v1641 = vsub.s32 0, %v1640
          %v1642 = vrot.slane %v1604, %v1641
          %v1643 = vlaneseq
          %v1644 = vshrl.u32 %v1643, 7
          %v1645 = vsub.s32 0, %v1644
          %v1646 = vrot.slane %v1618, %v1645
          %v1647 = vlaneseq
          %v1648 = vshrl.u32 %v1647, 7
          %v1649 = vsub.s32 0, %v1648
          %v1650 = vrot.slane %v1620, %v1649
          %v1651 = vlaneseq
          %v1652 = vshrl.u32 %v1651, 7
          %v1653 = vsub.s32 0, %v1652
          %v1654 = vrot.slane %v1622, %v1653
          %v1663 = vmul.f32 %v1479, %v1626
          %v1664 = vmul.f32 %v1483, %v1626
          %v1665 = vmul.f32 %v1491, %v1630
          %v1666 = vmul.f32 %v1495, %v1630
          %v1667 = vmul.f32 %v1503, %v1634
          %v1668 = vmul.f32 %v1507, %v1634
          %v1669 = vmul.f32 %v1515, %v1638
          %v1670 = vmul.f32 %v1519, %v1638
          %v1671 = vmul.f32 %v1527, %v1642
          %v1672 = vmul.f32 %v1531, %v1642
          %v1673 = vmul.f32 %v1539, %v1646
          %v1674 = vmul.f32 %v1543, %v1646
          %v1675 = vmul.f32 %v1551, %v1650
          %v1676 = vmul.f32 %v1555, %v1650
          %v1677 = vmul.f32 %v1563, %v1654
          %v1678 = vmul.f32 %v1567, %v1654
          %v1679 = vmul.f32 %v1469, %v710
          %v1680 = vmul.f32 %v1471, %v711
          %v1681 = vadd.f32 %v1679, %v1677
          %v1682 = vadd.f32 %v1680, %v1678
          %v1683 = vmul.f32 %v1465, %v1681
          %v1684 = vmul.f32 %v1467, %v1682
          %v1685 = vadd.f32 %v1683, %v1675
          %v1686 = vadd.f32 %v1684, %v1676
          %v1687 = vmul.f32 %v1461, %v1685
          %v1688 = vmul.f32 %v1463, %v1686
          %v1689 = vadd.f32 %v1687, %v1673
          %v1690 = vadd.f32 %v1688, %v1674
          %v1691 = vmul.f32 %v1457, %v1689
          %v1692 = vmul.f32 %v1459, %v1690
          %v1693 = vadd.f32 %v1691, %v1671
          %v1694 = vadd.f32 %v1692, %v1672
          %v1695 = vmul.f32 %v1453, %v1693
          %v1696 = vmul.f32 %v1455, %v1694
          %v1697 = vadd.f32 %v1695, %v1669
          %v1698 = vadd.f32 %v1696, %v1670
          %v1699 = vmul.f32 %v1449, %v1697
          %v1700 = vmul.f32 %v1451, %v1698
          %v1701 = vadd.f32 %v1699, %v1667
          %v1702 = vadd.f32 %v1700, %v1668
          %v1703 = vmul.f32 %v1445, %v1701
          %v1704 = vmul.f32 %v1447, %v1702
          %v1705 = vadd.f32 %v1703, %v1665
          %v1706 = vadd.f32 %v1704, %v1666
          %v1707 = vmul.f32 %v1441, %v1705
          %v1708 = vmul.f32 %v1443, %v1706
          %v1709 = vadd.f32 %v1707, %v1663
          %v1710 = vadd.f32 %v1708, %v1664
          %s1712 = sor.u32 256, 112
          %1713 = vbcast.lane.b32.xlu0 %v1475, %s1712
          %v1714 = vpop.permute.xlu0 %1713
          %s1716 = sor.u32 256, 120
          %1717 = vbcast.lane.b32.xlu0 %v1475, %s1716
          %v1718 = vpop.permute.xlu0 %1717
          %s1720 = sor.u32 256, 112
          %1721 = vbcast.lane.b32.xlu0 %v1487, %s1720
          %v1722 = vpop.permute.xlu0 %1721
          %s1724 = sor.u32 256, 120
          %1725 = vbcast.lane.b32.xlu0 %v1487, %s1724
          %v1726 = vpop.permute.xlu0 %1725
          %s1728 = sor.u32 256, 112
          %1729 = vbcast.lane.b32.xlu0 %v1499, %s1728
          %v1730 = vpop.permute.xlu0 %1729
          %s1732 = sor.u32 256, 120
          %1733 = vbcast.lane.b32.xlu0 %v1499, %s1732
          %v1734 = vpop.permute.xlu0 %1733
          %s1736 = sor.u32 256, 112
          %1737 = vbcast.lane.b32.xlu0 %v1511, %s1736
          %v1738 = vpop.permute.xlu0 %1737
          %s1740 = sor.u32 256, 120
          %1741 = vbcast.lane.b32.xlu0 %v1511, %s1740
          %v1742 = vpop.permute.xlu0 %1741
          %s1744 = sor.u32 256, 112
          %1745 = vbcast.lane.b32.xlu0 %v1523, %s1744
          %v1746 = vpop.permute.xlu0 %1745
          %s1748 = sor.u32 256, 120
          %1749 = vbcast.lane.b32.xlu0 %v1523, %s1748
          %v1750 = vpop.permute.xlu0 %1749
          %s1752 = sor.u32 256, 112
          %1753 = vbcast.lane.b32.xlu0 %v1535, %s1752
          %v1754 = vpop.permute.xlu0 %1753
          %s1756 = sor.u32 256, 120
          %1757 = vbcast.lane.b32.xlu0 %v1535, %s1756
          %v1758 = vpop.permute.xlu0 %1757
          %s1760 = sor.u32 256, 112
          %1761 = vbcast.lane.b32.xlu0 %v1547, %s1760
          %v1762 = vpop.permute.xlu0 %1761
          %s1764 = sor.u32 256, 120
          %1765 = vbcast.lane.b32.xlu0 %v1547, %s1764
          %v1766 = vpop.permute.xlu0 %1765
          %s1768 = sor.u32 256, 112
          %1769 = vbcast.lane.b32.xlu0 %v1559, %s1768
          %v1770 = vpop.permute.xlu0 %1769
          %s1772 = sor.u32 256, 120
          %1773 = vbcast.lane.b32.xlu0 %v1559, %s1772
          %v1774 = vpop.permute.xlu0 %1773
          %v1775 = vmul.f32 %v1714, %v1709
          %v1776 = vmul.f32 %v1718, %v1710
          %v1777 = vmul.f32 %v1722, %v1705
          %v1778 = vmul.f32 %v1726, %v1706
          %v1779 = vmul.f32 %v1730, %v1701
          %v1780 = vmul.f32 %v1734, %v1702
          %v1781 = vmul.f32 %v1738, %v1697
          %v1782 = vmul.f32 %v1742, %v1698
          %v1783 = vmul.f32 %v1746, %v1693
          %v1784 = vmul.f32 %v1750, %v1694
          %v1785 = vmul.f32 %v1754, %v1689
          %v1786 = vmul.f32 %v1758, %v1690
          %v1787 = vmul.f32 %v1762, %v1685
          %v1788 = vmul.f32 %v1766, %v1686
          %v1789 = vmul.f32 %v1770, %v1681
          %v1790 = vmul.f32 %v1774, %v1682
          %vm1791 = vcmask 785920
          %v1792 = vsel %vm1791, %v1775, 0.0
          %v1793 = vsel %vm1791, %v1776, 0.0
          %v1794 = vadd.f32 %v1792, %v1793
          %v1795 = vrot.slane %v1794, 4
          %v1796 = vadd.f32 %v1794, %v1795
          %v1797 = vrot.slane %v1796, 2
          %v1798 = vadd.f32 %v1796, %v1797
          %v1799 = vrot.slane %v1798, 1
          %v1800 = vadd.f32 %v1798, %v1799
          %v1801 = vsel %vm1791, %v1777, 0.0
          %v1802 = vsel %vm1791, %v1778, 0.0
          %v1803 = vadd.f32 %v1801, %v1802
          %v1804 = vrot.slane %v1803, 4
          %v1805 = vadd.f32 %v1803, %v1804
          %v1806 = vrot.slane %v1805, 2
          %v1807 = vadd.f32 %v1805, %v1806
          %v1808 = vrot.slane %v1807, 1
          %v1809 = vadd.f32 %v1807, %v1808
          %v1810 = vsel %vm1791, %v1779, 0.0
          %v1811 = vsel %vm1791, %v1780, 0.0
          %v1812 = vadd.f32 %v1810, %v1811
          %v1813 = vrot.slane %v1812, 4
          %v1814 = vadd.f32 %v1812, %v1813
          %v1815 = vrot.slane %v1814, 2
          %v1816 = vadd.f32 %v1814, %v1815
          %v1817 = vrot.slane %v1816, 1
          %v1818 = vadd.f32 %v1816, %v1817
          %v1819 = vsel %vm1791, %v1781, 0.0
          %v1820 = vsel %vm1791, %v1782, 0.0
          %v1821 = vadd.f32 %v1819, %v1820
          %v1822 = vrot.slane %v1821, 4
          %v1823 = vadd.f32 %v1821, %v1822
          %v1824 = vrot.slane %v1823, 2
          %v1825 = vadd.f32 %v1823, %v1824
          %v1826 = vrot.slane %v1825, 1
          %v1827 = vadd.f32 %v1825, %v1826
          %v1828 = vsel %vm1791, %v1783, 0.0
          %v1829 = vsel %vm1791, %v1784, 0.0
          %v1830 = vadd.f32 %v1828, %v1829
          %v1831 = vrot.slane %v1830, 4
          %v1832 = vadd.f32 %v1830, %v1831
          %v1833 = vrot.slane %v1832, 2
          %v1834 = vadd.f32 %v1832, %v1833
          %v1835 = vrot.slane %v1834, 1
          %v1836 = vadd.f32 %v1834, %v1835
          %v1837 = vsel %vm1791, %v1785, 0.0
          %v1838 = vsel %vm1791, %v1786, 0.0
          %v1839 = vadd.f32 %v1837, %v1838
          %v1840 = vrot.slane %v1839, 4
          %v1841 = vadd.f32 %v1839, %v1840
          %v1842 = vrot.slane %v1841, 2
          %v1843 = vadd.f32 %v1841, %v1842
          %v1844 = vrot.slane %v1843, 1
          %v1845 = vadd.f32 %v1843, %v1844
          %v1846 = vsel %vm1791, %v1787, 0.0
          %v1847 = vsel %vm1791, %v1788, 0.0
          %v1848 = vadd.f32 %v1846, %v1847
          %v1849 = vrot.slane %v1848, 4
          %v1850 = vadd.f32 %v1848, %v1849
          %v1851 = vrot.slane %v1850, 2
          %v1852 = vadd.f32 %v1850, %v1851
          %v1853 = vrot.slane %v1852, 1
          %v1854 = vadd.f32 %v1852, %v1853
          %v1855 = vsel %vm1791, %v1789, 0.0
          %v1856 = vsel %vm1791, %v1790, 0.0
          %v1857 = vadd.f32 %v1855, %v1856
          %v1858 = vrot.slane %v1857, 4
          %v1859 = vadd.f32 %v1857, %v1858
          %v1860 = vrot.slane %v1859, 2
          %v1861 = vadd.f32 %v1859, %v1860
          %v1862 = vrot.slane %v1861, 1
          %v1863 = vadd.f32 %v1861, %v1862
          %s1864 = scalar_lea.vmem %s497, %s1295
          %v1865 = vld [vmem:[%s1864] sm:$0xff]
          %v1874 = vsel %vm1276, %v1809, %v1800
          %v1875 = vsel %vm1278, %v1818, %v1874
          %v1876 = vsel %vm1280, %v1827, %v1875
          %v1877 = vsel %vm1282, %v1836, %v1876
          %v1878 = vsel %vm1284, %v1845, %v1877
          %v1879 = vsel %vm1286, %v1854, %v1878
          %v1880 = vsel %vm1288, %v1863, %v1879
          %1881 = vrot.lane.b32.xlu0 %v1880, 64
          %v1882 = vpop.permute.xlu0 %1881
          %v1884 = vadd.f32 %v1865, %v1882
          %1885 = vst.msk [vmem:[%s1864] sm:$0xff] %vm530, %v1884
        $region155: #{forward.10} parent=137 // loop_footer
          %s707 = sadd.s32 1, %s703
        $region156: #{forward.10} parent=137 // loop_footer_branch
          %702 = sbr.rel target = $region152
        $region157: #{forward.10} parent=137 // loop_exit
          _
        %p1886 = scmp.lt.s32.totalorder %s21, 1
        %s1887 = scalar_select %p1886, %s21, 1
        %p1888 = scmp.lt.s32.totalorder %s22, 1
        %s1889 = scalar_select %p1888, %s22, 1
        %s1890 = smul.addr %s1889, 8
        %s1891 = smul.addr %s1887, 16
        %s1892 = sadd.s32 %s1890, %s1891
        %s1893 = smul.addr %s1892, 8
        %s1894 = scalar_lea.vmem %s6, %s1893
        // Predicated region
        $region158: #{forward.10} parent=137 // pred_check
          %p1895 = pneg %p205
        $region159: #{forward.10} parent=137 // pred_check_branch
          %1897 = sbr.rel (%p1895) target = $region161
        $region160: #{forward.10} parent=137 // pred_region
          _
        $region161: #{forward.10} parent=137 // pred_fallthru
          _
      $region138: #{forward.10} parent=5 // pred_fallthru
        _
      %p1898 = scmp.le.s32.totalorder 2, %s12
      // Predicated region
      $region162: #{forward.10} parent=5 // pred_check
        %p1899 = pneg %p1898
      $region163: #{forward.10} parent=5 // pred_check_branch
        %1901 = sbr.rel (%p1899) target = $region165
      $region164: #{forward.10} parent=5 // pred_region
        %s1902 = ssub.s32 %s12, 2
        // Predicated region
        $region166: #{forward.10} parent=164 // pred_check
          %p1903 = pneg %p211
        $region167: #{forward.10} parent=164 // pred_check_branch
          %1905 = sbr.rel (%p1903) target = $region169
        $region168: #{forward.10} parent=164 // pred_region
          %p1906 = scmp.lt.s32.totalorder %s23, 1
          %s1907 = scalar_select %p1906, %s23, 1
          %p1908 = scmp.lt.s32.totalorder %s24, 1
          %s1909 = scalar_select %p1908, %s24, 1
          %s1910 = smul.addr %s1909, 8
          %s1911 = smul.addr %s1907, 16
          %s1912 = sadd.s32 %s1910, %s1911
          %s1913 = smul.addr %s1912, 8
          %s1914 = scalar_lea.vmem %s6, %s1913
        $region169: #{forward.10} parent=164 // pred_fallthru
          _
      $region165: #{forward.10} parent=5 // pred_fallthru
        _
    $region6: #{forward.10} parent=1 // loop_footer
      %s16 = sadd.s32 1, %s12
    $region7: #{forward.10} parent=1 // loop_footer_branch
      %11 = sbr.rel target = $region3
    $region8: #{forward.10} parent=1 // loop_exit
      _

// kernel: forward.15
$region0: #{forward.15}
  #allocation0 [shape = 'u32[]', space=smem, size = 0x4, offset = 0x4, fixed_abs, tag = 'smem constant byte address 0x4 - core index']
  #allocation1 [shape = 'u32[144,128]{1,0:T(1,128)}', space=vmem, size = 0x12000, scoped, tag = 'internal scratch']
  %s0 = inlined_call_operand.vmem [shape: f32[128,32], index: 0, kind: input, shape index: {}]
  %s1 = inlined_call_operand.vmem [shape: f32[128,32], index: 1, kind: input, shape index: {}]
  %s2 = inlined_call_operand.vmem [shape: f32[128,32], index: 2, kind: input, shape index: {}]
  %s3 = inlined_call_operand.vmem [shape: f32[128,16], index: 3, kind: input, shape index: {}]
  %s4 = inlined_call_operand.vmem [shape: f32[1,32], index: 4, kind: input, shape index: {}]
  %s5 = inlined_call_operand.vmem [shape: f32[1,32], index: 5, kind: input, shape index: {}]
  %s6 = inlined_call_operand.vmem [shape: f32[32,16], index: 6, kind: input, shape index: {}]
  %s7 = inlined_call_operand.hbm [shape: f32[128,16], index: 7, kind: output, shape index: {}]
  %s8 = sld [smem:[#allocation0]]
  $region38: #{forward.15} parent=0
    _
  %s10 = ssub.s32 1, %s8
  %s11 = scalar_select 0, %s10, %s8
  $region1: #{forward.15} parent=0
    #allocation2 [shape = 'u8[65536]{0}', space=vmem, size = 0x10000, scoped, tag = 'output window, operand 0, single buffered']
    #allocation3 [shape = 's32[1]{0}', space=sflag, size = 0x4, scoped, tag = 'scoped memory for forward.15']
    %12 = vsyncpa [#allocation3], 0
    // Predicated region
    $region2: #{forward.15} parent=1 // pred_check
      _
    $region3: #{forward.15} parent=1 // pred_check_branch
      %14 = sbr.rel (0) target = $region5
    $region4: #{forward.15} parent=1 // pred_region
      _
    $region5: #{forward.15} parent=1 // pred_fallthru
      _
    // Predicated region
    $region6: #{forward.15} parent=1 // pred_check
      _
    $region7: #{forward.15} parent=1 // pred_check_branch
      %16 = sbr.rel (0) target = $region9
    $region8: #{forward.15} parent=1 // pred_region
      _
    $region9: #{forward.15} parent=1 // pred_fallthru
      _
    // Predicated region
    $region10: #{forward.15} parent=1 // pred_check
      _
    $region11: #{forward.15} parent=1 // pred_check_branch
      %18 = sbr.rel (0) target = $region13
    $region12: #{forward.15} parent=1 // pred_region
      _
    $region13: #{forward.15} parent=1 // pred_fallthru
      _
    // Predicated region
    $region14: #{forward.15} parent=1 // pred_check
      _
    $region15: #{forward.15} parent=1 // pred_check_branch
      %20 = sbr.rel (0) target = $region17
    $region16: #{forward.15} parent=1 // pred_region
      _
    $region17: #{forward.15} parent=1 // pred_fallthru
      _
    // Predicated region
    $region18: #{forward.15} parent=1 // pred_check
      _
    $region19: #{forward.15} parent=1 // pred_check_branch
      %22 = sbr.rel (0) target = $region21
    $region20: #{forward.15} parent=1 // pred_region
      _
    $region21: #{forward.15} parent=1 // pred_fallthru
      _
    // Predicated region
    $region22: #{forward.15} parent=1 // pred_check
      _
    $region23: #{forward.15} parent=1 // pred_check_branch
      %24 = sbr.rel (0) target = $region25
    $region24: #{forward.15} parent=1 // pred_region
      _
    $region25: #{forward.15} parent=1 // pred_fallthru
      _
    // Predicated region
    $region26: #{forward.15} parent=1 // pred_check
      _
    $region27: #{forward.15} parent=1 // pred_check_branch
      %26 = sbr.rel (0) target = $region29
    $region28: #{forward.15} parent=1 // pred_region
      _
    $region29: #{forward.15} parent=1 // pred_fallthru
      _
    %v27 = vld [vmem:[%s0] sm:$0xff]
    %v28 = vld [vmem:[%s0 + $0x8] sm:$0xff]
    %v29 = vld [vmem:[%s0 + $0x10] sm:$0xff]
    %v30 = vld [vmem:[%s0 + $0x18] sm:$0xff]
    %v31 = vld [vmem:[%s0 + $0x20] sm:$0xff]
    %v32 = vld [vmem:[%s0 + $0x28] sm:$0xff]
    %v33 = vld [vmem:[%s0 + $0x30] sm:$0xff]
    %v34 = vld [vmem:[%s0 + $0x38] sm:$0xff]
    %v35 = vld [vmem:[%s0 + $0x40] sm:$0xff]
    %v36 = vld [vmem:[%s0 + $0x48] sm:$0xff]
    %v37 = vld [vmem:[%s0 + $0x50] sm:$0xff]
    %v38 = vld [vmem:[%s0 + $0x58] sm:$0xff]
    %v39 = vld [vmem:[%s0 + $0x60] sm:$0xff]
    %v40 = vld [vmem:[%s0 + $0x68] sm:$0xff]
    %v41 = vld [vmem:[%s0 + $0x70] sm:$0xff]
    %v42 = vld [vmem:[%s0 + $0x78] sm:$0xff]
    %v43 = vld [vmem:[%s1] sm:$0xff]
    %v44 = vld [vmem:[%s1 + $0x8] sm:$0xff]
    %v45 = vld [vmem:[%s1 + $0x10] sm:$0xff]
    %v46 = vld [vmem:[%s1 + $0x18] sm:$0xff]
    %v47 = vld [vmem:[%s1 + $0x20] sm:$0xff]
    %v48 = vld [vmem:[%s1 + $0x28] sm:$0xff]
    %v49 = vld [vmem:[%s1 + $0x30] sm:$0xff]
    %v50 = vld [vmem:[%s1 + $0x38] sm:$0xff]
    %v51 = vld [vmem:[%s1 + $0x40] sm:$0xff]
    %v52 = vld [vmem:[%s1 + $0x48] sm:$0xff]
    %v53 = vld [vmem:[%s1 + $0x50] sm:$0xff]
    %v54 = vld [vmem:[%s1 + $0x58] sm:$0xff]
    %v55 = vld [vmem:[%s1 + $0x60] sm:$0xff]
    %v56 = vld [vmem:[%s1 + $0x68] sm:$0xff]
    %v57 = vld [vmem:[%s1 + $0x70] sm:$0xff]
    %v58 = vld [vmem:[%s1 + $0x78] sm:$0xff]
    %v59 = vadd.f32 %v27, %v43
    %v60 = vadd.f32 %v28, %v44
    %v61 = vadd.f32 %v29, %v45
    %v62 = vadd.f32 %v30, %v46
    %v63 = vadd.f32 %v31, %v47
    %v64 = vadd.f32 %v32, %v48
    %v65 = vadd.f32 %v33, %v49
    %v66 = vadd.f32 %v34, %v50
    %v67 = vadd.f32 %v35, %v51
    %v68 = vadd.f32 %v36, %v52
    %v69 = vadd.f32 %v37, %v53
    %v70 = vadd.f32 %v38, %v54
    %v71 = vadd.f32 %v39, %v55
    %v72 = vadd.f32 %v40, %v56
    %v73 = vadd.f32 %v41, %v57
    %v74 = vadd.f32 %v42, %v58
    %vm75 = vcmask 261120
    %v76 = vsel %vm75, %v59, 0.0
    %77 = vadd.xlane.f32.xlu0 %v76
    %v78 = vpop.xlane.xlu0 %77
    %v79 = vsel %vm75, %v60, 0.0
    %80 = vadd.xlane.f32.xlu0 %v79
    %v81 = vpop.xlane.xlu0 %80
    %v82 = vsel %vm75, %v61, 0.0
    %83 = vadd.xlane.f32.xlu0 %v82
    %v84 = vpop.xlane.xlu0 %83
    %v85 = vsel %vm75, %v62, 0.0
    %86 = vadd.xlane.f32.xlu0 %v85
    %v87 = vpop.xlane.xlu0 %86
    %v88 = vsel %vm75, %v63, 0.0
    %89 = vadd.xlane.f32.xlu0 %v88
    %v90 = vpop.xlane.xlu0 %89
    %v91 = vsel %vm75, %v64, 0.0
    %92 = vadd.xlane.f32.xlu0 %v91
    %v93 = vpop.xlane.xlu0 %92
    %v94 = vsel %vm75, %v65, 0.0
    %95 = vadd.xlane.f32.xlu0 %v94
    %v96 = vpop.xlane.xlu0 %95
    %v97 = vsel %vm75, %v66, 0.0
    %98 = vadd.xlane.f32.xlu0 %v97
    %v99 = vpop.xlane.xlu0 %98
    %v100 = vsel %vm75, %v67, 0.0
    %101 = vadd.xlane.f32.xlu0 %v100
    %v102 = vpop.xlane.xlu0 %101
    %v103 = vsel %vm75, %v68, 0.0
    %104 = vadd.xlane.f32.xlu0 %v103
    %v105 = vpop.xlane.xlu0 %104
    %v106 = vsel %vm75, %v69, 0.0
    %107 = vadd.xlane.f32.xlu0 %v106
    %v108 = vpop.xlane.xlu0 %107
    %v109 = vsel %vm75, %v70, 0.0
    %110 = vadd.xlane.f32.xlu0 %v109
    %v111 = vpop.xlane.xlu0 %110
    %v112 = vsel %vm75, %v71, 0.0
    %113 = vadd.xlane.f32.xlu0 %v112
    %v114 = vpop.xlane.xlu0 %113
    %v115 = vsel %vm75, %v72, 0.0
    %116 = vadd.xlane.f32.xlu0 %v115
    %v117 = vpop.xlane.xlu0 %116
    %v118 = vsel %vm75, %v73, 0.0
    %119 = vadd.xlane.f32.xlu0 %v118
    %v120 = vpop.xlane.xlu0 %119
    %v121 = vsel %vm75, %v74, 0.0
    %122 = vadd.xlane.f32.xlu0 %v121
    %v123 = vpop.xlane.xlu0 %122
    %v124 = vrcp.pop 32.0
    %v125 = vmul.f32 %v78, %v124
    %v126 = vmul.f32 %v81, %v124
    %v127 = vmul.f32 %v84, %v124
    %v128 = vmul.f32 %v87, %v124
    %v129 = vmul.f32 %v90, %v124
    %v130 = vmul.f32 %v93, %v124
    %v131 = vmul.f32 %v96, %v124
    %v132 = vmul.f32 %v99, %v124
    %v133 = vmul.f32 %v102, %v124
    %v134 = vmul.f32 %v105, %v124
    %v135 = vmul.f32 %v108, %v124
    %v136 = vmul.f32 %v111, %v124
    %v137 = vmul.f32 %v114, %v124
    %v138 = vmul.f32 %v117, %v124
    %v139 = vmul.f32 %v120, %v124
    %v140 = vmul.f32 %v123, %v124
    %v141 = vsub.f32 %v59, %v125
    %v142 = vsub.f32 %v60, %v126
    %v143 = vsub.f32 %v61, %v127
    %v144 = vsub.f32 %v62, %v128
    %v145 = vsub.f32 %v63, %v129
    %v146 = vsub.f32 %v64, %v130
    %v147 = vsub.f32 %v65, %v131
    %v148 = vsub.f32 %v66, %v132
    %v149 = vsub.f32 %v67, %v133
    %v150 = vsub.f32 %v68, %v134
    %v151 = vsub.f32 %v69, %v135
    %v152 = vsub.f32 %v70, %v136
    %v153 = vsub.f32 %v71, %v137
    %v154 = vsub.f32 %v72, %v138
    %v155 = vsub.f32 %v73, %v139
    %v156 = vsub.f32 %v74, %v140
    %v157 = vmul.f32 %v141, %v141
    %v158 = vmul.f32 %v142, %v142
    %v159 = vmul.f32 %v143, %v143
    %v160 = vmul.f32 %v144, %v144
    %v161 = vmul.f32 %v145, %v145
    %v162 = vmul.f32 %v146, %v146
    %v163 = vmul.f32 %v147, %v147
    %v164 = vmul.f32 %v148, %v148
    %v165 = vmul.f32 %v149, %v149
    %v166 = vmul.f32 %v150, %v150
    %v167 = vmul.f32 %v151, %v151
    %v168 = vmul.f32 %v152, %v152
    %v169 = vmul.f32 %v153, %v153
    %v170 = vmul.f32 %v154, %v154
    %v171 = vmul.f32 %v155, %v155
    %v172 = vmul.f32 %v156, %v156
    %v173 = vsel %vm75, %v157, 0.0
    %174 = vadd.xlane.f32.xlu0 %v173
    %v175 = vpop.xlane.xlu0 %174
    %v176 = vsel %vm75, %v158, 0.0
    %177 = vadd.xlane.f32.xlu0 %v176
    %v178 = vpop.xlane.xlu0 %177
    %v179 = vsel %vm75, %v159, 0.0
    %180 = vadd.xlane.f32.xlu0 %v179
    %v181 = vpop.xlane.xlu0 %180
    %v182 = vsel %vm75, %v160, 0.0
    %183 = vadd.xlane.f32.xlu0 %v182
    %v184 = vpop.xlane.xlu0 %183
    %v185 = vsel %vm75, %v161, 0.0
    %186 = vadd.xlane.f32.xlu0 %v185
    %v187 = vpop.xlane.xlu0 %186
    %v188 = vsel %vm75, %v162, 0.0
    %189 = vadd.xlane.f32.xlu0 %v188
    %v190 = vpop.xlane.xlu0 %189
    %v191 = vsel %vm75, %v163, 0.0
    %192 = vadd.xlane.f32.xlu0 %v191
    %v193 = vpop.xlane.xlu0 %192
    %v194 = vsel %vm75, %v164, 0.0
    %195 = vadd.xlane.f32.xlu0 %v194
    %v196 = vpop.xlane.xlu0 %195
    %v197 = vsel %vm75, %v165, 0.0
    %198 = vadd.xlane.f32.xlu0 %v197
    %v199 = vpop.xlane.xlu0 %198
    %v200 = vsel %vm75, %v166, 0.0
    %201 = vadd.xlane.f32.xlu0 %v200
    %v202 = vpop.xlane.xlu0 %201
    %v203 = vsel %vm75, %v167, 0.0
    %204 = vadd.xlane.f32.xlu0 %v203
    %v205 = vpop.xlane.xlu0 %204
    %v206 = vsel %vm75, %v168, 0.0
    %207 = vadd.xlane.f32.xlu0 %v206
    %v208 = vpop.xlane.xlu0 %207
    %v209 = vsel %vm75, %v169, 0.0
    %210 = vadd.xlane.f32.xlu0 %v209
    %v211 = vpop.xlane.xlu0 %210
    %v212 = vsel %vm75, %v170, 0.0
    %213 = vadd.xlane.f32.xlu0 %v212
    %v214 = vpop.xlane.xlu0 %213
    %v215 = vsel %vm75, %v171, 0.0
    %216 = vadd.xlane.f32.xlu0 %v215
    %v217 = vpop.xlane.xlu0 %216
    %v218 = vsel %vm75, %v172, 0.0
    %219 = vadd.xlane.f32.xlu0 %v218
    %v220 = vpop.xlane.xlu0 %219
    %v221 = vmul.f32 %v175, %v124
    %v222 = vmul.f32 %v178, %v124
    %v223 = vmul.f32 %v181, %v124
    %v224 = vmul.f32 %v184, %v124
    %v225 = vmul.f32 %v187, %v124
    %v226 = vmul.f32 %v190, %v124
    %v227 = vmul.f32 %v193, %v124
    %v228 = vmul.f32 %v196, %v124
    %v229 = vmul.f32 %v199, %v124
    %v230 = vmul.f32 %v202, %v124
    %v231 = vmul.f32 %v205, %v124
    %v232 = vmul.f32 %v208, %v124
    %v233 = vmul.f32 %v211, %v124
    %v234 = vmul.f32 %v214, %v124
    %v235 = vmul.f32 %v217, %v124
    %v236 = vmul.f32 %v220, %v124
    %v237 = vadd.f32 %v221, 1e-05
    %v238 = vadd.f32 %v222, 1e-05
    %v239 = vadd.f32 %v223, 1e-05
    %v240 = vadd.f32 %v224, 1e-05
    %v241 = vadd.f32 %v225, 1e-05
    %v242 = vadd.f32 %v226, 1e-05
    %v243 = vadd.f32 %v227, 1e-05
    %v244 = vadd.f32 %v228, 1e-05
    %v245 = vadd.f32 %v229, 1e-05
    %v246 = vadd.f32 %v230, 1e-05
    %v247 = vadd.f32 %v231, 1e-05
    %v248 = vadd.f32 %v232, 1e-05
    %v249 = vadd.f32 %v233, 1e-05
    %v250 = vadd.f32 %v234, 1e-05
    %v251 = vadd.f32 %v235, 1e-05
    %v252 = vadd.f32 %v236, 1e-05
    %v253 = vrsqrt.pop %v237
    %v254 = vrsqrt.pop %v238
    %v255 = vrsqrt.pop %v239
    %v256 = vrsqrt.pop %v240
    %v257 = vrsqrt.pop %v241
    %v258 = vrsqrt.pop %v242
    %v259 = vrsqrt.pop %v243
    %v260 = vrsqrt.pop %v244
    %v261 = vrsqrt.pop %v245
    %v262 = vrsqrt.pop %v246
    %v263 = vrsqrt.pop %v247
    %v264 = vrsqrt.pop %v248
    %v265 = vrsqrt.pop %v249
    %v266 = vrsqrt.pop %v250
    %v267 = vrsqrt.pop %v251
    %v268 = vrsqrt.pop %v252
    %v269 = vmul.f32 %v141, %v253
    %v270 = vmul.f32 %v142, %v254
    %v271 = vmul.f32 %v143, %v255
    %v272 = vmul.f32 %v144, %v256
    %v273 = vmul.f32 %v145, %v257
    %v274 = vmul.f32 %v146, %v258
    %v275 = vmul.f32 %v147, %v259
    %v276 = vmul.f32 %v148, %v260
    %v277 = vmul.f32 %v149, %v261
    %v278 = vmul.f32 %v150, %v262
    %v279 = vmul.f32 %v151, %v263
    %v280 = vmul.f32 %v152, %v264
    %v281 = vmul.f32 %v153, %v265
    %v282 = vmul.f32 %v154, %v266
    %v283 = vmul.f32 %v155, %v267
    %v284 = vmul.f32 %v156, %v268
    %v285 = vld [vmem:[%s4] sm:$0x1]
    %v287 = vlaneseq
    %v288 = vshrl.u32 %v287, 7
    %v289 = vsub.s32 0, %v288
    %v290 = vrot.slane %v285, %v289
    %v292 = vmul.f32 %v269, %v290
    %v293 = vmul.f32 %v270, %v290
    %v294 = vmul.f32 %v271, %v290
    %v295 = vmul.f32 %v272, %v290
    %v296 = vmul.f32 %v273, %v290
    %v297 = vmul.f32 %v274, %v290
    %v298 = vmul.f32 %v275, %v290
    %v299 = vmul.f32 %v276, %v290
    %v300 = vmul.f32 %v277, %v290
    %v301 = vmul.f32 %v278, %v290
    %v302 = vmul.f32 %v279, %v290
    %v303 = vmul.f32 %v280, %v290
    %v304 = vmul.f32 %v281, %v290
    %v305 = vmul.f32 %v282, %v290
    %v306 = vmul.f32 %v283, %v290
    %v307 = vmul.f32 %v284, %v290
    %v308 = vld [vmem:[%s5] sm:$0x1]
    %v310 = vlaneseq
    %v311 = vshrl.u32 %v310, 7
    %v312 = vsub.s32 0, %v311
    %v313 = vrot.slane %v308, %v312
    %v315 = vadd.f32 %v292, %v313
    %v316 = vadd.f32 %v293, %v313
    %v317 = vadd.f32 %v294, %v313
    %v318 = vadd.f32 %v295, %v313
    %v319 = vadd.f32 %v296, %v313
    %v320 = vadd.f32 %v297, %v313
    %v321 = vadd.f32 %v298, %v313
    %v322 = vadd.f32 %v299, %v313
    %v323 = vadd.f32 %v300, %v313
    %v324 = vadd.f32 %v301, %v313
    %v325 = vadd.f32 %v302, %v313
    %v326 = vadd.f32 %v303, %v313
    %v327 = vadd.f32 %v304, %v313
    %v328 = vadd.f32 %v305, %v313
    %v329 = vadd.f32 %v306, %v313
    %v330 = vadd.f32 %v307, %v313
    %v331 = vld [vmem:[%s2] sm:$0xff]
    %v332 = vld [vmem:[%s2 + $0x8] sm:$0xff]
    %v333 = vld [vmem:[%s2 + $0x10] sm:$0xff]
    %v334 = vld [vmem:[%s2 + $0x18] sm:$0xff]
    %v335 = vld [vmem:[%s2 + $0x20] sm:$0xff]
    %v336 = vld [vmem:[%s2 + $0x28] sm:$0xff]
    %v337 = vld [vmem:[%s2 + $0x30] sm:$0xff]
    %v338 = vld [vmem:[%s2 + $0x38] sm:$0xff]
    %v339 = vld [vmem:[%s2 + $0x40] sm:$0xff]
    %v340 = vld [vmem:[%s2 + $0x48] sm:$0xff]
    %v341 = vld [vmem:[%s2 + $0x50] sm:$0xff]
    %v342 = vld [vmem:[%s2 + $0x58] sm:$0xff]
    %v343 = vld [vmem:[%s2 + $0x60] sm:$0xff]
    %v344 = vld [vmem:[%s2 + $0x68] sm:$0xff]
    %v345 = vld [vmem:[%s2 + $0x70] sm:$0xff]
    %v346 = vld [vmem:[%s2 + $0x78] sm:$0xff]
    %v347 = vxor.u32 %v331, 2147483648
    %v348 = vxor.u32 %v332, 2147483648
    %v349 = vxor.u32 %v333, 2147483648
    %v350 = vxor.u32 %v334, 2147483648
    %v351 = vxor.u32 %v335, 2147483648
    %v352 = vxor.u32 %v336, 2147483648
    %v353 = vxor.u32 %v337, 2147483648
    %v354 = vxor.u32 %v338, 2147483648
    %v355 = vxor.u32 %v339, 2147483648
    %v356 = vxor.u32 %v340, 2147483648
    %v357 = vxor.u32 %v341, 2147483648
    %v358 = vxor.u32 %v342, 2147483648
    %v359 = vxor.u32 %v343, 2147483648
    %v360 = vxor.u32 %v344, 2147483648
    %v361 = vxor.u32 %v345, 2147483648
    %v362 = vxor.u32 %v346, 2147483648
    %v363 = vmul.f32 %v347, 1.442695
    %v364 = vpow.pop %v363
    %v365 = vmul.f32 %v348, 1.442695
    %v366 = vpow.pop %v365
    %v367 = vmul.f32 %v349, 1.442695
    %v368 = vpow.pop %v367
    %v369 = vmul.f32 %v350, 1.442695
    %v370 = vpow.pop %v369
    %v371 = vmul.f32 %v351, 1.442695
    %v372 = vpow.pop %v371
    %v373 = vmul.f32 %v352, 1.442695
    %v374 = vpow.pop %v373
    %v375 = vmul.f32 %v353, 1.442695
    %v376 = vpow.pop %v375
    %v377 = vmul.f32 %v354, 1.442695
    %v378 = vpow.pop %v377
    %v379 = vmul.f32 %v355, 1.442695
    %v380 = vpow.pop %v379
    %v381 = vmul.f32 %v356, 1.442695
    %v382 = vpow.pop %v381
    %v383 = vmul.f32 %v357, 1.442695
    %v384 = vpow.pop %v383
    %v385 = vmul.f32 %v358, 1.442695
    %v386 = vpow.pop %v385
    %v387 = vmul.f32 %v359, 1.442695
    %v388 = vpow.pop %v387
    %v389 = vmul.f32 %v360, 1.442695
    %v390 = vpow.pop %v389
    %v391 = vmul.f32 %v361, 1.442695
    %v392 = vpow.pop %v391
    %v393 = vmul.f32 %v362, 1.442695
    %v394 = vpow.pop %v393
    %v395 = vadd.f32 %v364, 1.0
    %v396 = vadd.f32 %v366, 1.0
    %v397 = vadd.f32 %v368, 1.0
    %v398 = vadd.f32 %v370, 1.0
    %v399 = vadd.f32 %v372, 1.0
    %v400 = vadd.f32 %v374, 1.0
    %v401 = vadd.f32 %v376, 1.0
    %v402 = vadd.f32 %v378, 1.0
    %v403 = vadd.f32 %v380, 1.0
    %v404 = vadd.f32 %v382, 1.0
    %v405 = vadd.f32 %v384, 1.0
    %v406 = vadd.f32 %v386, 1.0
    %v407 = vadd.f32 %v388, 1.0
    %v408 = vadd.f32 %v390, 1.0
    %v409 = vadd.f32 %v392, 1.0
    %v410 = vadd.f32 %v394, 1.0
    %v411 = vrcp.pop %v395
    %v412 = vmul.f32 1.0, %v411
    %v413 = vrcp.pop %v396
    %v414 = vmul.f32 1.0, %v413
    %v415 = vrcp.pop %v397
    %v416 = vmul.f32 1.0, %v415
    %v417 = vrcp.pop %v398
    %v418 = vmul.f32 1.0, %v417
    %v419 = vrcp.pop %v399
    %v420 = vmul.f32 1.0, %v419
    %v421 = vrcp.pop %v400
    %v422 = vmul.f32 1.0, %v421
    %v423 = vrcp.pop %v401
    %v424 = vmul.f32 1.0, %v423
    %v425 = vrcp.pop %v402
    %v426 = vmul.f32 1.0, %v425
    %v427 = vrcp.pop %v403
    %v428 = vmul.f32 1.0, %v427
    %v429 = vrcp.pop %v404
    %v430 = vmul.f32 1.0, %v429
    %v431 = vrcp.pop %v405
    %v432 = vmul.f32 1.0, %v431
    %v433 = vrcp.pop %v406
    %v434 = vmul.f32 1.0, %v433
    %v435 = vrcp.pop %v407
    %v436 = vmul.f32 1.0, %v435
    %v437 = vrcp.pop %v408
    %v438 = vmul.f32 1.0, %v437
    %v439 = vrcp.pop %v409
    %v440 = vmul.f32 1.0, %v439
    %v441 = vrcp.pop %v410
    %v442 = vmul.f32 1.0, %v441
    %v443 = vmul.f32 %v331, %v412
    %v444 = vmul.f32 %v332, %v414
    %v445 = vmul.f32 %v333, %v416
    %v446 = vmul.f32 %v334, %v418
    %v447 = vmul.f32 %v335, %v420
    %v448 = vmul.f32 %v336, %v422
    %v449 = vmul.f32 %v337, %v424
    %v450 = vmul.f32 %v338, %v426
    %v451 = vmul.f32 %v339, %v428
    %v452 = vmul.f32 %v340, %v430
    %v453 = vmul.f32 %v341, %v432
    %v454 = vmul.f32 %v342, %v434
    %v455 = vmul.f32 %v343, %v436
    %v456 = vmul.f32 %v344, %v438
    %v457 = vmul.f32 %v345, %v440
    %v458 = vmul.f32 %v346, %v442
    %v459 = vmul.f32 %v315, %v443
    %v460 = vmul.f32 %v316, %v444
    %v461 = vmul.f32 %v317, %v445
    %v462 = vmul.f32 %v318, %v446
    %v463 = vmul.f32 %v319, %v447
    %v464 = vmul.f32 %v320, %v448
    %v465 = vmul.f32 %v321, %v449
    %v466 = vmul.f32 %v322, %v450
    %v467 = vmul.f32 %v323, %v451
    %v468 = vmul.f32 %v324, %v452
    %v469 = vmul.f32 %v325, %v453
    %v470 = vmul.f32 %v326, %v454
    %v471 = vmul.f32 %v327, %v455
    %v472 = vmul.f32 %v328, %v456
    %v473 = vmul.f32 %v329, %v457
    %v474 = vmul.f32 %v330, %v458
    %v475 = vld [vmem:[%s3] sm:$0xff]
    %v476 = vld [vmem:[%s3 + $0x8] sm:$0xff]
    %v477 = vld [vmem:[%s3 + $0x10] sm:$0xff]
    %v478 = vld [vmem:[%s3 + $0x18] sm:$0xff]
    %v479 = vld [vmem:[%s3 + $0x20] sm:$0xff]
    %v480 = vld [vmem:[%s3 + $0x28] sm:$0xff]
    %v481 = vld [vmem:[%s3 + $0x30] sm:$0xff]
    %v482 = vld [vmem:[%s3 + $0x38] sm:$0xff]
    %v483 = vld [vmem:[%s3 + $0x40] sm:$0xff]
    %v484 = vld [vmem:[%s3 + $0x48] sm:$0xff]
    %v485 = vld [vmem:[%s3 + $0x50] sm:$0xff]
    %v486 = vld [vmem:[%s3 + $0x58] sm:$0xff]
    %v487 = vld [vmem:[%s3 + $0x60] sm:$0xff]
    %v488 = vld [vmem:[%s3 + $0x68] sm:$0xff]
    %v489 = vld [vmem:[%s3 + $0x70] sm:$0xff]
    %v490 = vld [vmem:[%s3 + $0x78] sm:$0xff]
    %v491 = vld [vmem:[%s6] sm:$0xff]
    %v492 = vld [vmem:[%s6 + $0x8] sm:$0xff]
    %v493 = vld [vmem:[%s6 + $0x10] sm:$0xff]
    %v494 = vld [vmem:[%s6 + $0x18] sm:$0xff]
    %v496 = vsel %vm75, %v459, 0
    %v499 = vsel %vm75, %v460, 0
    %v502 = vsel %vm75, %v461, 0
    %v505 = vsel %vm75, %v462, 0
    %v508 = vsel %vm75, %v463, 0
    %v511 = vsel %vm75, %v464, 0
    %v514 = vsel %vm75, %v465, 0
    %v517 = vsel %vm75, %v466, 0
    %v520 = vsel %vm75, %v467, 0
    %v523 = vsel %vm75, %v468, 0
    %v526 = vsel %vm75, %v469, 0
    %v529 = vsel %vm75, %v470, 0
    %v532 = vsel %vm75, %v471, 0
    %v535 = vsel %vm75, %v472, 0
    %v538 = vsel %vm75, %v473, 0
    %v541 = vsel %vm75, %v474, 0
    %543 = vmatprep.subr.mxu0 0.0
    %544 = vmatpush1.msra.mxu0 0.0
    %545 = vmatprep.subr.mxu0 0.0
    %546 = vmatpush1.msra.mxu0 0.0
    %547 = vmatprep.subr.mxu0 0.0
    %548 = vmatpush1.msra.mxu0 0.0
    %549 = vmatprep.subr.mxu0 0.0
    %550 = vmatpush1.msra.mxu0 0.0
    %551 = vmatprep.subr.mxu0 0.0
    %552 = vmatpush1.msra.mxu0 0.0
    %553 = vmatprep.subr.mxu0 0.0
    %554 = vmatpush1.msra.mxu0 0.0
    %555 = vmatprep.subr.mxu0 0.0
    %556 = vmatpush1.msra.mxu0 0.0
    %557 = vmatprep.subr.mxu0 0.0
    %558 = vmatpush1.msra.mxu0 0.0
    %559 = vmatprep.subr.mxu0 0.0
    %560 = vmatpush1.msra.mxu0 0.0
    %561 = vmatprep.subr.mxu0 0.0
    %562 = vmatpush1.msra.mxu0 0.0
    %563 = vmatprep.subr.mxu0 0.0
    %564 = vmatpush1.msra.mxu0 0.0
    %565 = vmatprep.subr.mxu0 0.0
    %566 = vmatpush1.msra.mxu0 0.0
    %567 = vmatprep.subr.mxu0 0.0
    %568 = vmatpush1.msra.mxu0 %v494
    %569 = vmatprep.subr.mxu0 0.0
    %570 = vmatpush1.msra.mxu0 %v493
    %571 = vmatprep.subr.mxu0 0.0
    %572 = vmatpush1.msra.mxu0 %v492
    %573 = vmatprep.subr.mxu0 0.0
    %574 = vmatpush1.msra.mxu0 %v491
    %575 = vmatprep.subr.mxu0 0.0
    %576 = vmatpush2.msra.mxu0 0.0
    %577 = vmatprep.subr.mxu0 0.0
    %578 = vmatpush2.msra.mxu0 0.0
    %579 = vmatprep.subr.mxu0 0.0
    %580 = vmatpush2.msra.mxu0 0.0
    %581 = vmatprep.subr.mxu0 0.0
    %582 = vmatpush2.msra.mxu0 0.0
    %583 = vmatprep.subr.mxu0 0.0
    %584 = vmatpush2.msra.mxu0 0.0
    %585 = vmatprep.subr.mxu0 0.0
    %586 = vmatpush2.msra.mxu0 0.0
    %587 = vmatprep.subr.mxu0 0.0
    %588 = vmatpush2.msra.mxu0 0.0
    %589 = vmatprep.subr.mxu0 0.0
    %590 = vmatpush2.msra.mxu0 0.0
    %591 = vmatprep.subr.mxu0 0.0
    %592 = vmatpush2.msra.mxu0 0.0
    %593 = vmatprep.subr.mxu0 0.0
    %594 = vmatpush2.msra.mxu0 0.0
    %595 = vmatprep.subr.mxu0 0.0
    %596 = vmatpush2.msra.mxu0 0.0
    %597 = vmatprep.subr.mxu0 0.0
    %598 = vmatpush2.msra.mxu0 0.0
    %599 = vmatprep.subr.mxu0 0.0
    %600 = vmatpush2.msra.mxu0 0.0
    %601 = vmatprep.subr.mxu0 0.0
    %602 = vmatpush2.msra.mxu0 0.0
    %603 = vmatprep.subr.mxu0 0.0
    %604 = vmatpush2.msra.mxu0 0.0
    %605 = vmatprep.subr.mxu0 0.0
    %606 = vmatpush2.msra.mxu0 0.0
    %607 = vmatprep.mubr.f32.mxu0 0.0
    %608 = vmatmul.mubr.f32.gmra.mxu0 %v496
    %v609 = vpop.f32.mrf.mxu0
    %v610 = vadd.f32 0.0, %v609
    %v611 = vpop.f32.mrf.mxu0
    %612 = vmatprep.mubr.f32.mxu0 0.0
    %613 = vmatmul.mubr.f32.gmra.mxu0 %v499
    %v614 = vpop.f32.mrf.mxu0
    %v615 = vadd.f32 0.0, %v614
    %v616 = vpop.f32.mrf.mxu0
    %617 = vmatprep.mubr.f32.mxu0 0.0
    %618 = vmatmul.mubr.f32.gmra.mxu0 %v502
    %v619 = vpop.f32.mrf.mxu0
    %v620 = vadd.f32 0.0, %v619
    %v621 = vpop.f32.mrf.mxu0
    %622 = vmatprep.mubr.f32.mxu0 0.0
    %623 = vmatmul.mubr.f32.gmra.mxu0 %v505
    %v624 = vpop.f32.mrf.mxu0
    %v625 = vadd.f32 0.0, %v624
    %v626 = vpop.f32.mrf.mxu0
    %627 = vmatprep.mubr.f32.mxu0 0.0
    %628 = vmatmul.mubr.f32.gmra.mxu0 %v508
    %v629 = vpop.f32.mrf.mxu0
    %v630 = vadd.f32 0.0, %v629
    %v631 = vpop.f32.mrf.mxu0
    %632 = vmatprep.mubr.f32.mxu0 0.0
    %633 = vmatmul.mubr.f32.gmra.mxu0 %v511
    %v634 = vpop.f32.mrf.mxu0
    %v635 = vadd.f32 0.0, %v634
    %v636 = vpop.f32.mrf.mxu0
    %637 = vmatprep.mubr.f32.mxu0 0.0
    %638 = vmatmul.mubr.f32.gmra.mxu0 %v514
    %v639 = vpop.f32.mrf.mxu0
    %v640 = vadd.f32 0.0, %v639
    %v641 = vpop.f32.mrf.mxu0
    %642 = vmatprep.mubr.f32.mxu0 0.0
    %643 = vmatmul.mubr.f32.gmra.mxu0 %v517
    %v644 = vpop.f32.mrf.mxu0
    %v645 = vadd.f32 0.0, %v644
    %v646 = vpop.f32.mrf.mxu0
    %647 = vmatprep.mubr.f32.mxu0 0.0
    %648 = vmatmul.mubr.f32.gmra.mxu0 %v520
    %v649 = vpop.f32.mrf.mxu0
    %v650 = vadd.f32 0.0, %v649
    %v651 = vpop.f32.mrf.mxu0
    %652 = vmatprep.mubr.f32.mxu0 0.0
    %653 = vmatmul.mubr.f32.gmra.mxu0 %v523
    %v654 = vpop.f32.mrf.mxu0
    %v655 = vadd.f32 0.0, %v654
    %v656 = vpop.f32.mrf.mxu0
    %657 = vmatprep.mubr.f32.mxu0 0.0
    %658 = vmatmul.mubr.f32.gmra.mxu0 %v526
    %v659 = vpop.f32.mrf.mxu0
    %v660 = vadd.f32 0.0, %v659
    %v661 = vpop.f32.mrf.mxu0
    %662 = vmatprep.mubr.f32.mxu0 0.0
    %663 = vmatmul.mubr.f32.gmra.mxu0 %v529
    %v664 = vpop.f32.mrf.mxu0
    %v665 = vadd.f32 0.0, %v664
    %v666 = vpop.f32.mrf.mxu0
    %667 = vmatprep.mubr.f32.mxu0 0.0
    %668 = vmatmul.mubr.f32.gmra.mxu0 %v532
    %v669 = vpop.f32.mrf.mxu0
    %v670 = vadd.f32 0.0, %v669
    %v671 = vpop.f32.mrf.mxu0
    %672 = vmatprep.mubr.f32.mxu0 0.0
    %673 = vmatmul.mubr.f32.gmra.mxu0 %v535
    %v674 = vpop.f32.mrf.mxu0
    %v675 = vadd.f32 0.0, %v674
    %v676 = vpop.f32.mrf.mxu0
    %677 = vmatprep.mubr.f32.mxu0 0.0
    %678 = vmatmul.mubr.f32.gmra.mxu0 %v538
    %v679 = vpop.f32.mrf.mxu0
    %v680 = vadd.f32 0.0, %v679
    %v681 = vpop.f32.mrf.mxu0
    %682 = vmatprep.mubr.f32.mxu0 0.0
    %683 = vmatmul.mubr.f32.gmra.mxu0 %v541
    %v684 = vpop.f32.mrf.mxu0
    %v685 = vadd.f32 0.0, %v684
    %v686 = vpop.f32.mrf.mxu0
    %687 = vdwg.mxu0
    %v688 = vadd.f32 %v475, %v610
    %v689 = vadd.f32 %v476, %v615
    %v690 = vadd.f32 %v477, %v620
    %v691 = vadd.f32 %v478, %v625
    %v692 = vadd.f32 %v479, %v630
    %v693 = vadd.f32 %v480, %v635
    %v694 = vadd.f32 %v481, %v640
    %v695 = vadd.f32 %v482, %v645
    %v696 = vadd.f32 %v483, %v650
    %v697 = vadd.f32 %v484, %v655
    %v698 = vadd.f32 %v485, %v660
    %v699 = vadd.f32 %v486, %v665
    %v700 = vadd.f32 %v487, %v670
    %v701 = vadd.f32 %v488, %v675
    %v702 = vadd.f32 %v489, %v680
    %v703 = vadd.f32 %v490, %v685
    %vm704 = vcmask 130048
    %705 = vst.msk [vmem:[#allocation2] sm:$0xff] %vm704, %v688
    %706 = vst.msk [vmem:[#allocation2 + $0x8] sm:$0xff] %vm704, %v689
    %707 = vst.msk [vmem:[#allocation2 + $0x10] sm:$0xff] %vm704, %v690
    %708 = vst.msk [vmem:[#allocation2 + $0x18] sm:$0xff] %vm704, %v691
    %709 = vst.msk [vmem:[#allocation2 + $0x20] sm:$0xff] %vm704, %v692
    %710 = vst.msk [vmem:[#allocation2 + $0x28] sm:$0xff] %vm704, %v693
    %711 = vst.msk [vmem:[#allocation2 + $0x30] sm:$0xff] %vm704, %v694
    %712 = vst.msk [vmem:[#allocation2 + $0x38] sm:$0xff] %vm704, %v695
    %713 = vst.msk [vmem:[#allocation2 + $0x40] sm:$0xff] %vm704, %v696
    %714 = vst.msk [vmem:[#allocation2 + $0x48] sm:$0xff] %vm704, %v697
    %715 = vst.msk [vmem:[#allocation2 + $0x50] sm:$0xff] %vm704, %v698
    %716 = vst.msk [vmem:[#allocation2 + $0x58] sm:$0xff] %vm704, %v699
    %717 = vst.msk [vmem:[#allocation2 + $0x60] sm:$0xff] %vm704, %v700
    %718 = vst.msk [vmem:[#allocation2 + $0x68] sm:$0xff] %vm704, %v701
    %719 = vst.msk [vmem:[#allocation2 + $0x70] sm:$0xff] %vm704, %v702
    %720 = vst.msk [vmem:[#allocation2 + $0x78] sm:$0xff] %vm704, %v703
    // Predicated region
    $region30: #{forward.15} parent=1 // pred_check
      _
    $region31: #{forward.15} parent=1 // pred_check_branch
      %722 = sbr.rel (0) target = $region33
    $region32: #{forward.15} parent=1 // pred_region
      %s724 = ssub.s32 2048, 2048
      %725 = vsyncadd [#allocation3], %s724
      %s726 = sshll.u32 [#allocation2], 4
      %s727 = int_to_ptr.vmem [resolvable:$true] %s726
      %732 = dma.vmem_to_hbm [thread:$0]  %s727, 2048, %s7, [#allocation3], 128, 128, 8
    $region33: #{forward.15} parent=1 // pred_fallthru
      _
    // Predicated region
    $region34: #{forward.15} parent=1 // pred_check
      _
    $region35: #{forward.15} parent=1 // pred_check_branch
      %734 = sbr.rel (0) target = $region37
    $region36: #{forward.15} parent=1 // pred_region
      %735 = dma.done [#allocation3], 2048
    $region37: #{forward.15} parent=1 // pred_fallthru
      _
    %736 = vsyncpa [#allocation3], 1

</llo_original>
